<compile_context>
chip_gen: v5e
topology: v5e:2x2
jax: 0.10.0
libtpu: 0.0.40
codegen_flags: <defaults>
</compile_context>

<pallas_src>
import functools
import math

import jax
import jax.numpy as jnp
from jax import lax
from jax.experimental import pallas as pl
from jax.experimental.pallas import tpu as pltpu


# ----------------------------------------------------------------------------
# Deterministic parameter construction
# ----------------------------------------------------------------------------
class KeyGen:
    def __init__(self, key):
        self.key = key

    def __call__(self):
        self.key, k = jax.random.split(self.key)
        return k


def make_conv(kg, cout, cin, k):
    # HWIO layout (NHWC backbone).
    std = (2.0 / (cin * k * k)) ** 0.5
    return jax.random.normal(kg(), (k, k, cin, cout), jnp.float32) * std


def make_bn2d(kg, c):
    # BN folded into per-channel scale/bias (eval mode).
    scale = 1.0 + 0.01 * jax.random.normal(kg(), (c,), jnp.float32)
    bias = 0.01 * jax.random.normal(kg(), (c,), jnp.float32)
    return scale, bias


def make_linear(kg, fan_in, fan_out):
    std = 1.0 / (fan_in ** 0.5)
    w = jax.random.normal(kg(), (fan_in, fan_out), jnp.float32) * std
    b = jax.random.normal(kg(), (1, fan_out), jnp.float32) * std
    return w, b


def make_bn1d_fold(kg, c):
    gamma = 1.0 + 0.01 * jax.random.normal(kg(), (c,), jnp.float32)
    beta = 0.01 * jax.random.normal(kg(), (c,), jnp.float32)
    mean = 0.01 * jax.random.normal(kg(), (c,), jnp.float32)
    var = 1.0 + 0.1 * jnp.abs(jax.random.normal(kg(), (c,), jnp.float32))
    g = gamma / jnp.sqrt(var + 1e-5)
    s = beta - mean * g
    return g.reshape(1, c), s.reshape(1, c)


def make_bottleneck(kg, cin, planes, stride):
    p = {"stride": stride}
    p["w1"] = make_conv(kg, planes, cin, 1)
    p["bn1"] = make_bn2d(kg, planes)
    p["w2"] = make_conv(kg, planes, planes, 3)
    p["bn2"] = make_bn2d(kg, planes)
    p["w3"] = make_conv(kg, planes * 4, planes, 1)
    p["bn3"] = make_bn2d(kg, planes * 4)
    if stride != 1 or cin != planes * 4:
        p["wd"] = make_conv(kg, planes * 4, cin, 1)
        p["bnd"] = make_bn2d(kg, planes * 4)
    return p


def make_resnet50(kg):
    params = {"conv1": make_conv(kg, 64, 3, 7), "bn1": make_bn2d(kg, 64)}
    layers = []
    cin = 64
    for planes, nblocks, stride in [(64, 3, 1), (128, 4, 2), (256, 6, 2), (512, 3, 2)]:
        blocks = []
        for i in range(nblocks):
            s = stride if i == 0 else 1
            blocks.append(make_bottleneck(kg, cin, planes, s))
            cin = planes * 4
        layers.append(blocks)
    params["layers"] = layers
    return params


def make_params(kg):
    params = {"backbone": make_resnet50(kg)}
    # attention: Conv2d(2048,512,1) + ReLU + Conv2d(512,1,1) + Sigmoid  (1x1 convs -> matmuls)
    w, b = make_linear(kg, 2048, 512)
    params["att_w1"], params["att_b1"] = w.astype(jnp.bfloat16), b
    w, b = make_linear(kg, 512, 1)
    params["att_w2_row"], params["att_b2"] = w.T, b          # (1, 512) pre-transposed row
    # classifier: Linear(2048,1024)+BN+ReLU, Linear(1024,256)+BN+ReLU, Linear(256,1)
    w, b = make_linear(kg, 2048, 1024)
    params["cls_w1"], params["cls_b1"] = w.astype(jnp.bfloat16), b
    params["cls_g1"], params["cls_s1"] = make_bn1d_fold(kg, 1024)
    w, b = make_linear(kg, 1024, 256)
    params["cls_w2"], params["cls_b2"] = w.astype(jnp.bfloat16), b
    params["cls_g2"], params["cls_s2"] = make_bn1d_fold(kg, 256)
    w, b = make_linear(kg, 256, 1)
    params["cls_w3_row"], params["cls_b3"] = w.T, b          # (1, 256) pre-transposed row
    return params


# ----------------------------------------------------------------------------
# ResNet50 backbone (plain JAX glue, NHWC so features come out channel-last)
# TODO(synk): backbone conv stack left in plain JAX (lax.conv), not hand-written Pallas.
# ----------------------------------------------------------------------------
def conv2d(x, w, stride, pad):
    return lax.conv_general_dilated(
        x, w, window_strides=(stride, stride),
        padding=[(pad, pad), (pad, pad)],
        dimension_numbers=("NHWC", "HWIO", "NHWC"))


def bn2d(x, scale_bias):
    scale, bias = scale_bias
    return x * scale + bias          # broadcast over channel-last axis


def bottleneck_fwd(p, x):
    out = jnp.maximum(bn2d(conv2d(x, p["w1"], 1, 0), p["bn1"]), 0.0)
    out = jnp.maximum(bn2d(conv2d(out, p["w2"], p["stride"], 1), p["bn2"]), 0.0)
    out = bn2d(conv2d(out, p["w3"], 1, 0), p["bn3"])
    if "wd" in p:
        identity = bn2d(conv2d(x, p["wd"], p["stride"], 0), p["bnd"])
    else:
        identity = x
    return jnp.maximum(out + identity, 0.0)


def resnet50_features(params, x):
    x = conv2d(x, params["conv1"], 2, 3)
    x = bn2d(x, params["bn1"])
    x = jnp.maximum(x, 0.0)
    # maxpool 3x3, stride 2, pad 1  (NHWC)
    x = lax.reduce_window(x, -jnp.inf, lax.max,
                          (1, 3, 3, 1), (1, 2, 2, 1),
                          [(0, 0), (1, 1), (1, 1), (0, 0)])
    for blocks in params["layers"]:
        for p in blocks:
            x = bottleneck_fwd(p, x)
    return x  # (B, H, W, 2048)


# ----------------------------------------------------------------------------
# Fused Pallas kernel: attention (1x1 convs) + attended avg-pool + classifier MLP
# ----------------------------------------------------------------------------
def fused_head_kernel(f_ref, pool_ref,
                      aw1_ref, ab1_ref, aw2_ref, ab2_ref,
                      cw1_ref, cb1_ref, cg1_ref, cs1_ref,
                      cw2_ref, cb2_ref, cg2_ref, cs2_ref,
                      cw3_ref, cb3_ref, o_ref, *, inv_hw):
    f = f_ref[...]                                                  # (BB*HW, C) bf16, 2-D

    # ---- attention: Conv1x1(2048->512) + ReLU + Conv1x1(512->1) + Sigmoid ----
    h = jnp.dot(f, aw1_ref[...], preferred_element_type=jnp.float32) + ab1_ref[...]
    h = jnp.maximum(h, 0.0)                                         # (BB*HW, 512) f32
    # N=1 "matmul" done as VPU multiply + lane reduction (avoids 1-column MXU pass)
    logit = jnp.sum(h * aw2_ref[...], axis=-1, keepdims=True) + ab2_ref[0, 0]
    a = jax.nn.sigmoid(logit)                                       # (BB*HW, 1) f32

    # ---- attended average pool: static block-diagonal pooling matrix on the MXU ----
    attended = f * a.astype(f.dtype)                                # (BB*HW, C) bf16
    pooled = jnp.dot(pool_ref[...], attended,
                     preferred_element_type=jnp.float32) * inv_hw   # (BB, C) f32

    # ---- classifier MLP (Dropout = identity, BN folded, eval mode) ----
    x1 = jnp.dot(pooled.astype(jnp.bfloat16), cw1_ref[...],
                 preferred_element_type=jnp.float32) + cb1_ref[...]
    x1 = jnp.maximum(x1 * cg1_ref[...] + cs1_ref[...], 0.0)         # (BB, 1024)
    x2 = jnp.dot(x1.astype(jnp.bfloat16), cw2_ref[...],
                 preferred_element_type=jnp.float32) + cb2_ref[...]
    x2 = jnp.maximum(x2 * cg2_ref[...] + cs2_ref[...], 0.0)         # (BB, 256)
    # final Linear(256, 1): contract on features, emit lane-dense (1, BB) logits row
    out_row = lax.dot_general(cw3_ref[...], x2,
                              dimension_numbers=(((1,), (1,)), ((), ())),
                              preferred_element_type=jnp.float32)   # (1, BB)
    o_ref[...] = out_row + cb3_ref[0, 0]


def _round_up(x, m):
    return ((x + m - 1) // m) * m


def attention_classifier(f2d, p, hw):
    """f2d: (B*HW, 2048) bf16 features (channel-last, batch-major) -> (B, 1) f32 logits."""
    n_rows, C = f2d.shape
    B = n_rows // hw

    # --- choose batch block BB: classifier GEMM M = BB, attention GEMM M = BB*HW ---
    # Resident bf16 weights are ~6.6 MB; keep the double-buffered bf16 feature block plus
    # f32/bf16 temporaries comfortably under v7x's 64 MiB VMEM (ample on v5e/v6e's 128 MiB).
    feat_budget = 24 << 20                               # 2 x (BB*HW*C*2B) <= 24 MiB
    max_bb_vmem = max(8, feat_budget // (2 * hw * C * 2))
    bb = min(256, max_bb_vmem)                           # M>=256 fills v6e/v7x MXU (>=128 v5e)
    b8 = _round_up(B, 8)
    if b8 >= 16:
        # keep >= 2 grid steps so "parallel" can shard batch blocks over v7x's 2 TensorCores
        bb = min(bb, _round_up(math.ceil(B / 2), 8))
    bb = max(8, min((bb // 8) * 8, b8))                  # multiple of 8 -> sublane-aligned
    bp = _round_up(B, bb)
    num_blocks = bp // bb

    if bp != B:
        f2d = jnp.pad(f2d, ((0, (bp - B) * hw), (0, 0)))

    # Static block-diagonal pooling matrix: pool[b, r] = 1 iff r // hw == b.
    # 1/hw is applied in f32 inside the kernel so the bf16 matrix stays exact.
    pool_mat = jnp.repeat(jnp.eye(bb, dtype=jnp.bfloat16), hw, axis=1)   # (bb, bb*hw)

    vmem = pl.BlockSpec(memory_space=pltpu.MemorySpace.VMEM)   # whole-array VMEM resident
    smem = pl.BlockSpec(memory_space=pltpu.MemorySpace.SMEM)   # scalar biases

    out = pl.pallas_call(
        functools.partial(fused_head_kernel, inv_hw=float(1.0 / hw)),
        out_shape=jax.ShapeDtypeStruct((num_blocks, bb), jnp.float32),
        grid=(num_blocks,),
        in_specs=[
            pl.BlockSpec((bb * hw, C), lambda i: (i, 0)),      # features (pipelined, bf16)
            vmem,                                              # pooling matrix
            vmem, vmem, vmem, smem,                            # att w1, b1, w2_row, b2(scalar)
            vmem, vmem, vmem, vmem,                            # cls w1, b1, bn1 g/s
            vmem, vmem, vmem, vmem,                            # cls w2, b2, bn2 g/s
            vmem, smem,                                        # cls w3_row, b3(scalar)
        ],
        out_specs=pl.BlockSpec((1, bb), lambda i: (i, 0)),      # lane-dense logits row
        compiler_params=pltpu.CompilerParams(
            dimension_semantics=("parallel",),
            vmem_limit_bytes=56 << 20),                         # safe under v7x 64 MiB
    )(f2d, pool_mat,
      p["att_w1"], p["att_b1"], p["att_w2_row"], p["att_b2"],
      p["cls_w1"], p["cls_b1"], p["cls_g1"], p["cls_s1"],
      p["cls_w2"], p["cls_b2"], p["cls_g2"], p["cls_s2"],
      p["cls_w3_row"], p["cls_b3"])
    return out.reshape(bp, 1)[:B]


# ----------------------------------------------------------------------------
# Full forward
# ----------------------------------------------------------------------------
def face_classifier_forward(params, x):
    # PyTorch-style NCHW image -> NHWC once (TPU-native conv layout).
    x = jnp.transpose(x, (0, 2, 3, 1))
    feats = resnet50_features(params["backbone"], x)                # (B, H, W, 2048) f32
    B, H, W, C = feats.shape
    # Stream features to the Pallas head in bf16, already flattened to (B*HW, C):
    f2d = feats.reshape(B * H * W, C).astype(jnp.bfloat16)
    return attention_classifier(f2d, params, H * W)                 # (B, 1)


if __name__ == "__main__":
    kg = KeyGen(jax.random.PRNGKey(0))
    params = make_params(kg)
    # small input consistent with the module: 3-channel image; 64x64 -> 2x2 feature map
    x = jax.random.normal(kg(), (2, 3, 64, 64), jnp.float32)

    fwd = jax.jit(functools.partial(face_classifier_forward, params))
    out = fwd(x)
    jax.block_until_ready(out)

    assert out.shape == (2, 1), out.shape
    assert bool(jnp.all(jnp.isfinite(out)))
    print("KERNEL_OK")
</pallas_src>

<mosaic_0001>
module attributes {stable_mosaic.version = 11 : i64} {
  func.func @fused_head_kernel(%arg0: i32, %arg1: memref<32x2048xbf16, #tpu.memory_space<vmem>>, %arg2: memref<8x32xbf16, #tpu.memory_space<vmem>>, %arg3: memref<2048x512xbf16, #tpu.memory_space<vmem>>, %arg4: memref<1x512xf32, #tpu.memory_space<vmem>>, %arg5: memref<1x512xf32, #tpu.memory_space<vmem>>, %arg6: memref<1x1xf32, #tpu.memory_space<smem>>, %arg7: memref<2048x1024xbf16, #tpu.memory_space<vmem>>, %arg8: memref<1x1024xf32, #tpu.memory_space<vmem>>, %arg9: memref<1x1024xf32, #tpu.memory_space<vmem>>, %arg10: memref<1x1024xf32, #tpu.memory_space<vmem>>, %arg11: memref<1024x256xbf16, #tpu.memory_space<vmem>>, %arg12: memref<1x256xf32, #tpu.memory_space<vmem>>, %arg13: memref<1x256xf32, #tpu.memory_space<vmem>>, %arg14: memref<1x256xf32, #tpu.memory_space<vmem>>, %arg15: memref<1x256xf32, #tpu.memory_space<vmem>>, %arg16: memref<1x1xf32, #tpu.memory_space<smem>>, %arg17: memref<1x8xf32, #tpu.memory_space<vmem>>) attributes {dimension_semantics = [#tpu.dimension_semantics<parallel>], iteration_bounds = array<i64: 1>, scalar_prefetch = 0 : i64, scratch_operands = 0 : i64, tpu.core_type = #tpu.core_type<tc>, window_params = [{transform_indices = @transform_0, window_bounds = array<i64: 32, 2048>}, {pipeline_mode = #tpu.pipeline_mode<synchronous>, transform_indices = @transform_1, window_bounds = array<i64: 8, 32>}, {pipeline_mode = #tpu.pipeline_mode<synchronous>, transform_indices = @transform_2, window_bounds = array<i64: 2048, 512>}, {pipeline_mode = #tpu.pipeline_mode<synchronous>, transform_indices = @transform_3, window_bounds = array<i64: 1, 512>}, {pipeline_mode = #tpu.pipeline_mode<synchronous>, transform_indices = @transform_4, window_bounds = array<i64: 1, 512>}, {transform_indices = @transform_5, window_bounds = array<i64: 1, 1>}, {pipeline_mode = #tpu.pipeline_mode<synchronous>, transform_indices = @transform_6, window_bounds = array<i64: 2048, 1024>}, {pipeline_mode = #tpu.pipeline_mode<synchronous>, transform_indices = @transform_7, window_bounds = array<i64: 1, 1024>}, {pipeline_mode = #tpu.pipeline_mode<synchronous>, transform_indices = @transform_8, window_bounds = array<i64: 1, 1024>}, {pipeline_mode = #tpu.pipeline_mode<synchronous>, transform_indices = @transform_9, window_bounds = array<i64: 1, 1024>}, {pipeline_mode = #tpu.pipeline_mode<synchronous>, transform_indices = @transform_10, window_bounds = array<i64: 1024, 256>}, {pipeline_mode = #tpu.pipeline_mode<synchronous>, transform_indices = @transform_11, window_bounds = array<i64: 1, 256>}, {pipeline_mode = #tpu.pipeline_mode<synchronous>, transform_indices = @transform_12, window_bounds = array<i64: 1, 256>}, {pipeline_mode = #tpu.pipeline_mode<synchronous>, transform_indices = @transform_13, window_bounds = array<i64: 1, 256>}, {pipeline_mode = #tpu.pipeline_mode<synchronous>, transform_indices = @transform_14, window_bounds = array<i64: 1, 256>}, {transform_indices = @transform_15, window_bounds = array<i64: 1, 1>}, {transform_indices = @transform_16, window_bounds = array<i64: 1, 8>}]} {
    %c0 = arith.constant 0 : index
    %c0_0 = arith.constant 0 : index
    %0 = vector.load %arg1[%c0, %c0_0] : memref<32x2048xbf16, #tpu.memory_space<vmem>>, vector<32x2048xbf16>
    %c0_1 = arith.constant 0 : index
    %c0_2 = arith.constant 0 : index
    %1 = vector.load %arg3[%c0_1, %c0_2] : memref<2048x512xbf16, #tpu.memory_space<vmem>>, vector<2048x512xbf16>
    %cst = arith.constant dense<0.000000e+00> : vector<32x512xf32>
    %2 = tpu.matmul %0, %1, %cst {dimension_numbers = #tpu.dot_dimension_numbers<[1], [0], [0], [1], [0, 0, 1, 1], [], []>} : vector<32x2048xbf16>, vector<2048x512xbf16>, vector<32x512xf32> -> vector<32x512xf32>
    %c0_3 = arith.constant 0 : index
    %c0_4 = arith.constant 0 : index
    %3 = vector.load %arg4[%c0_3, %c0_4] : memref<1x512xf32, #tpu.memory_space<vmem>>, vector<1x512xf32>
    %4 = vector.broadcast %3 : vector<1x512xf32> to vector<32x512xf32>
    %5 = arith.addf %2, %4 : vector<32x512xf32>
    %cst_5 = arith.constant 0.000000e+00 : f32
    %6 = vector.broadcast %cst_5 : f32 to vector<32x512xf32>
    %7 = arith.maximumf %5, %6 : vector<32x512xf32>
    %c0_6 = arith.constant 0 : index
    %c0_7 = arith.constant 0 : index
    %8 = vector.load %arg5[%c0_6, %c0_7] : memref<1x512xf32, #tpu.memory_space<vmem>>, vector<1x512xf32>
    %9 = vector.broadcast %8 : vector<1x512xf32> to vector<32x512xf32>
    %10 = arith.mulf %7, %9 : vector<32x512xf32>
    %cst_8 = arith.constant dense<0.000000e+00> : vector<32xf32>
    %11 = vector.multi_reduction <add>, %10, %cst_8 [1] : vector<32x512xf32> to vector<32xf32>
    %12 = vector.shape_cast %11 : vector<32xf32> to vector<32x1xf32>
    %c0_9 = arith.constant 0 : index
    %c0_10 = arith.constant 0 : index
    %13 = memref.load %arg6[%c0_9, %c0_10] : memref<1x1xf32, #tpu.memory_space<smem>>
    %14 = vector.broadcast %13 : f32 to vector<32x1xf32>
    %15 = arith.addf %12, %14 : vector<32x1xf32>
    %16 = arith.negf %15 : vector<32x1xf32>
    %17 = math.exp %16 : vector<32x1xf32>
    %cst_11 = arith.constant 1.000000e+00 : f32
    %18 = vector.broadcast %cst_11 : f32 to vector<32x1xf32>
    %19 = arith.addf %18, %17 : vector<32x1xf32>
    %20 = arith.divf %18, %19 : vector<32x1xf32>
    %21 = arith.truncf %20 : vector<32x1xf32> to vector<32x1xbf16>
    %22 = vector.broadcast %21 : vector<32x1xbf16> to vector<32x2048xbf16>
    %23 = arith.mulf %0, %22 : vector<32x2048xbf16>
    %c0_12 = arith.constant 0 : index
    %c0_13 = arith.constant 0 : index
    %24 = vector.load %arg2[%c0_12, %c0_13] : memref<8x32xbf16, #tpu.memory_space<vmem>>, vector<8x32xbf16>
    %cst_14 = arith.constant dense<0.000000e+00> : vector<8x2048xf32>
    %25 = tpu.matmul %24, %23, %cst_14 {dimension_numbers = #tpu.dot_dimension_numbers<[1], [0], [0], [1], [0, 0, 1, 1], [], []>} : vector<8x32xbf16>, vector<32x2048xbf16>, vector<8x2048xf32> -> vector<8x2048xf32>
    %cst_15 = arith.constant 2.500000e-01 : f32
    %26 = vector.broadcast %cst_15 : f32 to vector<8x2048xf32>
    %27 = arith.mulf %25, %26 : vector<8x2048xf32>
    %28 = arith.truncf %27 : vector<8x2048xf32> to vector<8x2048xbf16>
    %c0_16 = arith.constant 0 : index
    %c0_17 = arith.constant 0 : index
    %29 = vector.load %arg7[%c0_16, %c0_17] : memref<2048x1024xbf16, #tpu.memory_space<vmem>>, vector<2048x1024xbf16>
    %cst_18 = arith.constant dense<0.000000e+00> : vector<8x1024xf32>
    %30 = tpu.matmul %28, %29, %cst_18 {dimension_numbers = #tpu.dot_dimension_numbers<[1], [0], [0], [1], [0, 0, 1, 1], [], []>} : vector<8x2048xbf16>, vector<2048x1024xbf16>, vector<8x1024xf32> -> vector<8x1024xf32>
    %c0_19 = arith.constant 0 : index
    %c0_20 = arith.constant 0 : index
    %31 = vector.load %arg8[%c0_19, %c0_20] : memref<1x1024xf32, #tpu.memory_space<vmem>>, vector<1x1024xf32>
    %32 = vector.broadcast %31 : vector<1x1024xf32> to vector<8x1024xf32>
    %33 = arith.addf %30, %32 : vector<8x1024xf32>
    %c0_21 = arith.constant 0 : index
    %c0_22 = arith.constant 0 : index
    %34 = vector.load %arg9[%c0_21, %c0_22] : memref<1x1024xf32, #tpu.memory_space<vmem>>, vector<1x1024xf32>
    %35 = vector.broadcast %34 : vector<1x1024xf32> to vector<8x1024xf32>
    %36 = arith.mulf %33, %35 : vector<8x1024xf32>
    %c0_23 = arith.constant 0 : index
    %c0_24 = arith.constant 0 : index
    %37 = vector.load %arg10[%c0_23, %c0_24] : memref<1x1024xf32, #tpu.memory_space<vmem>>, vector<1x1024xf32>
    %38 = vector.broadcast %37 : vector<1x1024xf32> to vector<8x1024xf32>
    %39 = arith.addf %36, %38 : vector<8x1024xf32>
    %cst_25 = arith.constant 0.000000e+00 : f32
    %40 = vector.broadcast %cst_25 : f32 to vector<8x1024xf32>
    %41 = arith.maximumf %39, %40 : vector<8x1024xf32>
    %42 = arith.truncf %41 : vector<8x1024xf32> to vector<8x1024xbf16>
    %c0_26 = arith.constant 0 : index
    %c0_27 = arith.constant 0 : index
    %43 = vector.load %arg11[%c0_26, %c0_27] : memref<1024x256xbf16, #tpu.memory_space<vmem>>, vector<1024x256xbf16>
    %cst_28 = arith.constant dense<0.000000e+00> : vector<8x256xf32>
    %44 = tpu.matmul %42, %43, %cst_28 {dimension_numbers = #tpu.dot_dimension_numbers<[1], [0], [0], [1], [0, 0, 1, 1], [], []>} : vector<8x1024xbf16>, vector<1024x256xbf16>, vector<8x256xf32> -> vector<8x256xf32>
    %c0_29 = arith.constant 0 : index
    %c0_30 = arith.constant 0 : index
    %45 = vector.load %arg12[%c0_29, %c0_30] : memref<1x256xf32, #tpu.memory_space<vmem>>, vector<1x256xf32>
    %46 = vector.broadcast %45 : vector<1x256xf32> to vector<8x256xf32>
    %47 = arith.addf %44, %46 : vector<8x256xf32>
    %c0_31 = arith.constant 0 : index
    %c0_32 = arith.constant 0 : index
    %48 = vector.load %arg13[%c0_31, %c0_32] : memref<1x256xf32, #tpu.memory_space<vmem>>, vector<1x256xf32>
    %49 = vector.broadcast %48 : vector<1x256xf32> to vector<8x256xf32>
    %50 = arith.mulf %47, %49 : vector<8x256xf32>
    %c0_33 = arith.constant 0 : index
    %c0_34 = arith.constant 0 : index
    %51 = vector.load %arg14[%c0_33, %c0_34] : memref<1x256xf32, #tpu.memory_space<vmem>>, vector<1x256xf32>
    %52 = vector.broadcast %51 : vector<1x256xf32> to vector<8x256xf32>
    %53 = arith.addf %50, %52 : vector<8x256xf32>
    %cst_35 = arith.constant 0.000000e+00 : f32
    %54 = vector.broadcast %cst_35 : f32 to vector<8x256xf32>
    %55 = arith.maximumf %53, %54 : vector<8x256xf32>
    %c0_36 = arith.constant 0 : index
    %c0_37 = arith.constant 0 : index
    %56 = vector.load %arg15[%c0_36, %c0_37] : memref<1x256xf32, #tpu.memory_space<vmem>>, vector<1x256xf32>
    %cst_38 = arith.constant dense<0.000000e+00> : vector<1x8xf32>
    %57 = tpu.matmul %56, %55, %cst_38 {dimension_numbers = #tpu.dot_dimension_numbers<[1], [1], [0], [0], [0, 0, 1, 0], [], []>} : vector<1x256xf32>, vector<8x256xf32>, vector<1x8xf32> -> vector<1x8xf32>
    %c0_39 = arith.constant 0 : index
    %c0_40 = arith.constant 0 : index
    %58 = memref.load %arg16[%c0_39, %c0_40] : memref<1x1xf32, #tpu.memory_space<smem>>
    %59 = vector.broadcast %58 : f32 to vector<1x8xf32>
    %60 = arith.addf %57, %59 : vector<1x8xf32>
    %c0_41 = arith.constant 0 : index
    %c0_42 = arith.constant 0 : index
    %61 = vector.load %arg17[%c0_41, %c0_42] : memref<1x8xf32, #tpu.memory_space<vmem>>, vector<1x8xf32>
    tpu.vector_store %arg17[%c0_41, %c0_42], %60 {strides = array<i32>} : memref<1x8xf32, #tpu.memory_space<vmem>>, vector<1x8xf32>,
    return
  }
  func.func @transform_0(%arg0: i32) -> (i32, i32) {
    %c0_i32 = arith.constant 0 : i32
    %c0_i32_0 = arith.constant 0 : i32
    return %arg0, %c0_i32 : i32, i32
  }
  func.func @transform_1(%arg0: i32) -> (i32, i32) {
    %c0_i32 = arith.constant 0 : i32
    %c0_i32_0 = arith.constant 0 : i32
    %c0_i32_1 = arith.constant 0 : i32
    return %c0_i32, %c0_i32_0 : i32, i32
  }
  func.func @transform_2(%arg0: i32) -> (i32, i32) {
    %c0_i32 = arith.constant 0 : i32
    %c0_i32_0 = arith.constant 0 : i32
    %c0_i32_1 = arith.constant 0 : i32
    return %c0_i32, %c0_i32_0 : i32, i32
  }
  func.func @transform_3(%arg0: i32) -> (i32, i32) {
    %c0_i32 = arith.constant 0 : i32
    %c0_i32_0 = arith.constant 0 : i32
    %c0_i32_1 = arith.constant 0 : i32
    return %c0_i32, %c0_i32_0 : i32, i32
  }
  func.func @transform_4(%arg0: i32) -> (i32, i32) {
    %c0_i32 = arith.constant 0 : i32
    %c0_i32_0 = arith.constant 0 : i32
    %c0_i32_1 = arith.constant 0 : i32
    return %c0_i32, %c0_i32_0 : i32, i32
  }
  func.func @transform_5(%arg0: i32) -> (i32, i32) {
    %c0_i32 = arith.constant 0 : i32
    %c0_i32_0 = arith.constant 0 : i32
    %c0_i32_1 = arith.constant 0 : i32
    return %c0_i32, %c0_i32_0 : i32, i32
  }
  func.func @transform_6(%arg0: i32) -> (i32, i32) {
    %c0_i32 = arith.constant 0 : i32
    %c0_i32_0 = arith.constant 0 : i32
    %c0_i32_1 = arith.constant 0 : i32
    return %c0_i32, %c0_i32_0 : i32, i32
  }
  func.func @transform_7(%arg0: i32) -> (i32, i32) {
    %c0_i32 = arith.constant 0 : i32
    %c0_i32_0 = arith.constant 0 : i32
    %c0_i32_1 = arith.constant 0 : i32
    return %c0_i32, %c0_i32_0 : i32, i32
  }
  func.func @transform_8(%arg0: i32) -> (i32, i32) {
    %c0_i32 = arith.constant 0 : i32
    %c0_i32_0 = arith.constant 0 : i32
    %c0_i32_1 = arith.constant 0 : i32
    return %c0_i32, %c0_i32_0 : i32, i32
  }
  func.func @transform_9(%arg0: i32) -> (i32, i32) {
    %c0_i32 = arith.constant 0 : i32
    %c0_i32_0 = arith.constant 0 : i32
    %c0_i32_1 = arith.constant 0 : i32
    return %c0_i32, %c0_i32_0 : i32, i32
  }
  func.func @transform_10(%arg0: i32) -> (i32, i32) {
    %c0_i32 = arith.constant 0 : i32
    %c0_i32_0 = arith.constant 0 : i32
    %c0_i32_1 = arith.constant 0 : i32
    return %c0_i32, %c0_i32_0 : i32, i32
  }
  func.func @transform_11(%arg0: i32) -> (i32, i32) {
    %c0_i32 = arith.constant 0 : i32
    %c0_i32_0 = arith.constant 0 : i32
    %c0_i32_1 = arith.constant 0 : i32
    return %c0_i32, %c0_i32_0 : i32, i32
  }
  func.func @transform_12(%arg0: i32) -> (i32, i32) {
    %c0_i32 = arith.constant 0 : i32
    %c0_i32_0 = arith.constant 0 : i32
    %c0_i32_1 = arith.constant 0 : i32
    return %c0_i32, %c0_i32_0 : i32, i32
  }
  func.func @transform_13(%arg0: i32) -> (i32, i32) {
    %c0_i32 = arith.constant 0 : i32
    %c0_i32_0 = arith.constant 0 : i32
    %c0_i32_1 = arith.constant 0 : i32
    return %c0_i32, %c0_i32_0 : i32, i32
  }
  func.func @transform_14(%arg0: i32) -> (i32, i32) {
    %c0_i32 = arith.constant 0 : i32
    %c0_i32_0 = arith.constant 0 : i32
    %c0_i32_1 = arith.constant 0 : i32
    return %c0_i32, %c0_i32_0 : i32, i32
  }
  func.func @transform_15(%arg0: i32) -> (i32, i32) {
    %c0_i32 = arith.constant 0 : i32
    %c0_i32_0 = arith.constant 0 : i32
    %c0_i32_1 = arith.constant 0 : i32
    return %c0_i32, %c0_i32_0 : i32, i32
  }
  func.func @transform_16(%arg0: i32) -> (i32, i32) {
    %c0_i32 = arith.constant 0 : i32
    %c0_i32_0 = arith.constant 0 : i32
    return %arg0, %c0_i32 : i32, i32
  }
}

</mosaic_0001>

<llo_original>
// kernel: face_classifier_forward.1
$region0: #{face_classifier_forward.1}
  #allocation0 [shape = 'u32[]', space=smem, size = 0x4, offset = 0x4, fixed_abs, tag = 'smem constant byte address 0x4 - core index']
  #allocation1 [shape = 'u32[72,128]{1,0:T(1,128)}', space=vmem, size = 0x9000, scoped, tag = 'internal scratch']
  #allocation2 [shape = 'f32[1,1]{1,0:T(1,128)S(6)}', space=smem, size = 0x200, scoped, tag = 'scoped memory for face_classifier_forward.1']
  #allocation3 [shape = 'f32[1,1]{1,0:T(1,128)S(6)}', space=smem, size = 0x200, scoped, tag = 'scoped memory for face_classifier_forward.1']
  %s0 = inlined_call_operand.vmem [shape: bf16[32,2048], index: 0, kind: input, shape index: {}]
  %s1 = inlined_call_operand.vmem [shape: bf16[8,32], index: 1, kind: input, shape index: {}]
  %s2 = inlined_call_operand.hbm [shape: bf16[2048,512], index: 2, kind: input, shape index: {}]
  %s3 = inlined_call_operand.vmem [shape: f32[1,512], index: 3, kind: input, shape index: {}]
  %s4 = inlined_call_operand.vmem [shape: f32[1,512], index: 4, kind: input, shape index: {}]
  %s5 = inlined_call_operand.<no memory space> [shape: f32[1,1], index: 5, kind: input, shape index: {}]
  %s6 = inlined_call_operand.vmem [shape: bf16[2048,1024], index: 6, kind: input, shape index: {}]
  %s7 = inlined_call_operand.vmem [shape: f32[1,1024], index: 7, kind: input, shape index: {}]
  %s8 = inlined_call_operand.vmem [shape: f32[1,1024], index: 8, kind: input, shape index: {}]
  %s9 = inlined_call_operand.vmem [shape: f32[1,1024], index: 9, kind: input, shape index: {}]
  %s10 = inlined_call_operand.vmem [shape: bf16[1024,256], index: 10, kind: input, shape index: {}]
  %s11 = inlined_call_operand.vmem [shape: f32[1,256], index: 11, kind: input, shape index: {}]
  %s12 = inlined_call_operand.vmem [shape: f32[1,256], index: 12, kind: input, shape index: {}]
  %s13 = inlined_call_operand.vmem [shape: f32[1,256], index: 13, kind: input, shape index: {}]
  %s14 = inlined_call_operand.vmem [shape: f32[1,256], index: 14, kind: input, shape index: {}]
  %s15 = inlined_call_operand.<no memory space> [shape: f32[1,1], index: 15, kind: input, shape index: {}]
  %s16 = inlined_call_operand.vmem [shape: f32[1,8], index: 16, kind: output, shape index: {}]
  %s17 = sld [smem:[#allocation0]]
  $region78: #{face_classifier_forward.1} parent=0
    _
  %s19 = ssub.s32 1, %s17
  %s20 = scalar_select 0, %s19, %s17
  %21 = sst [smem:[#allocation2]] %s5
  %22 = sst [smem:[#allocation3]] %s15
  $region1: #{face_classifier_forward.1} parent=0
    #allocation4 [shape = 'u8[2097152]{0}', space=vmem, size = 0x200000, scoped, tag = 'input window, operand 2, single buffered']
    #allocation5 [shape = 's32[1]{0}', space=sflag, size = 0x4, scoped, tag = 'scoped memory for face_classifier_forward.1']
    %23 = vsyncpa [#allocation5], 0
    // Predicated region
    $region2: #{face_classifier_forward.1} parent=1 // pred_check
      _
    $region3: #{face_classifier_forward.1} parent=1 // pred_check_branch
      %25 = sbr.rel (0) target = $region5
    $region4: #{face_classifier_forward.1} parent=1 // pred_region
      _
    $region5: #{face_classifier_forward.1} parent=1 // pred_fallthru
      _
    // Predicated region
    $region6: #{face_classifier_forward.1} parent=1 // pred_check
      _
    $region7: #{face_classifier_forward.1} parent=1 // pred_check_branch
      %27 = sbr.rel (0) target = $region9
    $region8: #{face_classifier_forward.1} parent=1 // pred_region
      _
    $region9: #{face_classifier_forward.1} parent=1 // pred_fallthru
      _
    // Predicated region
    $region10: #{face_classifier_forward.1} parent=1 // pred_check
      _
    $region11: #{face_classifier_forward.1} parent=1 // pred_check_branch
      %29 = sbr.rel (0) target = $region13
    $region12: #{face_classifier_forward.1} parent=1 // pred_region
      %31 = vsyncadd [#allocation5], 0
      %s32 = sshll.u32 %s2, 4
      %s33 = int_to_ptr.hbm [resolvable:$true] %s32
      %s34 = sshll.u32 [#allocation4], 4
      %s35 = int_to_ptr.vmem [resolvable:$true] %s34
      %40 = dma.hbm_to_vmem [thread:$0]  %s33, 65536, %s35, [#allocation5], 256, 256, 16
    $region13: #{face_classifier_forward.1} parent=1 // pred_fallthru
      _
    // Predicated region
    $region14: #{face_classifier_forward.1} parent=1 // pred_check
      _
    $region15: #{face_classifier_forward.1} parent=1 // pred_check_branch
      %42 = sbr.rel (0) target = $region17
    $region16: #{face_classifier_forward.1} parent=1 // pred_region
      _
    $region17: #{face_classifier_forward.1} parent=1 // pred_fallthru
      _
    // Predicated region
    $region18: #{face_classifier_forward.1} parent=1 // pred_check
      _
    $region19: #{face_classifier_forward.1} parent=1 // pred_check_branch
      %44 = sbr.rel (0) target = $region21
    $region20: #{face_classifier_forward.1} parent=1 // pred_region
      _
    $region21: #{face_classifier_forward.1} parent=1 // pred_fallthru
      _
    // Predicated region
    $region22: #{face_classifier_forward.1} parent=1 // pred_check
      _
    $region23: #{face_classifier_forward.1} parent=1 // pred_check_branch
      %46 = sbr.rel (0) target = $region25
    $region24: #{face_classifier_forward.1} parent=1 // pred_region
      _
    $region25: #{face_classifier_forward.1} parent=1 // pred_fallthru
      _
    // Predicated region
    $region26: #{face_classifier_forward.1} parent=1 // pred_check
      _
    $region27: #{face_classifier_forward.1} parent=1 // pred_check_branch
      %48 = sbr.rel (0) target = $region29
    $region28: #{face_classifier_forward.1} parent=1 // pred_region
      _
    $region29: #{face_classifier_forward.1} parent=1 // pred_fallthru
      _
    // Predicated region
    $region30: #{face_classifier_forward.1} parent=1 // pred_check
      _
    $region31: #{face_classifier_forward.1} parent=1 // pred_check_branch
      %50 = sbr.rel (0) target = $region33
    $region32: #{face_classifier_forward.1} parent=1 // pred_region
      _
    $region33: #{face_classifier_forward.1} parent=1 // pred_fallthru
      _
    // Predicated region
    $region34: #{face_classifier_forward.1} parent=1 // pred_check
      _
    $region35: #{face_classifier_forward.1} parent=1 // pred_check_branch
      %52 = sbr.rel (0) target = $region37
    $region36: #{face_classifier_forward.1} parent=1 // pred_region
      _
    $region37: #{face_classifier_forward.1} parent=1 // pred_fallthru
      _
    // Predicated region
    $region38: #{face_classifier_forward.1} parent=1 // pred_check
      _
    $region39: #{face_classifier_forward.1} parent=1 // pred_check_branch
      %54 = sbr.rel (0) target = $region41
    $region40: #{face_classifier_forward.1} parent=1 // pred_region
      _
    $region41: #{face_classifier_forward.1} parent=1 // pred_fallthru
      _
    // Predicated region
    $region42: #{face_classifier_forward.1} parent=1 // pred_check
      _
    $region43: #{face_classifier_forward.1} parent=1 // pred_check_branch
      %56 = sbr.rel (0) target = $region45
    $region44: #{face_classifier_forward.1} parent=1 // pred_region
      _
    $region45: #{face_classifier_forward.1} parent=1 // pred_fallthru
      _
    // Predicated region
    $region46: #{face_classifier_forward.1} parent=1 // pred_check
      _
    $region47: #{face_classifier_forward.1} parent=1 // pred_check_branch
      %58 = sbr.rel (0) target = $region49
    $region48: #{face_classifier_forward.1} parent=1 // pred_region
      _
    $region49: #{face_classifier_forward.1} parent=1 // pred_fallthru
      _
    // Predicated region
    $region50: #{face_classifier_forward.1} parent=1 // pred_check
      _
    $region51: #{face_classifier_forward.1} parent=1 // pred_check_branch
      %60 = sbr.rel (0) target = $region53
    $region52: #{face_classifier_forward.1} parent=1 // pred_region
      _
    $region53: #{face_classifier_forward.1} parent=1 // pred_fallthru
      _
    // Predicated region
    $region54: #{face_classifier_forward.1} parent=1 // pred_check
      _
    $region55: #{face_classifier_forward.1} parent=1 // pred_check_branch
      %62 = sbr.rel (0) target = $region57
    $region56: #{face_classifier_forward.1} parent=1 // pred_region
      _
    $region57: #{face_classifier_forward.1} parent=1 // pred_fallthru
      _
    // Predicated region
    $region58: #{face_classifier_forward.1} parent=1 // pred_check
      _
    $region59: #{face_classifier_forward.1} parent=1 // pred_check_branch
      %64 = sbr.rel (0) target = $region61
    $region60: #{face_classifier_forward.1} parent=1 // pred_region
      _
    $region61: #{face_classifier_forward.1} parent=1 // pred_fallthru
      _
    // Predicated region
    $region62: #{face_classifier_forward.1} parent=1 // pred_check
      _
    $region63: #{face_classifier_forward.1} parent=1 // pred_check_branch
      %66 = sbr.rel (0) target = $region65
    $region64: #{face_classifier_forward.1} parent=1 // pred_region
      _
    $region65: #{face_classifier_forward.1} parent=1 // pred_fallthru
      _
    // Predicated region
    $region66: #{face_classifier_forward.1} parent=1 // pred_check
      _
    $region67: #{face_classifier_forward.1} parent=1 // pred_check_branch
      %68 = sbr.rel (0) target = $region69
    $region68: #{face_classifier_forward.1} parent=1 // pred_region
      %70 = dma.done [#allocation5], 65536
    $region69: #{face_classifier_forward.1} parent=1 // pred_fallthru
      _
    %v72 = vld [vmem:[%s0] sm:$0xff]
    %v73 = vld [vmem:[%s0 + $0x8] sm:$0xff]
    %v74 = vld [vmem:[%s0 + $0x10] sm:$0xff]
    %v75 = vld [vmem:[%s0 + $0x18] sm:$0xff]
    %v76 = vld [vmem:[%s0 + $0x20] sm:$0xff]
    %v77 = vld [vmem:[%s0 + $0x28] sm:$0xff]
    %v78 = vld [vmem:[%s0 + $0x30] sm:$0xff]
    %v79 = vld [vmem:[%s0 + $0x38] sm:$0xff]
    %v80 = vld [vmem:[%s0 + $0x40] sm:$0xff]
    %v81 = vld [vmem:[%s0 + $0x48] sm:$0xff]
    %v82 = vld [vmem:[%s0 + $0x50] sm:$0xff]
    %v83 = vld [vmem:[%s0 + $0x58] sm:$0xff]
    %v84 = vld [vmem:[%s0 + $0x60] sm:$0xff]
    %v85 = vld [vmem:[%s0 + $0x68] sm:$0xff]
    %v86 = vld [vmem:[%s0 + $0x70] sm:$0xff]
    %v87 = vld [vmem:[%s0 + $0x78] sm:$0xff]
    %v88 = vld [vmem:[%s0 + $0x80] sm:$0xff]
    %v89 = vld [vmem:[%s0 + $0x88] sm:$0xff]
    %v90 = vld [vmem:[%s0 + $0x90] sm:$0xff]
    %v91 = vld [vmem:[%s0 + $0x98] sm:$0xff]
    %v92 = vld [vmem:[%s0 + $0xa0] sm:$0xff]
    %v93 = vld [vmem:[%s0 + $0xa8] sm:$0xff]
    %v94 = vld [vmem:[%s0 + $0xb0] sm:$0xff]
    %v95 = vld [vmem:[%s0 + $0xb8] sm:$0xff]
    %v96 = vld [vmem:[%s0 + $0xc0] sm:$0xff]
    %v97 = vld [vmem:[%s0 + $0xc8] sm:$0xff]
    %v98 = vld [vmem:[%s0 + $0xd0] sm:$0xff]
    %v99 = vld [vmem:[%s0 + $0xd8] sm:$0xff]
    %v100 = vld [vmem:[%s0 + $0xe0] sm:$0xff]
    %v101 = vld [vmem:[%s0 + $0xe8] sm:$0xff]
    %v102 = vld [vmem:[%s0 + $0xf0] sm:$0xff]
    %v103 = vld [vmem:[%s0 + $0xf8] sm:$0xff]
    %v104 = vld [vmem:[#allocation4] sm:$0xff]
    %v105 = vld [vmem:[#allocation4 + $0x8] sm:$0xff]
    %v106 = vld [vmem:[#allocation4 + $0x10] sm:$0xff]
    %v107 = vld [vmem:[#allocation4 + $0x18] sm:$0xff]
    %v108 = vld [vmem:[#allocation4 + $0x20] sm:$0xff]
    %v109 = vld [vmem:[#allocation4 + $0x28] sm:$0xff]
    %v110 = vld [vmem:[#allocation4 + $0x30] sm:$0xff]
    %v111 = vld [vmem:[#allocation4 + $0x38] sm:$0xff]
    %v112 = vld [vmem:[#allocation4 + $0x40] sm:$0xff]
    %v113 = vld [vmem:[#allocation4 + $0x48] sm:$0xff]
    %v114 = vld [vmem:[#allocation4 + $0x50] sm:$0xff]
    %v115 = vld [vmem:[#allocation4 + $0x58] sm:$0xff]
    %v116 = vld [vmem:[#allocation4 + $0x60] sm:$0xff]
    %v117 = vld [vmem:[#allocation4 + $0x68] sm:$0xff]
    %v118 = vld [vmem:[#allocation4 + $0x70] sm:$0xff]
    %v119 = vld [vmem:[#allocation4 + $0x78] sm:$0xff]
    %v120 = vld [vmem:[#allocation4 + $0x80] sm:$0xff]
    %v121 = vld [vmem:[#allocation4 + $0x88] sm:$0xff]
    %v122 = vld [vmem:[#allocation4 + $0x90] sm:$0xff]
    %v123 = vld [vmem:[#allocation4 + $0x98] sm:$0xff]
    %v124 = vld [vmem:[#allocation4 + $0xa0] sm:$0xff]
    %v125 = vld [vmem:[#allocation4 + $0xa8] sm:$0xff]
    %v126 = vld [vmem:[#allocation4 + $0xb0] sm:$0xff]
    %v127 = vld [vmem:[#allocation4 + $0xb8] sm:$0xff]
    %v128 = vld [vmem:[#allocation4 + $0xc0] sm:$0xff]
    %v129 = vld [vmem:[#allocation4 + $0xc8] sm:$0xff]
    %v130 = vld [vmem:[#allocation4 + $0xd0] sm:$0xff]
    %v131 = vld [vmem:[#allocation4 + $0xd8] sm:$0xff]
    %v132 = vld [vmem:[#allocation4 + $0xe0] sm:$0xff]
    %v133 = vld [vmem:[#allocation4 + $0xe8] sm:$0xff]
    %v134 = vld [vmem:[#allocation4 + $0xf0] sm:$0xff]
    %v135 = vld [vmem:[#allocation4 + $0xf8] sm:$0xff]
    %v136 = vld [vmem:[#allocation4 + $0x100] sm:$0xff]
    %v137 = vld [vmem:[#allocation4 + $0x108] sm:$0xff]
    %v138 = vld [vmem:[#allocation4 + $0x110] sm:$0xff]
    %v139 = vld [vmem:[#allocation4 + $0x118] sm:$0xff]
    %v140 = vld [vmem:[#allocation4 + $0x120] sm:$0xff]
    %v141 = vld [vmem:[#allocation4 + $0x128] sm:$0xff]
    %v142 = vld [vmem:[#allocation4 + $0x130] sm:$0xff]
    %v143 = vld [vmem:[#allocation4 + $0x138] sm:$0xff]
    %v144 = vld [vmem:[#allocation4 + $0x140] sm:$0xff]
    %v145 = vld [vmem:[#allocation4 + $0x148] sm:$0xff]
    %v146 = vld [vmem:[#allocation4 + $0x150] sm:$0xff]
    %v147 = vld [vmem:[#allocation4 + $0x158] sm:$0xff]
    %v148 = vld [vmem:[#allocation4 + $0x160] sm:$0xff]
    %v149 = vld [vmem:[#allocation4 + $0x168] sm:$0xff]
    %v150 = vld [vmem:[#allocation4 + $0x170] sm:$0xff]
    %v151 = vld [vmem:[#allocation4 + $0x178] sm:$0xff]
    %v152 = vld [vmem:[#allocation4 + $0x180] sm:$0xff]
    %v153 = vld [vmem:[#allocation4 + $0x188] sm:$0xff]
    %v154 = vld [vmem:[#allocation4 + $0x190] sm:$0xff]
    %v155 = vld [vmem:[#allocation4 + $0x198] sm:$0xff]
    %v156 = vld [vmem:[#allocation4 + $0x1a0] sm:$0xff]
    %v157 = vld [vmem:[#allocation4 + $0x1a8] sm:$0xff]
    %v158 = vld [vmem:[#allocation4 + $0x1b0] sm:$0xff]
    %v159 = vld [vmem:[#allocation4 + $0x1b8] sm:$0xff]
    %v160 = vld [vmem:[#allocation4 + $0x1c0] sm:$0xff]
    %v161 = vld [vmem:[#allocation4 + $0x1c8] sm:$0xff]
    %v162 = vld [vmem:[#allocation4 + $0x1d0] sm:$0xff]
    %v163 = vld [vmem:[#allocation4 + $0x1d8] sm:$0xff]
    %v164 = vld [vmem:[#allocation4 + $0x1e0] sm:$0xff]
    %v165 = vld [vmem:[#allocation4 + $0x1e8] sm:$0xff]
    %v166 = vld [vmem:[#allocation4 + $0x1f0] sm:$0xff]
    %v167 = vld [vmem:[#allocation4 + $0x1f8] sm:$0xff]
    %v168 = vld [vmem:[#allocation4 + $0x200] sm:$0xff]
    %v169 = vld [vmem:[#allocation4 + $0x208] sm:$0xff]
    %v170 = vld [vmem:[#allocation4 + $0x210] sm:$0xff]
    %v171 = vld [vmem:[#allocation4 + $0x218] sm:$0xff]
    %v172 = vld [vmem:[#allocation4 + $0x220] sm:$0xff]
    %v173 = vld [vmem:[#allocation4 + $0x228] sm:$0xff]
    %v174 = vld [vmem:[#allocation4 + $0x230] sm:$0xff]
    %v175 = vld [vmem:[#allocation4 + $0x238] sm:$0xff]
    %v176 = vld [vmem:[#allocation4 + $0x240] sm:$0xff]
    %v177 = vld [vmem:[#allocation4 + $0x248] sm:$0xff]
    %v178 = vld [vmem:[#allocation4 + $0x250] sm:$0xff]
    %v179 = vld [vmem:[#allocation4 + $0x258] sm:$0xff]
    %v180 = vld [vmem:[#allocation4 + $0x260] sm:$0xff]
    %v181 = vld [vmem:[#allocation4 + $0x268] sm:$0xff]
    %v182 = vld [vmem:[#allocation4 + $0x270] sm:$0xff]
    %v183 = vld [vmem:[#allocation4 + $0x278] sm:$0xff]
    %v184 = vld [vmem:[#allocation4 + $0x280] sm:$0xff]
    %v185 = vld [vmem:[#allocation4 + $0x288] sm:$0xff]
    %v186 = vld [vmem:[#allocation4 + $0x290] sm:$0xff]
    %v187 = vld [vmem:[#allocation4 + $0x298] sm:$0xff]
    %v188 = vld [vmem:[#allocation4 + $0x2a0] sm:$0xff]
    %v189 = vld [vmem:[#allocation4 + $0x2a8] sm:$0xff]
    %v190 = vld [vmem:[#allocation4 + $0x2b0] sm:$0xff]
    %v191 = vld [vmem:[#allocation4 + $0x2b8] sm:$0xff]
    %v192 = vld [vmem:[#allocation4 + $0x2c0] sm:$0xff]
    %v193 = vld [vmem:[#allocation4 + $0x2c8] sm:$0xff]
    %v194 = vld [vmem:[#allocation4 + $0x2d0] sm:$0xff]
    %v195 = vld [vmem:[#allocation4 + $0x2d8] sm:$0xff]
    %v196 = vld [vmem:[#allocation4 + $0x2e0] sm:$0xff]
    %v197 = vld [vmem:[#allocation4 + $0x2e8] sm:$0xff]
    %v198 = vld [vmem:[#allocation4 + $0x2f0] sm:$0xff]
    %v199 = vld [vmem:[#allocation4 + $0x2f8] sm:$0xff]
    %v200 = vld [vmem:[#allocation4 + $0x300] sm:$0xff]
    %v201 = vld [vmem:[#allocation4 + $0x308] sm:$0xff]
    %v202 = vld [vmem:[#allocation4 + $0x310] sm:$0xff]
    %v203 = vld [vmem:[#allocation4 + $0x318] sm:$0xff]
    %v204 = vld [vmem:[#allocation4 + $0x320] sm:$0xff]
    %v205 = vld [vmem:[#allocation4 + $0x328] sm:$0xff]
    %v206 = vld [vmem:[#allocation4 + $0x330] sm:$0xff]
    %v207 = vld [vmem:[#allocation4 + $0x338] sm:$0xff]
    %v208 = vld [vmem:[#allocation4 + $0x340] sm:$0xff]
    %v209 = vld [vmem:[#allocation4 + $0x348] sm:$0xff]
    %v210 = vld [vmem:[#allocation4 + $0x350] sm:$0xff]
    %v211 = vld [vmem:[#allocation4 + $0x358] sm:$0xff]
    %v212 = vld [vmem:[#allocation4 + $0x360] sm:$0xff]
    %v213 = vld [vmem:[#allocation4 + $0x368] sm:$0xff]
    %v214 = vld [vmem:[#allocation4 + $0x370] sm:$0xff]
    %v215 = vld [vmem:[#allocation4 + $0x378] sm:$0xff]
    %v216 = vld [vmem:[#allocation4 + $0x380] sm:$0xff]
    %v217 = vld [vmem:[#allocation4 + $0x388] sm:$0xff]
    %v218 = vld [vmem:[#allocation4 + $0x390] sm:$0xff]
    %v219 = vld [vmem:[#allocation4 + $0x398] sm:$0xff]
    %v220 = vld [vmem:[#allocation4 + $0x3a0] sm:$0xff]
    %v221 = vld [vmem:[#allocation4 + $0x3a8] sm:$0xff]
    %v222 = vld [vmem:[#allocation4 + $0x3b0] sm:$0xff]
    %v223 = vld [vmem:[#allocation4 + $0x3b8] sm:$0xff]
    %v224 = vld [vmem:[#allocation4 + $0x3c0] sm:$0xff]
    %v225 = vld [vmem:[#allocation4 + $0x3c8] sm:$0xff]
    %v226 = vld [vmem:[#allocation4 + $0x3d0] sm:$0xff]
    %v227 = vld [vmem:[#allocation4 + $0x3d8] sm:$0xff]
    %v228 = vld [vmem:[#allocation4 + $0x3e0] sm:$0xff]
    %v229 = vld [vmem:[#allocation4 + $0x3e8] sm:$0xff]
    %v230 = vld [vmem:[#allocation4 + $0x3f0] sm:$0xff]
    %v231 = vld [vmem:[#allocation4 + $0x3f8] sm:$0xff]
    %v232 = vld [vmem:[#allocation4 + $0x400] sm:$0xff]
    %v233 = vld [vmem:[#allocation4 + $0x408] sm:$0xff]
    %v234 = vld [vmem:[#allocation4 + $0x410] sm:$0xff]
    %v235 = vld [vmem:[#allocation4 + $0x418] sm:$0xff]
    %v236 = vld [vmem:[#allocation4 + $0x420] sm:$0xff]
    %v237 = vld [vmem:[#allocation4 + $0x428] sm:$0xff]
    %v238 = vld [vmem:[#allocation4 + $0x430] sm:$0xff]
    %v239 = vld [vmem:[#allocation4 + $0x438] sm:$0xff]
    %v240 = vld [vmem:[#allocation4 + $0x440] sm:$0xff]
    %v241 = vld [vmem:[#allocation4 + $0x448] sm:$0xff]
    %v242 = vld [vmem:[#allocation4 + $0x450] sm:$0xff]
    %v243 = vld [vmem:[#allocation4 + $0x458] sm:$0xff]
    %v244 = vld [vmem:[#allocation4 + $0x460] sm:$0xff]
    %v245 = vld [vmem:[#allocation4 + $0x468] sm:$0xff]
    %v246 = vld [vmem:[#allocation4 + $0x470] sm:$0xff]
    %v247 = vld [vmem:[#allocation4 + $0x478] sm:$0xff]
    %v248 = vld [vmem:[#allocation4 + $0x480] sm:$0xff]
    %v249 = vld [vmem:[#allocation4 + $0x488] sm:$0xff]
    %v250 = vld [vmem:[#allocation4 + $0x490] sm:$0xff]
    %v251 = vld [vmem:[#allocation4 + $0x498] sm:$0xff]
    %v252 = vld [vmem:[#allocation4 + $0x4a0] sm:$0xff]
    %v253 = vld [vmem:[#allocation4 + $0x4a8] sm:$0xff]
    %v254 = vld [vmem:[#allocation4 + $0x4b0] sm:$0xff]
    %v255 = vld [vmem:[#allocation4 + $0x4b8] sm:$0xff]
    %v256 = vld [vmem:[#allocation4 + $0x4c0] sm:$0xff]
    %v257 = vld [vmem:[#allocation4 + $0x4c8] sm:$0xff]
    %v258 = vld [vmem:[#allocation4 + $0x4d0] sm:$0xff]
    %v259 = vld [vmem:[#allocation4 + $0x4d8] sm:$0xff]
    %v260 = vld [vmem:[#allocation4 + $0x4e0] sm:$0xff]
    %v261 = vld [vmem:[#allocation4 + $0x4e8] sm:$0xff]
    %v262 = vld [vmem:[#allocation4 + $0x4f0] sm:$0xff]
    %v263 = vld [vmem:[#allocation4 + $0x4f8] sm:$0xff]
    %v264 = vld [vmem:[#allocation4 + $0x500] sm:$0xff]
    %v265 = vld [vmem:[#allocation4 + $0x508] sm:$0xff]
    %v266 = vld [vmem:[#allocation4 + $0x510] sm:$0xff]
    %v267 = vld [vmem:[#allocation4 + $0x518] sm:$0xff]
    %v268 = vld [vmem:[#allocation4 + $0x520] sm:$0xff]
    %v269 = vld [vmem:[#allocation4 + $0x528] sm:$0xff]
    %v270 = vld [vmem:[#allocation4 + $0x530] sm:$0xff]
    %v271 = vld [vmem:[#allocation4 + $0x538] sm:$0xff]
    %v272 = vld [vmem:[#allocation4 + $0x540] sm:$0xff]
    %v273 = vld [vmem:[#allocation4 + $0x548] sm:$0xff]
    %v274 = vld [vmem:[#allocation4 + $0x550] sm:$0xff]
    %v275 = vld [vmem:[#allocation4 + $0x558] sm:$0xff]
    %v276 = vld [vmem:[#allocation4 + $0x560] sm:$0xff]
    %v277 = vld [vmem:[#allocation4 + $0x568] sm:$0xff]
    %v278 = vld [vmem:[#allocation4 + $0x570] sm:$0xff]
    %v279 = vld [vmem:[#allocation4 + $0x578] sm:$0xff]
    %v280 = vld [vmem:[#allocation4 + $0x580] sm:$0xff]
    %v281 = vld [vmem:[#allocation4 + $0x588] sm:$0xff]
    %v282 = vld [vmem:[#allocation4 + $0x590] sm:$0xff]
    %v283 = vld [vmem:[#allocation4 + $0x598] sm:$0xff]
    %v284 = vld [vmem:[#allocation4 + $0x5a0] sm:$0xff]
    %v285 = vld [vmem:[#allocation4 + $0x5a8] sm:$0xff]
    %v286 = vld [vmem:[#allocation4 + $0x5b0] sm:$0xff]
    %v287 = vld [vmem:[#allocation4 + $0x5b8] sm:$0xff]
    %v288 = vld [vmem:[#allocation4 + $0x5c0] sm:$0xff]
    %v289 = vld [vmem:[#allocation4 + $0x5c8] sm:$0xff]
    %v290 = vld [vmem:[#allocation4 + $0x5d0] sm:$0xff]
    %v291 = vld [vmem:[#allocation4 + $0x5d8] sm:$0xff]
    %v292 = vld [vmem:[#allocation4 + $0x5e0] sm:$0xff]
    %v293 = vld [vmem:[#allocation4 + $0x5e8] sm:$0xff]
    %v294 = vld [vmem:[#allocation4 + $0x5f0] sm:$0xff]
    %v295 = vld [vmem:[#allocation4 + $0x5f8] sm:$0xff]
    %v296 = vld [vmem:[#allocation4 + $0x600] sm:$0xff]
    %v297 = vld [vmem:[#allocation4 + $0x608] sm:$0xff]
    %v298 = vld [vmem:[#allocation4 + $0x610] sm:$0xff]
    %v299 = vld [vmem:[#allocation4 + $0x618] sm:$0xff]
    %v300 = vld [vmem:[#allocation4 + $0x620] sm:$0xff]
    %v301 = vld [vmem:[#allocation4 + $0x628] sm:$0xff]
    %v302 = vld [vmem:[#allocation4 + $0x630] sm:$0xff]
    %v303 = vld [vmem:[#allocation4 + $0x638] sm:$0xff]
    %v304 = vld [vmem:[#allocation4 + $0x640] sm:$0xff]
    %v305 = vld [vmem:[#allocation4 + $0x648] sm:$0xff]
    %v306 = vld [vmem:[#allocation4 + $0x650] sm:$0xff]
    %v307 = vld [vmem:[#allocation4 + $0x658] sm:$0xff]
    %v308 = vld [vmem:[#allocation4 + $0x660] sm:$0xff]
    %v309 = vld [vmem:[#allocation4 + $0x668] sm:$0xff]
    %v310 = vld [vmem:[#allocation4 + $0x670] sm:$0xff]
    %v311 = vld [vmem:[#allocation4 + $0x678] sm:$0xff]
    %v312 = vld [vmem:[#allocation4 + $0x680] sm:$0xff]
    %v313 = vld [vmem:[#allocation4 + $0x688] sm:$0xff]
    %v314 = vld [vmem:[#allocation4 + $0x690] sm:$0xff]
    %v315 = vld [vmem:[#allocation4 + $0x698] sm:$0xff]
    %v316 = vld [vmem:[#allocation4 + $0x6a0] sm:$0xff]
    %v317 = vld [vmem:[#allocation4 + $0x6a8] sm:$0xff]
    %v318 = vld [vmem:[#allocation4 + $0x6b0] sm:$0xff]
    %v319 = vld [vmem:[#allocation4 + $0x6b8] sm:$0xff]
    %v320 = vld [vmem:[#allocation4 + $0x6c0] sm:$0xff]
    %v321 = vld [vmem:[#allocation4 + $0x6c8] sm:$0xff]
    %v322 = vld [vmem:[#allocation4 + $0x6d0] sm:$0xff]
    %v323 = vld [vmem:[#allocation4 + $0x6d8] sm:$0xff]
    %v324 = vld [vmem:[#allocation4 + $0x6e0] sm:$0xff]
    %v325 = vld [vmem:[#allocation4 + $0x6e8] sm:$0xff]
    %v326 = vld [vmem:[#allocation4 + $0x6f0] sm:$0xff]
    %v327 = vld [vmem:[#allocation4 + $0x6f8] sm:$0xff]
    %v328 = vld [vmem:[#allocation4 + $0x700] sm:$0xff]
    %v329 = vld [vmem:[#allocation4 + $0x708] sm:$0xff]
    %v330 = vld [vmem:[#allocation4 + $0x710] sm:$0xff]
    %v331 = vld [vmem:[#allocation4 + $0x718] sm:$0xff]
    %v332 = vld [vmem:[#allocation4 + $0x720] sm:$0xff]
    %v333 = vld [vmem:[#allocation4 + $0x728] sm:$0xff]
    %v334 = vld [vmem:[#allocation4 + $0x730] sm:$0xff]
    %v335 = vld [vmem:[#allocation4 + $0x738] sm:$0xff]
    %v336 = vld [vmem:[#allocation4 + $0x740] sm:$0xff]
    %v337 = vld [vmem:[#allocation4 + $0x748] sm:$0xff]
    %v338 = vld [vmem:[#allocation4 + $0x750] sm:$0xff]
    %v339 = vld [vmem:[#allocation4 + $0x758] sm:$0xff]
    %v340 = vld [vmem:[#allocation4 + $0x760] sm:$0xff]
    %v341 = vld [vmem:[#allocation4 + $0x768] sm:$0xff]
    %v342 = vld [vmem:[#allocation4 + $0x770] sm:$0xff]
    %v343 = vld [vmem:[#allocation4 + $0x778] sm:$0xff]
    %v344 = vld [vmem:[#allocation4 + $0x780] sm:$0xff]
    %v345 = vld [vmem:[#allocation4 + $0x788] sm:$0xff]
    %v346 = vld [vmem:[#allocation4 + $0x790] sm:$0xff]
    %v347 = vld [vmem:[#allocation4 + $0x798] sm:$0xff]
    %v348 = vld [vmem:[#allocation4 + $0x7a0] sm:$0xff]
    %v349 = vld [vmem:[#allocation4 + $0x7a8] sm:$0xff]
    %v350 = vld [vmem:[#allocation4 + $0x7b0] sm:$0xff]
    %v351 = vld [vmem:[#allocation4 + $0x7b8] sm:$0xff]
    %v352 = vld [vmem:[#allocation4 + $0x7c0] sm:$0xff]
    %v353 = vld [vmem:[#allocation4 + $0x7c8] sm:$0xff]
    %v354 = vld [vmem:[#allocation4 + $0x7d0] sm:$0xff]
    %v355 = vld [vmem:[#allocation4 + $0x7d8] sm:$0xff]
    %v356 = vld [vmem:[#allocation4 + $0x7e0] sm:$0xff]
    %v357 = vld [vmem:[#allocation4 + $0x7e8] sm:$0xff]
    %v358 = vld [vmem:[#allocation4 + $0x7f0] sm:$0xff]
    %v359 = vld [vmem:[#allocation4 + $0x7f8] sm:$0xff]
    %v360 = vld [vmem:[#allocation4 + $0x800] sm:$0xff]
    %v361 = vld [vmem:[#allocation4 + $0x808] sm:$0xff]
    %v362 = vld [vmem:[#allocation4 + $0x810] sm:$0xff]
    %v363 = vld [vmem:[#allocation4 + $0x818] sm:$0xff]
    %v364 = vld [vmem:[#allocation4 + $0x820] sm:$0xff]
    %v365 = vld [vmem:[#allocation4 + $0x828] sm:$0xff]
    %v366 = vld [vmem:[#allocation4 + $0x830] sm:$0xff]
    %v367 = vld [vmem:[#allocation4 + $0x838] sm:$0xff]
    %v368 = vld [vmem:[#allocation4 + $0x840] sm:$0xff]
    %v369 = vld [vmem:[#allocation4 + $0x848] sm:$0xff]
    %v370 = vld [vmem:[#allocation4 + $0x850] sm:$0xff]
    %v371 = vld [vmem:[#allocation4 + $0x858] sm:$0xff]
    %v372 = vld [vmem:[#allocation4 + $0x860] sm:$0xff]
    %v373 = vld [vmem:[#allocation4 + $0x868] sm:$0xff]
    %v374 = vld [vmem:[#allocation4 + $0x870] sm:$0xff]
    %v375 = vld [vmem:[#allocation4 + $0x878] sm:$0xff]
    %v376 = vld [vmem:[#allocation4 + $0x880] sm:$0xff]
    %v377 = vld [vmem:[#allocation4 + $0x888] sm:$0xff]
    %v378 = vld [vmem:[#allocation4 + $0x890] sm:$0xff]
    %v379 = vld [vmem:[#allocation4 + $0x898] sm:$0xff]
    %v380 = vld [vmem:[#allocation4 + $0x8a0] sm:$0xff]
    %v381 = vld [vmem:[#allocation4 + $0x8a8] sm:$0xff]
    %v382 = vld [vmem:[#allocation4 + $0x8b0] sm:$0xff]
    %v383 = vld [vmem:[#allocation4 + $0x8b8] sm:$0xff]
    %v384 = vld [vmem:[#allocation4 + $0x8c0] sm:$0xff]
    %v385 = vld [vmem:[#allocation4 + $0x8c8] sm:$0xff]
    %v386 = vld [vmem:[#allocation4 + $0x8d0] sm:$0xff]
    %v387 = vld [vmem:[#allocation4 + $0x8d8] sm:$0xff]
    %v388 = vld [vmem:[#allocation4 + $0x8e0] sm:$0xff]
    %v389 = vld [vmem:[#allocation4 + $0x8e8] sm:$0xff]
    %v390 = vld [vmem:[#allocation4 + $0x8f0] sm:$0xff]
    %v391 = vld [vmem:[#allocation4 + $0x8f8] sm:$0xff]
    %v392 = vld [vmem:[#allocation4 + $0x900] sm:$0xff]
    %v393 = vld [vmem:[#allocation4 + $0x908] sm:$0xff]
    %v394 = vld [vmem:[#allocation4 + $0x910] sm:$0xff]
    %v395 = vld [vmem:[#allocation4 + $0x918] sm:$0xff]
    %v396 = vld [vmem:[#allocation4 + $0x920] sm:$0xff]
    %v397 = vld [vmem:[#allocation4 + $0x928] sm:$0xff]
    %v398 = vld [vmem:[#allocation4 + $0x930] sm:$0xff]
    %v399 = vld [vmem:[#allocation4 + $0x938] sm:$0xff]
    %v400 = vld [vmem:[#allocation4 + $0x940] sm:$0xff]
    %v401 = vld [vmem:[#allocation4 + $0x948] sm:$0xff]
    %v402 = vld [vmem:[#allocation4 + $0x950] sm:$0xff]
    %v403 = vld [vmem:[#allocation4 + $0x958] sm:$0xff]
    %v404 = vld [vmem:[#allocation4 + $0x960] sm:$0xff]
    %v405 = vld [vmem:[#allocation4 + $0x968] sm:$0xff]
    %v406 = vld [vmem:[#allocation4 + $0x970] sm:$0xff]
    %v407 = vld [vmem:[#allocation4 + $0x978] sm:$0xff]
    %v408 = vld [vmem:[#allocation4 + $0x980] sm:$0xff]
    %v409 = vld [vmem:[#allocation4 + $0x988] sm:$0xff]
    %v410 = vld [vmem:[#allocation4 + $0x990] sm:$0xff]
    %v411 = vld [vmem:[#allocation4 + $0x998] sm:$0xff]
    %v412 = vld [vmem:[#allocation4 + $0x9a0] sm:$0xff]
    %v413 = vld [vmem:[#allocation4 + $0x9a8] sm:$0xff]
    %v414 = vld [vmem:[#allocation4 + $0x9b0] sm:$0xff]
    %v415 = vld [vmem:[#allocation4 + $0x9b8] sm:$0xff]
    %v416 = vld [vmem:[#allocation4 + $0x9c0] sm:$0xff]
    %v417 = vld [vmem:[#allocation4 + $0x9c8] sm:$0xff]
    %v418 = vld [vmem:[#allocation4 + $0x9d0] sm:$0xff]
    %v419 = vld [vmem:[#allocation4 + $0x9d8] sm:$0xff]
    %v420 = vld [vmem:[#allocation4 + $0x9e0] sm:$0xff]
    %v421 = vld [vmem:[#allocation4 + $0x9e8] sm:$0xff]
    %v422 = vld [vmem:[#allocation4 + $0x9f0] sm:$0xff]
    %v423 = vld [vmem:[#allocation4 + $0x9f8] sm:$0xff]
    %v424 = vld [vmem:[#allocation4 + $0xa00] sm:$0xff]
    %v425 = vld [vmem:[#allocation4 + $0xa08] sm:$0xff]
    %v426 = vld [vmem:[#allocation4 + $0xa10] sm:$0xff]
    %v427 = vld [vmem:[#allocation4 + $0xa18] sm:$0xff]
    %v428 = vld [vmem:[#allocation4 + $0xa20] sm:$0xff]
    %v429 = vld [vmem:[#allocation4 + $0xa28] sm:$0xff]
    %v430 = vld [vmem:[#allocation4 + $0xa30] sm:$0xff]
    %v431 = vld [vmem:[#allocation4 + $0xa38] sm:$0xff]
    %v432 = vld [vmem:[#allocation4 + $0xa40] sm:$0xff]
    %v433 = vld [vmem:[#allocation4 + $0xa48] sm:$0xff]
    %v434 = vld [vmem:[#allocation4 + $0xa50] sm:$0xff]
    %v435 = vld [vmem:[#allocation4 + $0xa58] sm:$0xff]
    %v436 = vld [vmem:[#allocation4 + $0xa60] sm:$0xff]
    %v437 = vld [vmem:[#allocation4 + $0xa68] sm:$0xff]
    %v438 = vld [vmem:[#allocation4 + $0xa70] sm:$0xff]
    %v439 = vld [vmem:[#allocation4 + $0xa78] sm:$0xff]
    %v440 = vld [vmem:[#allocation4 + $0xa80] sm:$0xff]
    %v441 = vld [vmem:[#allocation4 + $0xa88] sm:$0xff]
    %v442 = vld [vmem:[#allocation4 + $0xa90] sm:$0xff]
    %v443 = vld [vmem:[#allocation4 + $0xa98] sm:$0xff]
    %v444 = vld [vmem:[#allocation4 + $0xaa0] sm:$0xff]
    %v445 = vld [vmem:[#allocation4 + $0xaa8] sm:$0xff]
    %v446 = vld [vmem:[#allocation4 + $0xab0] sm:$0xff]
    %v447 = vld [vmem:[#allocation4 + $0xab8] sm:$0xff]
    %v448 = vld [vmem:[#allocation4 + $0xac0] sm:$0xff]
    %v449 = vld [vmem:[#allocation4 + $0xac8] sm:$0xff]
    %v450 = vld [vmem:[#allocation4 + $0xad0] sm:$0xff]
    %v451 = vld [vmem:[#allocation4 + $0xad8] sm:$0xff]
    %v452 = vld [vmem:[#allocation4 + $0xae0] sm:$0xff]
    %v453 = vld [vmem:[#allocation4 + $0xae8] sm:$0xff]
    %v454 = vld [vmem:[#allocation4 + $0xaf0] sm:$0xff]
    %v455 = vld [vmem:[#allocation4 + $0xaf8] sm:$0xff]
    %v456 = vld [vmem:[#allocation4 + $0xb00] sm:$0xff]
    %v457 = vld [vmem:[#allocation4 + $0xb08] sm:$0xff]
    %v458 = vld [vmem:[#allocation4 + $0xb10] sm:$0xff]
    %v459 = vld [vmem:[#allocation4 + $0xb18] sm:$0xff]
    %v460 = vld [vmem:[#allocation4 + $0xb20] sm:$0xff]
    %v461 = vld [vmem:[#allocation4 + $0xb28] sm:$0xff]
    %v462 = vld [vmem:[#allocation4 + $0xb30] sm:$0xff]
    %v463 = vld [vmem:[#allocation4 + $0xb38] sm:$0xff]
    %v464 = vld [vmem:[#allocation4 + $0xb40] sm:$0xff]
    %v465 = vld [vmem:[#allocation4 + $0xb48] sm:$0xff]
    %v466 = vld [vmem:[#allocation4 + $0xb50] sm:$0xff]
    %v467 = vld [vmem:[#allocation4 + $0xb58] sm:$0xff]
    %v468 = vld [vmem:[#allocation4 + $0xb60] sm:$0xff]
    %v469 = vld [vmem:[#allocation4 + $0xb68] sm:$0xff]
    %v470 = vld [vmem:[#allocation4 + $0xb70] sm:$0xff]
    %v471 = vld [vmem:[#allocation4 + $0xb78] sm:$0xff]
    %v472 = vld [vmem:[#allocation4 + $0xb80] sm:$0xff]
    %v473 = vld [vmem:[#allocation4 + $0xb88] sm:$0xff]
    %v474 = vld [vmem:[#allocation4 + $0xb90] sm:$0xff]
    %v475 = vld [vmem:[#allocation4 + $0xb98] sm:$0xff]
    %v476 = vld [vmem:[#allocation4 + $0xba0] sm:$0xff]
    %v477 = vld [vmem:[#allocation4 + $0xba8] sm:$0xff]
    %v478 = vld [vmem:[#allocation4 + $0xbb0] sm:$0xff]
    %v479 = vld [vmem:[#allocation4 + $0xbb8] sm:$0xff]
    %v480 = vld [vmem:[#allocation4 + $0xbc0] sm:$0xff]
    %v481 = vld [vmem:[#allocation4 + $0xbc8] sm:$0xff]
    %v482 = vld [vmem:[#allocation4 + $0xbd0] sm:$0xff]
    %v483 = vld [vmem:[#allocation4 + $0xbd8] sm:$0xff]
    %v484 = vld [vmem:[#allocation4 + $0xbe0] sm:$0xff]
    %v485 = vld [vmem:[#allocation4 + $0xbe8] sm:$0xff]
    %v486 = vld [vmem:[#allocation4 + $0xbf0] sm:$0xff]
    %v487 = vld [vmem:[#allocation4 + $0xbf8] sm:$0xff]
    %v488 = vld [vmem:[#allocation4 + $0xc00] sm:$0xff]
    %v489 = vld [vmem:[#allocation4 + $0xc08] sm:$0xff]
    %v490 = vld [vmem:[#allocation4 + $0xc10] sm:$0xff]
    %v491 = vld [vmem:[#allocation4 + $0xc18] sm:$0xff]
    %v492 = vld [vmem:[#allocation4 + $0xc20] sm:$0xff]
    %v493 = vld [vmem:[#allocation4 + $0xc28] sm:$0xff]
    %v494 = vld [vmem:[#allocation4 + $0xc30] sm:$0xff]
    %v495 = vld [vmem:[#allocation4 + $0xc38] sm:$0xff]
    %v496 = vld [vmem:[#allocation4 + $0xc40] sm:$0xff]
    %v497 = vld [vmem:[#allocation4 + $0xc48] sm:$0xff]
    %v498 = vld [vmem:[#allocation4 + $0xc50] sm:$0xff]
    %v499 = vld [vmem:[#allocation4 + $0xc58] sm:$0xff]
    %v500 = vld [vmem:[#allocation4 + $0xc60] sm:$0xff]
    %v501 = vld [vmem:[#allocation4 + $0xc68] sm:$0xff]
    %v502 = vld [vmem:[#allocation4 + $0xc70] sm:$0xff]
    %v503 = vld [vmem:[#allocation4 + $0xc78] sm:$0xff]
    %v504 = vld [vmem:[#allocation4 + $0xc80] sm:$0xff]
    %v505 = vld [vmem:[#allocation4 + $0xc88] sm:$0xff]
    %v506 = vld [vmem:[#allocation4 + $0xc90] sm:$0xff]
    %v507 = vld [vmem:[#allocation4 + $0xc98] sm:$0xff]
    %v508 = vld [vmem:[#allocation4 + $0xca0] sm:$0xff]
    %v509 = vld [vmem:[#allocation4 + $0xca8] sm:$0xff]
    %v510 = vld [vmem:[#allocation4 + $0xcb0] sm:$0xff]
    %v511 = vld [vmem:[#allocation4 + $0xcb8] sm:$0xff]
    %v512 = vld [vmem:[#allocation4 + $0xcc0] sm:$0xff]
    %v513 = vld [vmem:[#allocation4 + $0xcc8] sm:$0xff]
    %v514 = vld [vmem:[#allocation4 + $0xcd0] sm:$0xff]
    %v515 = vld [vmem:[#allocation4 + $0xcd8] sm:$0xff]
    %v516 = vld [vmem:[#allocation4 + $0xce0] sm:$0xff]
    %v517 = vld [vmem:[#allocation4 + $0xce8] sm:$0xff]
    %v518 = vld [vmem:[#allocation4 + $0xcf0] sm:$0xff]
    %v519 = vld [vmem:[#allocation4 + $0xcf8] sm:$0xff]
    %v520 = vld [vmem:[#allocation4 + $0xd00] sm:$0xff]
    %v521 = vld [vmem:[#allocation4 + $0xd08] sm:$0xff]
    %v522 = vld [vmem:[#allocation4 + $0xd10] sm:$0xff]
    %v523 = vld [vmem:[#allocation4 + $0xd18] sm:$0xff]
    %v524 = vld [vmem:[#allocation4 + $0xd20] sm:$0xff]
    %v525 = vld [vmem:[#allocation4 + $0xd28] sm:$0xff]
    %v526 = vld [vmem:[#allocation4 + $0xd30] sm:$0xff]
    %v527 = vld [vmem:[#allocation4 + $0xd38] sm:$0xff]
    %v528 = vld [vmem:[#allocation4 + $0xd40] sm:$0xff]
    %v529 = vld [vmem:[#allocation4 + $0xd48] sm:$0xff]
    %v530 = vld [vmem:[#allocation4 + $0xd50] sm:$0xff]
    %v531 = vld [vmem:[#allocation4 + $0xd58] sm:$0xff]
    %v532 = vld [vmem:[#allocation4 + $0xd60] sm:$0xff]
    %v533 = vld [vmem:[#allocation4 + $0xd68] sm:$0xff]
    %v534 = vld [vmem:[#allocation4 + $0xd70] sm:$0xff]
    %v535 = vld [vmem:[#allocation4 + $0xd78] sm:$0xff]
    %v536 = vld [vmem:[#allocation4 + $0xd80] sm:$0xff]
    %v537 = vld [vmem:[#allocation4 + $0xd88] sm:$0xff]
    %v538 = vld [vmem:[#allocation4 + $0xd90] sm:$0xff]
    %v539 = vld [vmem:[#allocation4 + $0xd98] sm:$0xff]
    %v540 = vld [vmem:[#allocation4 + $0xda0] sm:$0xff]
    %v541 = vld [vmem:[#allocation4 + $0xda8] sm:$0xff]
    %v542 = vld [vmem:[#allocation4 + $0xdb0] sm:$0xff]
    %v543 = vld [vmem:[#allocation4 + $0xdb8] sm:$0xff]
    %v544 = vld [vmem:[#allocation4 + $0xdc0] sm:$0xff]
    %v545 = vld [vmem:[#allocation4 + $0xdc8] sm:$0xff]
    %v546 = vld [vmem:[#allocation4 + $0xdd0] sm:$0xff]
    %v547 = vld [vmem:[#allocation4 + $0xdd8] sm:$0xff]
    %v548 = vld [vmem:[#allocation4 + $0xde0] sm:$0xff]
    %v549 = vld [vmem:[#allocation4 + $0xde8] sm:$0xff]
    %v550 = vld [vmem:[#allocation4 + $0xdf0] sm:$0xff]
    %v551 = vld [vmem:[#allocation4 + $0xdf8] sm:$0xff]
    %v552 = vld [vmem:[#allocation4 + $0xe00] sm:$0xff]
    %v553 = vld [vmem:[#allocation4 + $0xe08] sm:$0xff]
    %v554 = vld [vmem:[#allocation4 + $0xe10] sm:$0xff]
    %v555 = vld [vmem:[#allocation4 + $0xe18] sm:$0xff]
    %v556 = vld [vmem:[#allocation4 + $0xe20] sm:$0xff]
    %v557 = vld [vmem:[#allocation4 + $0xe28] sm:$0xff]
    %v558 = vld [vmem:[#allocation4 + $0xe30] sm:$0xff]
    %v559 = vld [vmem:[#allocation4 + $0xe38] sm:$0xff]
    %v560 = vld [vmem:[#allocation4 + $0xe40] sm:$0xff]
    %v561 = vld [vmem:[#allocation4 + $0xe48] sm:$0xff]
    %v562 = vld [vmem:[#allocation4 + $0xe50] sm:$0xff]
    %v563 = vld [vmem:[#allocation4 + $0xe58] sm:$0xff]
    %v564 = vld [vmem:[#allocation4 + $0xe60] sm:$0xff]
    %v565 = vld [vmem:[#allocation4 + $0xe68] sm:$0xff]
    %v566 = vld [vmem:[#allocation4 + $0xe70] sm:$0xff]
    %v567 = vld [vmem:[#allocation4 + $0xe78] sm:$0xff]
    %v568 = vld [vmem:[#allocation4 + $0xe80] sm:$0xff]
    %v569 = vld [vmem:[#allocation4 + $0xe88] sm:$0xff]
    %v570 = vld [vmem:[#allocation4 + $0xe90] sm:$0xff]
    %v571 = vld [vmem:[#allocation4 + $0xe98] sm:$0xff]
    %v572 = vld [vmem:[#allocation4 + $0xea0] sm:$0xff]
    %v573 = vld [vmem:[#allocation4 + $0xea8] sm:$0xff]
    %v574 = vld [vmem:[#allocation4 + $0xeb0] sm:$0xff]
    %v575 = vld [vmem:[#allocation4 + $0xeb8] sm:$0xff]
    %v576 = vld [vmem:[#allocation4 + $0xec0] sm:$0xff]
    %v577 = vld [vmem:[#allocation4 + $0xec8] sm:$0xff]
    %v578 = vld [vmem:[#allocation4 + $0xed0] sm:$0xff]
    %v579 = vld [vmem:[#allocation4 + $0xed8] sm:$0xff]
    %v580 = vld [vmem:[#allocation4 + $0xee0] sm:$0xff]
    %v581 = vld [vmem:[#allocation4 + $0xee8] sm:$0xff]
    %v582 = vld [vmem:[#allocation4 + $0xef0] sm:$0xff]
    %v583 = vld [vmem:[#allocation4 + $0xef8] sm:$0xff]
    %v584 = vld [vmem:[#allocation4 + $0xf00] sm:$0xff]
    %v585 = vld [vmem:[#allocation4 + $0xf08] sm:$0xff]
    %v586 = vld [vmem:[#allocation4 + $0xf10] sm:$0xff]
    %v587 = vld [vmem:[#allocation4 + $0xf18] sm:$0xff]
    %v588 = vld [vmem:[#allocation4 + $0xf20] sm:$0xff]
    %v589 = vld [vmem:[#allocation4 + $0xf28] sm:$0xff]
    %v590 = vld [vmem:[#allocation4 + $0xf30] sm:$0xff]
    %v591 = vld [vmem:[#allocation4 + $0xf38] sm:$0xff]
    %v592 = vld [vmem:[#allocation4 + $0xf40] sm:$0xff]
    %v593 = vld [vmem:[#allocation4 + $0xf48] sm:$0xff]
    %v594 = vld [vmem:[#allocation4 + $0xf50] sm:$0xff]
    %v595 = vld [vmem:[#allocation4 + $0xf58] sm:$0xff]
    %v596 = vld [vmem:[#allocation4 + $0xf60] sm:$0xff]
    %v597 = vld [vmem:[#allocation4 + $0xf68] sm:$0xff]
    %v598 = vld [vmem:[#allocation4 + $0xf70] sm:$0xff]
    %v599 = vld [vmem:[#allocation4 + $0xf78] sm:$0xff]
    %v600 = vld [vmem:[#allocation4 + $0xf80] sm:$0xff]
    %v601 = vld [vmem:[#allocation4 + $0xf88] sm:$0xff]
    %v602 = vld [vmem:[#allocation4 + $0xf90] sm:$0xff]
    %v603 = vld [vmem:[#allocation4 + $0xf98] sm:$0xff]
    %v604 = vld [vmem:[#allocation4 + $0xfa0] sm:$0xff]
    %v605 = vld [vmem:[#allocation4 + $0xfa8] sm:$0xff]
    %v606 = vld [vmem:[#allocation4 + $0xfb0] sm:$0xff]
    %v607 = vld [vmem:[#allocation4 + $0xfb8] sm:$0xff]
    %v608 = vld [vmem:[#allocation4 + $0xfc0] sm:$0xff]
    %v609 = vld [vmem:[#allocation4 + $0xfc8] sm:$0xff]
    %v610 = vld [vmem:[#allocation4 + $0xfd0] sm:$0xff]
    %v611 = vld [vmem:[#allocation4 + $0xfd8] sm:$0xff]
    %v612 = vld [vmem:[#allocation4 + $0xfe0] sm:$0xff]
    %v613 = vld [vmem:[#allocation4 + $0xfe8] sm:$0xff]
    %v614 = vld [vmem:[#allocation4 + $0xff0] sm:$0xff]
    %v615 = vld [vmem:[#allocation4 + $0xff8] sm:$0xff]
    %v616 = vld [vmem:[%s3] sm:$0xf]
    %v618 = vperm.slane %v616, 0
    %v619 = vperm.slane %v616, 1
    %v620 = vperm.slane %v616, 2
    %v621 = vperm.slane %v616, 3
    %v658 = vunpack.c.l.b16 %v72
    %v659 = vunpack.c.h.b16 %v72
    %v660 = vunpack.c.l.b16 %v73
    %v661 = vunpack.c.h.b16 %v73
    %v662 = vunpack.c.l.b16 %v74
    %v663 = vunpack.c.h.b16 %v74
    %v664 = vunpack.c.l.b16 %v75
    %v665 = vunpack.c.h.b16 %v75
    %v666 = vunpack.c.l.b16 %v76
    %v667 = vunpack.c.h.b16 %v76
    %v668 = vunpack.c.l.b16 %v77
    %v669 = vunpack.c.h.b16 %v77
    %v670 = vunpack.c.l.b16 %v78
    %v671 = vunpack.c.h.b16 %v78
    %v672 = vunpack.c.l.b16 %v79
    %v673 = vunpack.c.h.b16 %v79
    %v674 = vunpack.c.l.b16 %v80
    %v675 = vunpack.c.h.b16 %v80
    %v676 = vunpack.c.l.b16 %v81
    %v677 = vunpack.c.h.b16 %v81
    %v678 = vunpack.c.l.b16 %v82
    %v679 = vunpack.c.h.b16 %v82
    %v680 = vunpack.c.l.b16 %v83
    %v681 = vunpack.c.h.b16 %v83
    %v682 = vunpack.c.l.b16 %v84
    %v683 = vunpack.c.h.b16 %v84
    %v684 = vunpack.c.l.b16 %v85
    %v685 = vunpack.c.h.b16 %v85
    %v686 = vunpack.c.l.b16 %v86
    %v687 = vunpack.c.h.b16 %v86
    %v688 = vunpack.c.l.b16 %v87
    %v689 = vunpack.c.h.b16 %v87
    %v690 = vunpack.c.l.b16 %v88
    %v691 = vunpack.c.h.b16 %v88
    %v692 = vunpack.c.l.b16 %v89
    %v693 = vunpack.c.h.b16 %v89
    %v694 = vunpack.c.l.b16 %v90
    %v695 = vunpack.c.h.b16 %v90
    %v696 = vunpack.c.l.b16 %v91
    %v697 = vunpack.c.h.b16 %v91
    %v698 = vunpack.c.l.b16 %v92
    %v699 = vunpack.c.h.b16 %v92
    %v700 = vunpack.c.l.b16 %v93
    %v701 = vunpack.c.h.b16 %v93
    %v702 = vunpack.c.l.b16 %v94
    %v703 = vunpack.c.h.b16 %v94
    %v704 = vunpack.c.l.b16 %v95
    %v705 = vunpack.c.h.b16 %v95
    %v706 = vunpack.c.l.b16 %v96
    %v707 = vunpack.c.h.b16 %v96
    %v708 = vunpack.c.l.b16 %v97
    %v709 = vunpack.c.h.b16 %v97
    %v710 = vunpack.c.l.b16 %v98
    %v711 = vunpack.c.h.b16 %v98
    %v712 = vunpack.c.l.b16 %v99
    %v713 = vunpack.c.h.b16 %v99
    %v714 = vunpack.c.l.b16 %v100
    %v715 = vunpack.c.h.b16 %v100
    %v716 = vunpack.c.l.b16 %v101
    %v717 = vunpack.c.h.b16 %v101
    %v718 = vunpack.c.l.b16 %v102
    %v719 = vunpack.c.h.b16 %v102
    %v720 = vunpack.c.l.b16 %v103
    %v721 = vunpack.c.h.b16 %v103
    %v722 = vpack.c.b16 %v674, %v658
    %v723 = vpack.c.b16 %v675, %v659
    %v724 = vpack.c.b16 %v676, %v660
    %v725 = vpack.c.b16 %v677, %v661
    %v726 = vpack.c.b16 %v678, %v662
    %v727 = vpack.c.b16 %v679, %v663
    %v728 = vpack.c.b16 %v680, %v664
    %v729 = vpack.c.b16 %v681, %v665
    %v730 = vpack.c.b16 %v682, %v666
    %v731 = vpack.c.b16 %v683, %v667
    %v732 = vpack.c.b16 %v684, %v668
    %v733 = vpack.c.b16 %v685, %v669
    %v734 = vpack.c.b16 %v686, %v670
    %v735 = vpack.c.b16 %v687, %v671
    %v736 = vpack.c.b16 %v688, %v672
    %v737 = vpack.c.b16 %v689, %v673
    %v738 = vpack.c.b16 %v706, %v690
    %v739 = vpack.c.b16 %v707, %v691
    %v740 = vpack.c.b16 %v708, %v692
    %v741 = vpack.c.b16 %v709, %v693
    %v742 = vpack.c.b16 %v710, %v694
    %v743 = vpack.c.b16 %v711, %v695
    %v744 = vpack.c.b16 %v712, %v696
    %v745 = vpack.c.b16 %v713, %v697
    %v746 = vpack.c.b16 %v714, %v698
    %v747 = vpack.c.b16 %v715, %v699
    %v748 = vpack.c.b16 %v716, %v700
    %v749 = vpack.c.b16 %v717, %v701
    %v750 = vpack.c.b16 %v718, %v702
    %v751 = vpack.c.b16 %v719, %v703
    %v752 = vpack.c.b16 %v720, %v704
    %v753 = vpack.c.b16 %v721, %v705
    %v1298 = vunpack.c.l.b16 %v104
    %v1299 = vunpack.c.h.b16 %v104
    %v1300 = vunpack.c.l.b16 %v105
    %v1301 = vunpack.c.h.b16 %v105
    %v1302 = vunpack.c.l.b16 %v106
    %v1303 = vunpack.c.h.b16 %v106
    %v1304 = vunpack.c.l.b16 %v107
    %v1305 = vunpack.c.h.b16 %v107
    %v1306 = vunpack.c.l.b16 %v108
    %v1307 = vunpack.c.h.b16 %v108
    %v1308 = vunpack.c.l.b16 %v109
    %v1309 = vunpack.c.h.b16 %v109
    %v1310 = vunpack.c.l.b16 %v110
    %v1311 = vunpack.c.h.b16 %v110
    %v1312 = vunpack.c.l.b16 %v111
    %v1313 = vunpack.c.h.b16 %v111
    %v1314 = vunpack.c.l.b16 %v112
    %v1315 = vunpack.c.h.b16 %v112
    %v1316 = vunpack.c.l.b16 %v113
    %v1317 = vunpack.c.h.b16 %v113
    %v1318 = vunpack.c.l.b16 %v114
    %v1319 = vunpack.c.h.b16 %v114
    %v1320 = vunpack.c.l.b16 %v115
    %v1321 = vunpack.c.h.b16 %v115
    %v1322 = vunpack.c.l.b16 %v116
    %v1323 = vunpack.c.h.b16 %v116
    %v1324 = vunpack.c.l.b16 %v117
    %v1325 = vunpack.c.h.b16 %v117
    %v1326 = vunpack.c.l.b16 %v118
    %v1327 = vunpack.c.h.b16 %v118
    %v1328 = vunpack.c.l.b16 %v119
    %v1329 = vunpack.c.h.b16 %v119
    %v1330 = vunpack.c.l.b16 %v120
    %v1331 = vunpack.c.h.b16 %v120
    %v1332 = vunpack.c.l.b16 %v121
    %v1333 = vunpack.c.h.b16 %v121
    %v1334 = vunpack.c.l.b16 %v122
    %v1335 = vunpack.c.h.b16 %v122
    %v1336 = vunpack.c.l.b16 %v123
    %v1337 = vunpack.c.h.b16 %v123
    %v1338 = vunpack.c.l.b16 %v124
    %v1339 = vunpack.c.h.b16 %v124
    %v1340 = vunpack.c.l.b16 %v125
    %v1341 = vunpack.c.h.b16 %v125
    %v1342 = vunpack.c.l.b16 %v126
    %v1343 = vunpack.c.h.b16 %v126
    %v1344 = vunpack.c.l.b16 %v127
    %v1345 = vunpack.c.h.b16 %v127
    %v1346 = vunpack.c.l.b16 %v128
    %v1347 = vunpack.c.h.b16 %v128
    %v1348 = vunpack.c.l.b16 %v129
    %v1349 = vunpack.c.h.b16 %v129
    %v1350 = vunpack.c.l.b16 %v130
    %v1351 = vunpack.c.h.b16 %v130
    %v1352 = vunpack.c.l.b16 %v131
    %v1353 = vunpack.c.h.b16 %v131
    %v1354 = vunpack.c.l.b16 %v132
    %v1355 = vunpack.c.h.b16 %v132
    %v1356 = vunpack.c.l.b16 %v133
    %v1357 = vunpack.c.h.b16 %v133
    %v1358 = vunpack.c.l.b16 %v134
    %v1359 = vunpack.c.h.b16 %v134
    %v1360 = vunpack.c.l.b16 %v135
    %v1361 = vunpack.c.h.b16 %v135
    %v1362 = vunpack.c.l.b16 %v136
    %v1363 = vunpack.c.h.b16 %v136
    %v1364 = vunpack.c.l.b16 %v137
    %v1365 = vunpack.c.h.b16 %v137
    %v1366 = vunpack.c.l.b16 %v138
    %v1367 = vunpack.c.h.b16 %v138
    %v1368 = vunpack.c.l.b16 %v139
    %v1369 = vunpack.c.h.b16 %v139
    %v1370 = vunpack.c.l.b16 %v140
    %v1371 = vunpack.c.h.b16 %v140
    %v1372 = vunpack.c.l.b16 %v141
    %v1373 = vunpack.c.h.b16 %v141
    %v1374 = vunpack.c.l.b16 %v142
    %v1375 = vunpack.c.h.b16 %v142
    %v1376 = vunpack.c.l.b16 %v143
    %v1377 = vunpack.c.h.b16 %v143
    %v1378 = vunpack.c.l.b16 %v144
    %v1379 = vunpack.c.h.b16 %v144
    %v1380 = vunpack.c.l.b16 %v145
    %v1381 = vunpack.c.h.b16 %v145
    %v1382 = vunpack.c.l.b16 %v146
    %v1383 = vunpack.c.h.b16 %v146
    %v1384 = vunpack.c.l.b16 %v147
    %v1385 = vunpack.c.h.b16 %v147
    %v1386 = vunpack.c.l.b16 %v148
    %v1387 = vunpack.c.h.b16 %v148
    %v1388 = vunpack.c.l.b16 %v149
    %v1389 = vunpack.c.h.b16 %v149
    %v1390 = vunpack.c.l.b16 %v150
    %v1391 = vunpack.c.h.b16 %v150
    %v1392 = vunpack.c.l.b16 %v151
    %v1393 = vunpack.c.h.b16 %v151
    %v1394 = vunpack.c.l.b16 %v152
    %v1395 = vunpack.c.h.b16 %v152
    %v1396 = vunpack.c.l.b16 %v153
    %v1397 = vunpack.c.h.b16 %v153
    %v1398 = vunpack.c.l.b16 %v154
    %v1399 = vunpack.c.h.b16 %v154
    %v1400 = vunpack.c.l.b16 %v155
    %v1401 = vunpack.c.h.b16 %v155
    %v1402 = vunpack.c.l.b16 %v156
    %v1403 = vunpack.c.h.b16 %v156
    %v1404 = vunpack.c.l.b16 %v157
    %v1405 = vunpack.c.h.b16 %v157
    %v1406 = vunpack.c.l.b16 %v158
    %v1407 = vunpack.c.h.b16 %v158
    %v1408 = vunpack.c.l.b16 %v159
    %v1409 = vunpack.c.h.b16 %v159
    %v1410 = vunpack.c.l.b16 %v160
    %v1411 = vunpack.c.h.b16 %v160
    %v1412 = vunpack.c.l.b16 %v161
    %v1413 = vunpack.c.h.b16 %v161
    %v1414 = vunpack.c.l.b16 %v162
    %v1415 = vunpack.c.h.b16 %v162
    %v1416 = vunpack.c.l.b16 %v163
    %v1417 = vunpack.c.h.b16 %v163
    %v1418 = vunpack.c.l.b16 %v164
    %v1419 = vunpack.c.h.b16 %v164
    %v1420 = vunpack.c.l.b16 %v165
    %v1421 = vunpack.c.h.b16 %v165
    %v1422 = vunpack.c.l.b16 %v166
    %v1423 = vunpack.c.h.b16 %v166
    %v1424 = vunpack.c.l.b16 %v167
    %v1425 = vunpack.c.h.b16 %v167
    %v1426 = vunpack.c.l.b16 %v168
    %v1427 = vunpack.c.h.b16 %v168
    %v1428 = vunpack.c.l.b16 %v169
    %v1429 = vunpack.c.h.b16 %v169
    %v1430 = vunpack.c.l.b16 %v170
    %v1431 = vunpack.c.h.b16 %v170
    %v1432 = vunpack.c.l.b16 %v171
    %v1433 = vunpack.c.h.b16 %v171
    %v1434 = vunpack.c.l.b16 %v172
    %v1435 = vunpack.c.h.b16 %v172
    %v1436 = vunpack.c.l.b16 %v173
    %v1437 = vunpack.c.h.b16 %v173
    %v1438 = vunpack.c.l.b16 %v174
    %v1439 = vunpack.c.h.b16 %v174
    %v1440 = vunpack.c.l.b16 %v175
    %v1441 = vunpack.c.h.b16 %v175
    %v1442 = vunpack.c.l.b16 %v176
    %v1443 = vunpack.c.h.b16 %v176
    %v1444 = vunpack.c.l.b16 %v177
    %v1445 = vunpack.c.h.b16 %v177
    %v1446 = vunpack.c.l.b16 %v178
    %v1447 = vunpack.c.h.b16 %v178
    %v1448 = vunpack.c.l.b16 %v179
    %v1449 = vunpack.c.h.b16 %v179
    %v1450 = vunpack.c.l.b16 %v180
    %v1451 = vunpack.c.h.b16 %v180
    %v1452 = vunpack.c.l.b16 %v181
    %v1453 = vunpack.c.h.b16 %v181
    %v1454 = vunpack.c.l.b16 %v182
    %v1455 = vunpack.c.h.b16 %v182
    %v1456 = vunpack.c.l.b16 %v183
    %v1457 = vunpack.c.h.b16 %v183
    %v1458 = vunpack.c.l.b16 %v184
    %v1459 = vunpack.c.h.b16 %v184
    %v1460 = vunpack.c.l.b16 %v185
    %v1461 = vunpack.c.h.b16 %v185
    %v1462 = vunpack.c.l.b16 %v186
    %v1463 = vunpack.c.h.b16 %v186
    %v1464 = vunpack.c.l.b16 %v187
    %v1465 = vunpack.c.h.b16 %v187
    %v1466 = vunpack.c.l.b16 %v188
    %v1467 = vunpack.c.h.b16 %v188
    %v1468 = vunpack.c.l.b16 %v189
    %v1469 = vunpack.c.h.b16 %v189
    %v1470 = vunpack.c.l.b16 %v190
    %v1471 = vunpack.c.h.b16 %v190
    %v1472 = vunpack.c.l.b16 %v191
    %v1473 = vunpack.c.h.b16 %v191
    %v1474 = vunpack.c.l.b16 %v192
    %v1475 = vunpack.c.h.b16 %v192
    %v1476 = vunpack.c.l.b16 %v193
    %v1477 = vunpack.c.h.b16 %v193
    %v1478 = vunpack.c.l.b16 %v194
    %v1479 = vunpack.c.h.b16 %v194
    %v1480 = vunpack.c.l.b16 %v195
    %v1481 = vunpack.c.h.b16 %v195
    %v1482 = vunpack.c.l.b16 %v196
    %v1483 = vunpack.c.h.b16 %v196
    %v1484 = vunpack.c.l.b16 %v197
    %v1485 = vunpack.c.h.b16 %v197
    %v1486 = vunpack.c.l.b16 %v198
    %v1487 = vunpack.c.h.b16 %v198
    %v1488 = vunpack.c.l.b16 %v199
    %v1489 = vunpack.c.h.b16 %v199
    %v1490 = vunpack.c.l.b16 %v200
    %v1491 = vunpack.c.h.b16 %v200
    %v1492 = vunpack.c.l.b16 %v201
    %v1493 = vunpack.c.h.b16 %v201
    %v1494 = vunpack.c.l.b16 %v202
    %v1495 = vunpack.c.h.b16 %v202
    %v1496 = vunpack.c.l.b16 %v203
    %v1497 = vunpack.c.h.b16 %v203
    %v1498 = vunpack.c.l.b16 %v204
    %v1499 = vunpack.c.h.b16 %v204
    %v1500 = vunpack.c.l.b16 %v205
    %v1501 = vunpack.c.h.b16 %v205
    %v1502 = vunpack.c.l.b16 %v206
    %v1503 = vunpack.c.h.b16 %v206
    %v1504 = vunpack.c.l.b16 %v207
    %v1505 = vunpack.c.h.b16 %v207
    %v1506 = vunpack.c.l.b16 %v208
    %v1507 = vunpack.c.h.b16 %v208
    %v1508 = vunpack.c.l.b16 %v209
    %v1509 = vunpack.c.h.b16 %v209
    %v1510 = vunpack.c.l.b16 %v210
    %v1511 = vunpack.c.h.b16 %v210
    %v1512 = vunpack.c.l.b16 %v211
    %v1513 = vunpack.c.h.b16 %v211
    %v1514 = vunpack.c.l.b16 %v212
    %v1515 = vunpack.c.h.b16 %v212
    %v1516 = vunpack.c.l.b16 %v213
    %v1517 = vunpack.c.h.b16 %v213
    %v1518 = vunpack.c.l.b16 %v214
    %v1519 = vunpack.c.h.b16 %v214
    %v1520 = vunpack.c.l.b16 %v215
    %v1521 = vunpack.c.h.b16 %v215
    %v1522 = vunpack.c.l.b16 %v216
    %v1523 = vunpack.c.h.b16 %v216
    %v1524 = vunpack.c.l.b16 %v217
    %v1525 = vunpack.c.h.b16 %v217
    %v1526 = vunpack.c.l.b16 %v218
    %v1527 = vunpack.c.h.b16 %v218
    %v1528 = vunpack.c.l.b16 %v219
    %v1529 = vunpack.c.h.b16 %v219
    %v1530 = vunpack.c.l.b16 %v220
    %v1531 = vunpack.c.h.b16 %v220
    %v1532 = vunpack.c.l.b16 %v221
    %v1533 = vunpack.c.h.b16 %v221
    %v1534 = vunpack.c.l.b16 %v222
    %v1535 = vunpack.c.h.b16 %v222
    %v1536 = vunpack.c.l.b16 %v223
    %v1537 = vunpack.c.h.b16 %v223
    %v1538 = vunpack.c.l.b16 %v224
    %v1539 = vunpack.c.h.b16 %v224
    %v1540 = vunpack.c.l.b16 %v225
    %v1541 = vunpack.c.h.b16 %v225
    %v1542 = vunpack.c.l.b16 %v226
    %v1543 = vunpack.c.h.b16 %v226
    %v1544 = vunpack.c.l.b16 %v227
    %v1545 = vunpack.c.h.b16 %v227
    %v1546 = vunpack.c.l.b16 %v228
    %v1547 = vunpack.c.h.b16 %v228
    %v1548 = vunpack.c.l.b16 %v229
    %v1549 = vunpack.c.h.b16 %v229
    %v1550 = vunpack.c.l.b16 %v230
    %v1551 = vunpack.c.h.b16 %v230
    %v1552 = vunpack.c.l.b16 %v231
    %v1553 = vunpack.c.h.b16 %v231
    %v1554 = vunpack.c.l.b16 %v232
    %v1555 = vunpack.c.h.b16 %v232
    %v1556 = vunpack.c.l.b16 %v233
    %v1557 = vunpack.c.h.b16 %v233
    %v1558 = vunpack.c.l.b16 %v234
    %v1559 = vunpack.c.h.b16 %v234
    %v1560 = vunpack.c.l.b16 %v235
    %v1561 = vunpack.c.h.b16 %v235
    %v1562 = vunpack.c.l.b16 %v236
    %v1563 = vunpack.c.h.b16 %v236
    %v1564 = vunpack.c.l.b16 %v237
    %v1565 = vunpack.c.h.b16 %v237
    %v1566 = vunpack.c.l.b16 %v238
    %v1567 = vunpack.c.h.b16 %v238
    %v1568 = vunpack.c.l.b16 %v239
    %v1569 = vunpack.c.h.b16 %v239
    %v1570 = vunpack.c.l.b16 %v240
    %v1571 = vunpack.c.h.b16 %v240
    %v1572 = vunpack.c.l.b16 %v241
    %v1573 = vunpack.c.h.b16 %v241
    %v1574 = vunpack.c.l.b16 %v242
    %v1575 = vunpack.c.h.b16 %v242
    %v1576 = vunpack.c.l.b16 %v243
    %v1577 = vunpack.c.h.b16 %v243
    %v1578 = vunpack.c.l.b16 %v244
    %v1579 = vunpack.c.h.b16 %v244
    %v1580 = vunpack.c.l.b16 %v245
    %v1581 = vunpack.c.h.b16 %v245
    %v1582 = vunpack.c.l.b16 %v246
    %v1583 = vunpack.c.h.b16 %v246
    %v1584 = vunpack.c.l.b16 %v247
    %v1585 = vunpack.c.h.b16 %v247
    %v1586 = vunpack.c.l.b16 %v248
    %v1587 = vunpack.c.h.b16 %v248
    %v1588 = vunpack.c.l.b16 %v249
    %v1589 = vunpack.c.h.b16 %v249
    %v1590 = vunpack.c.l.b16 %v250
    %v1591 = vunpack.c.h.b16 %v250
    %v1592 = vunpack.c.l.b16 %v251
    %v1593 = vunpack.c.h.b16 %v251
    %v1594 = vunpack.c.l.b16 %v252
    %v1595 = vunpack.c.h.b16 %v252
    %v1596 = vunpack.c.l.b16 %v253
    %v1597 = vunpack.c.h.b16 %v253
    %v1598 = vunpack.c.l.b16 %v254
    %v1599 = vunpack.c.h.b16 %v254
    %v1600 = vunpack.c.l.b16 %v255
    %v1601 = vunpack.c.h.b16 %v255
    %v1602 = vunpack.c.l.b16 %v256
    %v1603 = vunpack.c.h.b16 %v256
    %v1604 = vunpack.c.l.b16 %v257
    %v1605 = vunpack.c.h.b16 %v257
    %v1606 = vunpack.c.l.b16 %v258
    %v1607 = vunpack.c.h.b16 %v258
    %v1608 = vunpack.c.l.b16 %v259
    %v1609 = vunpack.c.h.b16 %v259
    %v1610 = vunpack.c.l.b16 %v260
    %v1611 = vunpack.c.h.b16 %v260
    %v1612 = vunpack.c.l.b16 %v261
    %v1613 = vunpack.c.h.b16 %v261
    %v1614 = vunpack.c.l.b16 %v262
    %v1615 = vunpack.c.h.b16 %v262
    %v1616 = vunpack.c.l.b16 %v263
    %v1617 = vunpack.c.h.b16 %v263
    %v1618 = vunpack.c.l.b16 %v264
    %v1619 = vunpack.c.h.b16 %v264
    %v1620 = vunpack.c.l.b16 %v265
    %v1621 = vunpack.c.h.b16 %v265
    %v1622 = vunpack.c.l.b16 %v266
    %v1623 = vunpack.c.h.b16 %v266
    %v1624 = vunpack.c.l.b16 %v267
    %v1625 = vunpack.c.h.b16 %v267
    %v1626 = vunpack.c.l.b16 %v268
    %v1627 = vunpack.c.h.b16 %v268
    %v1628 = vunpack.c.l.b16 %v269
    %v1629 = vunpack.c.h.b16 %v269
    %v1630 = vunpack.c.l.b16 %v270
    %v1631 = vunpack.c.h.b16 %v270
    %v1632 = vunpack.c.l.b16 %v271
    %v1633 = vunpack.c.h.b16 %v271
    %v1634 = vunpack.c.l.b16 %v272
    %v1635 = vunpack.c.h.b16 %v272
    %v1636 = vunpack.c.l.b16 %v273
    %v1637 = vunpack.c.h.b16 %v273
    %v1638 = vunpack.c.l.b16 %v274
    %v1639 = vunpack.c.h.b16 %v274
    %v1640 = vunpack.c.l.b16 %v275
    %v1641 = vunpack.c.h.b16 %v275
    %v1642 = vunpack.c.l.b16 %v276
    %v1643 = vunpack.c.h.b16 %v276
    %v1644 = vunpack.c.l.b16 %v277
    %v1645 = vunpack.c.h.b16 %v277
    %v1646 = vunpack.c.l.b16 %v278
    %v1647 = vunpack.c.h.b16 %v278
    %v1648 = vunpack.c.l.b16 %v279
    %v1649 = vunpack.c.h.b16 %v279
    %v1650 = vunpack.c.l.b16 %v280
    %v1651 = vunpack.c.h.b16 %v280
    %v1652 = vunpack.c.l.b16 %v281
    %v1653 = vunpack.c.h.b16 %v281
    %v1654 = vunpack.c.l.b16 %v282
    %v1655 = vunpack.c.h.b16 %v282
    %v1656 = vunpack.c.l.b16 %v283
    %v1657 = vunpack.c.h.b16 %v283
    %v1658 = vunpack.c.l.b16 %v284
    %v1659 = vunpack.c.h.b16 %v284
    %v1660 = vunpack.c.l.b16 %v285
    %v1661 = vunpack.c.h.b16 %v285
    %v1662 = vunpack.c.l.b16 %v286
    %v1663 = vunpack.c.h.b16 %v286
    %v1664 = vunpack.c.l.b16 %v287
    %v1665 = vunpack.c.h.b16 %v287
    %v1666 = vunpack.c.l.b16 %v288
    %v1667 = vunpack.c.h.b16 %v288
    %v1668 = vunpack.c.l.b16 %v289
    %v1669 = vunpack.c.h.b16 %v289
    %v1670 = vunpack.c.l.b16 %v290
    %v1671 = vunpack.c.h.b16 %v290
    %v1672 = vunpack.c.l.b16 %v291
    %v1673 = vunpack.c.h.b16 %v291
    %v1674 = vunpack.c.l.b16 %v292
    %v1675 = vunpack.c.h.b16 %v292
    %v1676 = vunpack.c.l.b16 %v293
    %v1677 = vunpack.c.h.b16 %v293
    %v1678 = vunpack.c.l.b16 %v294
    %v1679 = vunpack.c.h.b16 %v294
    %v1680 = vunpack.c.l.b16 %v295
    %v1681 = vunpack.c.h.b16 %v295
    %v1682 = vunpack.c.l.b16 %v296
    %v1683 = vunpack.c.h.b16 %v296
    %v1684 = vunpack.c.l.b16 %v297
    %v1685 = vunpack.c.h.b16 %v297
    %v1686 = vunpack.c.l.b16 %v298
    %v1687 = vunpack.c.h.b16 %v298
    %v1688 = vunpack.c.l.b16 %v299
    %v1689 = vunpack.c.h.b16 %v299
    %v1690 = vunpack.c.l.b16 %v300
    %v1691 = vunpack.c.h.b16 %v300
    %v1692 = vunpack.c.l.b16 %v301
    %v1693 = vunpack.c.h.b16 %v301
    %v1694 = vunpack.c.l.b16 %v302
    %v1695 = vunpack.c.h.b16 %v302
    %v1696 = vunpack.c.l.b16 %v303
    %v1697 = vunpack.c.h.b16 %v303
    %v1698 = vunpack.c.l.b16 %v304
    %v1699 = vunpack.c.h.b16 %v304
    %v1700 = vunpack.c.l.b16 %v305
    %v1701 = vunpack.c.h.b16 %v305
    %v1702 = vunpack.c.l.b16 %v306
    %v1703 = vunpack.c.h.b16 %v306
    %v1704 = vunpack.c.l.b16 %v307
    %v1705 = vunpack.c.h.b16 %v307
    %v1706 = vunpack.c.l.b16 %v308
    %v1707 = vunpack.c.h.b16 %v308
    %v1708 = vunpack.c.l.b16 %v309
    %v1709 = vunpack.c.h.b16 %v309
    %v1710 = vunpack.c.l.b16 %v310
    %v1711 = vunpack.c.h.b16 %v310
    %v1712 = vunpack.c.l.b16 %v311
    %v1713 = vunpack.c.h.b16 %v311
    %v1714 = vunpack.c.l.b16 %v312
    %v1715 = vunpack.c.h.b16 %v312
    %v1716 = vunpack.c.l.b16 %v313
    %v1717 = vunpack.c.h.b16 %v313
    %v1718 = vunpack.c.l.b16 %v314
    %v1719 = vunpack.c.h.b16 %v314
    %v1720 = vunpack.c.l.b16 %v315
    %v1721 = vunpack.c.h.b16 %v315
    %v1722 = vunpack.c.l.b16 %v316
    %v1723 = vunpack.c.h.b16 %v316
    %v1724 = vunpack.c.l.b16 %v317
    %v1725 = vunpack.c.h.b16 %v317
    %v1726 = vunpack.c.l.b16 %v318
    %v1727 = vunpack.c.h.b16 %v318
    %v1728 = vunpack.c.l.b16 %v319
    %v1729 = vunpack.c.h.b16 %v319
    %v1730 = vunpack.c.l.b16 %v320
    %v1731 = vunpack.c.h.b16 %v320
    %v1732 = vunpack.c.l.b16 %v321
    %v1733 = vunpack.c.h.b16 %v321
    %v1734 = vunpack.c.l.b16 %v322
    %v1735 = vunpack.c.h.b16 %v322
    %v1736 = vunpack.c.l.b16 %v323
    %v1737 = vunpack.c.h.b16 %v323
    %v1738 = vunpack.c.l.b16 %v324
    %v1739 = vunpack.c.h.b16 %v324
    %v1740 = vunpack.c.l.b16 %v325
    %v1741 = vunpack.c.h.b16 %v325
    %v1742 = vunpack.c.l.b16 %v326
    %v1743 = vunpack.c.h.b16 %v326
    %v1744 = vunpack.c.l.b16 %v327
    %v1745 = vunpack.c.h.b16 %v327
    %v1746 = vunpack.c.l.b16 %v328
    %v1747 = vunpack.c.h.b16 %v328
    %v1748 = vunpack.c.l.b16 %v329
    %v1749 = vunpack.c.h.b16 %v329
    %v1750 = vunpack.c.l.b16 %v330
    %v1751 = vunpack.c.h.b16 %v330
    %v1752 = vunpack.c.l.b16 %v331
    %v1753 = vunpack.c.h.b16 %v331
    %v1754 = vunpack.c.l.b16 %v332
    %v1755 = vunpack.c.h.b16 %v332
    %v1756 = vunpack.c.l.b16 %v333
    %v1757 = vunpack.c.h.b16 %v333
    %v1758 = vunpack.c.l.b16 %v334
    %v1759 = vunpack.c.h.b16 %v334
    %v1760 = vunpack.c.l.b16 %v335
    %v1761 = vunpack.c.h.b16 %v335
    %v1762 = vunpack.c.l.b16 %v336
    %v1763 = vunpack.c.h.b16 %v336
    %v1764 = vunpack.c.l.b16 %v337
    %v1765 = vunpack.c.h.b16 %v337
    %v1766 = vunpack.c.l.b16 %v338
    %v1767 = vunpack.c.h.b16 %v338
    %v1768 = vunpack.c.l.b16 %v339
    %v1769 = vunpack.c.h.b16 %v339
    %v1770 = vunpack.c.l.b16 %v340
    %v1771 = vunpack.c.h.b16 %v340
    %v1772 = vunpack.c.l.b16 %v341
    %v1773 = vunpack.c.h.b16 %v341
    %v1774 = vunpack.c.l.b16 %v342
    %v1775 = vunpack.c.h.b16 %v342
    %v1776 = vunpack.c.l.b16 %v343
    %v1777 = vunpack.c.h.b16 %v343
    %v1778 = vunpack.c.l.b16 %v344
    %v1779 = vunpack.c.h.b16 %v344
    %v1780 = vunpack.c.l.b16 %v345
    %v1781 = vunpack.c.h.b16 %v345
    %v1782 = vunpack.c.l.b16 %v346
    %v1783 = vunpack.c.h.b16 %v346
    %v1784 = vunpack.c.l.b16 %v347
    %v1785 = vunpack.c.h.b16 %v347
    %v1786 = vunpack.c.l.b16 %v348
    %v1787 = vunpack.c.h.b16 %v348
    %v1788 = vunpack.c.l.b16 %v349
    %v1789 = vunpack.c.h.b16 %v349
    %v1790 = vunpack.c.l.b16 %v350
    %v1791 = vunpack.c.h.b16 %v350
    %v1792 = vunpack.c.l.b16 %v351
    %v1793 = vunpack.c.h.b16 %v351
    %v1794 = vunpack.c.l.b16 %v352
    %v1795 = vunpack.c.h.b16 %v352
    %v1796 = vunpack.c.l.b16 %v353
    %v1797 = vunpack.c.h.b16 %v353
    %v1798 = vunpack.c.l.b16 %v354
    %v1799 = vunpack.c.h.b16 %v354
    %v1800 = vunpack.c.l.b16 %v355
    %v1801 = vunpack.c.h.b16 %v355
    %v1802 = vunpack.c.l.b16 %v356
    %v1803 = vunpack.c.h.b16 %v356
    %v1804 = vunpack.c.l.b16 %v357
    %v1805 = vunpack.c.h.b16 %v357
    %v1806 = vunpack.c.l.b16 %v358
    %v1807 = vunpack.c.h.b16 %v358
    %v1808 = vunpack.c.l.b16 %v359
    %v1809 = vunpack.c.h.b16 %v359
    %v1810 = vunpack.c.l.b16 %v360
    %v1811 = vunpack.c.h.b16 %v360
    %v1812 = vunpack.c.l.b16 %v361
    %v1813 = vunpack.c.h.b16 %v361
    %v1814 = vunpack.c.l.b16 %v362
    %v1815 = vunpack.c.h.b16 %v362
    %v1816 = vunpack.c.l.b16 %v363
    %v1817 = vunpack.c.h.b16 %v363
    %v1818 = vunpack.c.l.b16 %v364
    %v1819 = vunpack.c.h.b16 %v364
    %v1820 = vunpack.c.l.b16 %v365
    %v1821 = vunpack.c.h.b16 %v365
    %v1822 = vunpack.c.l.b16 %v366
    %v1823 = vunpack.c.h.b16 %v366
    %v1824 = vunpack.c.l.b16 %v367
    %v1825 = vunpack.c.h.b16 %v367
    %v1826 = vunpack.c.l.b16 %v368
    %v1827 = vunpack.c.h.b16 %v368
    %v1828 = vunpack.c.l.b16 %v369
    %v1829 = vunpack.c.h.b16 %v369
    %v1830 = vunpack.c.l.b16 %v370
    %v1831 = vunpack.c.h.b16 %v370
    %v1832 = vunpack.c.l.b16 %v371
    %v1833 = vunpack.c.h.b16 %v371
    %v1834 = vunpack.c.l.b16 %v372
    %v1835 = vunpack.c.h.b16 %v372
    %v1836 = vunpack.c.l.b16 %v373
    %v1837 = vunpack.c.h.b16 %v373
    %v1838 = vunpack.c.l.b16 %v374
    %v1839 = vunpack.c.h.b16 %v374
    %v1840 = vunpack.c.l.b16 %v375
    %v1841 = vunpack.c.h.b16 %v375
    %v1842 = vunpack.c.l.b16 %v376
    %v1843 = vunpack.c.h.b16 %v376
    %v1844 = vunpack.c.l.b16 %v377
    %v1845 = vunpack.c.h.b16 %v377
    %v1846 = vunpack.c.l.b16 %v378
    %v1847 = vunpack.c.h.b16 %v378
    %v1848 = vunpack.c.l.b16 %v379
    %v1849 = vunpack.c.h.b16 %v379
    %v1850 = vunpack.c.l.b16 %v380
    %v1851 = vunpack.c.h.b16 %v380
    %v1852 = vunpack.c.l.b16 %v381
    %v1853 = vunpack.c.h.b16 %v381
    %v1854 = vunpack.c.l.b16 %v382
    %v1855 = vunpack.c.h.b16 %v382
    %v1856 = vunpack.c.l.b16 %v383
    %v1857 = vunpack.c.h.b16 %v383
    %v1858 = vunpack.c.l.b16 %v384
    %v1859 = vunpack.c.h.b16 %v384
    %v1860 = vunpack.c.l.b16 %v385
    %v1861 = vunpack.c.h.b16 %v385
    %v1862 = vunpack.c.l.b16 %v386
    %v1863 = vunpack.c.h.b16 %v386
    %v1864 = vunpack.c.l.b16 %v387
    %v1865 = vunpack.c.h.b16 %v387
    %v1866 = vunpack.c.l.b16 %v388
    %v1867 = vunpack.c.h.b16 %v388
    %v1868 = vunpack.c.l.b16 %v389
    %v1869 = vunpack.c.h.b16 %v389
    %v1870 = vunpack.c.l.b16 %v390
    %v1871 = vunpack.c.h.b16 %v390
    %v1872 = vunpack.c.l.b16 %v391
    %v1873 = vunpack.c.h.b16 %v391
    %v1874 = vunpack.c.l.b16 %v392
    %v1875 = vunpack.c.h.b16 %v392
    %v1876 = vunpack.c.l.b16 %v393
    %v1877 = vunpack.c.h.b16 %v393
    %v1878 = vunpack.c.l.b16 %v394
    %v1879 = vunpack.c.h.b16 %v394
    %v1880 = vunpack.c.l.b16 %v395
    %v1881 = vunpack.c.h.b16 %v395
    %v1882 = vunpack.c.l.b16 %v396
    %v1883 = vunpack.c.h.b16 %v396
    %v1884 = vunpack.c.l.b16 %v397
    %v1885 = vunpack.c.h.b16 %v397
    %v1886 = vunpack.c.l.b16 %v398
    %v1887 = vunpack.c.h.b16 %v398
    %v1888 = vunpack.c.l.b16 %v399
    %v1889 = vunpack.c.h.b16 %v399
    %v1890 = vunpack.c.l.b16 %v400
    %v1891 = vunpack.c.h.b16 %v400
    %v1892 = vunpack.c.l.b16 %v401
    %v1893 = vunpack.c.h.b16 %v401
    %v1894 = vunpack.c.l.b16 %v402
    %v1895 = vunpack.c.h.b16 %v402
    %v1896 = vunpack.c.l.b16 %v403
    %v1897 = vunpack.c.h.b16 %v403
    %v1898 = vunpack.c.l.b16 %v404
    %v1899 = vunpack.c.h.b16 %v404
    %v1900 = vunpack.c.l.b16 %v405
    %v1901 = vunpack.c.h.b16 %v405
    %v1902 = vunpack.c.l.b16 %v406
    %v1903 = vunpack.c.h.b16 %v406
    %v1904 = vunpack.c.l.b16 %v407
    %v1905 = vunpack.c.h.b16 %v407
    %v1906 = vunpack.c.l.b16 %v408
    %v1907 = vunpack.c.h.b16 %v408
    %v1908 = vunpack.c.l.b16 %v409
    %v1909 = vunpack.c.h.b16 %v409
    %v1910 = vunpack.c.l.b16 %v410
    %v1911 = vunpack.c.h.b16 %v410
    %v1912 = vunpack.c.l.b16 %v411
    %v1913 = vunpack.c.h.b16 %v411
    %v1914 = vunpack.c.l.b16 %v412
    %v1915 = vunpack.c.h.b16 %v412
    %v1916 = vunpack.c.l.b16 %v413
    %v1917 = vunpack.c.h.b16 %v413
    %v1918 = vunpack.c.l.b16 %v414
    %v1919 = vunpack.c.h.b16 %v414
    %v1920 = vunpack.c.l.b16 %v415
    %v1921 = vunpack.c.h.b16 %v415
    %v1922 = vunpack.c.l.b16 %v416
    %v1923 = vunpack.c.h.b16 %v416
    %v1924 = vunpack.c.l.b16 %v417
    %v1925 = vunpack.c.h.b16 %v417
    %v1926 = vunpack.c.l.b16 %v418
    %v1927 = vunpack.c.h.b16 %v418
    %v1928 = vunpack.c.l.b16 %v419
    %v1929 = vunpack.c.h.b16 %v419
    %v1930 = vunpack.c.l.b16 %v420
    %v1931 = vunpack.c.h.b16 %v420
    %v1932 = vunpack.c.l.b16 %v421
    %v1933 = vunpack.c.h.b16 %v421
    %v1934 = vunpack.c.l.b16 %v422
    %v1935 = vunpack.c.h.b16 %v422
    %v1936 = vunpack.c.l.b16 %v423
    %v1937 = vunpack.c.h.b16 %v423
    %v1938 = vunpack.c.l.b16 %v424
    %v1939 = vunpack.c.h.b16 %v424
    %v1940 = vunpack.c.l.b16 %v425
    %v1941 = vunpack.c.h.b16 %v425
    %v1942 = vunpack.c.l.b16 %v426
    %v1943 = vunpack.c.h.b16 %v426
    %v1944 = vunpack.c.l.b16 %v427
    %v1945 = vunpack.c.h.b16 %v427
    %v1946 = vunpack.c.l.b16 %v428
    %v1947 = vunpack.c.h.b16 %v428
    %v1948 = vunpack.c.l.b16 %v429
    %v1949 = vunpack.c.h.b16 %v429
    %v1950 = vunpack.c.l.b16 %v430
    %v1951 = vunpack.c.h.b16 %v430
    %v1952 = vunpack.c.l.b16 %v431
    %v1953 = vunpack.c.h.b16 %v431
    %v1954 = vunpack.c.l.b16 %v432
    %v1955 = vunpack.c.h.b16 %v432
    %v1956 = vunpack.c.l.b16 %v433
    %v1957 = vunpack.c.h.b16 %v433
    %v1958 = vunpack.c.l.b16 %v434
    %v1959 = vunpack.c.h.b16 %v434
    %v1960 = vunpack.c.l.b16 %v435
    %v1961 = vunpack.c.h.b16 %v435
    %v1962 = vunpack.c.l.b16 %v436
    %v1963 = vunpack.c.h.b16 %v436
    %v1964 = vunpack.c.l.b16 %v437
    %v1965 = vunpack.c.h.b16 %v437
    %v1966 = vunpack.c.l.b16 %v438
    %v1967 = vunpack.c.h.b16 %v438
    %v1968 = vunpack.c.l.b16 %v439
    %v1969 = vunpack.c.h.b16 %v439
    %v1970 = vunpack.c.l.b16 %v440
    %v1971 = vunpack.c.h.b16 %v440
    %v1972 = vunpack.c.l.b16 %v441
    %v1973 = vunpack.c.h.b16 %v441
    %v1974 = vunpack.c.l.b16 %v442
    %v1975 = vunpack.c.h.b16 %v442
    %v1976 = vunpack.c.l.b16 %v443
    %v1977 = vunpack.c.h.b16 %v443
    %v1978 = vunpack.c.l.b16 %v444
    %v1979 = vunpack.c.h.b16 %v444
    %v1980 = vunpack.c.l.b16 %v445
    %v1981 = vunpack.c.h.b16 %v445
    %v1982 = vunpack.c.l.b16 %v446
    %v1983 = vunpack.c.h.b16 %v446
    %v1984 = vunpack.c.l.b16 %v447
    %v1985 = vunpack.c.h.b16 %v447
    %v1986 = vunpack.c.l.b16 %v448
    %v1987 = vunpack.c.h.b16 %v448
    %v1988 = vunpack.c.l.b16 %v449
    %v1989 = vunpack.c.h.b16 %v449
    %v1990 = vunpack.c.l.b16 %v450
    %v1991 = vunpack.c.h.b16 %v450
    %v1992 = vunpack.c.l.b16 %v451
    %v1993 = vunpack.c.h.b16 %v451
    %v1994 = vunpack.c.l.b16 %v452
    %v1995 = vunpack.c.h.b16 %v452
    %v1996 = vunpack.c.l.b16 %v453
    %v1997 = vunpack.c.h.b16 %v453
    %v1998 = vunpack.c.l.b16 %v454
    %v1999 = vunpack.c.h.b16 %v454
    %v2000 = vunpack.c.l.b16 %v455
    %v2001 = vunpack.c.h.b16 %v455
    %v2002 = vunpack.c.l.b16 %v456
    %v2003 = vunpack.c.h.b16 %v456
    %v2004 = vunpack.c.l.b16 %v457
    %v2005 = vunpack.c.h.b16 %v457
    %v2006 = vunpack.c.l.b16 %v458
    %v2007 = vunpack.c.h.b16 %v458
    %v2008 = vunpack.c.l.b16 %v459
    %v2009 = vunpack.c.h.b16 %v459
    %v2010 = vunpack.c.l.b16 %v460
    %v2011 = vunpack.c.h.b16 %v460
    %v2012 = vunpack.c.l.b16 %v461
    %v2013 = vunpack.c.h.b16 %v461
    %v2014 = vunpack.c.l.b16 %v462
    %v2015 = vunpack.c.h.b16 %v462
    %v2016 = vunpack.c.l.b16 %v463
    %v2017 = vunpack.c.h.b16 %v463
    %v2018 = vunpack.c.l.b16 %v464
    %v2019 = vunpack.c.h.b16 %v464
    %v2020 = vunpack.c.l.b16 %v465
    %v2021 = vunpack.c.h.b16 %v465
    %v2022 = vunpack.c.l.b16 %v466
    %v2023 = vunpack.c.h.b16 %v466
    %v2024 = vunpack.c.l.b16 %v467
    %v2025 = vunpack.c.h.b16 %v467
    %v2026 = vunpack.c.l.b16 %v468
    %v2027 = vunpack.c.h.b16 %v468
    %v2028 = vunpack.c.l.b16 %v469
    %v2029 = vunpack.c.h.b16 %v469
    %v2030 = vunpack.c.l.b16 %v470
    %v2031 = vunpack.c.h.b16 %v470
    %v2032 = vunpack.c.l.b16 %v471
    %v2033 = vunpack.c.h.b16 %v471
    %v2034 = vunpack.c.l.b16 %v472
    %v2035 = vunpack.c.h.b16 %v472
    %v2036 = vunpack.c.l.b16 %v473
    %v2037 = vunpack.c.h.b16 %v473
    %v2038 = vunpack.c.l.b16 %v474
    %v2039 = vunpack.c.h.b16 %v474
    %v2040 = vunpack.c.l.b16 %v475
    %v2041 = vunpack.c.h.b16 %v475
    %v2042 = vunpack.c.l.b16 %v476
    %v2043 = vunpack.c.h.b16 %v476
    %v2044 = vunpack.c.l.b16 %v477
    %v2045 = vunpack.c.h.b16 %v477
    %v2046 = vunpack.c.l.b16 %v478
    %v2047 = vunpack.c.h.b16 %v478
    %v2048 = vunpack.c.l.b16 %v479
    %v2049 = vunpack.c.h.b16 %v479
    %v2050 = vunpack.c.l.b16 %v480
    %v2051 = vunpack.c.h.b16 %v480
    %v2052 = vunpack.c.l.b16 %v481
    %v2053 = vunpack.c.h.b16 %v481
    %v2054 = vunpack.c.l.b16 %v482
    %v2055 = vunpack.c.h.b16 %v482
    %v2056 = vunpack.c.l.b16 %v483
    %v2057 = vunpack.c.h.b16 %v483
    %v2058 = vunpack.c.l.b16 %v484
    %v2059 = vunpack.c.h.b16 %v484
    %v2060 = vunpack.c.l.b16 %v485
    %v2061 = vunpack.c.h.b16 %v485
    %v2062 = vunpack.c.l.b16 %v486
    %v2063 = vunpack.c.h.b16 %v486
    %v2064 = vunpack.c.l.b16 %v487
    %v2065 = vunpack.c.h.b16 %v487
    %v2066 = vunpack.c.l.b16 %v488
    %v2067 = vunpack.c.h.b16 %v488
    %v2068 = vunpack.c.l.b16 %v489
    %v2069 = vunpack.c.h.b16 %v489
    %v2070 = vunpack.c.l.b16 %v490
    %v2071 = vunpack.c.h.b16 %v490
    %v2072 = vunpack.c.l.b16 %v491
    %v2073 = vunpack.c.h.b16 %v491
    %v2074 = vunpack.c.l.b16 %v492
    %v2075 = vunpack.c.h.b16 %v492
    %v2076 = vunpack.c.l.b16 %v493
    %v2077 = vunpack.c.h.b16 %v493
    %v2078 = vunpack.c.l.b16 %v494
    %v2079 = vunpack.c.h.b16 %v494
    %v2080 = vunpack.c.l.b16 %v495
    %v2081 = vunpack.c.h.b16 %v495
    %v2082 = vunpack.c.l.b16 %v496
    %v2083 = vunpack.c.h.b16 %v496
    %v2084 = vunpack.c.l.b16 %v497
    %v2085 = vunpack.c.h.b16 %v497
    %v2086 = vunpack.c.l.b16 %v498
    %v2087 = vunpack.c.h.b16 %v498
    %v2088 = vunpack.c.l.b16 %v499
    %v2089 = vunpack.c.h.b16 %v499
    %v2090 = vunpack.c.l.b16 %v500
    %v2091 = vunpack.c.h.b16 %v500
    %v2092 = vunpack.c.l.b16 %v501
    %v2093 = vunpack.c.h.b16 %v501
    %v2094 = vunpack.c.l.b16 %v502
    %v2095 = vunpack.c.h.b16 %v502
    %v2096 = vunpack.c.l.b16 %v503
    %v2097 = vunpack.c.h.b16 %v503
    %v2098 = vunpack.c.l.b16 %v504
    %v2099 = vunpack.c.h.b16 %v504
    %v2100 = vunpack.c.l.b16 %v505
    %v2101 = vunpack.c.h.b16 %v505
    %v2102 = vunpack.c.l.b16 %v506
    %v2103 = vunpack.c.h.b16 %v506
    %v2104 = vunpack.c.l.b16 %v507
    %v2105 = vunpack.c.h.b16 %v507
    %v2106 = vunpack.c.l.b16 %v508
    %v2107 = vunpack.c.h.b16 %v508
    %v2108 = vunpack.c.l.b16 %v509
    %v2109 = vunpack.c.h.b16 %v509
    %v2110 = vunpack.c.l.b16 %v510
    %v2111 = vunpack.c.h.b16 %v510
    %v2112 = vunpack.c.l.b16 %v511
    %v2113 = vunpack.c.h.b16 %v511
    %v2114 = vunpack.c.l.b16 %v512
    %v2115 = vunpack.c.h.b16 %v512
    %v2116 = vunpack.c.l.b16 %v513
    %v2117 = vunpack.c.h.b16 %v513
    %v2118 = vunpack.c.l.b16 %v514
    %v2119 = vunpack.c.h.b16 %v514
    %v2120 = vunpack.c.l.b16 %v515
    %v2121 = vunpack.c.h.b16 %v515
    %v2122 = vunpack.c.l.b16 %v516
    %v2123 = vunpack.c.h.b16 %v516
    %v2124 = vunpack.c.l.b16 %v517
    %v2125 = vunpack.c.h.b16 %v517
    %v2126 = vunpack.c.l.b16 %v518
    %v2127 = vunpack.c.h.b16 %v518
    %v2128 = vunpack.c.l.b16 %v519
    %v2129 = vunpack.c.h.b16 %v519
    %v2130 = vunpack.c.l.b16 %v520
    %v2131 = vunpack.c.h.b16 %v520
    %v2132 = vunpack.c.l.b16 %v521
    %v2133 = vunpack.c.h.b16 %v521
    %v2134 = vunpack.c.l.b16 %v522
    %v2135 = vunpack.c.h.b16 %v522
    %v2136 = vunpack.c.l.b16 %v523
    %v2137 = vunpack.c.h.b16 %v523
    %v2138 = vunpack.c.l.b16 %v524
    %v2139 = vunpack.c.h.b16 %v524
    %v2140 = vunpack.c.l.b16 %v525
    %v2141 = vunpack.c.h.b16 %v525
    %v2142 = vunpack.c.l.b16 %v526
    %v2143 = vunpack.c.h.b16 %v526
    %v2144 = vunpack.c.l.b16 %v527
    %v2145 = vunpack.c.h.b16 %v527
    %v2146 = vunpack.c.l.b16 %v528
    %v2147 = vunpack.c.h.b16 %v528
    %v2148 = vunpack.c.l.b16 %v529
    %v2149 = vunpack.c.h.b16 %v529
    %v2150 = vunpack.c.l.b16 %v530
    %v2151 = vunpack.c.h.b16 %v530
    %v2152 = vunpack.c.l.b16 %v531
    %v2153 = vunpack.c.h.b16 %v531
    %v2154 = vunpack.c.l.b16 %v532
    %v2155 = vunpack.c.h.b16 %v532
    %v2156 = vunpack.c.l.b16 %v533
    %v2157 = vunpack.c.h.b16 %v533
    %v2158 = vunpack.c.l.b16 %v534
    %v2159 = vunpack.c.h.b16 %v534
    %v2160 = vunpack.c.l.b16 %v535
    %v2161 = vunpack.c.h.b16 %v535
    %v2162 = vunpack.c.l.b16 %v536
    %v2163 = vunpack.c.h.b16 %v536
    %v2164 = vunpack.c.l.b16 %v537
    %v2165 = vunpack.c.h.b16 %v537
    %v2166 = vunpack.c.l.b16 %v538
    %v2167 = vunpack.c.h.b16 %v538
    %v2168 = vunpack.c.l.b16 %v539
    %v2169 = vunpack.c.h.b16 %v539
    %v2170 = vunpack.c.l.b16 %v540
    %v2171 = vunpack.c.h.b16 %v540
    %v2172 = vunpack.c.l.b16 %v541
    %v2173 = vunpack.c.h.b16 %v541
    %v2174 = vunpack.c.l.b16 %v542
    %v2175 = vunpack.c.h.b16 %v542
    %v2176 = vunpack.c.l.b16 %v543
    %v2177 = vunpack.c.h.b16 %v543
    %v2178 = vunpack.c.l.b16 %v544
    %v2179 = vunpack.c.h.b16 %v544
    %v2180 = vunpack.c.l.b16 %v545
    %v2181 = vunpack.c.h.b16 %v545
    %v2182 = vunpack.c.l.b16 %v546
    %v2183 = vunpack.c.h.b16 %v546
    %v2184 = vunpack.c.l.b16 %v547
    %v2185 = vunpack.c.h.b16 %v547
    %v2186 = vunpack.c.l.b16 %v548
    %v2187 = vunpack.c.h.b16 %v548
    %v2188 = vunpack.c.l.b16 %v549
    %v2189 = vunpack.c.h.b16 %v549
    %v2190 = vunpack.c.l.b16 %v550
    %v2191 = vunpack.c.h.b16 %v550
    %v2192 = vunpack.c.l.b16 %v551
    %v2193 = vunpack.c.h.b16 %v551
    %v2194 = vunpack.c.l.b16 %v552
    %v2195 = vunpack.c.h.b16 %v552
    %v2196 = vunpack.c.l.b16 %v553
    %v2197 = vunpack.c.h.b16 %v553
    %v2198 = vunpack.c.l.b16 %v554
    %v2199 = vunpack.c.h.b16 %v554
    %v2200 = vunpack.c.l.b16 %v555
    %v2201 = vunpack.c.h.b16 %v555
    %v2202 = vunpack.c.l.b16 %v556
    %v2203 = vunpack.c.h.b16 %v556
    %v2204 = vunpack.c.l.b16 %v557
    %v2205 = vunpack.c.h.b16 %v557
    %v2206 = vunpack.c.l.b16 %v558
    %v2207 = vunpack.c.h.b16 %v558
    %v2208 = vunpack.c.l.b16 %v559
    %v2209 = vunpack.c.h.b16 %v559
    %v2210 = vunpack.c.l.b16 %v560
    %v2211 = vunpack.c.h.b16 %v560
    %v2212 = vunpack.c.l.b16 %v561
    %v2213 = vunpack.c.h.b16 %v561
    %v2214 = vunpack.c.l.b16 %v562
    %v2215 = vunpack.c.h.b16 %v562
    %v2216 = vunpack.c.l.b16 %v563
    %v2217 = vunpack.c.h.b16 %v563
    %v2218 = vunpack.c.l.b16 %v564
    %v2219 = vunpack.c.h.b16 %v564
    %v2220 = vunpack.c.l.b16 %v565
    %v2221 = vunpack.c.h.b16 %v565
    %v2222 = vunpack.c.l.b16 %v566
    %v2223 = vunpack.c.h.b16 %v566
    %v2224 = vunpack.c.l.b16 %v567
    %v2225 = vunpack.c.h.b16 %v567
    %v2226 = vunpack.c.l.b16 %v568
    %v2227 = vunpack.c.h.b16 %v568
    %v2228 = vunpack.c.l.b16 %v569
    %v2229 = vunpack.c.h.b16 %v569
    %v2230 = vunpack.c.l.b16 %v570
    %v2231 = vunpack.c.h.b16 %v570
    %v2232 = vunpack.c.l.b16 %v571
    %v2233 = vunpack.c.h.b16 %v571
    %v2234 = vunpack.c.l.b16 %v572
    %v2235 = vunpack.c.h.b16 %v572
    %v2236 = vunpack.c.l.b16 %v573
    %v2237 = vunpack.c.h.b16 %v573
    %v2238 = vunpack.c.l.b16 %v574
    %v2239 = vunpack.c.h.b16 %v574
    %v2240 = vunpack.c.l.b16 %v575
    %v2241 = vunpack.c.h.b16 %v575
    %v2242 = vunpack.c.l.b16 %v576
    %v2243 = vunpack.c.h.b16 %v576
    %v2244 = vunpack.c.l.b16 %v577
    %v2245 = vunpack.c.h.b16 %v577
    %v2246 = vunpack.c.l.b16 %v578
    %v2247 = vunpack.c.h.b16 %v578
    %v2248 = vunpack.c.l.b16 %v579
    %v2249 = vunpack.c.h.b16 %v579
    %v2250 = vunpack.c.l.b16 %v580
    %v2251 = vunpack.c.h.b16 %v580
    %v2252 = vunpack.c.l.b16 %v581
    %v2253 = vunpack.c.h.b16 %v581
    %v2254 = vunpack.c.l.b16 %v582
    %v2255 = vunpack.c.h.b16 %v582
    %v2256 = vunpack.c.l.b16 %v583
    %v2257 = vunpack.c.h.b16 %v583
    %v2258 = vunpack.c.l.b16 %v584
    %v2259 = vunpack.c.h.b16 %v584
    %v2260 = vunpack.c.l.b16 %v585
    %v2261 = vunpack.c.h.b16 %v585
    %v2262 = vunpack.c.l.b16 %v586
    %v2263 = vunpack.c.h.b16 %v586
    %v2264 = vunpack.c.l.b16 %v587
    %v2265 = vunpack.c.h.b16 %v587
    %v2266 = vunpack.c.l.b16 %v588
    %v2267 = vunpack.c.h.b16 %v588
    %v2268 = vunpack.c.l.b16 %v589
    %v2269 = vunpack.c.h.b16 %v589
    %v2270 = vunpack.c.l.b16 %v590
    %v2271 = vunpack.c.h.b16 %v590
    %v2272 = vunpack.c.l.b16 %v591
    %v2273 = vunpack.c.h.b16 %v591
    %v2274 = vunpack.c.l.b16 %v592
    %v2275 = vunpack.c.h.b16 %v592
    %v2276 = vunpack.c.l.b16 %v593
    %v2277 = vunpack.c.h.b16 %v593
    %v2278 = vunpack.c.l.b16 %v594
    %v2279 = vunpack.c.h.b16 %v594
    %v2280 = vunpack.c.l.b16 %v595
    %v2281 = vunpack.c.h.b16 %v595
    %v2282 = vunpack.c.l.b16 %v596
    %v2283 = vunpack.c.h.b16 %v596
    %v2284 = vunpack.c.l.b16 %v597
    %v2285 = vunpack.c.h.b16 %v597
    %v2286 = vunpack.c.l.b16 %v598
    %v2287 = vunpack.c.h.b16 %v598
    %v2288 = vunpack.c.l.b16 %v599
    %v2289 = vunpack.c.h.b16 %v599
    %v2290 = vunpack.c.l.b16 %v600
    %v2291 = vunpack.c.h.b16 %v600
    %v2292 = vunpack.c.l.b16 %v601
    %v2293 = vunpack.c.h.b16 %v601
    %v2294 = vunpack.c.l.b16 %v602
    %v2295 = vunpack.c.h.b16 %v602
    %v2296 = vunpack.c.l.b16 %v603
    %v2297 = vunpack.c.h.b16 %v603
    %v2298 = vunpack.c.l.b16 %v604
    %v2299 = vunpack.c.h.b16 %v604
    %v2300 = vunpack.c.l.b16 %v605
    %v2301 = vunpack.c.h.b16 %v605
    %v2302 = vunpack.c.l.b16 %v606
    %v2303 = vunpack.c.h.b16 %v606
    %v2304 = vunpack.c.l.b16 %v607
    %v2305 = vunpack.c.h.b16 %v607
    %v2306 = vunpack.c.l.b16 %v608
    %v2307 = vunpack.c.h.b16 %v608
    %v2308 = vunpack.c.l.b16 %v609
    %v2309 = vunpack.c.h.b16 %v609
    %v2310 = vunpack.c.l.b16 %v610
    %v2311 = vunpack.c.h.b16 %v610
    %v2312 = vunpack.c.l.b16 %v611
    %v2313 = vunpack.c.h.b16 %v611
    %v2314 = vunpack.c.l.b16 %v612
    %v2315 = vunpack.c.h.b16 %v612
    %v2316 = vunpack.c.l.b16 %v613
    %v2317 = vunpack.c.h.b16 %v613
    %v2318 = vunpack.c.l.b16 %v614
    %v2319 = vunpack.c.h.b16 %v614
    %v2320 = vunpack.c.l.b16 %v615
    %v2321 = vunpack.c.h.b16 %v615
    %v2322 = vpack.c.b16 %v1302, %v1298
    %v2323 = vpack.c.b16 %v1303, %v1299
    %v2324 = vpack.c.b16 %v1304, %v1300
    %v2325 = vpack.c.b16 %v1305, %v1301
    %v2326 = vpack.c.b16 %v1310, %v1306
    %v2327 = vpack.c.b16 %v1311, %v1307
    %v2328 = vpack.c.b16 %v1312, %v1308
    %v2329 = vpack.c.b16 %v1313, %v1309
    %v2330 = vpack.c.b16 %v1318, %v1314
    %v2331 = vpack.c.b16 %v1319, %v1315
    %v2332 = vpack.c.b16 %v1320, %v1316
    %v2333 = vpack.c.b16 %v1321, %v1317
    %v2334 = vpack.c.b16 %v1326, %v1322
    %v2335 = vpack.c.b16 %v1327, %v1323
    %v2336 = vpack.c.b16 %v1328, %v1324
    %v2337 = vpack.c.b16 %v1329, %v1325
    %v2338 = vpack.c.b16 %v1334, %v1330
    %v2339 = vpack.c.b16 %v1335, %v1331
    %v2340 = vpack.c.b16 %v1336, %v1332
    %v2341 = vpack.c.b16 %v1337, %v1333
    %v2342 = vpack.c.b16 %v1342, %v1338
    %v2343 = vpack.c.b16 %v1343, %v1339
    %v2344 = vpack.c.b16 %v1344, %v1340
    %v2345 = vpack.c.b16 %v1345, %v1341
    %v2346 = vpack.c.b16 %v1350, %v1346
    %v2347 = vpack.c.b16 %v1351, %v1347
    %v2348 = vpack.c.b16 %v1352, %v1348
    %v2349 = vpack.c.b16 %v1353, %v1349
    %v2350 = vpack.c.b16 %v1358, %v1354
    %v2351 = vpack.c.b16 %v1359, %v1355
    %v2352 = vpack.c.b16 %v1360, %v1356
    %v2353 = vpack.c.b16 %v1361, %v1357
    %v2354 = vpack.c.b16 %v1366, %v1362
    %v2355 = vpack.c.b16 %v1367, %v1363
    %v2356 = vpack.c.b16 %v1368, %v1364
    %v2357 = vpack.c.b16 %v1369, %v1365
    %v2358 = vpack.c.b16 %v1374, %v1370
    %v2359 = vpack.c.b16 %v1375, %v1371
    %v2360 = vpack.c.b16 %v1376, %v1372
    %v2361 = vpack.c.b16 %v1377, %v1373
    %v2362 = vpack.c.b16 %v1382, %v1378
    %v2363 = vpack.c.b16 %v1383, %v1379
    %v2364 = vpack.c.b16 %v1384, %v1380
    %v2365 = vpack.c.b16 %v1385, %v1381
    %v2366 = vpack.c.b16 %v1390, %v1386
    %v2367 = vpack.c.b16 %v1391, %v1387
    %v2368 = vpack.c.b16 %v1392, %v1388
    %v2369 = vpack.c.b16 %v1393, %v1389
    %v2370 = vpack.c.b16 %v1398, %v1394
    %v2371 = vpack.c.b16 %v1399, %v1395
    %v2372 = vpack.c.b16 %v1400, %v1396
    %v2373 = vpack.c.b16 %v1401, %v1397
    %v2374 = vpack.c.b16 %v1406, %v1402
    %v2375 = vpack.c.b16 %v1407, %v1403
    %v2376 = vpack.c.b16 %v1408, %v1404
    %v2377 = vpack.c.b16 %v1409, %v1405
    %v2378 = vpack.c.b16 %v1414, %v1410
    %v2379 = vpack.c.b16 %v1415, %v1411
    %v2380 = vpack.c.b16 %v1416, %v1412
    %v2381 = vpack.c.b16 %v1417, %v1413
    %v2382 = vpack.c.b16 %v1422, %v1418
    %v2383 = vpack.c.b16 %v1423, %v1419
    %v2384 = vpack.c.b16 %v1424, %v1420
    %v2385 = vpack.c.b16 %v1425, %v1421
    %v2386 = vpack.c.b16 %v1430, %v1426
    %v2387 = vpack.c.b16 %v1431, %v1427
    %v2388 = vpack.c.b16 %v1432, %v1428
    %v2389 = vpack.c.b16 %v1433, %v1429
    %v2390 = vpack.c.b16 %v1438, %v1434
    %v2391 = vpack.c.b16 %v1439, %v1435
    %v2392 = vpack.c.b16 %v1440, %v1436
    %v2393 = vpack.c.b16 %v1441, %v1437
    %v2394 = vpack.c.b16 %v1446, %v1442
    %v2395 = vpack.c.b16 %v1447, %v1443
    %v2396 = vpack.c.b16 %v1448, %v1444
    %v2397 = vpack.c.b16 %v1449, %v1445
    %v2398 = vpack.c.b16 %v1454, %v1450
    %v2399 = vpack.c.b16 %v1455, %v1451
    %v2400 = vpack.c.b16 %v1456, %v1452
    %v2401 = vpack.c.b16 %v1457, %v1453
    %v2402 = vpack.c.b16 %v1462, %v1458
    %v2403 = vpack.c.b16 %v1463, %v1459
    %v2404 = vpack.c.b16 %v1464, %v1460
    %v2405 = vpack.c.b16 %v1465, %v1461
    %v2406 = vpack.c.b16 %v1470, %v1466
    %v2407 = vpack.c.b16 %v1471, %v1467
    %v2408 = vpack.c.b16 %v1472, %v1468
    %v2409 = vpack.c.b16 %v1473, %v1469
    %v2410 = vpack.c.b16 %v1478, %v1474
    %v2411 = vpack.c.b16 %v1479, %v1475
    %v2412 = vpack.c.b16 %v1480, %v1476
    %v2413 = vpack.c.b16 %v1481, %v1477
    %v2414 = vpack.c.b16 %v1486, %v1482
    %v2415 = vpack.c.b16 %v1487, %v1483
    %v2416 = vpack.c.b16 %v1488, %v1484
    %v2417 = vpack.c.b16 %v1489, %v1485
    %v2418 = vpack.c.b16 %v1494, %v1490
    %v2419 = vpack.c.b16 %v1495, %v1491
    %v2420 = vpack.c.b16 %v1496, %v1492
    %v2421 = vpack.c.b16 %v1497, %v1493
    %v2422 = vpack.c.b16 %v1502, %v1498
    %v2423 = vpack.c.b16 %v1503, %v1499
    %v2424 = vpack.c.b16 %v1504, %v1500
    %v2425 = vpack.c.b16 %v1505, %v1501
    %v2426 = vpack.c.b16 %v1510, %v1506
    %v2427 = vpack.c.b16 %v1511, %v1507
    %v2428 = vpack.c.b16 %v1512, %v1508
    %v2429 = vpack.c.b16 %v1513, %v1509
    %v2430 = vpack.c.b16 %v1518, %v1514
    %v2431 = vpack.c.b16 %v1519, %v1515
    %v2432 = vpack.c.b16 %v1520, %v1516
    %v2433 = vpack.c.b16 %v1521, %v1517
    %v2434 = vpack.c.b16 %v1526, %v1522
    %v2435 = vpack.c.b16 %v1527, %v1523
    %v2436 = vpack.c.b16 %v1528, %v1524
    %v2437 = vpack.c.b16 %v1529, %v1525
    %v2438 = vpack.c.b16 %v1534, %v1530
    %v2439 = vpack.c.b16 %v1535, %v1531
    %v2440 = vpack.c.b16 %v1536, %v1532
    %v2441 = vpack.c.b16 %v1537, %v1533
    %v2442 = vpack.c.b16 %v1542, %v1538
    %v2443 = vpack.c.b16 %v1543, %v1539
    %v2444 = vpack.c.b16 %v1544, %v1540
    %v2445 = vpack.c.b16 %v1545, %v1541
    %v2446 = vpack.c.b16 %v1550, %v1546
    %v2447 = vpack.c.b16 %v1551, %v1547
    %v2448 = vpack.c.b16 %v1552, %v1548
    %v2449 = vpack.c.b16 %v1553, %v1549
    %v2450 = vpack.c.b16 %v1558, %v1554
    %v2451 = vpack.c.b16 %v1559, %v1555
    %v2452 = vpack.c.b16 %v1560, %v1556
    %v2453 = vpack.c.b16 %v1561, %v1557
    %v2454 = vpack.c.b16 %v1566, %v1562
    %v2455 = vpack.c.b16 %v1567, %v1563
    %v2456 = vpack.c.b16 %v1568, %v1564
    %v2457 = vpack.c.b16 %v1569, %v1565
    %v2458 = vpack.c.b16 %v1574, %v1570
    %v2459 = vpack.c.b16 %v1575, %v1571
    %v2460 = vpack.c.b16 %v1576, %v1572
    %v2461 = vpack.c.b16 %v1577, %v1573
    %v2462 = vpack.c.b16 %v1582, %v1578
    %v2463 = vpack.c.b16 %v1583, %v1579
    %v2464 = vpack.c.b16 %v1584, %v1580
    %v2465 = vpack.c.b16 %v1585, %v1581
    %v2466 = vpack.c.b16 %v1590, %v1586
    %v2467 = vpack.c.b16 %v1591, %v1587
    %v2468 = vpack.c.b16 %v1592, %v1588
    %v2469 = vpack.c.b16 %v1593, %v1589
    %v2470 = vpack.c.b16 %v1598, %v1594
    %v2471 = vpack.c.b16 %v1599, %v1595
    %v2472 = vpack.c.b16 %v1600, %v1596
    %v2473 = vpack.c.b16 %v1601, %v1597
    %v2474 = vpack.c.b16 %v1606, %v1602
    %v2475 = vpack.c.b16 %v1607, %v1603
    %v2476 = vpack.c.b16 %v1608, %v1604
    %v2477 = vpack.c.b16 %v1609, %v1605
    %v2478 = vpack.c.b16 %v1614, %v1610
    %v2479 = vpack.c.b16 %v1615, %v1611
    %v2480 = vpack.c.b16 %v1616, %v1612
    %v2481 = vpack.c.b16 %v1617, %v1613
    %v2482 = vpack.c.b16 %v1622, %v1618
    %v2483 = vpack.c.b16 %v1623, %v1619
    %v2484 = vpack.c.b16 %v1624, %v1620
    %v2485 = vpack.c.b16 %v1625, %v1621
    %v2486 = vpack.c.b16 %v1630, %v1626
    %v2487 = vpack.c.b16 %v1631, %v1627
    %v2488 = vpack.c.b16 %v1632, %v1628
    %v2489 = vpack.c.b16 %v1633, %v1629
    %v2490 = vpack.c.b16 %v1638, %v1634
    %v2491 = vpack.c.b16 %v1639, %v1635
    %v2492 = vpack.c.b16 %v1640, %v1636
    %v2493 = vpack.c.b16 %v1641, %v1637
    %v2494 = vpack.c.b16 %v1646, %v1642
    %v2495 = vpack.c.b16 %v1647, %v1643
    %v2496 = vpack.c.b16 %v1648, %v1644
    %v2497 = vpack.c.b16 %v1649, %v1645
    %v2498 = vpack.c.b16 %v1654, %v1650
    %v2499 = vpack.c.b16 %v1655, %v1651
    %v2500 = vpack.c.b16 %v1656, %v1652
    %v2501 = vpack.c.b16 %v1657, %v1653
    %v2502 = vpack.c.b16 %v1662, %v1658
    %v2503 = vpack.c.b16 %v1663, %v1659
    %v2504 = vpack.c.b16 %v1664, %v1660
    %v2505 = vpack.c.b16 %v1665, %v1661
    %v2506 = vpack.c.b16 %v1670, %v1666
    %v2507 = vpack.c.b16 %v1671, %v1667
    %v2508 = vpack.c.b16 %v1672, %v1668
    %v2509 = vpack.c.b16 %v1673, %v1669
    %v2510 = vpack.c.b16 %v1678, %v1674
    %v2511 = vpack.c.b16 %v1679, %v1675
    %v2512 = vpack.c.b16 %v1680, %v1676
    %v2513 = vpack.c.b16 %v1681, %v1677
    %v2514 = vpack.c.b16 %v1686, %v1682
    %v2515 = vpack.c.b16 %v1687, %v1683
    %v2516 = vpack.c.b16 %v1688, %v1684
    %v2517 = vpack.c.b16 %v1689, %v1685
    %v2518 = vpack.c.b16 %v1694, %v1690
    %v2519 = vpack.c.b16 %v1695, %v1691
    %v2520 = vpack.c.b16 %v1696, %v1692
    %v2521 = vpack.c.b16 %v1697, %v1693
    %v2522 = vpack.c.b16 %v1702, %v1698
    %v2523 = vpack.c.b16 %v1703, %v1699
    %v2524 = vpack.c.b16 %v1704, %v1700
    %v2525 = vpack.c.b16 %v1705, %v1701
    %v2526 = vpack.c.b16 %v1710, %v1706
    %v2527 = vpack.c.b16 %v1711, %v1707
    %v2528 = vpack.c.b16 %v1712, %v1708
    %v2529 = vpack.c.b16 %v1713, %v1709
    %v2530 = vpack.c.b16 %v1718, %v1714
    %v2531 = vpack.c.b16 %v1719, %v1715
    %v2532 = vpack.c.b16 %v1720, %v1716
    %v2533 = vpack.c.b16 %v1721, %v1717
    %v2534 = vpack.c.b16 %v1726, %v1722
    %v2535 = vpack.c.b16 %v1727, %v1723
    %v2536 = vpack.c.b16 %v1728, %v1724
    %v2537 = vpack.c.b16 %v1729, %v1725
    %v2538 = vpack.c.b16 %v1734, %v1730
    %v2539 = vpack.c.b16 %v1735, %v1731
    %v2540 = vpack.c.b16 %v1736, %v1732
    %v2541 = vpack.c.b16 %v1737, %v1733
    %v2542 = vpack.c.b16 %v1742, %v1738
    %v2543 = vpack.c.b16 %v1743, %v1739
    %v2544 = vpack.c.b16 %v1744, %v1740
    %v2545 = vpack.c.b16 %v1745, %v1741
    %v2546 = vpack.c.b16 %v1750, %v1746
    %v2547 = vpack.c.b16 %v1751, %v1747
    %v2548 = vpack.c.b16 %v1752, %v1748
    %v2549 = vpack.c.b16 %v1753, %v1749
    %v2550 = vpack.c.b16 %v1758, %v1754
    %v2551 = vpack.c.b16 %v1759, %v1755
    %v2552 = vpack.c.b16 %v1760, %v1756
    %v2553 = vpack.c.b16 %v1761, %v1757
    %v2554 = vpack.c.b16 %v1766, %v1762
    %v2555 = vpack.c.b16 %v1767, %v1763
    %v2556 = vpack.c.b16 %v1768, %v1764
    %v2557 = vpack.c.b16 %v1769, %v1765
    %v2558 = vpack.c.b16 %v1774, %v1770
    %v2559 = vpack.c.b16 %v1775, %v1771
    %v2560 = vpack.c.b16 %v1776, %v1772
    %v2561 = vpack.c.b16 %v1777, %v1773
    %v2562 = vpack.c.b16 %v1782, %v1778
    %v2563 = vpack.c.b16 %v1783, %v1779
    %v2564 = vpack.c.b16 %v1784, %v1780
    %v2565 = vpack.c.b16 %v1785, %v1781
    %v2566 = vpack.c.b16 %v1790, %v1786
    %v2567 = vpack.c.b16 %v1791, %v1787
    %v2568 = vpack.c.b16 %v1792, %v1788
    %v2569 = vpack.c.b16 %v1793, %v1789
    %v2570 = vpack.c.b16 %v1798, %v1794
    %v2571 = vpack.c.b16 %v1799, %v1795
    %v2572 = vpack.c.b16 %v1800, %v1796
    %v2573 = vpack.c.b16 %v1801, %v1797
    %v2574 = vpack.c.b16 %v1806, %v1802
    %v2575 = vpack.c.b16 %v1807, %v1803
    %v2576 = vpack.c.b16 %v1808, %v1804
    %v2577 = vpack.c.b16 %v1809, %v1805
    %v2578 = vpack.c.b16 %v1814, %v1810
    %v2579 = vpack.c.b16 %v1815, %v1811
    %v2580 = vpack.c.b16 %v1816, %v1812
    %v2581 = vpack.c.b16 %v1817, %v1813
    %v2582 = vpack.c.b16 %v1822, %v1818
    %v2583 = vpack.c.b16 %v1823, %v1819
    %v2584 = vpack.c.b16 %v1824, %v1820
    %v2585 = vpack.c.b16 %v1825, %v1821
    %v2586 = vpack.c.b16 %v1830, %v1826
    %v2587 = vpack.c.b16 %v1831, %v1827
    %v2588 = vpack.c.b16 %v1832, %v1828
    %v2589 = vpack.c.b16 %v1833, %v1829
    %v2590 = vpack.c.b16 %v1838, %v1834
    %v2591 = vpack.c.b16 %v1839, %v1835
    %v2592 = vpack.c.b16 %v1840, %v1836
    %v2593 = vpack.c.b16 %v1841, %v1837
    %v2594 = vpack.c.b16 %v1846, %v1842
    %v2595 = vpack.c.b16 %v1847, %v1843
    %v2596 = vpack.c.b16 %v1848, %v1844
    %v2597 = vpack.c.b16 %v1849, %v1845
    %v2598 = vpack.c.b16 %v1854, %v1850
    %v2599 = vpack.c.b16 %v1855, %v1851
    %v2600 = vpack.c.b16 %v1856, %v1852
    %v2601 = vpack.c.b16 %v1857, %v1853
    %v2602 = vpack.c.b16 %v1862, %v1858
    %v2603 = vpack.c.b16 %v1863, %v1859
    %v2604 = vpack.c.b16 %v1864, %v1860
    %v2605 = vpack.c.b16 %v1865, %v1861
    %v2606 = vpack.c.b16 %v1870, %v1866
    %v2607 = vpack.c.b16 %v1871, %v1867
    %v2608 = vpack.c.b16 %v1872, %v1868
    %v2609 = vpack.c.b16 %v1873, %v1869
    %v2610 = vpack.c.b16 %v1878, %v1874
    %v2611 = vpack.c.b16 %v1879, %v1875
    %v2612 = vpack.c.b16 %v1880, %v1876
    %v2613 = vpack.c.b16 %v1881, %v1877
    %v2614 = vpack.c.b16 %v1886, %v1882
    %v2615 = vpack.c.b16 %v1887, %v1883
    %v2616 = vpack.c.b16 %v1888, %v1884
    %v2617 = vpack.c.b16 %v1889, %v1885
    %v2618 = vpack.c.b16 %v1894, %v1890
    %v2619 = vpack.c.b16 %v1895, %v1891
    %v2620 = vpack.c.b16 %v1896, %v1892
    %v2621 = vpack.c.b16 %v1897, %v1893
    %v2622 = vpack.c.b16 %v1902, %v1898
    %v2623 = vpack.c.b16 %v1903, %v1899
    %v2624 = vpack.c.b16 %v1904, %v1900
    %v2625 = vpack.c.b16 %v1905, %v1901
    %v2626 = vpack.c.b16 %v1910, %v1906
    %v2627 = vpack.c.b16 %v1911, %v1907
    %v2628 = vpack.c.b16 %v1912, %v1908
    %v2629 = vpack.c.b16 %v1913, %v1909
    %v2630 = vpack.c.b16 %v1918, %v1914
    %v2631 = vpack.c.b16 %v1919, %v1915
    %v2632 = vpack.c.b16 %v1920, %v1916
    %v2633 = vpack.c.b16 %v1921, %v1917
    %v2634 = vpack.c.b16 %v1926, %v1922
    %v2635 = vpack.c.b16 %v1927, %v1923
    %v2636 = vpack.c.b16 %v1928, %v1924
    %v2637 = vpack.c.b16 %v1929, %v1925
    %v2638 = vpack.c.b16 %v1934, %v1930
    %v2639 = vpack.c.b16 %v1935, %v1931
    %v2640 = vpack.c.b16 %v1936, %v1932
    %v2641 = vpack.c.b16 %v1937, %v1933
    %v2642 = vpack.c.b16 %v1942, %v1938
    %v2643 = vpack.c.b16 %v1943, %v1939
    %v2644 = vpack.c.b16 %v1944, %v1940
    %v2645 = vpack.c.b16 %v1945, %v1941
    %v2646 = vpack.c.b16 %v1950, %v1946
    %v2647 = vpack.c.b16 %v1951, %v1947
    %v2648 = vpack.c.b16 %v1952, %v1948
    %v2649 = vpack.c.b16 %v1953, %v1949
    %v2650 = vpack.c.b16 %v1958, %v1954
    %v2651 = vpack.c.b16 %v1959, %v1955
    %v2652 = vpack.c.b16 %v1960, %v1956
    %v2653 = vpack.c.b16 %v1961, %v1957
    %v2654 = vpack.c.b16 %v1966, %v1962
    %v2655 = vpack.c.b16 %v1967, %v1963
    %v2656 = vpack.c.b16 %v1968, %v1964
    %v2657 = vpack.c.b16 %v1969, %v1965
    %v2658 = vpack.c.b16 %v1974, %v1970
    %v2659 = vpack.c.b16 %v1975, %v1971
    %v2660 = vpack.c.b16 %v1976, %v1972
    %v2661 = vpack.c.b16 %v1977, %v1973
    %v2662 = vpack.c.b16 %v1982, %v1978
    %v2663 = vpack.c.b16 %v1983, %v1979
    %v2664 = vpack.c.b16 %v1984, %v1980
    %v2665 = vpack.c.b16 %v1985, %v1981
    %v2666 = vpack.c.b16 %v1990, %v1986
    %v2667 = vpack.c.b16 %v1991, %v1987
    %v2668 = vpack.c.b16 %v1992, %v1988
    %v2669 = vpack.c.b16 %v1993, %v1989
    %v2670 = vpack.c.b16 %v1998, %v1994
    %v2671 = vpack.c.b16 %v1999, %v1995
    %v2672 = vpack.c.b16 %v2000, %v1996
    %v2673 = vpack.c.b16 %v2001, %v1997
    %v2674 = vpack.c.b16 %v2006, %v2002
    %v2675 = vpack.c.b16 %v2007, %v2003
    %v2676 = vpack.c.b16 %v2008, %v2004
    %v2677 = vpack.c.b16 %v2009, %v2005
    %v2678 = vpack.c.b16 %v2014, %v2010
    %v2679 = vpack.c.b16 %v2015, %v2011
    %v2680 = vpack.c.b16 %v2016, %v2012
    %v2681 = vpack.c.b16 %v2017, %v2013
    %v2682 = vpack.c.b16 %v2022, %v2018
    %v2683 = vpack.c.b16 %v2023, %v2019
    %v2684 = vpack.c.b16 %v2024, %v2020
    %v2685 = vpack.c.b16 %v2025, %v2021
    %v2686 = vpack.c.b16 %v2030, %v2026
    %v2687 = vpack.c.b16 %v2031, %v2027
    %v2688 = vpack.c.b16 %v2032, %v2028
    %v2689 = vpack.c.b16 %v2033, %v2029
    %v2690 = vpack.c.b16 %v2038, %v2034
    %v2691 = vpack.c.b16 %v2039, %v2035
    %v2692 = vpack.c.b16 %v2040, %v2036
    %v2693 = vpack.c.b16 %v2041, %v2037
    %v2694 = vpack.c.b16 %v2046, %v2042
    %v2695 = vpack.c.b16 %v2047, %v2043
    %v2696 = vpack.c.b16 %v2048, %v2044
    %v2697 = vpack.c.b16 %v2049, %v2045
    %v2698 = vpack.c.b16 %v2054, %v2050
    %v2699 = vpack.c.b16 %v2055, %v2051
    %v2700 = vpack.c.b16 %v2056, %v2052
    %v2701 = vpack.c.b16 %v2057, %v2053
    %v2702 = vpack.c.b16 %v2062, %v2058
    %v2703 = vpack.c.b16 %v2063, %v2059
    %v2704 = vpack.c.b16 %v2064, %v2060
    %v2705 = vpack.c.b16 %v2065, %v2061
    %v2706 = vpack.c.b16 %v2070, %v2066
    %v2707 = vpack.c.b16 %v2071, %v2067
    %v2708 = vpack.c.b16 %v2072, %v2068
    %v2709 = vpack.c.b16 %v2073, %v2069
    %v2710 = vpack.c.b16 %v2078, %v2074
    %v2711 = vpack.c.b16 %v2079, %v2075
    %v2712 = vpack.c.b16 %v2080, %v2076
    %v2713 = vpack.c.b16 %v2081, %v2077
    %v2714 = vpack.c.b16 %v2086, %v2082
    %v2715 = vpack.c.b16 %v2087, %v2083
    %v2716 = vpack.c.b16 %v2088, %v2084
    %v2717 = vpack.c.b16 %v2089, %v2085
    %v2718 = vpack.c.b16 %v2094, %v2090
    %v2719 = vpack.c.b16 %v2095, %v2091
    %v2720 = vpack.c.b16 %v2096, %v2092
    %v2721 = vpack.c.b16 %v2097, %v2093
    %v2722 = vpack.c.b16 %v2102, %v2098
    %v2723 = vpack.c.b16 %v2103, %v2099
    %v2724 = vpack.c.b16 %v2104, %v2100
    %v2725 = vpack.c.b16 %v2105, %v2101
    %v2726 = vpack.c.b16 %v2110, %v2106
    %v2727 = vpack.c.b16 %v2111, %v2107
    %v2728 = vpack.c.b16 %v2112, %v2108
    %v2729 = vpack.c.b16 %v2113, %v2109
    %v2730 = vpack.c.b16 %v2118, %v2114
    %v2731 = vpack.c.b16 %v2119, %v2115
    %v2732 = vpack.c.b16 %v2120, %v2116
    %v2733 = vpack.c.b16 %v2121, %v2117
    %v2734 = vpack.c.b16 %v2126, %v2122
    %v2735 = vpack.c.b16 %v2127, %v2123
    %v2736 = vpack.c.b16 %v2128, %v2124
    %v2737 = vpack.c.b16 %v2129, %v2125
    %v2738 = vpack.c.b16 %v2134, %v2130
    %v2739 = vpack.c.b16 %v2135, %v2131
    %v2740 = vpack.c.b16 %v2136, %v2132
    %v2741 = vpack.c.b16 %v2137, %v2133
    %v2742 = vpack.c.b16 %v2142, %v2138
    %v2743 = vpack.c.b16 %v2143, %v2139
    %v2744 = vpack.c.b16 %v2144, %v2140
    %v2745 = vpack.c.b16 %v2145, %v2141
    %v2746 = vpack.c.b16 %v2150, %v2146
    %v2747 = vpack.c.b16 %v2151, %v2147
    %v2748 = vpack.c.b16 %v2152, %v2148
    %v2749 = vpack.c.b16 %v2153, %v2149
    %v2750 = vpack.c.b16 %v2158, %v2154
    %v2751 = vpack.c.b16 %v2159, %v2155
    %v2752 = vpack.c.b16 %v2160, %v2156
    %v2753 = vpack.c.b16 %v2161, %v2157
    %v2754 = vpack.c.b16 %v2166, %v2162
    %v2755 = vpack.c.b16 %v2167, %v2163
    %v2756 = vpack.c.b16 %v2168, %v2164
    %v2757 = vpack.c.b16 %v2169, %v2165
    %v2758 = vpack.c.b16 %v2174, %v2170
    %v2759 = vpack.c.b16 %v2175, %v2171
    %v2760 = vpack.c.b16 %v2176, %v2172
    %v2761 = vpack.c.b16 %v2177, %v2173
    %v2762 = vpack.c.b16 %v2182, %v2178
    %v2763 = vpack.c.b16 %v2183, %v2179
    %v2764 = vpack.c.b16 %v2184, %v2180
    %v2765 = vpack.c.b16 %v2185, %v2181
    %v2766 = vpack.c.b16 %v2190, %v2186
    %v2767 = vpack.c.b16 %v2191, %v2187
    %v2768 = vpack.c.b16 %v2192, %v2188
    %v2769 = vpack.c.b16 %v2193, %v2189
    %v2770 = vpack.c.b16 %v2198, %v2194
    %v2771 = vpack.c.b16 %v2199, %v2195
    %v2772 = vpack.c.b16 %v2200, %v2196
    %v2773 = vpack.c.b16 %v2201, %v2197
    %v2774 = vpack.c.b16 %v2206, %v2202
    %v2775 = vpack.c.b16 %v2207, %v2203
    %v2776 = vpack.c.b16 %v2208, %v2204
    %v2777 = vpack.c.b16 %v2209, %v2205
    %v2778 = vpack.c.b16 %v2214, %v2210
    %v2779 = vpack.c.b16 %v2215, %v2211
    %v2780 = vpack.c.b16 %v2216, %v2212
    %v2781 = vpack.c.b16 %v2217, %v2213
    %v2782 = vpack.c.b16 %v2222, %v2218
    %v2783 = vpack.c.b16 %v2223, %v2219
    %v2784 = vpack.c.b16 %v2224, %v2220
    %v2785 = vpack.c.b16 %v2225, %v2221
    %v2786 = vpack.c.b16 %v2230, %v2226
    %v2787 = vpack.c.b16 %v2231, %v2227
    %v2788 = vpack.c.b16 %v2232, %v2228
    %v2789 = vpack.c.b16 %v2233, %v2229
    %v2790 = vpack.c.b16 %v2238, %v2234
    %v2791 = vpack.c.b16 %v2239, %v2235
    %v2792 = vpack.c.b16 %v2240, %v2236
    %v2793 = vpack.c.b16 %v2241, %v2237
    %v2794 = vpack.c.b16 %v2246, %v2242
    %v2795 = vpack.c.b16 %v2247, %v2243
    %v2796 = vpack.c.b16 %v2248, %v2244
    %v2797 = vpack.c.b16 %v2249, %v2245
    %v2798 = vpack.c.b16 %v2254, %v2250
    %v2799 = vpack.c.b16 %v2255, %v2251
    %v2800 = vpack.c.b16 %v2256, %v2252
    %v2801 = vpack.c.b16 %v2257, %v2253
    %v2802 = vpack.c.b16 %v2262, %v2258
    %v2803 = vpack.c.b16 %v2263, %v2259
    %v2804 = vpack.c.b16 %v2264, %v2260
    %v2805 = vpack.c.b16 %v2265, %v2261
    %v2806 = vpack.c.b16 %v2270, %v2266
    %v2807 = vpack.c.b16 %v2271, %v2267
    %v2808 = vpack.c.b16 %v2272, %v2268
    %v2809 = vpack.c.b16 %v2273, %v2269
    %v2810 = vpack.c.b16 %v2278, %v2274
    %v2811 = vpack.c.b16 %v2279, %v2275
    %v2812 = vpack.c.b16 %v2280, %v2276
    %v2813 = vpack.c.b16 %v2281, %v2277
    %v2814 = vpack.c.b16 %v2286, %v2282
    %v2815 = vpack.c.b16 %v2287, %v2283
    %v2816 = vpack.c.b16 %v2288, %v2284
    %v2817 = vpack.c.b16 %v2289, %v2285
    %v2818 = vpack.c.b16 %v2294, %v2290
    %v2819 = vpack.c.b16 %v2295, %v2291
    %v2820 = vpack.c.b16 %v2296, %v2292
    %v2821 = vpack.c.b16 %v2297, %v2293
    %v2822 = vpack.c.b16 %v2302, %v2298
    %v2823 = vpack.c.b16 %v2303, %v2299
    %v2824 = vpack.c.b16 %v2304, %v2300
    %v2825 = vpack.c.b16 %v2305, %v2301
    %v2826 = vpack.c.b16 %v2310, %v2306
    %v2827 = vpack.c.b16 %v2311, %v2307
    %v2828 = vpack.c.b16 %v2312, %v2308
    %v2829 = vpack.c.b16 %v2313, %v2309
    %v2830 = vpack.c.b16 %v2318, %v2314
    %v2831 = vpack.c.b16 %v2319, %v2315
    %v2832 = vpack.c.b16 %v2320, %v2316
    %v2833 = vpack.c.b16 %v2321, %v2317
    %3346 = vmatpush.bf16.msra.mxu0 %v2350
    %3347 = vmatpush.bf16.msra.mxu0 %v2346
    %3348 = vmatpush.bf16.msra.mxu0 %v2342
    %3349 = vmatpush.bf16.msra.mxu0 %v2338
    %3350 = vmatpush.bf16.msra.mxu0 %v2334
    %3351 = vmatpush.bf16.msra.mxu0 %v2330
    %3352 = vmatpush.bf16.msra.mxu0 %v2326
    %3353 = vmatpush.bf16.msra.mxu0 %v2322
    %3354 = vmatmul.bf16.gmra.mxu0 %v722
    %v3355 = vpop.f32.mrf.mxu0
    %v3356 = vadd.f32 %v618, %v3355
    %v3357 = vpop.f32.mrf.mxu0
    %v3358 = vadd.f32 %v618, %v3357
    %3359 = vmatmul.bf16.gmra.mxu0 %v738
    %v3360 = vpop.f32.mrf.mxu0
    %v3361 = vadd.f32 %v618, %v3360
    %v3362 = vpop.f32.mrf.mxu0
    %v3363 = vadd.f32 %v618, %v3362
    %3364 = vdwg.mxu0
    %3365 = vmatpush.bf16.msra.mxu0 %v2382
    %3366 = vmatpush.bf16.msra.mxu0 %v2378
    %3367 = vmatpush.bf16.msra.mxu0 %v2374
    %3368 = vmatpush.bf16.msra.mxu0 %v2370
    %3369 = vmatpush.bf16.msra.mxu0 %v2366
    %3370 = vmatpush.bf16.msra.mxu0 %v2362
    %3371 = vmatpush.bf16.msra.mxu0 %v2358
    %3372 = vmatpush.bf16.msra.mxu0 %v2354
    %3373 = vmatmul.bf16.gmra.mxu0 %v723
    %v3374 = vpop.f32.mrf.mxu0
    %v3375 = vadd.f32 %v3356, %v3374
    %v3376 = vpop.f32.mrf.mxu0
    %v3377 = vadd.f32 %v3358, %v3376
    %3378 = vmatmul.bf16.gmra.mxu0 %v739
    %v3379 = vpop.f32.mrf.mxu0
    %v3380 = vadd.f32 %v3361, %v3379
    %v3381 = vpop.f32.mrf.mxu0
    %v3382 = vadd.f32 %v3363, %v3381
    %3383 = vdwg.mxu0
    %3384 = vmatpush.bf16.msra.mxu0 %v2414
    %3385 = vmatpush.bf16.msra.mxu0 %v2410
    %3386 = vmatpush.bf16.msra.mxu0 %v2406
    %3387 = vmatpush.bf16.msra.mxu0 %v2402
    %3388 = vmatpush.bf16.msra.mxu0 %v2398
    %3389 = vmatpush.bf16.msra.mxu0 %v2394
    %3390 = vmatpush.bf16.msra.mxu0 %v2390
    %3391 = vmatpush.bf16.msra.mxu0 %v2386
    %3392 = vmatmul.bf16.gmra.mxu0 %v724
    %v3393 = vpop.f32.mrf.mxu0
    %v3394 = vadd.f32 %v3375, %v3393
    %v3395 = vpop.f32.mrf.mxu0
    %v3396 = vadd.f32 %v3377, %v3395
    %3397 = vmatmul.bf16.gmra.mxu0 %v740
    %v3398 = vpop.f32.mrf.mxu0
    %v3399 = vadd.f32 %v3380, %v3398
    %v3400 = vpop.f32.mrf.mxu0
    %v3401 = vadd.f32 %v3382, %v3400
    %3402 = vdwg.mxu0
    %3403 = vmatpush.bf16.msra.mxu0 %v2446
    %3404 = vmatpush.bf16.msra.mxu0 %v2442
    %3405 = vmatpush.bf16.msra.mxu0 %v2438
    %3406 = vmatpush.bf16.msra.mxu0 %v2434
    %3407 = vmatpush.bf16.msra.mxu0 %v2430
    %3408 = vmatpush.bf16.msra.mxu0 %v2426
    %3409 = vmatpush.bf16.msra.mxu0 %v2422
    %3410 = vmatpush.bf16.msra.mxu0 %v2418
    %3411 = vmatmul.bf16.gmra.mxu0 %v725
    %v3412 = vpop.f32.mrf.mxu0
    %v3413 = vadd.f32 %v3394, %v3412
    %v3414 = vpop.f32.mrf.mxu0
    %v3415 = vadd.f32 %v3396, %v3414
    %3416 = vmatmul.bf16.gmra.mxu0 %v741
    %v3417 = vpop.f32.mrf.mxu0
    %v3418 = vadd.f32 %v3399, %v3417
    %v3419 = vpop.f32.mrf.mxu0
    %v3420 = vadd.f32 %v3401, %v3419
    %3421 = vdwg.mxu0
    %3422 = vmatpush.bf16.msra.mxu0 %v2478
    %3423 = vmatpush.bf16.msra.mxu0 %v2474
    %3424 = vmatpush.bf16.msra.mxu0 %v2470
    %3425 = vmatpush.bf16.msra.mxu0 %v2466
    %3426 = vmatpush.bf16.msra.mxu0 %v2462
    %3427 = vmatpush.bf16.msra.mxu0 %v2458
    %3428 = vmatpush.bf16.msra.mxu0 %v2454
    %3429 = vmatpush.bf16.msra.mxu0 %v2450
    %3430 = vmatmul.bf16.gmra.mxu0 %v726
    %v3431 = vpop.f32.mrf.mxu0
    %v3432 = vadd.f32 %v3413, %v3431
    %v3433 = vpop.f32.mrf.mxu0
    %v3434 = vadd.f32 %v3415, %v3433
    %3435 = vmatmul.bf16.gmra.mxu0 %v742
    %v3436 = vpop.f32.mrf.mxu0
    %v3437 = vadd.f32 %v3418, %v3436
    %v3438 = vpop.f32.mrf.mxu0
    %v3439 = vadd.f32 %v3420, %v3438
    %3440 = vdwg.mxu0
    %3441 = vmatpush.bf16.msra.mxu0 %v2510
    %3442 = vmatpush.bf16.msra.mxu0 %v2506
    %3443 = vmatpush.bf16.msra.mxu0 %v2502
    %3444 = vmatpush.bf16.msra.mxu0 %v2498
    %3445 = vmatpush.bf16.msra.mxu0 %v2494
    %3446 = vmatpush.bf16.msra.mxu0 %v2490
    %3447 = vmatpush.bf16.msra.mxu0 %v2486
    %3448 = vmatpush.bf16.msra.mxu0 %v2482
    %3449 = vmatmul.bf16.gmra.mxu0 %v727
    %v3450 = vpop.f32.mrf.mxu0
    %v3451 = vadd.f32 %v3432, %v3450
    %v3452 = vpop.f32.mrf.mxu0
    %v3453 = vadd.f32 %v3434, %v3452
    %3454 = vmatmul.bf16.gmra.mxu0 %v743
    %v3455 = vpop.f32.mrf.mxu0
    %v3456 = vadd.f32 %v3437, %v3455
    %v3457 = vpop.f32.mrf.mxu0
    %v3458 = vadd.f32 %v3439, %v3457
    %3459 = vdwg.mxu0
    %3460 = vmatpush.bf16.msra.mxu0 %v2542
    %3461 = vmatpush.bf16.msra.mxu0 %v2538
    %3462 = vmatpush.bf16.msra.mxu0 %v2534
    %3463 = vmatpush.bf16.msra.mxu0 %v2530
    %3464 = vmatpush.bf16.msra.mxu0 %v2526
    %3465 = vmatpush.bf16.msra.mxu0 %v2522
    %3466 = vmatpush.bf16.msra.mxu0 %v2518
    %3467 = vmatpush.bf16.msra.mxu0 %v2514
    %3468 = vmatmul.bf16.gmra.mxu0 %v728
    %v3469 = vpop.f32.mrf.mxu0
    %v3470 = vadd.f32 %v3451, %v3469
    %v3471 = vpop.f32.mrf.mxu0
    %v3472 = vadd.f32 %v3453, %v3471
    %3473 = vmatmul.bf16.gmra.mxu0 %v744
    %v3474 = vpop.f32.mrf.mxu0
    %v3475 = vadd.f32 %v3456, %v3474
    %v3476 = vpop.f32.mrf.mxu0
    %v3477 = vadd.f32 %v3458, %v3476
    %3478 = vdwg.mxu0
    %3479 = vmatpush.bf16.msra.mxu0 %v2574
    %3480 = vmatpush.bf16.msra.mxu0 %v2570
    %3481 = vmatpush.bf16.msra.mxu0 %v2566
    %3482 = vmatpush.bf16.msra.mxu0 %v2562
    %3483 = vmatpush.bf16.msra.mxu0 %v2558
    %3484 = vmatpush.bf16.msra.mxu0 %v2554
    %3485 = vmatpush.bf16.msra.mxu0 %v2550
    %3486 = vmatpush.bf16.msra.mxu0 %v2546
    %3487 = vmatmul.bf16.gmra.mxu0 %v729
    %v3488 = vpop.f32.mrf.mxu0
    %v3489 = vadd.f32 %v3470, %v3488
    %v3490 = vpop.f32.mrf.mxu0
    %v3491 = vadd.f32 %v3472, %v3490
    %3492 = vmatmul.bf16.gmra.mxu0 %v745
    %v3493 = vpop.f32.mrf.mxu0
    %v3494 = vadd.f32 %v3475, %v3493
    %v3495 = vpop.f32.mrf.mxu0
    %v3496 = vadd.f32 %v3477, %v3495
    %3497 = vdwg.mxu0
    %3498 = vmatpush.bf16.msra.mxu0 %v2606
    %3499 = vmatpush.bf16.msra.mxu0 %v2602
    %3500 = vmatpush.bf16.msra.mxu0 %v2598
    %3501 = vmatpush.bf16.msra.mxu0 %v2594
    %3502 = vmatpush.bf16.msra.mxu0 %v2590
    %3503 = vmatpush.bf16.msra.mxu0 %v2586
    %3504 = vmatpush.bf16.msra.mxu0 %v2582
    %3505 = vmatpush.bf16.msra.mxu0 %v2578
    %3506 = vmatmul.bf16.gmra.mxu0 %v730
    %v3507 = vpop.f32.mrf.mxu0
    %v3508 = vadd.f32 %v3489, %v3507
    %v3509 = vpop.f32.mrf.mxu0
    %v3510 = vadd.f32 %v3491, %v3509
    %3511 = vmatmul.bf16.gmra.mxu0 %v746
    %v3512 = vpop.f32.mrf.mxu0
    %v3513 = vadd.f32 %v3494, %v3512
    %v3514 = vpop.f32.mrf.mxu0
    %v3515 = vadd.f32 %v3496, %v3514
    %3516 = vdwg.mxu0
    %3517 = vmatpush.bf16.msra.mxu0 %v2638
    %3518 = vmatpush.bf16.msra.mxu0 %v2634
    %3519 = vmatpush.bf16.msra.mxu0 %v2630
    %3520 = vmatpush.bf16.msra.mxu0 %v2626
    %3521 = vmatpush.bf16.msra.mxu0 %v2622
    %3522 = vmatpush.bf16.msra.mxu0 %v2618
    %3523 = vmatpush.bf16.msra.mxu0 %v2614
    %3524 = vmatpush.bf16.msra.mxu0 %v2610
    %3525 = vmatmul.bf16.gmra.mxu0 %v731
    %v3526 = vpop.f32.mrf.mxu0
    %v3527 = vadd.f32 %v3508, %v3526
    %v3528 = vpop.f32.mrf.mxu0
    %v3529 = vadd.f32 %v3510, %v3528
    %3530 = vmatmul.bf16.gmra.mxu0 %v747
    %v3531 = vpop.f32.mrf.mxu0
    %v3532 = vadd.f32 %v3513, %v3531
    %v3533 = vpop.f32.mrf.mxu0
    %v3534 = vadd.f32 %v3515, %v3533
    %3535 = vdwg.mxu0
    %3536 = vmatpush.bf16.msra.mxu0 %v2670
    %3537 = vmatpush.bf16.msra.mxu0 %v2666
    %3538 = vmatpush.bf16.msra.mxu0 %v2662
    %3539 = vmatpush.bf16.msra.mxu0 %v2658
    %3540 = vmatpush.bf16.msra.mxu0 %v2654
    %3541 = vmatpush.bf16.msra.mxu0 %v2650
    %3542 = vmatpush.bf16.msra.mxu0 %v2646
    %3543 = vmatpush.bf16.msra.mxu0 %v2642
    %3544 = vmatmul.bf16.gmra.mxu0 %v732
    %v3545 = vpop.f32.mrf.mxu0
    %v3546 = vadd.f32 %v3527, %v3545
    %v3547 = vpop.f32.mrf.mxu0
    %v3548 = vadd.f32 %v3529, %v3547
    %3549 = vmatmul.bf16.gmra.mxu0 %v748
    %v3550 = vpop.f32.mrf.mxu0
    %v3551 = vadd.f32 %v3532, %v3550
    %v3552 = vpop.f32.mrf.mxu0
    %v3553 = vadd.f32 %v3534, %v3552
    %3554 = vdwg.mxu0
    %3555 = vmatpush.bf16.msra.mxu0 %v2702
    %3556 = vmatpush.bf16.msra.mxu0 %v2698
    %3557 = vmatpush.bf16.msra.mxu0 %v2694
    %3558 = vmatpush.bf16.msra.mxu0 %v2690
    %3559 = vmatpush.bf16.msra.mxu0 %v2686
    %3560 = vmatpush.bf16.msra.mxu0 %v2682
    %3561 = vmatpush.bf16.msra.mxu0 %v2678
    %3562 = vmatpush.bf16.msra.mxu0 %v2674
    %3563 = vmatmul.bf16.gmra.mxu0 %v733
    %v3564 = vpop.f32.mrf.mxu0
    %v3565 = vadd.f32 %v3546, %v3564
    %v3566 = vpop.f32.mrf.mxu0
    %v3567 = vadd.f32 %v3548, %v3566
    %3568 = vmatmul.bf16.gmra.mxu0 %v749
    %v3569 = vpop.f32.mrf.mxu0
    %v3570 = vadd.f32 %v3551, %v3569
    %v3571 = vpop.f32.mrf.mxu0
    %v3572 = vadd.f32 %v3553, %v3571
    %3573 = vdwg.mxu0
    %3574 = vmatpush.bf16.msra.mxu0 %v2734
    %3575 = vmatpush.bf16.msra.mxu0 %v2730
    %3576 = vmatpush.bf16.msra.mxu0 %v2726
    %3577 = vmatpush.bf16.msra.mxu0 %v2722
    %3578 = vmatpush.bf16.msra.mxu0 %v2718
    %3579 = vmatpush.bf16.msra.mxu0 %v2714
    %3580 = vmatpush.bf16.msra.mxu0 %v2710
    %3581 = vmatpush.bf16.msra.mxu0 %v2706
    %3582 = vmatmul.bf16.gmra.mxu0 %v734
    %v3583 = vpop.f32.mrf.mxu0
    %v3584 = vadd.f32 %v3565, %v3583
    %v3585 = vpop.f32.mrf.mxu0
    %v3586 = vadd.f32 %v3567, %v3585
    %3587 = vmatmul.bf16.gmra.mxu0 %v750
    %v3588 = vpop.f32.mrf.mxu0
    %v3589 = vadd.f32 %v3570, %v3588
    %v3590 = vpop.f32.mrf.mxu0
    %v3591 = vadd.f32 %v3572, %v3590
    %3592 = vdwg.mxu0
    %3593 = vmatpush.bf16.msra.mxu0 %v2766
    %3594 = vmatpush.bf16.msra.mxu0 %v2762
    %3595 = vmatpush.bf16.msra.mxu0 %v2758
    %3596 = vmatpush.bf16.msra.mxu0 %v2754
    %3597 = vmatpush.bf16.msra.mxu0 %v2750
    %3598 = vmatpush.bf16.msra.mxu0 %v2746
    %3599 = vmatpush.bf16.msra.mxu0 %v2742
    %3600 = vmatpush.bf16.msra.mxu0 %v2738
    %3601 = vmatmul.bf16.gmra.mxu0 %v735
    %v3602 = vpop.f32.mrf.mxu0
    %v3603 = vadd.f32 %v3584, %v3602
    %v3604 = vpop.f32.mrf.mxu0
    %v3605 = vadd.f32 %v3586, %v3604
    %3606 = vmatmul.bf16.gmra.mxu0 %v751
    %v3607 = vpop.f32.mrf.mxu0
    %v3608 = vadd.f32 %v3589, %v3607
    %v3609 = vpop.f32.mrf.mxu0
    %v3610 = vadd.f32 %v3591, %v3609
    %3611 = vdwg.mxu0
    %3612 = vmatpush.bf16.msra.mxu0 %v2798
    %3613 = vmatpush.bf16.msra.mxu0 %v2794
    %3614 = vmatpush.bf16.msra.mxu0 %v2790
    %3615 = vmatpush.bf16.msra.mxu0 %v2786
    %3616 = vmatpush.bf16.msra.mxu0 %v2782
    %3617 = vmatpush.bf16.msra.mxu0 %v2778
    %3618 = vmatpush.bf16.msra.mxu0 %v2774
    %3619 = vmatpush.bf16.msra.mxu0 %v2770
    %3620 = vmatmul.bf16.gmra.mxu0 %v736
    %v3621 = vpop.f32.mrf.mxu0
    %v3622 = vadd.f32 %v3603, %v3621
    %v3623 = vpop.f32.mrf.mxu0
    %v3624 = vadd.f32 %v3605, %v3623
    %3625 = vmatmul.bf16.gmra.mxu0 %v752
    %v3626 = vpop.f32.mrf.mxu0
    %v3627 = vadd.f32 %v3608, %v3626
    %v3628 = vpop.f32.mrf.mxu0
    %v3629 = vadd.f32 %v3610, %v3628
    %3630 = vdwg.mxu0
    %3631 = vmatpush.bf16.msra.mxu0 %v2830
    %3632 = vmatpush.bf16.msra.mxu0 %v2826
    %3633 = vmatpush.bf16.msra.mxu0 %v2822
    %3634 = vmatpush.bf16.msra.mxu0 %v2818
    %3635 = vmatpush.bf16.msra.mxu0 %v2814
    %3636 = vmatpush.bf16.msra.mxu0 %v2810
    %3637 = vmatpush.bf16.msra.mxu0 %v2806
    %3638 = vmatpush.bf16.msra.mxu0 %v2802
    %3639 = vmatmul.bf16.gmra.mxu0 %v737
    %v3640 = vpop.f32.mrf.mxu0
    %v3641 = vadd.f32 %v3622, %v3640
    %v3642 = vpop.f32.mrf.mxu0
    %v3643 = vadd.f32 %v3624, %v3642
    %3644 = vmatmul.bf16.gmra.mxu0 %v753
    %v3645 = vpop.f32.mrf.mxu0
    %v3646 = vadd.f32 %v3627, %v3645
    %v3647 = vpop.f32.mrf.mxu0
    %v3648 = vadd.f32 %v3629, %v3647
    %3649 = vdwg.mxu0
    %3650 = vmatpush.bf16.msra.mxu0 %v2351
    %3651 = vmatpush.bf16.msra.mxu0 %v2347
    %3652 = vmatpush.bf16.msra.mxu0 %v2343
    %3653 = vmatpush.bf16.msra.mxu0 %v2339
    %3654 = vmatpush.bf16.msra.mxu0 %v2335
    %3655 = vmatpush.bf16.msra.mxu0 %v2331
    %3656 = vmatpush.bf16.msra.mxu0 %v2327
    %3657 = vmatpush.bf16.msra.mxu0 %v2323
    %3658 = vmatmul.bf16.gmra.mxu0 %v722
    %v3659 = vpop.f32.mrf.mxu0
    %v3660 = vadd.f32 %v619, %v3659
    %v3661 = vpop.f32.mrf.mxu0
    %v3662 = vadd.f32 %v619, %v3661
    %3663 = vmatmul.bf16.gmra.mxu0 %v738
    %v3664 = vpop.f32.mrf.mxu0
    %v3665 = vadd.f32 %v619, %v3664
    %v3666 = vpop.f32.mrf.mxu0
    %v3667 = vadd.f32 %v619, %v3666
    %3668 = vdwg.mxu0
    %3669 = vmatpush.bf16.msra.mxu0 %v2383
    %3670 = vmatpush.bf16.msra.mxu0 %v2379
    %3671 = vmatpush.bf16.msra.mxu0 %v2375
    %3672 = vmatpush.bf16.msra.mxu0 %v2371
    %3673 = vmatpush.bf16.msra.mxu0 %v2367
    %3674 = vmatpush.bf16.msra.mxu0 %v2363
    %3675 = vmatpush.bf16.msra.mxu0 %v2359
    %3676 = vmatpush.bf16.msra.mxu0 %v2355
    %3677 = vmatmul.bf16.gmra.mxu0 %v723
    %v3678 = vpop.f32.mrf.mxu0
    %v3679 = vadd.f32 %v3660, %v3678
    %v3680 = vpop.f32.mrf.mxu0
    %v3681 = vadd.f32 %v3662, %v3680
    %3682 = vmatmul.bf16.gmra.mxu0 %v739
    %v3683 = vpop.f32.mrf.mxu0
    %v3684 = vadd.f32 %v3665, %v3683
    %v3685 = vpop.f32.mrf.mxu0
    %v3686 = vadd.f32 %v3667, %v3685
    %3687 = vdwg.mxu0
    %3688 = vmatpush.bf16.msra.mxu0 %v2415
    %3689 = vmatpush.bf16.msra.mxu0 %v2411
    %3690 = vmatpush.bf16.msra.mxu0 %v2407
    %3691 = vmatpush.bf16.msra.mxu0 %v2403
    %3692 = vmatpush.bf16.msra.mxu0 %v2399
    %3693 = vmatpush.bf16.msra.mxu0 %v2395
    %3694 = vmatpush.bf16.msra.mxu0 %v2391
    %3695 = vmatpush.bf16.msra.mxu0 %v2387
    %3696 = vmatmul.bf16.gmra.mxu0 %v724
    %v3697 = vpop.f32.mrf.mxu0
    %v3698 = vadd.f32 %v3679, %v3697
    %v3699 = vpop.f32.mrf.mxu0
    %v3700 = vadd.f32 %v3681, %v3699
    %3701 = vmatmul.bf16.gmra.mxu0 %v740
    %v3702 = vpop.f32.mrf.mxu0
    %v3703 = vadd.f32 %v3684, %v3702
    %v3704 = vpop.f32.mrf.mxu0
    %v3705 = vadd.f32 %v3686, %v3704
    %3706 = vdwg.mxu0
    %3707 = vmatpush.bf16.msra.mxu0 %v2447
    %3708 = vmatpush.bf16.msra.mxu0 %v2443
    %3709 = vmatpush.bf16.msra.mxu0 %v2439
    %3710 = vmatpush.bf16.msra.mxu0 %v2435
    %3711 = vmatpush.bf16.msra.mxu0 %v2431
    %3712 = vmatpush.bf16.msra.mxu0 %v2427
    %3713 = vmatpush.bf16.msra.mxu0 %v2423
    %3714 = vmatpush.bf16.msra.mxu0 %v2419
    %3715 = vmatmul.bf16.gmra.mxu0 %v725
    %v3716 = vpop.f32.mrf.mxu0
    %v3717 = vadd.f32 %v3698, %v3716
    %v3718 = vpop.f32.mrf.mxu0
    %v3719 = vadd.f32 %v3700, %v3718
    %3720 = vmatmul.bf16.gmra.mxu0 %v741
    %v3721 = vpop.f32.mrf.mxu0
    %v3722 = vadd.f32 %v3703, %v3721
    %v3723 = vpop.f32.mrf.mxu0
    %v3724 = vadd.f32 %v3705, %v3723
    %3725 = vdwg.mxu0
    %3726 = vmatpush.bf16.msra.mxu0 %v2479
    %3727 = vmatpush.bf16.msra.mxu0 %v2475
    %3728 = vmatpush.bf16.msra.mxu0 %v2471
    %3729 = vmatpush.bf16.msra.mxu0 %v2467
    %3730 = vmatpush.bf16.msra.mxu0 %v2463
    %3731 = vmatpush.bf16.msra.mxu0 %v2459
    %3732 = vmatpush.bf16.msra.mxu0 %v2455
    %3733 = vmatpush.bf16.msra.mxu0 %v2451
    %3734 = vmatmul.bf16.gmra.mxu0 %v726
    %v3735 = vpop.f32.mrf.mxu0
    %v3736 = vadd.f32 %v3717, %v3735
    %v3737 = vpop.f32.mrf.mxu0
    %v3738 = vadd.f32 %v3719, %v3737
    %3739 = vmatmul.bf16.gmra.mxu0 %v742
    %v3740 = vpop.f32.mrf.mxu0
    %v3741 = vadd.f32 %v3722, %v3740
    %v3742 = vpop.f32.mrf.mxu0
    %v3743 = vadd.f32 %v3724, %v3742
    %3744 = vdwg.mxu0
    %3745 = vmatpush.bf16.msra.mxu0 %v2511
    %3746 = vmatpush.bf16.msra.mxu0 %v2507
    %3747 = vmatpush.bf16.msra.mxu0 %v2503
    %3748 = vmatpush.bf16.msra.mxu0 %v2499
    %3749 = vmatpush.bf16.msra.mxu0 %v2495
    %3750 = vmatpush.bf16.msra.mxu0 %v2491
    %3751 = vmatpush.bf16.msra.mxu0 %v2487
    %3752 = vmatpush.bf16.msra.mxu0 %v2483
    %3753 = vmatmul.bf16.gmra.mxu0 %v727
    %v3754 = vpop.f32.mrf.mxu0
    %v3755 = vadd.f32 %v3736, %v3754
    %v3756 = vpop.f32.mrf.mxu0
    %v3757 = vadd.f32 %v3738, %v3756
    %3758 = vmatmul.bf16.gmra.mxu0 %v743
    %v3759 = vpop.f32.mrf.mxu0
    %v3760 = vadd.f32 %v3741, %v3759
    %v3761 = vpop.f32.mrf.mxu0
    %v3762 = vadd.f32 %v3743, %v3761
    %3763 = vdwg.mxu0
    %3764 = vmatpush.bf16.msra.mxu0 %v2543
    %3765 = vmatpush.bf16.msra.mxu0 %v2539
    %3766 = vmatpush.bf16.msra.mxu0 %v2535
    %3767 = vmatpush.bf16.msra.mxu0 %v2531
    %3768 = vmatpush.bf16.msra.mxu0 %v2527
    %3769 = vmatpush.bf16.msra.mxu0 %v2523
    %3770 = vmatpush.bf16.msra.mxu0 %v2519
    %3771 = vmatpush.bf16.msra.mxu0 %v2515
    %3772 = vmatmul.bf16.gmra.mxu0 %v728
    %v3773 = vpop.f32.mrf.mxu0
    %v3774 = vadd.f32 %v3755, %v3773
    %v3775 = vpop.f32.mrf.mxu0
    %v3776 = vadd.f32 %v3757, %v3775
    %3777 = vmatmul.bf16.gmra.mxu0 %v744
    %v3778 = vpop.f32.mrf.mxu0
    %v3779 = vadd.f32 %v3760, %v3778
    %v3780 = vpop.f32.mrf.mxu0
    %v3781 = vadd.f32 %v3762, %v3780
    %3782 = vdwg.mxu0
    %3783 = vmatpush.bf16.msra.mxu0 %v2575
    %3784 = vmatpush.bf16.msra.mxu0 %v2571
    %3785 = vmatpush.bf16.msra.mxu0 %v2567
    %3786 = vmatpush.bf16.msra.mxu0 %v2563
    %3787 = vmatpush.bf16.msra.mxu0 %v2559
    %3788 = vmatpush.bf16.msra.mxu0 %v2555
    %3789 = vmatpush.bf16.msra.mxu0 %v2551
    %3790 = vmatpush.bf16.msra.mxu0 %v2547
    %3791 = vmatmul.bf16.gmra.mxu0 %v729
    %v3792 = vpop.f32.mrf.mxu0
    %v3793 = vadd.f32 %v3774, %v3792
    %v3794 = vpop.f32.mrf.mxu0
    %v3795 = vadd.f32 %v3776, %v3794
    %3796 = vmatmul.bf16.gmra.mxu0 %v745
    %v3797 = vpop.f32.mrf.mxu0
    %v3798 = vadd.f32 %v3779, %v3797
    %v3799 = vpop.f32.mrf.mxu0
    %v3800 = vadd.f32 %v3781, %v3799
    %3801 = vdwg.mxu0
    %3802 = vmatpush.bf16.msra.mxu0 %v2607
    %3803 = vmatpush.bf16.msra.mxu0 %v2603
    %3804 = vmatpush.bf16.msra.mxu0 %v2599
    %3805 = vmatpush.bf16.msra.mxu0 %v2595
    %3806 = vmatpush.bf16.msra.mxu0 %v2591
    %3807 = vmatpush.bf16.msra.mxu0 %v2587
    %3808 = vmatpush.bf16.msra.mxu0 %v2583
    %3809 = vmatpush.bf16.msra.mxu0 %v2579
    %3810 = vmatmul.bf16.gmra.mxu0 %v730
    %v3811 = vpop.f32.mrf.mxu0
    %v3812 = vadd.f32 %v3793, %v3811
    %v3813 = vpop.f32.mrf.mxu0
    %v3814 = vadd.f32 %v3795, %v3813
    %3815 = vmatmul.bf16.gmra.mxu0 %v746
    %v3816 = vpop.f32.mrf.mxu0
    %v3817 = vadd.f32 %v3798, %v3816
    %v3818 = vpop.f32.mrf.mxu0
    %v3819 = vadd.f32 %v3800, %v3818
    %3820 = vdwg.mxu0
    %3821 = vmatpush.bf16.msra.mxu0 %v2639
    %3822 = vmatpush.bf16.msra.mxu0 %v2635
    %3823 = vmatpush.bf16.msra.mxu0 %v2631
    %3824 = vmatpush.bf16.msra.mxu0 %v2627
    %3825 = vmatpush.bf16.msra.mxu0 %v2623
    %3826 = vmatpush.bf16.msra.mxu0 %v2619
    %3827 = vmatpush.bf16.msra.mxu0 %v2615
    %3828 = vmatpush.bf16.msra.mxu0 %v2611
    %3829 = vmatmul.bf16.gmra.mxu0 %v731
    %v3830 = vpop.f32.mrf.mxu0
    %v3831 = vadd.f32 %v3812, %v3830
    %v3832 = vpop.f32.mrf.mxu0
    %v3833 = vadd.f32 %v3814, %v3832
    %3834 = vmatmul.bf16.gmra.mxu0 %v747
    %v3835 = vpop.f32.mrf.mxu0
    %v3836 = vadd.f32 %v3817, %v3835
    %v3837 = vpop.f32.mrf.mxu0
    %v3838 = vadd.f32 %v3819, %v3837
    %3839 = vdwg.mxu0
    %3840 = vmatpush.bf16.msra.mxu0 %v2671
    %3841 = vmatpush.bf16.msra.mxu0 %v2667
    %3842 = vmatpush.bf16.msra.mxu0 %v2663
    %3843 = vmatpush.bf16.msra.mxu0 %v2659
    %3844 = vmatpush.bf16.msra.mxu0 %v2655
    %3845 = vmatpush.bf16.msra.mxu0 %v2651
    %3846 = vmatpush.bf16.msra.mxu0 %v2647
    %3847 = vmatpush.bf16.msra.mxu0 %v2643
    %3848 = vmatmul.bf16.gmra.mxu0 %v732
    %v3849 = vpop.f32.mrf.mxu0
    %v3850 = vadd.f32 %v3831, %v3849
    %v3851 = vpop.f32.mrf.mxu0
    %v3852 = vadd.f32 %v3833, %v3851
    %3853 = vmatmul.bf16.gmra.mxu0 %v748
    %v3854 = vpop.f32.mrf.mxu0
    %v3855 = vadd.f32 %v3836, %v3854
    %v3856 = vpop.f32.mrf.mxu0
    %v3857 = vadd.f32 %v3838, %v3856
    %3858 = vdwg.mxu0
    %3859 = vmatpush.bf16.msra.mxu0 %v2703
    %3860 = vmatpush.bf16.msra.mxu0 %v2699
    %3861 = vmatpush.bf16.msra.mxu0 %v2695
    %3862 = vmatpush.bf16.msra.mxu0 %v2691
    %3863 = vmatpush.bf16.msra.mxu0 %v2687
    %3864 = vmatpush.bf16.msra.mxu0 %v2683
    %3865 = vmatpush.bf16.msra.mxu0 %v2679
    %3866 = vmatpush.bf16.msra.mxu0 %v2675
    %3867 = vmatmul.bf16.gmra.mxu0 %v733
    %v3868 = vpop.f32.mrf.mxu0
    %v3869 = vadd.f32 %v3850, %v3868
    %v3870 = vpop.f32.mrf.mxu0
    %v3871 = vadd.f32 %v3852, %v3870
    %3872 = vmatmul.bf16.gmra.mxu0 %v749
    %v3873 = vpop.f32.mrf.mxu0
    %v3874 = vadd.f32 %v3855, %v3873
    %v3875 = vpop.f32.mrf.mxu0
    %v3876 = vadd.f32 %v3857, %v3875
    %3877 = vdwg.mxu0
    %3878 = vmatpush.bf16.msra.mxu0 %v2735
    %3879 = vmatpush.bf16.msra.mxu0 %v2731
    %3880 = vmatpush.bf16.msra.mxu0 %v2727
    %3881 = vmatpush.bf16.msra.mxu0 %v2723
    %3882 = vmatpush.bf16.msra.mxu0 %v2719
    %3883 = vmatpush.bf16.msra.mxu0 %v2715
    %3884 = vmatpush.bf16.msra.mxu0 %v2711
    %3885 = vmatpush.bf16.msra.mxu0 %v2707
    %3886 = vmatmul.bf16.gmra.mxu0 %v734
    %v3887 = vpop.f32.mrf.mxu0
    %v3888 = vadd.f32 %v3869, %v3887
    %v3889 = vpop.f32.mrf.mxu0
    %v3890 = vadd.f32 %v3871, %v3889
    %3891 = vmatmul.bf16.gmra.mxu0 %v750
    %v3892 = vpop.f32.mrf.mxu0
    %v3893 = vadd.f32 %v3874, %v3892
    %v3894 = vpop.f32.mrf.mxu0
    %v3895 = vadd.f32 %v3876, %v3894
    %3896 = vdwg.mxu0
    %3897 = vmatpush.bf16.msra.mxu0 %v2767
    %3898 = vmatpush.bf16.msra.mxu0 %v2763
    %3899 = vmatpush.bf16.msra.mxu0 %v2759
    %3900 = vmatpush.bf16.msra.mxu0 %v2755
    %3901 = vmatpush.bf16.msra.mxu0 %v2751
    %3902 = vmatpush.bf16.msra.mxu0 %v2747
    %3903 = vmatpush.bf16.msra.mxu0 %v2743
    %3904 = vmatpush.bf16.msra.mxu0 %v2739
    %3905 = vmatmul.bf16.gmra.mxu0 %v735
    %v3906 = vpop.f32.mrf.mxu0
    %v3907 = vadd.f32 %v3888, %v3906
    %v3908 = vpop.f32.mrf.mxu0
    %v3909 = vadd.f32 %v3890, %v3908
    %3910 = vmatmul.bf16.gmra.mxu0 %v751
    %v3911 = vpop.f32.mrf.mxu0
    %v3912 = vadd.f32 %v3893, %v3911
    %v3913 = vpop.f32.mrf.mxu0
    %v3914 = vadd.f32 %v3895, %v3913
    %3915 = vdwg.mxu0
    %3916 = vmatpush.bf16.msra.mxu0 %v2799
    %3917 = vmatpush.bf16.msra.mxu0 %v2795
    %3918 = vmatpush.bf16.msra.mxu0 %v2791
    %3919 = vmatpush.bf16.msra.mxu0 %v2787
    %3920 = vmatpush.bf16.msra.mxu0 %v2783
    %3921 = vmatpush.bf16.msra.mxu0 %v2779
    %3922 = vmatpush.bf16.msra.mxu0 %v2775
    %3923 = vmatpush.bf16.msra.mxu0 %v2771
    %3924 = vmatmul.bf16.gmra.mxu0 %v736
    %v3925 = vpop.f32.mrf.mxu0
    %v3926 = vadd.f32 %v3907, %v3925
    %v3927 = vpop.f32.mrf.mxu0
    %v3928 = vadd.f32 %v3909, %v3927
    %3929 = vmatmul.bf16.gmra.mxu0 %v752
    %v3930 = vpop.f32.mrf.mxu0
    %v3931 = vadd.f32 %v3912, %v3930
    %v3932 = vpop.f32.mrf.mxu0
    %v3933 = vadd.f32 %v3914, %v3932
    %3934 = vdwg.mxu0
    %3935 = vmatpush.bf16.msra.mxu0 %v2831
    %3936 = vmatpush.bf16.msra.mxu0 %v2827
    %3937 = vmatpush.bf16.msra.mxu0 %v2823
    %3938 = vmatpush.bf16.msra.mxu0 %v2819
    %3939 = vmatpush.bf16.msra.mxu0 %v2815
    %3940 = vmatpush.bf16.msra.mxu0 %v2811
    %3941 = vmatpush.bf16.msra.mxu0 %v2807
    %3942 = vmatpush.bf16.msra.mxu0 %v2803
    %3943 = vmatmul.bf16.gmra.mxu0 %v737
    %v3944 = vpop.f32.mrf.mxu0
    %v3945 = vadd.f32 %v3926, %v3944
    %v3946 = vpop.f32.mrf.mxu0
    %v3947 = vadd.f32 %v3928, %v3946
    %3948 = vmatmul.bf16.gmra.mxu0 %v753
    %v3949 = vpop.f32.mrf.mxu0
    %v3950 = vadd.f32 %v3931, %v3949
    %v3951 = vpop.f32.mrf.mxu0
    %v3952 = vadd.f32 %v3933, %v3951
    %3953 = vdwg.mxu0
    %3954 = vmatpush.bf16.msra.mxu0 %v2352
    %3955 = vmatpush.bf16.msra.mxu0 %v2348
    %3956 = vmatpush.bf16.msra.mxu0 %v2344
    %3957 = vmatpush.bf16.msra.mxu0 %v2340
    %3958 = vmatpush.bf16.msra.mxu0 %v2336
    %3959 = vmatpush.bf16.msra.mxu0 %v2332
    %3960 = vmatpush.bf16.msra.mxu0 %v2328
    %3961 = vmatpush.bf16.msra.mxu0 %v2324
    %3962 = vmatmul.bf16.gmra.mxu0 %v722
    %v3963 = vpop.f32.mrf.mxu0
    %v3964 = vadd.f32 %v620, %v3963
    %v3965 = vpop.f32.mrf.mxu0
    %v3966 = vadd.f32 %v620, %v3965
    %3967 = vmatmul.bf16.gmra.mxu0 %v738
    %v3968 = vpop.f32.mrf.mxu0
    %v3969 = vadd.f32 %v620, %v3968
    %v3970 = vpop.f32.mrf.mxu0
    %v3971 = vadd.f32 %v620, %v3970
    %3972 = vdwg.mxu0
    %3973 = vmatpush.bf16.msra.mxu0 %v2384
    %3974 = vmatpush.bf16.msra.mxu0 %v2380
    %3975 = vmatpush.bf16.msra.mxu0 %v2376
    %3976 = vmatpush.bf16.msra.mxu0 %v2372
    %3977 = vmatpush.bf16.msra.mxu0 %v2368
    %3978 = vmatpush.bf16.msra.mxu0 %v2364
    %3979 = vmatpush.bf16.msra.mxu0 %v2360
    %3980 = vmatpush.bf16.msra.mxu0 %v2356
    %3981 = vmatmul.bf16.gmra.mxu0 %v723
    %v3982 = vpop.f32.mrf.mxu0
    %v3983 = vadd.f32 %v3964, %v3982
    %v3984 = vpop.f32.mrf.mxu0
    %v3985 = vadd.f32 %v3966, %v3984
    %3986 = vmatmul.bf16.gmra.mxu0 %v739
    %v3987 = vpop.f32.mrf.mxu0
    %v3988 = vadd.f32 %v3969, %v3987
    %v3989 = vpop.f32.mrf.mxu0
    %v3990 = vadd.f32 %v3971, %v3989
    %3991 = vdwg.mxu0
    %3992 = vmatpush.bf16.msra.mxu0 %v2416
    %3993 = vmatpush.bf16.msra.mxu0 %v2412
    %3994 = vmatpush.bf16.msra.mxu0 %v2408
    %3995 = vmatpush.bf16.msra.mxu0 %v2404
    %3996 = vmatpush.bf16.msra.mxu0 %v2400
    %3997 = vmatpush.bf16.msra.mxu0 %v2396
    %3998 = vmatpush.bf16.msra.mxu0 %v2392
    %3999 = vmatpush.bf16.msra.mxu0 %v2388
    %4000 = vmatmul.bf16.gmra.mxu0 %v724
    %v4001 = vpop.f32.mrf.mxu0
    %v4002 = vadd.f32 %v3983, %v4001
    %v4003 = vpop.f32.mrf.mxu0
    %v4004 = vadd.f32 %v3985, %v4003
    %4005 = vmatmul.bf16.gmra.mxu0 %v740
    %v4006 = vpop.f32.mrf.mxu0
    %v4007 = vadd.f32 %v3988, %v4006
    %v4008 = vpop.f32.mrf.mxu0
    %v4009 = vadd.f32 %v3990, %v4008
    %4010 = vdwg.mxu0
    %4011 = vmatpush.bf16.msra.mxu0 %v2448
    %4012 = vmatpush.bf16.msra.mxu0 %v2444
    %4013 = vmatpush.bf16.msra.mxu0 %v2440
    %4014 = vmatpush.bf16.msra.mxu0 %v2436
    %4015 = vmatpush.bf16.msra.mxu0 %v2432
    %4016 = vmatpush.bf16.msra.mxu0 %v2428
    %4017 = vmatpush.bf16.msra.mxu0 %v2424
    %4018 = vmatpush.bf16.msra.mxu0 %v2420
    %4019 = vmatmul.bf16.gmra.mxu0 %v725
    %v4020 = vpop.f32.mrf.mxu0
    %v4021 = vadd.f32 %v4002, %v4020
    %v4022 = vpop.f32.mrf.mxu0
    %v4023 = vadd.f32 %v4004, %v4022
    %4024 = vmatmul.bf16.gmra.mxu0 %v741
    %v4025 = vpop.f32.mrf.mxu0
    %v4026 = vadd.f32 %v4007, %v4025
    %v4027 = vpop.f32.mrf.mxu0
    %v4028 = vadd.f32 %v4009, %v4027
    %4029 = vdwg.mxu0
    %4030 = vmatpush.bf16.msra.mxu0 %v2480
    %4031 = vmatpush.bf16.msra.mxu0 %v2476
    %4032 = vmatpush.bf16.msra.mxu0 %v2472
    %4033 = vmatpush.bf16.msra.mxu0 %v2468
    %4034 = vmatpush.bf16.msra.mxu0 %v2464
    %4035 = vmatpush.bf16.msra.mxu0 %v2460
    %4036 = vmatpush.bf16.msra.mxu0 %v2456
    %4037 = vmatpush.bf16.msra.mxu0 %v2452
    %4038 = vmatmul.bf16.gmra.mxu0 %v726
    %v4039 = vpop.f32.mrf.mxu0
    %v4040 = vadd.f32 %v4021, %v4039
    %v4041 = vpop.f32.mrf.mxu0
    %v4042 = vadd.f32 %v4023, %v4041
    %4043 = vmatmul.bf16.gmra.mxu0 %v742
    %v4044 = vpop.f32.mrf.mxu0
    %v4045 = vadd.f32 %v4026, %v4044
    %v4046 = vpop.f32.mrf.mxu0
    %v4047 = vadd.f32 %v4028, %v4046
    %4048 = vdwg.mxu0
    %4049 = vmatpush.bf16.msra.mxu0 %v2512
    %4050 = vmatpush.bf16.msra.mxu0 %v2508
    %4051 = vmatpush.bf16.msra.mxu0 %v2504
    %4052 = vmatpush.bf16.msra.mxu0 %v2500
    %4053 = vmatpush.bf16.msra.mxu0 %v2496
    %4054 = vmatpush.bf16.msra.mxu0 %v2492
    %4055 = vmatpush.bf16.msra.mxu0 %v2488
    %4056 = vmatpush.bf16.msra.mxu0 %v2484
    %4057 = vmatmul.bf16.gmra.mxu0 %v727
    %v4058 = vpop.f32.mrf.mxu0
    %v4059 = vadd.f32 %v4040, %v4058
    %v4060 = vpop.f32.mrf.mxu0
    %v4061 = vadd.f32 %v4042, %v4060
    %4062 = vmatmul.bf16.gmra.mxu0 %v743
    %v4063 = vpop.f32.mrf.mxu0
    %v4064 = vadd.f32 %v4045, %v4063
    %v4065 = vpop.f32.mrf.mxu0
    %v4066 = vadd.f32 %v4047, %v4065
    %4067 = vdwg.mxu0
    %4068 = vmatpush.bf16.msra.mxu0 %v2544
    %4069 = vmatpush.bf16.msra.mxu0 %v2540
    %4070 = vmatpush.bf16.msra.mxu0 %v2536
    %4071 = vmatpush.bf16.msra.mxu0 %v2532
    %4072 = vmatpush.bf16.msra.mxu0 %v2528
    %4073 = vmatpush.bf16.msra.mxu0 %v2524
    %4074 = vmatpush.bf16.msra.mxu0 %v2520
    %4075 = vmatpush.bf16.msra.mxu0 %v2516
    %4076 = vmatmul.bf16.gmra.mxu0 %v728
    %v4077 = vpop.f32.mrf.mxu0
    %v4078 = vadd.f32 %v4059, %v4077
    %v4079 = vpop.f32.mrf.mxu0
    %v4080 = vadd.f32 %v4061, %v4079
    %4081 = vmatmul.bf16.gmra.mxu0 %v744
    %v4082 = vpop.f32.mrf.mxu0
    %v4083 = vadd.f32 %v4064, %v4082
    %v4084 = vpop.f32.mrf.mxu0
    %v4085 = vadd.f32 %v4066, %v4084
    %4086 = vdwg.mxu0
    %4087 = vmatpush.bf16.msra.mxu0 %v2576
    %4088 = vmatpush.bf16.msra.mxu0 %v2572
    %4089 = vmatpush.bf16.msra.mxu0 %v2568
    %4090 = vmatpush.bf16.msra.mxu0 %v2564
    %4091 = vmatpush.bf16.msra.mxu0 %v2560
    %4092 = vmatpush.bf16.msra.mxu0 %v2556
    %4093 = vmatpush.bf16.msra.mxu0 %v2552
    %4094 = vmatpush.bf16.msra.mxu0 %v2548
    %4095 = vmatmul.bf16.gmra.mxu0 %v729
    %v4096 = vpop.f32.mrf.mxu0
    %v4097 = vadd.f32 %v4078, %v4096
    %v4098 = vpop.f32.mrf.mxu0
    %v4099 = vadd.f32 %v4080, %v4098
    %4100 = vmatmul.bf16.gmra.mxu0 %v745
    %v4101 = vpop.f32.mrf.mxu0
    %v4102 = vadd.f32 %v4083, %v4101
    %v4103 = vpop.f32.mrf.mxu0
    %v4104 = vadd.f32 %v4085, %v4103
    %4105 = vdwg.mxu0
    %4106 = vmatpush.bf16.msra.mxu0 %v2608
    %4107 = vmatpush.bf16.msra.mxu0 %v2604
    %4108 = vmatpush.bf16.msra.mxu0 %v2600
    %4109 = vmatpush.bf16.msra.mxu0 %v2596
    %4110 = vmatpush.bf16.msra.mxu0 %v2592
    %4111 = vmatpush.bf16.msra.mxu0 %v2588
    %4112 = vmatpush.bf16.msra.mxu0 %v2584
    %4113 = vmatpush.bf16.msra.mxu0 %v2580
    %4114 = vmatmul.bf16.gmra.mxu0 %v730
    %v4115 = vpop.f32.mrf.mxu0
    %v4116 = vadd.f32 %v4097, %v4115
    %v4117 = vpop.f32.mrf.mxu0
    %v4118 = vadd.f32 %v4099, %v4117
    %4119 = vmatmul.bf16.gmra.mxu0 %v746
    %v4120 = vpop.f32.mrf.mxu0
    %v4121 = vadd.f32 %v4102, %v4120
    %v4122 = vpop.f32.mrf.mxu0
    %v4123 = vadd.f32 %v4104, %v4122
    %4124 = vdwg.mxu0
    %4125 = vmatpush.bf16.msra.mxu0 %v2640
    %4126 = vmatpush.bf16.msra.mxu0 %v2636
    %4127 = vmatpush.bf16.msra.mxu0 %v2632
    %4128 = vmatpush.bf16.msra.mxu0 %v2628
    %4129 = vmatpush.bf16.msra.mxu0 %v2624
    %4130 = vmatpush.bf16.msra.mxu0 %v2620
    %4131 = vmatpush.bf16.msra.mxu0 %v2616
    %4132 = vmatpush.bf16.msra.mxu0 %v2612
    %4133 = vmatmul.bf16.gmra.mxu0 %v731
    %v4134 = vpop.f32.mrf.mxu0
    %v4135 = vadd.f32 %v4116, %v4134
    %v4136 = vpop.f32.mrf.mxu0
    %v4137 = vadd.f32 %v4118, %v4136
    %4138 = vmatmul.bf16.gmra.mxu0 %v747
    %v4139 = vpop.f32.mrf.mxu0
    %v4140 = vadd.f32 %v4121, %v4139
    %v4141 = vpop.f32.mrf.mxu0
    %v4142 = vadd.f32 %v4123, %v4141
    %4143 = vdwg.mxu0
    %4144 = vmatpush.bf16.msra.mxu0 %v2672
    %4145 = vmatpush.bf16.msra.mxu0 %v2668
    %4146 = vmatpush.bf16.msra.mxu0 %v2664
    %4147 = vmatpush.bf16.msra.mxu0 %v2660
    %4148 = vmatpush.bf16.msra.mxu0 %v2656
    %4149 = vmatpush.bf16.msra.mxu0 %v2652
    %4150 = vmatpush.bf16.msra.mxu0 %v2648
    %4151 = vmatpush.bf16.msra.mxu0 %v2644
    %4152 = vmatmul.bf16.gmra.mxu0 %v732
    %v4153 = vpop.f32.mrf.mxu0
    %v4154 = vadd.f32 %v4135, %v4153
    %v4155 = vpop.f32.mrf.mxu0
    %v4156 = vadd.f32 %v4137, %v4155
    %4157 = vmatmul.bf16.gmra.mxu0 %v748
    %v4158 = vpop.f32.mrf.mxu0
    %v4159 = vadd.f32 %v4140, %v4158
    %v4160 = vpop.f32.mrf.mxu0
    %v4161 = vadd.f32 %v4142, %v4160
    %4162 = vdwg.mxu0
    %4163 = vmatpush.bf16.msra.mxu0 %v2704
    %4164 = vmatpush.bf16.msra.mxu0 %v2700
    %4165 = vmatpush.bf16.msra.mxu0 %v2696
    %4166 = vmatpush.bf16.msra.mxu0 %v2692
    %4167 = vmatpush.bf16.msra.mxu0 %v2688
    %4168 = vmatpush.bf16.msra.mxu0 %v2684
    %4169 = vmatpush.bf16.msra.mxu0 %v2680
    %4170 = vmatpush.bf16.msra.mxu0 %v2676
    %4171 = vmatmul.bf16.gmra.mxu0 %v733
    %v4172 = vpop.f32.mrf.mxu0
    %v4173 = vadd.f32 %v4154, %v4172
    %v4174 = vpop.f32.mrf.mxu0
    %v4175 = vadd.f32 %v4156, %v4174
    %4176 = vmatmul.bf16.gmra.mxu0 %v749
    %v4177 = vpop.f32.mrf.mxu0
    %v4178 = vadd.f32 %v4159, %v4177
    %v4179 = vpop.f32.mrf.mxu0
    %v4180 = vadd.f32 %v4161, %v4179
    %4181 = vdwg.mxu0
    %4182 = vmatpush.bf16.msra.mxu0 %v2736
    %4183 = vmatpush.bf16.msra.mxu0 %v2732
    %4184 = vmatpush.bf16.msra.mxu0 %v2728
    %4185 = vmatpush.bf16.msra.mxu0 %v2724
    %4186 = vmatpush.bf16.msra.mxu0 %v2720
    %4187 = vmatpush.bf16.msra.mxu0 %v2716
    %4188 = vmatpush.bf16.msra.mxu0 %v2712
    %4189 = vmatpush.bf16.msra.mxu0 %v2708
    %4190 = vmatmul.bf16.gmra.mxu0 %v734
    %v4191 = vpop.f32.mrf.mxu0
    %v4192 = vadd.f32 %v4173, %v4191
    %v4193 = vpop.f32.mrf.mxu0
    %v4194 = vadd.f32 %v4175, %v4193
    %4195 = vmatmul.bf16.gmra.mxu0 %v750
    %v4196 = vpop.f32.mrf.mxu0
    %v4197 = vadd.f32 %v4178, %v4196
    %v4198 = vpop.f32.mrf.mxu0
    %v4199 = vadd.f32 %v4180, %v4198
    %4200 = vdwg.mxu0
    %4201 = vmatpush.bf16.msra.mxu0 %v2768
    %4202 = vmatpush.bf16.msra.mxu0 %v2764
    %4203 = vmatpush.bf16.msra.mxu0 %v2760
    %4204 = vmatpush.bf16.msra.mxu0 %v2756
    %4205 = vmatpush.bf16.msra.mxu0 %v2752
    %4206 = vmatpush.bf16.msra.mxu0 %v2748
    %4207 = vmatpush.bf16.msra.mxu0 %v2744
    %4208 = vmatpush.bf16.msra.mxu0 %v2740
    %4209 = vmatmul.bf16.gmra.mxu0 %v735
    %v4210 = vpop.f32.mrf.mxu0
    %v4211 = vadd.f32 %v4192, %v4210
    %v4212 = vpop.f32.mrf.mxu0
    %v4213 = vadd.f32 %v4194, %v4212
    %4214 = vmatmul.bf16.gmra.mxu0 %v751
    %v4215 = vpop.f32.mrf.mxu0
    %v4216 = vadd.f32 %v4197, %v4215
    %v4217 = vpop.f32.mrf.mxu0
    %v4218 = vadd.f32 %v4199, %v4217
    %4219 = vdwg.mxu0
    %4220 = vmatpush.bf16.msra.mxu0 %v2800
    %4221 = vmatpush.bf16.msra.mxu0 %v2796
    %4222 = vmatpush.bf16.msra.mxu0 %v2792
    %4223 = vmatpush.bf16.msra.mxu0 %v2788
    %4224 = vmatpush.bf16.msra.mxu0 %v2784
    %4225 = vmatpush.bf16.msra.mxu0 %v2780
    %4226 = vmatpush.bf16.msra.mxu0 %v2776
    %4227 = vmatpush.bf16.msra.mxu0 %v2772
    %4228 = vmatmul.bf16.gmra.mxu0 %v736
    %v4229 = vpop.f32.mrf.mxu0
    %v4230 = vadd.f32 %v4211, %v4229
    %v4231 = vpop.f32.mrf.mxu0
    %v4232 = vadd.f32 %v4213, %v4231
    %4233 = vmatmul.bf16.gmra.mxu0 %v752
    %v4234 = vpop.f32.mrf.mxu0
    %v4235 = vadd.f32 %v4216, %v4234
    %v4236 = vpop.f32.mrf.mxu0
    %v4237 = vadd.f32 %v4218, %v4236
    %4238 = vdwg.mxu0
    %4239 = vmatpush.bf16.msra.mxu0 %v2832
    %4240 = vmatpush.bf16.msra.mxu0 %v2828
    %4241 = vmatpush.bf16.msra.mxu0 %v2824
    %4242 = vmatpush.bf16.msra.mxu0 %v2820
    %4243 = vmatpush.bf16.msra.mxu0 %v2816
    %4244 = vmatpush.bf16.msra.mxu0 %v2812
    %4245 = vmatpush.bf16.msra.mxu0 %v2808
    %4246 = vmatpush.bf16.msra.mxu0 %v2804
    %4247 = vmatmul.bf16.gmra.mxu0 %v737
    %v4248 = vpop.f32.mrf.mxu0
    %v4249 = vadd.f32 %v4230, %v4248
    %v4250 = vpop.f32.mrf.mxu0
    %v4251 = vadd.f32 %v4232, %v4250
    %4252 = vmatmul.bf16.gmra.mxu0 %v753
    %v4253 = vpop.f32.mrf.mxu0
    %v4254 = vadd.f32 %v4235, %v4253
    %v4255 = vpop.f32.mrf.mxu0
    %v4256 = vadd.f32 %v4237, %v4255
    %4257 = vdwg.mxu0
    %4258 = vmatpush.bf16.msra.mxu0 %v2353
    %4259 = vmatpush.bf16.msra.mxu0 %v2349
    %4260 = vmatpush.bf16.msra.mxu0 %v2345
    %4261 = vmatpush.bf16.msra.mxu0 %v2341
    %4262 = vmatpush.bf16.msra.mxu0 %v2337
    %4263 = vmatpush.bf16.msra.mxu0 %v2333
    %4264 = vmatpush.bf16.msra.mxu0 %v2329
    %4265 = vmatpush.bf16.msra.mxu0 %v2325
    %4266 = vmatmul.bf16.gmra.mxu0 %v722
    %v4267 = vpop.f32.mrf.mxu0
    %v4268 = vadd.f32 %v621, %v4267
    %v4269 = vpop.f32.mrf.mxu0
    %v4270 = vadd.f32 %v621, %v4269
    %4271 = vmatmul.bf16.gmra.mxu0 %v738
    %v4272 = vpop.f32.mrf.mxu0
    %v4273 = vadd.f32 %v621, %v4272
    %v4274 = vpop.f32.mrf.mxu0
    %v4275 = vadd.f32 %v621, %v4274
    %4276 = vdwg.mxu0
    %4277 = vmatpush.bf16.msra.mxu0 %v2385
    %4278 = vmatpush.bf16.msra.mxu0 %v2381
    %4279 = vmatpush.bf16.msra.mxu0 %v2377
    %4280 = vmatpush.bf16.msra.mxu0 %v2373
    %4281 = vmatpush.bf16.msra.mxu0 %v2369
    %4282 = vmatpush.bf16.msra.mxu0 %v2365
    %4283 = vmatpush.bf16.msra.mxu0 %v2361
    %4284 = vmatpush.bf16.msra.mxu0 %v2357
    %4285 = vmatmul.bf16.gmra.mxu0 %v723
    %v4286 = vpop.f32.mrf.mxu0
    %v4287 = vadd.f32 %v4268, %v4286
    %v4288 = vpop.f32.mrf.mxu0
    %v4289 = vadd.f32 %v4270, %v4288
    %4290 = vmatmul.bf16.gmra.mxu0 %v739
    %v4291 = vpop.f32.mrf.mxu0
    %v4292 = vadd.f32 %v4273, %v4291
    %v4293 = vpop.f32.mrf.mxu0
    %v4294 = vadd.f32 %v4275, %v4293
    %4295 = vdwg.mxu0
    %4296 = vmatpush.bf16.msra.mxu0 %v2417
    %4297 = vmatpush.bf16.msra.mxu0 %v2413
    %4298 = vmatpush.bf16.msra.mxu0 %v2409
    %4299 = vmatpush.bf16.msra.mxu0 %v2405
    %4300 = vmatpush.bf16.msra.mxu0 %v2401
    %4301 = vmatpush.bf16.msra.mxu0 %v2397
    %4302 = vmatpush.bf16.msra.mxu0 %v2393
    %4303 = vmatpush.bf16.msra.mxu0 %v2389
    %4304 = vmatmul.bf16.gmra.mxu0 %v724
    %v4305 = vpop.f32.mrf.mxu0
    %v4306 = vadd.f32 %v4287, %v4305
    %v4307 = vpop.f32.mrf.mxu0
    %v4308 = vadd.f32 %v4289, %v4307
    %4309 = vmatmul.bf16.gmra.mxu0 %v740
    %v4310 = vpop.f32.mrf.mxu0
    %v4311 = vadd.f32 %v4292, %v4310
    %v4312 = vpop.f32.mrf.mxu0
    %v4313 = vadd.f32 %v4294, %v4312
    %4314 = vdwg.mxu0
    %4315 = vmatpush.bf16.msra.mxu0 %v2449
    %4316 = vmatpush.bf16.msra.mxu0 %v2445
    %4317 = vmatpush.bf16.msra.mxu0 %v2441
    %4318 = vmatpush.bf16.msra.mxu0 %v2437
    %4319 = vmatpush.bf16.msra.mxu0 %v2433
    %4320 = vmatpush.bf16.msra.mxu0 %v2429
    %4321 = vmatpush.bf16.msra.mxu0 %v2425
    %4322 = vmatpush.bf16.msra.mxu0 %v2421
    %4323 = vmatmul.bf16.gmra.mxu0 %v725
    %v4324 = vpop.f32.mrf.mxu0
    %v4325 = vadd.f32 %v4306, %v4324
    %v4326 = vpop.f32.mrf.mxu0
    %v4327 = vadd.f32 %v4308, %v4326
    %4328 = vmatmul.bf16.gmra.mxu0 %v741
    %v4329 = vpop.f32.mrf.mxu0
    %v4330 = vadd.f32 %v4311, %v4329
    %v4331 = vpop.f32.mrf.mxu0
    %v4332 = vadd.f32 %v4313, %v4331
    %4333 = vdwg.mxu0
    %4334 = vmatpush.bf16.msra.mxu0 %v2481
    %4335 = vmatpush.bf16.msra.mxu0 %v2477
    %4336 = vmatpush.bf16.msra.mxu0 %v2473
    %4337 = vmatpush.bf16.msra.mxu0 %v2469
    %4338 = vmatpush.bf16.msra.mxu0 %v2465
    %4339 = vmatpush.bf16.msra.mxu0 %v2461
    %4340 = vmatpush.bf16.msra.mxu0 %v2457
    %4341 = vmatpush.bf16.msra.mxu0 %v2453
    %4342 = vmatmul.bf16.gmra.mxu0 %v726
    %v4343 = vpop.f32.mrf.mxu0
    %v4344 = vadd.f32 %v4325, %v4343
    %v4345 = vpop.f32.mrf.mxu0
    %v4346 = vadd.f32 %v4327, %v4345
    %4347 = vmatmul.bf16.gmra.mxu0 %v742
    %v4348 = vpop.f32.mrf.mxu0
    %v4349 = vadd.f32 %v4330, %v4348
    %v4350 = vpop.f32.mrf.mxu0
    %v4351 = vadd.f32 %v4332, %v4350
    %4352 = vdwg.mxu0
    %4353 = vmatpush.bf16.msra.mxu0 %v2513
    %4354 = vmatpush.bf16.msra.mxu0 %v2509
    %4355 = vmatpush.bf16.msra.mxu0 %v2505
    %4356 = vmatpush.bf16.msra.mxu0 %v2501
    %4357 = vmatpush.bf16.msra.mxu0 %v2497
    %4358 = vmatpush.bf16.msra.mxu0 %v2493
    %4359 = vmatpush.bf16.msra.mxu0 %v2489
    %4360 = vmatpush.bf16.msra.mxu0 %v2485
    %4361 = vmatmul.bf16.gmra.mxu0 %v727
    %v4362 = vpop.f32.mrf.mxu0
    %v4363 = vadd.f32 %v4344, %v4362
    %v4364 = vpop.f32.mrf.mxu0
    %v4365 = vadd.f32 %v4346, %v4364
    %4366 = vmatmul.bf16.gmra.mxu0 %v743
    %v4367 = vpop.f32.mrf.mxu0
    %v4368 = vadd.f32 %v4349, %v4367
    %v4369 = vpop.f32.mrf.mxu0
    %v4370 = vadd.f32 %v4351, %v4369
    %4371 = vdwg.mxu0
    %4372 = vmatpush.bf16.msra.mxu0 %v2545
    %4373 = vmatpush.bf16.msra.mxu0 %v2541
    %4374 = vmatpush.bf16.msra.mxu0 %v2537
    %4375 = vmatpush.bf16.msra.mxu0 %v2533
    %4376 = vmatpush.bf16.msra.mxu0 %v2529
    %4377 = vmatpush.bf16.msra.mxu0 %v2525
    %4378 = vmatpush.bf16.msra.mxu0 %v2521
    %4379 = vmatpush.bf16.msra.mxu0 %v2517
    %4380 = vmatmul.bf16.gmra.mxu0 %v728
    %v4381 = vpop.f32.mrf.mxu0
    %v4382 = vadd.f32 %v4363, %v4381
    %v4383 = vpop.f32.mrf.mxu0
    %v4384 = vadd.f32 %v4365, %v4383
    %4385 = vmatmul.bf16.gmra.mxu0 %v744
    %v4386 = vpop.f32.mrf.mxu0
    %v4387 = vadd.f32 %v4368, %v4386
    %v4388 = vpop.f32.mrf.mxu0
    %v4389 = vadd.f32 %v4370, %v4388
    %4390 = vdwg.mxu0
    %4391 = vmatpush.bf16.msra.mxu0 %v2577
    %4392 = vmatpush.bf16.msra.mxu0 %v2573
    %4393 = vmatpush.bf16.msra.mxu0 %v2569
    %4394 = vmatpush.bf16.msra.mxu0 %v2565
    %4395 = vmatpush.bf16.msra.mxu0 %v2561
    %4396 = vmatpush.bf16.msra.mxu0 %v2557
    %4397 = vmatpush.bf16.msra.mxu0 %v2553
    %4398 = vmatpush.bf16.msra.mxu0 %v2549
    %4399 = vmatmul.bf16.gmra.mxu0 %v729
    %v4400 = vpop.f32.mrf.mxu0
    %v4401 = vadd.f32 %v4382, %v4400
    %v4402 = vpop.f32.mrf.mxu0
    %v4403 = vadd.f32 %v4384, %v4402
    %4404 = vmatmul.bf16.gmra.mxu0 %v745
    %v4405 = vpop.f32.mrf.mxu0
    %v4406 = vadd.f32 %v4387, %v4405
    %v4407 = vpop.f32.mrf.mxu0
    %v4408 = vadd.f32 %v4389, %v4407
    %4409 = vdwg.mxu0
    %4410 = vmatpush.bf16.msra.mxu0 %v2609
    %4411 = vmatpush.bf16.msra.mxu0 %v2605
    %4412 = vmatpush.bf16.msra.mxu0 %v2601
    %4413 = vmatpush.bf16.msra.mxu0 %v2597
    %4414 = vmatpush.bf16.msra.mxu0 %v2593
    %4415 = vmatpush.bf16.msra.mxu0 %v2589
    %4416 = vmatpush.bf16.msra.mxu0 %v2585
    %4417 = vmatpush.bf16.msra.mxu0 %v2581
    %4418 = vmatmul.bf16.gmra.mxu0 %v730
    %v4419 = vpop.f32.mrf.mxu0
    %v4420 = vadd.f32 %v4401, %v4419
    %v4421 = vpop.f32.mrf.mxu0
    %v4422 = vadd.f32 %v4403, %v4421
    %4423 = vmatmul.bf16.gmra.mxu0 %v746
    %v4424 = vpop.f32.mrf.mxu0
    %v4425 = vadd.f32 %v4406, %v4424
    %v4426 = vpop.f32.mrf.mxu0
    %v4427 = vadd.f32 %v4408, %v4426
    %4428 = vdwg.mxu0
    %4429 = vmatpush.bf16.msra.mxu0 %v2641
    %4430 = vmatpush.bf16.msra.mxu0 %v2637
    %4431 = vmatpush.bf16.msra.mxu0 %v2633
    %4432 = vmatpush.bf16.msra.mxu0 %v2629
    %4433 = vmatpush.bf16.msra.mxu0 %v2625
    %4434 = vmatpush.bf16.msra.mxu0 %v2621
    %4435 = vmatpush.bf16.msra.mxu0 %v2617
    %4436 = vmatpush.bf16.msra.mxu0 %v2613
    %4437 = vmatmul.bf16.gmra.mxu0 %v731
    %v4438 = vpop.f32.mrf.mxu0
    %v4439 = vadd.f32 %v4420, %v4438
    %v4440 = vpop.f32.mrf.mxu0
    %v4441 = vadd.f32 %v4422, %v4440
    %4442 = vmatmul.bf16.gmra.mxu0 %v747
    %v4443 = vpop.f32.mrf.mxu0
    %v4444 = vadd.f32 %v4425, %v4443
    %v4445 = vpop.f32.mrf.mxu0
    %v4446 = vadd.f32 %v4427, %v4445
    %4447 = vdwg.mxu0
    %4448 = vmatpush.bf16.msra.mxu0 %v2673
    %4449 = vmatpush.bf16.msra.mxu0 %v2669
    %4450 = vmatpush.bf16.msra.mxu0 %v2665
    %4451 = vmatpush.bf16.msra.mxu0 %v2661
    %4452 = vmatpush.bf16.msra.mxu0 %v2657
    %4453 = vmatpush.bf16.msra.mxu0 %v2653
    %4454 = vmatpush.bf16.msra.mxu0 %v2649
    %4455 = vmatpush.bf16.msra.mxu0 %v2645
    %4456 = vmatmul.bf16.gmra.mxu0 %v732
    %v4457 = vpop.f32.mrf.mxu0
    %v4458 = vadd.f32 %v4439, %v4457
    %v4459 = vpop.f32.mrf.mxu0
    %v4460 = vadd.f32 %v4441, %v4459
    %4461 = vmatmul.bf16.gmra.mxu0 %v748
    %v4462 = vpop.f32.mrf.mxu0
    %v4463 = vadd.f32 %v4444, %v4462
    %v4464 = vpop.f32.mrf.mxu0
    %v4465 = vadd.f32 %v4446, %v4464
    %4466 = vdwg.mxu0
    %4467 = vmatpush.bf16.msra.mxu0 %v2705
    %4468 = vmatpush.bf16.msra.mxu0 %v2701
    %4469 = vmatpush.bf16.msra.mxu0 %v2697
    %4470 = vmatpush.bf16.msra.mxu0 %v2693
    %4471 = vmatpush.bf16.msra.mxu0 %v2689
    %4472 = vmatpush.bf16.msra.mxu0 %v2685
    %4473 = vmatpush.bf16.msra.mxu0 %v2681
    %4474 = vmatpush.bf16.msra.mxu0 %v2677
    %4475 = vmatmul.bf16.gmra.mxu0 %v733
    %v4476 = vpop.f32.mrf.mxu0
    %v4477 = vadd.f32 %v4458, %v4476
    %v4478 = vpop.f32.mrf.mxu0
    %v4479 = vadd.f32 %v4460, %v4478
    %4480 = vmatmul.bf16.gmra.mxu0 %v749
    %v4481 = vpop.f32.mrf.mxu0
    %v4482 = vadd.f32 %v4463, %v4481
    %v4483 = vpop.f32.mrf.mxu0
    %v4484 = vadd.f32 %v4465, %v4483
    %4485 = vdwg.mxu0
    %4486 = vmatpush.bf16.msra.mxu0 %v2737
    %4487 = vmatpush.bf16.msra.mxu0 %v2733
    %4488 = vmatpush.bf16.msra.mxu0 %v2729
    %4489 = vmatpush.bf16.msra.mxu0 %v2725
    %4490 = vmatpush.bf16.msra.mxu0 %v2721
    %4491 = vmatpush.bf16.msra.mxu0 %v2717
    %4492 = vmatpush.bf16.msra.mxu0 %v2713
    %4493 = vmatpush.bf16.msra.mxu0 %v2709
    %4494 = vmatmul.bf16.gmra.mxu0 %v734
    %v4495 = vpop.f32.mrf.mxu0
    %v4496 = vadd.f32 %v4477, %v4495
    %v4497 = vpop.f32.mrf.mxu0
    %v4498 = vadd.f32 %v4479, %v4497
    %4499 = vmatmul.bf16.gmra.mxu0 %v750
    %v4500 = vpop.f32.mrf.mxu0
    %v4501 = vadd.f32 %v4482, %v4500
    %v4502 = vpop.f32.mrf.mxu0
    %v4503 = vadd.f32 %v4484, %v4502
    %4504 = vdwg.mxu0
    %4505 = vmatpush.bf16.msra.mxu0 %v2769
    %4506 = vmatpush.bf16.msra.mxu0 %v2765
    %4507 = vmatpush.bf16.msra.mxu0 %v2761
    %4508 = vmatpush.bf16.msra.mxu0 %v2757
    %4509 = vmatpush.bf16.msra.mxu0 %v2753
    %4510 = vmatpush.bf16.msra.mxu0 %v2749
    %4511 = vmatpush.bf16.msra.mxu0 %v2745
    %4512 = vmatpush.bf16.msra.mxu0 %v2741
    %4513 = vmatmul.bf16.gmra.mxu0 %v735
    %v4514 = vpop.f32.mrf.mxu0
    %v4515 = vadd.f32 %v4496, %v4514
    %v4516 = vpop.f32.mrf.mxu0
    %v4517 = vadd.f32 %v4498, %v4516
    %4518 = vmatmul.bf16.gmra.mxu0 %v751
    %v4519 = vpop.f32.mrf.mxu0
    %v4520 = vadd.f32 %v4501, %v4519
    %v4521 = vpop.f32.mrf.mxu0
    %v4522 = vadd.f32 %v4503, %v4521
    %4523 = vdwg.mxu0
    %4524 = vmatpush.bf16.msra.mxu0 %v2801
    %4525 = vmatpush.bf16.msra.mxu0 %v2797
    %4526 = vmatpush.bf16.msra.mxu0 %v2793
    %4527 = vmatpush.bf16.msra.mxu0 %v2789
    %4528 = vmatpush.bf16.msra.mxu0 %v2785
    %4529 = vmatpush.bf16.msra.mxu0 %v2781
    %4530 = vmatpush.bf16.msra.mxu0 %v2777
    %4531 = vmatpush.bf16.msra.mxu0 %v2773
    %4532 = vmatmul.bf16.gmra.mxu0 %v736
    %v4533 = vpop.f32.mrf.mxu0
    %v4534 = vadd.f32 %v4515, %v4533
    %v4535 = vpop.f32.mrf.mxu0
    %v4536 = vadd.f32 %v4517, %v4535
    %4537 = vmatmul.bf16.gmra.mxu0 %v752
    %v4538 = vpop.f32.mrf.mxu0
    %v4539 = vadd.f32 %v4520, %v4538
    %v4540 = vpop.f32.mrf.mxu0
    %v4541 = vadd.f32 %v4522, %v4540
    %4542 = vdwg.mxu0
    %4543 = vmatpush.bf16.msra.mxu0 %v2833
    %4544 = vmatpush.bf16.msra.mxu0 %v2829
    %4545 = vmatpush.bf16.msra.mxu0 %v2825
    %4546 = vmatpush.bf16.msra.mxu0 %v2821
    %4547 = vmatpush.bf16.msra.mxu0 %v2817
    %4548 = vmatpush.bf16.msra.mxu0 %v2813
    %4549 = vmatpush.bf16.msra.mxu0 %v2809
    %4550 = vmatpush.bf16.msra.mxu0 %v2805
    %4551 = vmatmul.bf16.gmra.mxu0 %v737
    %v4552 = vpop.f32.mrf.mxu0
    %v4553 = vadd.f32 %v4534, %v4552
    %v4554 = vpop.f32.mrf.mxu0
    %v4555 = vadd.f32 %v4536, %v4554
    %4556 = vmatmul.bf16.gmra.mxu0 %v753
    %v4557 = vpop.f32.mrf.mxu0
    %v4558 = vadd.f32 %v4539, %v4557
    %v4559 = vpop.f32.mrf.mxu0
    %v4560 = vadd.f32 %v4541, %v4559
    %4561 = vdwg.mxu0
    %v4562 = vmax.f32 %v3641, 0.0
    %v4563 = vmax.f32 %v3945, 0.0
    %v4564 = vmax.f32 %v4249, 0.0
    %v4565 = vmax.f32 %v4553, 0.0
    %v4566 = vmax.f32 %v3643, 0.0
    %v4567 = vmax.f32 %v3947, 0.0
    %v4568 = vmax.f32 %v4251, 0.0
    %v4569 = vmax.f32 %v4555, 0.0
    %v4570 = vmax.f32 %v3646, 0.0
    %v4571 = vmax.f32 %v3950, 0.0
    %v4572 = vmax.f32 %v4254, 0.0
    %v4573 = vmax.f32 %v4558, 0.0
    %v4574 = vmax.f32 %v3648, 0.0
    %v4575 = vmax.f32 %v3952, 0.0
    %v4576 = vmax.f32 %v4256, 0.0
    %v4577 = vmax.f32 %v4560, 0.0
    %v4578 = vld [vmem:[%s4] sm:$0xf]
    %v4580 = vperm.slane %v4578, 0
    %v4581 = vperm.slane %v4578, 1
    %v4582 = vperm.slane %v4578, 2
    %v4583 = vperm.slane %v4578, 3
    %v4588 = vmul.f32 %v4562, %v4580
    %v4589 = vmul.f32 %v4563, %v4581
    %v4590 = vmul.f32 %v4564, %v4582
    %v4591 = vmul.f32 %v4565, %v4583
    %v4592 = vmul.f32 %v4566, %v4580
    %v4593 = vmul.f32 %v4567, %v4581
    %v4594 = vmul.f32 %v4568, %v4582
    %v4595 = vmul.f32 %v4569, %v4583
    %v4596 = vmul.f32 %v4570, %v4580
    %v4597 = vmul.f32 %v4571, %v4581
    %v4598 = vmul.f32 %v4572, %v4582
    %v4599 = vmul.f32 %v4573, %v4583
    %v4600 = vmul.f32 %v4574, %v4580
    %v4601 = vmul.f32 %v4575, %v4581
    %v4602 = vmul.f32 %v4576, %v4582
    %v4603 = vmul.f32 %v4577, %v4583
    %v4604 = vadd.f32 %v4588, %v4589
    %v4605 = vadd.f32 %v4604, %v4590
    %v4606 = vadd.f32 %v4605, %v4591
    %4607 = vadd.xlane.f32.xlu0 %v4606
    %v4608 = vpop.xlane.xlu0 %4607
    %v4609 = vadd.f32 %v4592, %v4593
    %v4610 = vadd.f32 %v4609, %v4594
    %v4611 = vadd.f32 %v4610, %v4595
    %4612 = vadd.xlane.f32.xlu0 %v4611
    %v4613 = vpop.xlane.xlu0 %4612
    %v4614 = vadd.f32 %v4596, %v4597
    %v4615 = vadd.f32 %v4614, %v4598
    %v4616 = vadd.f32 %v4615, %v4599
    %4617 = vadd.xlane.f32.xlu0 %v4616
    %v4618 = vpop.xlane.xlu0 %4617
    %v4619 = vadd.f32 %v4600, %v4601
    %v4620 = vadd.f32 %v4619, %v4602
    %v4621 = vadd.f32 %v4620, %v4603
    %4622 = vadd.xlane.f32.xlu0 %v4621
    %v4623 = vpop.xlane.xlu0 %4622
    %s4624 = sld [smem:[#allocation2]]
    %v4625 = vstv %s4624
    %v4626 = vadd.f32 %v4608, %v4625
    %v4627 = vadd.f32 %v4613, %v4625
    %v4628 = vadd.f32 %v4618, %v4625
    %v4629 = vadd.f32 %v4623, %v4625
    %v4630 = vxor.u32 %v4626, 2147483648
    %v4631 = vxor.u32 %v4627, 2147483648
    %v4632 = vxor.u32 %v4628, 2147483648
    %v4633 = vxor.u32 %v4629, 2147483648
    %v4634 = vmul.f32 %v4630, 1.442695
    %v4635 = vpow.pop %v4634
    %v4636 = vmul.f32 %v4631, 1.442695
    %v4637 = vpow.pop %v4636
    %v4638 = vmul.f32 %v4632, 1.442695
    %v4639 = vpow.pop %v4638
    %v4640 = vmul.f32 %v4633, 1.442695
    %v4641 = vpow.pop %v4640
    %v4642 = vadd.f32 %v4635, 1.0
    %v4643 = vadd.f32 %v4637, 1.0
    %v4644 = vadd.f32 %v4639, 1.0
    %v4645 = vadd.f32 %v4641, 1.0
    %v4646 = vrcp.pop %v4642
    %v4647 = vmul.f32 %v4642, %v4646
    %v4648 = vsub.f32 1.0, %v4647
    %v4649 = vmul.f32 %v4646, %v4648
    %v4650 = vadd.f32 %v4646, %v4649
    %vm4651 = vweird.f32 %v4642
    %vm4652 = vweird.f32 %v4646
    %vm4653 = vmor %vm4651, %vm4652
    %v4654 = vsel %vm4653, %v4646, %v4650
    %v4655 = vand.u32 2147483647, %v4642
    %vm4656 = vcmp.eq.f32.partialorder %v4655, 8.507059e+37
    %v4657 = vand.u32 %v4642, 2147483648
    %v4658 = vor.u32 1.1754944e-38, %v4657
    %v4659 = vsel %vm4656, %v4658, %v4654
    %v4660 = vmul.f32 1.0, %v4659
    %v4661 = vrcp.pop %v4643
    %v4662 = vmul.f32 %v4643, %v4661
    %v4663 = vsub.f32 1.0, %v4662
    %v4664 = vmul.f32 %v4661, %v4663
    %v4665 = vadd.f32 %v4661, %v4664
    %vm4666 = vweird.f32 %v4643
    %vm4667 = vweird.f32 %v4661
    %vm4668 = vmor %vm4666, %vm4667
    %v4669 = vsel %vm4668, %v4661, %v4665
    %v4670 = vand.u32 2147483647, %v4643
    %vm4671 = vcmp.eq.f32.partialorder %v4670, 8.507059e+37
    %v4672 = vand.u32 %v4643, 2147483648
    %v4673 = vor.u32 1.1754944e-38, %v4672
    %v4674 = vsel %vm4671, %v4673, %v4669
    %v4675 = vmul.f32 1.0, %v4674
    %v4676 = vrcp.pop %v4644
    %v4677 = vmul.f32 %v4644, %v4676
    %v4678 = vsub.f32 1.0, %v4677
    %v4679 = vmul.f32 %v4676, %v4678
    %v4680 = vadd.f32 %v4676, %v4679
    %vm4681 = vweird.f32 %v4644
    %vm4682 = vweird.f32 %v4676
    %vm4683 = vmor %vm4681, %vm4682
    %v4684 = vsel %vm4683, %v4676, %v4680
    %v4685 = vand.u32 2147483647, %v4644
    %vm4686 = vcmp.eq.f32.partialorder %v4685, 8.507059e+37
    %v4687 = vand.u32 %v4644, 2147483648
    %v4688 = vor.u32 1.1754944e-38, %v4687
    %v4689 = vsel %vm4686, %v4688, %v4684
    %v4690 = vmul.f32 1.0, %v4689
    %v4691 = vrcp.pop %v4645
    %v4692 = vmul.f32 %v4645, %v4691
    %v4693 = vsub.f32 1.0, %v4692
    %v4694 = vmul.f32 %v4691, %v4693
    %v4695 = vadd.f32 %v4691, %v4694
    %vm4696 = vweird.f32 %v4645
    %vm4697 = vweird.f32 %v4691
    %vm4698 = vmor %vm4696, %vm4697
    %v4699 = vsel %vm4698, %v4691, %v4695
    %v4700 = vand.u32 2147483647, %v4645
    %vm4701 = vcmp.eq.f32.partialorder %v4700, 8.507059e+37
    %v4702 = vand.u32 %v4645, 2147483648
    %v4703 = vor.u32 1.1754944e-38, %v4702
    %v4704 = vsel %vm4701, %v4703, %v4699
    %v4705 = vmul.f32 1.0, %v4704
    %v4706 = vpack.c.bf16 %v4660, %v4660
    %v4707 = vpack.c.bf16 %v4675, %v4675
    %v4708 = vpack.c.bf16 %v4690, %v4690
    %v4709 = vpack.c.bf16 %v4705, %v4705
    %v4710 = vunpack.c.l.bf16 %v72
    %v4711 = vunpack.c.h.bf16 %v72
    %v4712 = vunpack.c.l.bf16 %v73
    %v4713 = vunpack.c.h.bf16 %v73
    %v4714 = vunpack.c.l.bf16 %v74
    %v4715 = vunpack.c.h.bf16 %v74
    %v4716 = vunpack.c.l.bf16 %v75
    %v4717 = vunpack.c.h.bf16 %v75
    %v4718 = vunpack.c.l.bf16 %v76
    %v4719 = vunpack.c.h.bf16 %v76
    %v4720 = vunpack.c.l.bf16 %v77
    %v4721 = vunpack.c.h.bf16 %v77
    %v4722 = vunpack.c.l.bf16 %v78
    %v4723 = vunpack.c.h.bf16 %v78
    %v4724 = vunpack.c.l.bf16 %v79
    %v4725 = vunpack.c.h.bf16 %v79
    %v4726 = vunpack.c.l.bf16 %v80
    %v4727 = vunpack.c.h.bf16 %v80
    %v4728 = vunpack.c.l.bf16 %v81
    %v4729 = vunpack.c.h.bf16 %v81
    %v4730 = vunpack.c.l.bf16 %v82
    %v4731 = vunpack.c.h.bf16 %v82
    %v4732 = vunpack.c.l.bf16 %v83
    %v4733 = vunpack.c.h.bf16 %v83
    %v4734 = vunpack.c.l.bf16 %v84
    %v4735 = vunpack.c.h.bf16 %v84
    %v4736 = vunpack.c.l.bf16 %v85
    %v4737 = vunpack.c.h.bf16 %v85
    %v4738 = vunpack.c.l.bf16 %v86
    %v4739 = vunpack.c.h.bf16 %v86
    %v4740 = vunpack.c.l.bf16 %v87
    %v4741 = vunpack.c.h.bf16 %v87
    %v4742 = vunpack.c.l.bf16 %v88
    %v4743 = vunpack.c.h.bf16 %v88
    %v4744 = vunpack.c.l.bf16 %v89
    %v4745 = vunpack.c.h.bf16 %v89
    %v4746 = vunpack.c.l.bf16 %v90
    %v4747 = vunpack.c.h.bf16 %v90
    %v4748 = vunpack.c.l.bf16 %v91
    %v4749 = vunpack.c.h.bf16 %v91
    %v4750 = vunpack.c.l.bf16 %v92
    %v4751 = vunpack.c.h.bf16 %v92
    %v4752 = vunpack.c.l.bf16 %v93
    %v4753 = vunpack.c.h.bf16 %v93
    %v4754 = vunpack.c.l.bf16 %v94
    %v4755 = vunpack.c.h.bf16 %v94
    %v4756 = vunpack.c.l.bf16 %v95
    %v4757 = vunpack.c.h.bf16 %v95
    %v4758 = vunpack.c.l.bf16 %v96
    %v4759 = vunpack.c.h.bf16 %v96
    %v4760 = vunpack.c.l.bf16 %v97
    %v4761 = vunpack.c.h.bf16 %v97
    %v4762 = vunpack.c.l.bf16 %v98
    %v4763 = vunpack.c.h.bf16 %v98
    %v4764 = vunpack.c.l.bf16 %v99
    %v4765 = vunpack.c.h.bf16 %v99
    %v4766 = vunpack.c.l.bf16 %v100
    %v4767 = vunpack.c.h.bf16 %v100
    %v4768 = vunpack.c.l.bf16 %v101
    %v4769 = vunpack.c.h.bf16 %v101
    %v4770 = vunpack.c.l.bf16 %v102
    %v4771 = vunpack.c.h.bf16 %v102
    %v4772 = vunpack.c.l.bf16 %v103
    %v4773 = vunpack.c.h.bf16 %v103
    %v4774 = vunpack.c.l.bf16 %v4706
    %v4775 = vunpack.c.l.bf16 %v4707
    %v4776 = vunpack.c.l.bf16 %v4708
    %v4777 = vunpack.c.l.bf16 %v4709
    %v4778 = vmul.f32 %v4710, %v4774
    %v4779 = vmul.f32 %v4711, %v4774
    %v4780 = vmul.f32 %v4712, %v4774
    %v4781 = vmul.f32 %v4713, %v4774
    %v4782 = vmul.f32 %v4714, %v4774
    %v4783 = vmul.f32 %v4715, %v4774
    %v4784 = vmul.f32 %v4716, %v4774
    %v4785 = vmul.f32 %v4717, %v4774
    %v4786 = vmul.f32 %v4718, %v4774
    %v4787 = vmul.f32 %v4719, %v4774
    %v4788 = vmul.f32 %v4720, %v4774
    %v4789 = vmul.f32 %v4721, %v4774
    %v4790 = vmul.f32 %v4722, %v4774
    %v4791 = vmul.f32 %v4723, %v4774
    %v4792 = vmul.f32 %v4724, %v4774
    %v4793 = vmul.f32 %v4725, %v4774
    %v4794 = vmul.f32 %v4726, %v4775
    %v4795 = vmul.f32 %v4727, %v4775
    %v4796 = vmul.f32 %v4728, %v4775
    %v4797 = vmul.f32 %v4729, %v4775
    %v4798 = vmul.f32 %v4730, %v4775
    %v4799 = vmul.f32 %v4731, %v4775
    %v4800 = vmul.f32 %v4732, %v4775
    %v4801 = vmul.f32 %v4733, %v4775
    %v4802 = vmul.f32 %v4734, %v4775
    %v4803 = vmul.f32 %v4735, %v4775
    %v4804 = vmul.f32 %v4736, %v4775
    %v4805 = vmul.f32 %v4737, %v4775
    %v4806 = vmul.f32 %v4738, %v4775
    %v4807 = vmul.f32 %v4739, %v4775
    %v4808 = vmul.f32 %v4740, %v4775
    %v4809 = vmul.f32 %v4741, %v4775
    %v4810 = vmul.f32 %v4742, %v4776
    %v4811 = vmul.f32 %v4743, %v4776
    %v4812 = vmul.f32 %v4744, %v4776
    %v4813 = vmul.f32 %v4745, %v4776
    %v4814 = vmul.f32 %v4746, %v4776
    %v4815 = vmul.f32 %v4747, %v4776
    %v4816 = vmul.f32 %v4748, %v4776
    %v4817 = vmul.f32 %v4749, %v4776
    %v4818 = vmul.f32 %v4750, %v4776
    %v4819 = vmul.f32 %v4751, %v4776
    %v4820 = vmul.f32 %v4752, %v4776
    %v4821 = vmul.f32 %v4753, %v4776
    %v4822 = vmul.f32 %v4754, %v4776
    %v4823 = vmul.f32 %v4755, %v4776
    %v4824 = vmul.f32 %v4756, %v4776
    %v4825 = vmul.f32 %v4757, %v4776
    %v4826 = vmul.f32 %v4758, %v4777
    %v4827 = vmul.f32 %v4759, %v4777
    %v4828 = vmul.f32 %v4760, %v4777
    %v4829 = vmul.f32 %v4761, %v4777
    %v4830 = vmul.f32 %v4762, %v4777
    %v4831 = vmul.f32 %v4763, %v4777
    %v4832 = vmul.f32 %v4764, %v4777
    %v4833 = vmul.f32 %v4765, %v4777
    %v4834 = vmul.f32 %v4766, %v4777
    %v4835 = vmul.f32 %v4767, %v4777
    %v4836 = vmul.f32 %v4768, %v4777
    %v4837 = vmul.f32 %v4769, %v4777
    %v4838 = vmul.f32 %v4770, %v4777
    %v4839 = vmul.f32 %v4771, %v4777
    %v4840 = vmul.f32 %v4772, %v4777
    %v4841 = vmul.f32 %v4773, %v4777
    %v4842 = vpack.c.bf16 %v4794, %v4778
    %v4843 = vpack.c.bf16 %v4795, %v4779
    %v4844 = vpack.c.bf16 %v4796, %v4780
    %v4845 = vpack.c.bf16 %v4797, %v4781
    %v4846 = vpack.c.bf16 %v4798, %v4782
    %v4847 = vpack.c.bf16 %v4799, %v4783
    %v4848 = vpack.c.bf16 %v4800, %v4784
    %v4849 = vpack.c.bf16 %v4801, %v4785
    %v4850 = vpack.c.bf16 %v4802, %v4786
    %v4851 = vpack.c.bf16 %v4803, %v4787
    %v4852 = vpack.c.bf16 %v4804, %v4788
    %v4853 = vpack.c.bf16 %v4805, %v4789
    %v4854 = vpack.c.bf16 %v4806, %v4790
    %v4855 = vpack.c.bf16 %v4807, %v4791
    %v4856 = vpack.c.bf16 %v4808, %v4792
    %v4857 = vpack.c.bf16 %v4809, %v4793
    %v4858 = vpack.c.bf16 %v4826, %v4810
    %v4859 = vpack.c.bf16 %v4827, %v4811
    %v4860 = vpack.c.bf16 %v4828, %v4812
    %v4861 = vpack.c.bf16 %v4829, %v4813
    %v4862 = vpack.c.bf16 %v4830, %v4814
    %v4863 = vpack.c.bf16 %v4831, %v4815
    %v4864 = vpack.c.bf16 %v4832, %v4816
    %v4865 = vpack.c.bf16 %v4833, %v4817
    %v4866 = vpack.c.bf16 %v4834, %v4818
    %v4867 = vpack.c.bf16 %v4835, %v4819
    %v4868 = vpack.c.bf16 %v4836, %v4820
    %v4869 = vpack.c.bf16 %v4837, %v4821
    %v4870 = vpack.c.bf16 %v4838, %v4822
    %v4871 = vpack.c.bf16 %v4839, %v4823
    %v4872 = vpack.c.bf16 %v4840, %v4824
    %v4873 = vpack.c.bf16 %v4841, %v4825
    %v4874 = vld [vmem:[%s1] sm:$0xf]
    %vm4875 = vcmask 261120
    %v4877 = vsel %vm4875, %v4874, 0
    %4879 = vmatpush.bf16.msra.mxu0 0
    %4880 = vmatpush.bf16.msra.mxu0 0
    %4881 = vmatpush.bf16.msra.mxu0 0
    %4882 = vmatpush.bf16.msra.mxu0 0
    %4883 = vmatpush.bf16.msra.mxu0 0
    %4884 = vmatpush.bf16.msra.mxu0 0
    %4885 = vmatpush.bf16.msra.mxu0 %v4858
    %4886 = vmatpush.bf16.msra.mxu0 %v4842
    %4887 = vmatmul.bf16.gmra.mxu0 %v4877
    %v4888 = vpop.f32.mrf.mxu0
    %v4889 = vadd.f32 0.0, %v4888
    %v4890 = vpop.f32.mrf.mxu0
    %4891 = vdwg.mxu0
    %4892 = vmatpush.bf16.msra.mxu0 0
    %4893 = vmatpush.bf16.msra.mxu0 0
    %4894 = vmatpush.bf16.msra.mxu0 0
    %4895 = vmatpush.bf16.msra.mxu0 0
    %4896 = vmatpush.bf16.msra.mxu0 0
    %4897 = vmatpush.bf16.msra.mxu0 0
    %4898 = vmatpush.bf16.msra.mxu0 %v4859
    %4899 = vmatpush.bf16.msra.mxu0 %v4843
    %4900 = vmatmul.bf16.gmra.mxu0 %v4877
    %v4901 = vpop.f32.mrf.mxu0
    %v4902 = vadd.f32 0.0, %v4901
    %v4903 = vpop.f32.mrf.mxu0
    %4904 = vdwg.mxu0
    %4905 = vmatpush.bf16.msra.mxu0 0
    %4906 = vmatpush.bf16.msra.mxu0 0
    %4907 = vmatpush.bf16.msra.mxu0 0
    %4908 = vmatpush.bf16.msra.mxu0 0
    %4909 = vmatpush.bf16.msra.mxu0 0
    %4910 = vmatpush.bf16.msra.mxu0 0
    %4911 = vmatpush.bf16.msra.mxu0 %v4860
    %4912 = vmatpush.bf16.msra.mxu0 %v4844
    %4913 = vmatmul.bf16.gmra.mxu0 %v4877
    %v4914 = vpop.f32.mrf.mxu0
    %v4915 = vadd.f32 0.0, %v4914
    %v4916 = vpop.f32.mrf.mxu0
    %4917 = vdwg.mxu0
    %4918 = vmatpush.bf16.msra.mxu0 0
    %4919 = vmatpush.bf16.msra.mxu0 0
    %4920 = vmatpush.bf16.msra.mxu0 0
    %4921 = vmatpush.bf16.msra.mxu0 0
    %4922 = vmatpush.bf16.msra.mxu0 0
    %4923 = vmatpush.bf16.msra.mxu0 0
    %4924 = vmatpush.bf16.msra.mxu0 %v4861
    %4925 = vmatpush.bf16.msra.mxu0 %v4845
    %4926 = vmatmul.bf16.gmra.mxu0 %v4877
    %v4927 = vpop.f32.mrf.mxu0
    %v4928 = vadd.f32 0.0, %v4927
    %v4929 = vpop.f32.mrf.mxu0
    %4930 = vdwg.mxu0
    %4931 = vmatpush.bf16.msra.mxu0 0
    %4932 = vmatpush.bf16.msra.mxu0 0
    %4933 = vmatpush.bf16.msra.mxu0 0
    %4934 = vmatpush.bf16.msra.mxu0 0
    %4935 = vmatpush.bf16.msra.mxu0 0
    %4936 = vmatpush.bf16.msra.mxu0 0
    %4937 = vmatpush.bf16.msra.mxu0 %v4862
    %4938 = vmatpush.bf16.msra.mxu0 %v4846
    %4939 = vmatmul.bf16.gmra.mxu0 %v4877
    %v4940 = vpop.f32.mrf.mxu0
    %v4941 = vadd.f32 0.0, %v4940
    %v4942 = vpop.f32.mrf.mxu0
    %4943 = vdwg.mxu0
    %4944 = vmatpush.bf16.msra.mxu0 0
    %4945 = vmatpush.bf16.msra.mxu0 0
    %4946 = vmatpush.bf16.msra.mxu0 0
    %4947 = vmatpush.bf16.msra.mxu0 0
    %4948 = vmatpush.bf16.msra.mxu0 0
    %4949 = vmatpush.bf16.msra.mxu0 0
    %4950 = vmatpush.bf16.msra.mxu0 %v4863
    %4951 = vmatpush.bf16.msra.mxu0 %v4847
    %4952 = vmatmul.bf16.gmra.mxu0 %v4877
    %v4953 = vpop.f32.mrf.mxu0
    %v4954 = vadd.f32 0.0, %v4953
    %v4955 = vpop.f32.mrf.mxu0
    %4956 = vdwg.mxu0
    %4957 = vmatpush.bf16.msra.mxu0 0
    %4958 = vmatpush.bf16.msra.mxu0 0
    %4959 = vmatpush.bf16.msra.mxu0 0
    %4960 = vmatpush.bf16.msra.mxu0 0
    %4961 = vmatpush.bf16.msra.mxu0 0
    %4962 = vmatpush.bf16.msra.mxu0 0
    %4963 = vmatpush.bf16.msra.mxu0 %v4864
    %4964 = vmatpush.bf16.msra.mxu0 %v4848
    %4965 = vmatmul.bf16.gmra.mxu0 %v4877
    %v4966 = vpop.f32.mrf.mxu0
    %v4967 = vadd.f32 0.0, %v4966
    %v4968 = vpop.f32.mrf.mxu0
    %4969 = vdwg.mxu0
    %4970 = vmatpush.bf16.msra.mxu0 0
    %4971 = vmatpush.bf16.msra.mxu0 0
    %4972 = vmatpush.bf16.msra.mxu0 0
    %4973 = vmatpush.bf16.msra.mxu0 0
    %4974 = vmatpush.bf16.msra.mxu0 0
    %4975 = vmatpush.bf16.msra.mxu0 0
    %4976 = vmatpush.bf16.msra.mxu0 %v4865
    %4977 = vmatpush.bf16.msra.mxu0 %v4849
    %4978 = vmatmul.bf16.gmra.mxu0 %v4877
    %v4979 = vpop.f32.mrf.mxu0
    %v4980 = vadd.f32 0.0, %v4979
    %v4981 = vpop.f32.mrf.mxu0
    %4982 = vdwg.mxu0
    %4983 = vmatpush.bf16.msra.mxu0 0
    %4984 = vmatpush.bf16.msra.mxu0 0
    %4985 = vmatpush.bf16.msra.mxu0 0
    %4986 = vmatpush.bf16.msra.mxu0 0
    %4987 = vmatpush.bf16.msra.mxu0 0
    %4988 = vmatpush.bf16.msra.mxu0 0
    %4989 = vmatpush.bf16.msra.mxu0 %v4866
    %4990 = vmatpush.bf16.msra.mxu0 %v4850
    %4991 = vmatmul.bf16.gmra.mxu0 %v4877
    %v4992 = vpop.f32.mrf.mxu0
    %v4993 = vadd.f32 0.0, %v4992
    %v4994 = vpop.f32.mrf.mxu0
    %4995 = vdwg.mxu0
    %4996 = vmatpush.bf16.msra.mxu0 0
    %4997 = vmatpush.bf16.msra.mxu0 0
    %4998 = vmatpush.bf16.msra.mxu0 0
    %4999 = vmatpush.bf16.msra.mxu0 0
    %5000 = vmatpush.bf16.msra.mxu0 0
    %5001 = vmatpush.bf16.msra.mxu0 0
    %5002 = vmatpush.bf16.msra.mxu0 %v4867
    %5003 = vmatpush.bf16.msra.mxu0 %v4851
    %5004 = vmatmul.bf16.gmra.mxu0 %v4877
    %v5005 = vpop.f32.mrf.mxu0
    %v5006 = vadd.f32 0.0, %v5005
    %v5007 = vpop.f32.mrf.mxu0
    %5008 = vdwg.mxu0
    %5009 = vmatpush.bf16.msra.mxu0 0
    %5010 = vmatpush.bf16.msra.mxu0 0
    %5011 = vmatpush.bf16.msra.mxu0 0
    %5012 = vmatpush.bf16.msra.mxu0 0
    %5013 = vmatpush.bf16.msra.mxu0 0
    %5014 = vmatpush.bf16.msra.mxu0 0
    %5015 = vmatpush.bf16.msra.mxu0 %v4868
    %5016 = vmatpush.bf16.msra.mxu0 %v4852
    %5017 = vmatmul.bf16.gmra.mxu0 %v4877
    %v5018 = vpop.f32.mrf.mxu0
    %v5019 = vadd.f32 0.0, %v5018
    %v5020 = vpop.f32.mrf.mxu0
    %5021 = vdwg.mxu0
    %5022 = vmatpush.bf16.msra.mxu0 0
    %5023 = vmatpush.bf16.msra.mxu0 0
    %5024 = vmatpush.bf16.msra.mxu0 0
    %5025 = vmatpush.bf16.msra.mxu0 0
    %5026 = vmatpush.bf16.msra.mxu0 0
    %5027 = vmatpush.bf16.msra.mxu0 0
    %5028 = vmatpush.bf16.msra.mxu0 %v4869
    %5029 = vmatpush.bf16.msra.mxu0 %v4853
    %5030 = vmatmul.bf16.gmra.mxu0 %v4877
    %v5031 = vpop.f32.mrf.mxu0
    %v5032 = vadd.f32 0.0, %v5031
    %v5033 = vpop.f32.mrf.mxu0
    %5034 = vdwg.mxu0
    %5035 = vmatpush.bf16.msra.mxu0 0
    %5036 = vmatpush.bf16.msra.mxu0 0
    %5037 = vmatpush.bf16.msra.mxu0 0
    %5038 = vmatpush.bf16.msra.mxu0 0
    %5039 = vmatpush.bf16.msra.mxu0 0
    %5040 = vmatpush.bf16.msra.mxu0 0
    %5041 = vmatpush.bf16.msra.mxu0 %v4870
    %5042 = vmatpush.bf16.msra.mxu0 %v4854
    %5043 = vmatmul.bf16.gmra.mxu0 %v4877
    %v5044 = vpop.f32.mrf.mxu0
    %v5045 = vadd.f32 0.0, %v5044
    %v5046 = vpop.f32.mrf.mxu0
    %5047 = vdwg.mxu0
    %5048 = vmatpush.bf16.msra.mxu0 0
    %5049 = vmatpush.bf16.msra.mxu0 0
    %5050 = vmatpush.bf16.msra.mxu0 0
    %5051 = vmatpush.bf16.msra.mxu0 0
    %5052 = vmatpush.bf16.msra.mxu0 0
    %5053 = vmatpush.bf16.msra.mxu0 0
    %5054 = vmatpush.bf16.msra.mxu0 %v4871
    %5055 = vmatpush.bf16.msra.mxu0 %v4855
    %5056 = vmatmul.bf16.gmra.mxu0 %v4877
    %v5057 = vpop.f32.mrf.mxu0
    %v5058 = vadd.f32 0.0, %v5057
    %v5059 = vpop.f32.mrf.mxu0
    %5060 = vdwg.mxu0
    %5061 = vmatpush.bf16.msra.mxu0 0
    %5062 = vmatpush.bf16.msra.mxu0 0
    %5063 = vmatpush.bf16.msra.mxu0 0
    %5064 = vmatpush.bf16.msra.mxu0 0
    %5065 = vmatpush.bf16.msra.mxu0 0
    %5066 = vmatpush.bf16.msra.mxu0 0
    %5067 = vmatpush.bf16.msra.mxu0 %v4872
    %5068 = vmatpush.bf16.msra.mxu0 %v4856
    %5069 = vmatmul.bf16.gmra.mxu0 %v4877
    %v5070 = vpop.f32.mrf.mxu0
    %v5071 = vadd.f32 0.0, %v5070
    %v5072 = vpop.f32.mrf.mxu0
    %5073 = vdwg.mxu0
    %5074 = vmatpush.bf16.msra.mxu0 0
    %5075 = vmatpush.bf16.msra.mxu0 0
    %5076 = vmatpush.bf16.msra.mxu0 0
    %5077 = vmatpush.bf16.msra.mxu0 0
    %5078 = vmatpush.bf16.msra.mxu0 0
    %5079 = vmatpush.bf16.msra.mxu0 0
    %5080 = vmatpush.bf16.msra.mxu0 %v4873
    %5081 = vmatpush.bf16.msra.mxu0 %v4857
    %5082 = vmatmul.bf16.gmra.mxu0 %v4877
    %v5083 = vpop.f32.mrf.mxu0
    %v5084 = vadd.f32 0.0, %v5083
    %v5085 = vpop.f32.mrf.mxu0
    %5086 = vdwg.mxu0
    %v5087 = vmul.f32 %v4889, 0.25
    %v5088 = vmul.f32 %v4902, 0.25
    %v5089 = vmul.f32 %v4915, 0.25
    %v5090 = vmul.f32 %v4928, 0.25
    %v5091 = vmul.f32 %v4941, 0.25
    %v5092 = vmul.f32 %v4954, 0.25
    %v5093 = vmul.f32 %v4967, 0.25
    %v5094 = vmul.f32 %v4980, 0.25
    %v5095 = vmul.f32 %v4993, 0.25
    %v5096 = vmul.f32 %v5006, 0.25
    %v5097 = vmul.f32 %v5019, 0.25
    %v5098 = vmul.f32 %v5032, 0.25
    %v5099 = vmul.f32 %v5045, 0.25
    %v5100 = vmul.f32 %v5058, 0.25
    %v5101 = vmul.f32 %v5071, 0.25
    %v5102 = vmul.f32 %v5084, 0.25
    %v5103 = vpack.c.bf16 %v5087, %v5087
    %v5104 = vpack.c.bf16 %v5088, %v5088
    %v5105 = vpack.c.bf16 %v5089, %v5089
    %v5106 = vpack.c.bf16 %v5090, %v5090
    %v5107 = vpack.c.bf16 %v5091, %v5091
    %v5108 = vpack.c.bf16 %v5092, %v5092
    %v5109 = vpack.c.bf16 %v5093, %v5093
    %v5110 = vpack.c.bf16 %v5094, %v5094
    %v5111 = vpack.c.bf16 %v5095, %v5095
    %v5112 = vpack.c.bf16 %v5096, %v5096
    %v5113 = vpack.c.bf16 %v5097, %v5097
    %v5114 = vpack.c.bf16 %v5098, %v5098
    %v5115 = vpack.c.bf16 %v5099, %v5099
    %v5116 = vpack.c.bf16 %v5100, %v5100
    %v5117 = vpack.c.bf16 %v5101, %v5101
    %v5118 = vpack.c.bf16 %v5102, %v5102
    %v5119 = vld [vmem:[%s6] sm:$0xff]
    %v5120 = vld [vmem:[%s6 + $0x8] sm:$0xff]
    %v5121 = vld [vmem:[%s6 + $0x10] sm:$0xff]
    %v5122 = vld [vmem:[%s6 + $0x18] sm:$0xff]
    %v5123 = vld [vmem:[%s6 + $0x20] sm:$0xff]
    %v5124 = vld [vmem:[%s6 + $0x28] sm:$0xff]
    %v5125 = vld [vmem:[%s6 + $0x30] sm:$0xff]
    %v5126 = vld [vmem:[%s6 + $0x38] sm:$0xff]
    %v5127 = vld [vmem:[%s6 + $0x40] sm:$0xff]
    %v5128 = vld [vmem:[%s6 + $0x48] sm:$0xff]
    %v5129 = vld [vmem:[%s6 + $0x50] sm:$0xff]
    %v5130 = vld [vmem:[%s6 + $0x58] sm:$0xff]
    %v5131 = vld [vmem:[%s6 + $0x60] sm:$0xff]
    %v5132 = vld [vmem:[%s6 + $0x68] sm:$0xff]
    %v5133 = vld [vmem:[%s6 + $0x70] sm:$0xff]
    %v5134 = vld [vmem:[%s6 + $0x78] sm:$0xff]
    %v5135 = vld [vmem:[%s6 + $0x80] sm:$0xff]
    %v5136 = vld [vmem:[%s6 + $0x88] sm:$0xff]
    %v5137 = vld [vmem:[%s6 + $0x90] sm:$0xff]
    %v5138 = vld [vmem:[%s6 + $0x98] sm:$0xff]
    %v5139 = vld [vmem:[%s6 + $0xa0] sm:$0xff]
    %v5140 = vld [vmem:[%s6 + $0xa8] sm:$0xff]
    %v5141 = vld [vmem:[%s6 + $0xb0] sm:$0xff]
    %v5142 = vld [vmem:[%s6 + $0xb8] sm:$0xff]
    %v5143 = vld [vmem:[%s6 + $0xc0] sm:$0xff]
    %v5144 = vld [vmem:[%s6 + $0xc8] sm:$0xff]
    %v5145 = vld [vmem:[%s6 + $0xd0] sm:$0xff]
    %v5146 = vld [vmem:[%s6 + $0xd8] sm:$0xff]
    %v5147 = vld [vmem:[%s6 + $0xe0] sm:$0xff]
    %v5148 = vld [vmem:[%s6 + $0xe8] sm:$0xff]
    %v5149 = vld [vmem:[%s6 + $0xf0] sm:$0xff]
    %v5150 = vld [vmem:[%s6 + $0xf8] sm:$0xff]
    %v5151 = vld [vmem:[%s6 + $0x100] sm:$0xff]
    %v5152 = vld [vmem:[%s6 + $0x108] sm:$0xff]
    %v5153 = vld [vmem:[%s6 + $0x110] sm:$0xff]
    %v5154 = vld [vmem:[%s6 + $0x118] sm:$0xff]
    %v5155 = vld [vmem:[%s6 + $0x120] sm:$0xff]
    %v5156 = vld [vmem:[%s6 + $0x128] sm:$0xff]
    %v5157 = vld [vmem:[%s6 + $0x130] sm:$0xff]
    %v5158 = vld [vmem:[%s6 + $0x138] sm:$0xff]
    %v5159 = vld [vmem:[%s6 + $0x140] sm:$0xff]
    %v5160 = vld [vmem:[%s6 + $0x148] sm:$0xff]
    %v5161 = vld [vmem:[%s6 + $0x150] sm:$0xff]
    %v5162 = vld [vmem:[%s6 + $0x158] sm:$0xff]
    %v5163 = vld [vmem:[%s6 + $0x160] sm:$0xff]
    %v5164 = vld [vmem:[%s6 + $0x168] sm:$0xff]
    %v5165 = vld [vmem:[%s6 + $0x170] sm:$0xff]
    %v5166 = vld [vmem:[%s6 + $0x178] sm:$0xff]
    %v5167 = vld [vmem:[%s6 + $0x180] sm:$0xff]
    %v5168 = vld [vmem:[%s6 + $0x188] sm:$0xff]
    %v5169 = vld [vmem:[%s6 + $0x190] sm:$0xff]
    %v5170 = vld [vmem:[%s6 + $0x198] sm:$0xff]
    %v5171 = vld [vmem:[%s6 + $0x1a0] sm:$0xff]
    %v5172 = vld [vmem:[%s6 + $0x1a8] sm:$0xff]
    %v5173 = vld [vmem:[%s6 + $0x1b0] sm:$0xff]
    %v5174 = vld [vmem:[%s6 + $0x1b8] sm:$0xff]
    %v5175 = vld [vmem:[%s6 + $0x1c0] sm:$0xff]
    %v5176 = vld [vmem:[%s6 + $0x1c8] sm:$0xff]
    %v5177 = vld [vmem:[%s6 + $0x1d0] sm:$0xff]
    %v5178 = vld [vmem:[%s6 + $0x1d8] sm:$0xff]
    %v5179 = vld [vmem:[%s6 + $0x1e0] sm:$0xff]
    %v5180 = vld [vmem:[%s6 + $0x1e8] sm:$0xff]
    %v5181 = vld [vmem:[%s6 + $0x1f0] sm:$0xff]
    %v5182 = vld [vmem:[%s6 + $0x1f8] sm:$0xff]
    %v5183 = vld [vmem:[%s6 + $0x200] sm:$0xff]
    %v5184 = vld [vmem:[%s6 + $0x208] sm:$0xff]
    %v5185 = vld [vmem:[%s6 + $0x210] sm:$0xff]
    %v5186 = vld [vmem:[%s6 + $0x218] sm:$0xff]
    %v5187 = vld [vmem:[%s6 + $0x220] sm:$0xff]
    %v5188 = vld [vmem:[%s6 + $0x228] sm:$0xff]
    %v5189 = vld [vmem:[%s6 + $0x230] sm:$0xff]
    %v5190 = vld [vmem:[%s6 + $0x238] sm:$0xff]
    %v5191 = vld [vmem:[%s6 + $0x240] sm:$0xff]
    %v5192 = vld [vmem:[%s6 + $0x248] sm:$0xff]
    %v5193 = vld [vmem:[%s6 + $0x250] sm:$0xff]
    %v5194 = vld [vmem:[%s6 + $0x258] sm:$0xff]
    %v5195 = vld [vmem:[%s6 + $0x260] sm:$0xff]
    %v5196 = vld [vmem:[%s6 + $0x268] sm:$0xff]
    %v5197 = vld [vmem:[%s6 + $0x270] sm:$0xff]
    %v5198 = vld [vmem:[%s6 + $0x278] sm:$0xff]
    %v5199 = vld [vmem:[%s6 + $0x280] sm:$0xff]
    %v5200 = vld [vmem:[%s6 + $0x288] sm:$0xff]
    %v5201 = vld [vmem:[%s6 + $0x290] sm:$0xff]
    %v5202 = vld [vmem:[%s6 + $0x298] sm:$0xff]
    %v5203 = vld [vmem:[%s6 + $0x2a0] sm:$0xff]
    %v5204 = vld [vmem:[%s6 + $0x2a8] sm:$0xff]
    %v5205 = vld [vmem:[%s6 + $0x2b0] sm:$0xff]
    %v5206 = vld [vmem:[%s6 + $0x2b8] sm:$0xff]
    %v5207 = vld [vmem:[%s6 + $0x2c0] sm:$0xff]
    %v5208 = vld [vmem:[%s6 + $0x2c8] sm:$0xff]
    %v5209 = vld [vmem:[%s6 + $0x2d0] sm:$0xff]
    %v5210 = vld [vmem:[%s6 + $0x2d8] sm:$0xff]
    %v5211 = vld [vmem:[%s6 + $0x2e0] sm:$0xff]
    %v5212 = vld [vmem:[%s6 + $0x2e8] sm:$0xff]
    %v5213 = vld [vmem:[%s6 + $0x2f0] sm:$0xff]
    %v5214 = vld [vmem:[%s6 + $0x2f8] sm:$0xff]
    %v5215 = vld [vmem:[%s6 + $0x300] sm:$0xff]
    %v5216 = vld [vmem:[%s6 + $0x308] sm:$0xff]
    %v5217 = vld [vmem:[%s6 + $0x310] sm:$0xff]
    %v5218 = vld [vmem:[%s6 + $0x318] sm:$0xff]
    %v5219 = vld [vmem:[%s6 + $0x320] sm:$0xff]
    %v5220 = vld [vmem:[%s6 + $0x328] sm:$0xff]
    %v5221 = vld [vmem:[%s6 + $0x330] sm:$0xff]
    %v5222 = vld [vmem:[%s6 + $0x338] sm:$0xff]
    %v5223 = vld [vmem:[%s6 + $0x340] sm:$0xff]
    %v5224 = vld [vmem:[%s6 + $0x348] sm:$0xff]
    %v5225 = vld [vmem:[%s6 + $0x350] sm:$0xff]
    %v5226 = vld [vmem:[%s6 + $0x358] sm:$0xff]
    %v5227 = vld [vmem:[%s6 + $0x360] sm:$0xff]
    %v5228 = vld [vmem:[%s6 + $0x368] sm:$0xff]
    %v5229 = vld [vmem:[%s6 + $0x370] sm:$0xff]
    %v5230 = vld [vmem:[%s6 + $0x378] sm:$0xff]
    %v5231 = vld [vmem:[%s6 + $0x380] sm:$0xff]
    %v5232 = vld [vmem:[%s6 + $0x388] sm:$0xff]
    %v5233 = vld [vmem:[%s6 + $0x390] sm:$0xff]
    %v5234 = vld [vmem:[%s6 + $0x398] sm:$0xff]
    %v5235 = vld [vmem:[%s6 + $0x3a0] sm:$0xff]
    %v5236 = vld [vmem:[%s6 + $0x3a8] sm:$0xff]
    %v5237 = vld [vmem:[%s6 + $0x3b0] sm:$0xff]
    %v5238 = vld [vmem:[%s6 + $0x3b8] sm:$0xff]
    %v5239 = vld [vmem:[%s6 + $0x3c0] sm:$0xff]
    %v5240 = vld [vmem:[%s6 + $0x3c8] sm:$0xff]
    %v5241 = vld [vmem:[%s6 + $0x3d0] sm:$0xff]
    %v5242 = vld [vmem:[%s6 + $0x3d8] sm:$0xff]
    %v5243 = vld [vmem:[%s6 + $0x3e0] sm:$0xff]
    %v5244 = vld [vmem:[%s6 + $0x3e8] sm:$0xff]
    %v5245 = vld [vmem:[%s6 + $0x3f0] sm:$0xff]
    %v5246 = vld [vmem:[%s6 + $0x3f8] sm:$0xff]
    %v5247 = vld [vmem:[%s6 + $0x400] sm:$0xff]
    %v5248 = vld [vmem:[%s6 + $0x408] sm:$0xff]
    %v5249 = vld [vmem:[%s6 + $0x410] sm:$0xff]
    %v5250 = vld [vmem:[%s6 + $0x418] sm:$0xff]
    %v5251 = vld [vmem:[%s6 + $0x420] sm:$0xff]
    %v5252 = vld [vmem:[%s6 + $0x428] sm:$0xff]
    %v5253 = vld [vmem:[%s6 + $0x430] sm:$0xff]
    %v5254 = vld [vmem:[%s6 + $0x438] sm:$0xff]
    %v5255 = vld [vmem:[%s6 + $0x440] sm:$0xff]
    %v5256 = vld [vmem:[%s6 + $0x448] sm:$0xff]
    %v5257 = vld [vmem:[%s6 + $0x450] sm:$0xff]
    %v5258 = vld [vmem:[%s6 + $0x458] sm:$0xff]
    %v5259 = vld [vmem:[%s6 + $0x460] sm:$0xff]
    %v5260 = vld [vmem:[%s6 + $0x468] sm:$0xff]
    %v5261 = vld [vmem:[%s6 + $0x470] sm:$0xff]
    %v5262 = vld [vmem:[%s6 + $0x478] sm:$0xff]
    %v5263 = vld [vmem:[%s6 + $0x480] sm:$0xff]
    %v5264 = vld [vmem:[%s6 + $0x488] sm:$0xff]
    %v5265 = vld [vmem:[%s6 + $0x490] sm:$0xff]
    %v5266 = vld [vmem:[%s6 + $0x498] sm:$0xff]
    %v5267 = vld [vmem:[%s6 + $0x4a0] sm:$0xff]
    %v5268 = vld [vmem:[%s6 + $0x4a8] sm:$0xff]
    %v5269 = vld [vmem:[%s6 + $0x4b0] sm:$0xff]
    %v5270 = vld [vmem:[%s6 + $0x4b8] sm:$0xff]
    %v5271 = vld [vmem:[%s6 + $0x4c0] sm:$0xff]
    %v5272 = vld [vmem:[%s6 + $0x4c8] sm:$0xff]
    %v5273 = vld [vmem:[%s6 + $0x4d0] sm:$0xff]
    %v5274 = vld [vmem:[%s6 + $0x4d8] sm:$0xff]
    %v5275 = vld [vmem:[%s6 + $0x4e0] sm:$0xff]
    %v5276 = vld [vmem:[%s6 + $0x4e8] sm:$0xff]
    %v5277 = vld [vmem:[%s6 + $0x4f0] sm:$0xff]
    %v5278 = vld [vmem:[%s6 + $0x4f8] sm:$0xff]
    %v5279 = vld [vmem:[%s6 + $0x500] sm:$0xff]
    %v5280 = vld [vmem:[%s6 + $0x508] sm:$0xff]
    %v5281 = vld [vmem:[%s6 + $0x510] sm:$0xff]
    %v5282 = vld [vmem:[%s6 + $0x518] sm:$0xff]
    %v5283 = vld [vmem:[%s6 + $0x520] sm:$0xff]
    %v5284 = vld [vmem:[%s6 + $0x528] sm:$0xff]
    %v5285 = vld [vmem:[%s6 + $0x530] sm:$0xff]
    %v5286 = vld [vmem:[%s6 + $0x538] sm:$0xff]
    %v5287 = vld [vmem:[%s6 + $0x540] sm:$0xff]
    %v5288 = vld [vmem:[%s6 + $0x548] sm:$0xff]
    %v5289 = vld [vmem:[%s6 + $0x550] sm:$0xff]
    %v5290 = vld [vmem:[%s6 + $0x558] sm:$0xff]
    %v5291 = vld [vmem:[%s6 + $0x560] sm:$0xff]
    %v5292 = vld [vmem:[%s6 + $0x568] sm:$0xff]
    %v5293 = vld [vmem:[%s6 + $0x570] sm:$0xff]
    %v5294 = vld [vmem:[%s6 + $0x578] sm:$0xff]
    %v5295 = vld [vmem:[%s6 + $0x580] sm:$0xff]
    %v5296 = vld [vmem:[%s6 + $0x588] sm:$0xff]
    %v5297 = vld [vmem:[%s6 + $0x590] sm:$0xff]
    %v5298 = vld [vmem:[%s6 + $0x598] sm:$0xff]
    %v5299 = vld [vmem:[%s6 + $0x5a0] sm:$0xff]
    %v5300 = vld [vmem:[%s6 + $0x5a8] sm:$0xff]
    %v5301 = vld [vmem:[%s6 + $0x5b0] sm:$0xff]
    %v5302 = vld [vmem:[%s6 + $0x5b8] sm:$0xff]
    %v5303 = vld [vmem:[%s6 + $0x5c0] sm:$0xff]
    %v5304 = vld [vmem:[%s6 + $0x5c8] sm:$0xff]
    %v5305 = vld [vmem:[%s6 + $0x5d0] sm:$0xff]
    %v5306 = vld [vmem:[%s6 + $0x5d8] sm:$0xff]
    %v5307 = vld [vmem:[%s6 + $0x5e0] sm:$0xff]
    %v5308 = vld [vmem:[%s6 + $0x5e8] sm:$0xff]
    %v5309 = vld [vmem:[%s6 + $0x5f0] sm:$0xff]
    %v5310 = vld [vmem:[%s6 + $0x5f8] sm:$0xff]
    %v5311 = vld [vmem:[%s6 + $0x600] sm:$0xff]
    %v5312 = vld [vmem:[%s6 + $0x608] sm:$0xff]
    %v5313 = vld [vmem:[%s6 + $0x610] sm:$0xff]
    %v5314 = vld [vmem:[%s6 + $0x618] sm:$0xff]
    %v5315 = vld [vmem:[%s6 + $0x620] sm:$0xff]
    %v5316 = vld [vmem:[%s6 + $0x628] sm:$0xff]
    %v5317 = vld [vmem:[%s6 + $0x630] sm:$0xff]
    %v5318 = vld [vmem:[%s6 + $0x638] sm:$0xff]
    %v5319 = vld [vmem:[%s6 + $0x640] sm:$0xff]
    %v5320 = vld [vmem:[%s6 + $0x648] sm:$0xff]
    %v5321 = vld [vmem:[%s6 + $0x650] sm:$0xff]
    %v5322 = vld [vmem:[%s6 + $0x658] sm:$0xff]
    %v5323 = vld [vmem:[%s6 + $0x660] sm:$0xff]
    %v5324 = vld [vmem:[%s6 + $0x668] sm:$0xff]
    %v5325 = vld [vmem:[%s6 + $0x670] sm:$0xff]
    %v5326 = vld [vmem:[%s6 + $0x678] sm:$0xff]
    %v5327 = vld [vmem:[%s6 + $0x680] sm:$0xff]
    %v5328 = vld [vmem:[%s6 + $0x688] sm:$0xff]
    %v5329 = vld [vmem:[%s6 + $0x690] sm:$0xff]
    %v5330 = vld [vmem:[%s6 + $0x698] sm:$0xff]
    %v5331 = vld [vmem:[%s6 + $0x6a0] sm:$0xff]
    %v5332 = vld [vmem:[%s6 + $0x6a8] sm:$0xff]
    %v5333 = vld [vmem:[%s6 + $0x6b0] sm:$0xff]
    %v5334 = vld [vmem:[%s6 + $0x6b8] sm:$0xff]
    %v5335 = vld [vmem:[%s6 + $0x6c0] sm:$0xff]
    %v5336 = vld [vmem:[%s6 + $0x6c8] sm:$0xff]
    %v5337 = vld [vmem:[%s6 + $0x6d0] sm:$0xff]
    %v5338 = vld [vmem:[%s6 + $0x6d8] sm:$0xff]
    %v5339 = vld [vmem:[%s6 + $0x6e0] sm:$0xff]
    %v5340 = vld [vmem:[%s6 + $0x6e8] sm:$0xff]
    %v5341 = vld [vmem:[%s6 + $0x6f0] sm:$0xff]
    %v5342 = vld [vmem:[%s6 + $0x6f8] sm:$0xff]
    %v5343 = vld [vmem:[%s6 + $0x700] sm:$0xff]
    %v5344 = vld [vmem:[%s6 + $0x708] sm:$0xff]
    %v5345 = vld [vmem:[%s6 + $0x710] sm:$0xff]
    %v5346 = vld [vmem:[%s6 + $0x718] sm:$0xff]
    %v5347 = vld [vmem:[%s6 + $0x720] sm:$0xff]
    %v5348 = vld [vmem:[%s6 + $0x728] sm:$0xff]
    %v5349 = vld [vmem:[%s6 + $0x730] sm:$0xff]
    %v5350 = vld [vmem:[%s6 + $0x738] sm:$0xff]
    %v5351 = vld [vmem:[%s6 + $0x740] sm:$0xff]
    %v5352 = vld [vmem:[%s6 + $0x748] sm:$0xff]
    %v5353 = vld [vmem:[%s6 + $0x750] sm:$0xff]
    %v5354 = vld [vmem:[%s6 + $0x758] sm:$0xff]
    %v5355 = vld [vmem:[%s6 + $0x760] sm:$0xff]
    %v5356 = vld [vmem:[%s6 + $0x768] sm:$0xff]
    %v5357 = vld [vmem:[%s6 + $0x770] sm:$0xff]
    %v5358 = vld [vmem:[%s6 + $0x778] sm:$0xff]
    %v5359 = vld [vmem:[%s6 + $0x780] sm:$0xff]
    %v5360 = vld [vmem:[%s6 + $0x788] sm:$0xff]
    %v5361 = vld [vmem:[%s6 + $0x790] sm:$0xff]
    %v5362 = vld [vmem:[%s6 + $0x798] sm:$0xff]
    %v5363 = vld [vmem:[%s6 + $0x7a0] sm:$0xff]
    %v5364 = vld [vmem:[%s6 + $0x7a8] sm:$0xff]
    %v5365 = vld [vmem:[%s6 + $0x7b0] sm:$0xff]
    %v5366 = vld [vmem:[%s6 + $0x7b8] sm:$0xff]
    %v5367 = vld [vmem:[%s6 + $0x7c0] sm:$0xff]
    %v5368 = vld [vmem:[%s6 + $0x7c8] sm:$0xff]
    %v5369 = vld [vmem:[%s6 + $0x7d0] sm:$0xff]
    %v5370 = vld [vmem:[%s6 + $0x7d8] sm:$0xff]
    %v5371 = vld [vmem:[%s6 + $0x7e0] sm:$0xff]
    %v5372 = vld [vmem:[%s6 + $0x7e8] sm:$0xff]
    %v5373 = vld [vmem:[%s6 + $0x7f0] sm:$0xff]
    %v5374 = vld [vmem:[%s6 + $0x7f8] sm:$0xff]
    %v5375 = vld [vmem:[%s6 + $0x800] sm:$0xff]
    %v5376 = vld [vmem:[%s6 + $0x808] sm:$0xff]
    %v5377 = vld [vmem:[%s6 + $0x810] sm:$0xff]
    %v5378 = vld [vmem:[%s6 + $0x818] sm:$0xff]
    %v5379 = vld [vmem:[%s6 + $0x820] sm:$0xff]
    %v5380 = vld [vmem:[%s6 + $0x828] sm:$0xff]
    %v5381 = vld [vmem:[%s6 + $0x830] sm:$0xff]
    %v5382 = vld [vmem:[%s6 + $0x838] sm:$0xff]
    %v5383 = vld [vmem:[%s6 + $0x840] sm:$0xff]
    %v5384 = vld [vmem:[%s6 + $0x848] sm:$0xff]
    %v5385 = vld [vmem:[%s6 + $0x850] sm:$0xff]
    %v5386 = vld [vmem:[%s6 + $0x858] sm:$0xff]
    %v5387 = vld [vmem:[%s6 + $0x860] sm:$0xff]
    %v5388 = vld [vmem:[%s6 + $0x868] sm:$0xff]
    %v5389 = vld [vmem:[%s6 + $0x870] sm:$0xff]
    %v5390 = vld [vmem:[%s6 + $0x878] sm:$0xff]
    %v5391 = vld [vmem:[%s6 + $0x880] sm:$0xff]
    %v5392 = vld [vmem:[%s6 + $0x888] sm:$0xff]
    %v5393 = vld [vmem:[%s6 + $0x890] sm:$0xff]
    %v5394 = vld [vmem:[%s6 + $0x898] sm:$0xff]
    %v5395 = vld [vmem:[%s6 + $0x8a0] sm:$0xff]
    %v5396 = vld [vmem:[%s6 + $0x8a8] sm:$0xff]
    %v5397 = vld [vmem:[%s6 + $0x8b0] sm:$0xff]
    %v5398 = vld [vmem:[%s6 + $0x8b8] sm:$0xff]
    %v5399 = vld [vmem:[%s6 + $0x8c0] sm:$0xff]
    %v5400 = vld [vmem:[%s6 + $0x8c8] sm:$0xff]
    %v5401 = vld [vmem:[%s6 + $0x8d0] sm:$0xff]
    %v5402 = vld [vmem:[%s6 + $0x8d8] sm:$0xff]
    %v5403 = vld [vmem:[%s6 + $0x8e0] sm:$0xff]
    %v5404 = vld [vmem:[%s6 + $0x8e8] sm:$0xff]
    %v5405 = vld [vmem:[%s6 + $0x8f0] sm:$0xff]
    %v5406 = vld [vmem:[%s6 + $0x8f8] sm:$0xff]
    %v5407 = vld [vmem:[%s6 + $0x900] sm:$0xff]
    %v5408 = vld [vmem:[%s6 + $0x908] sm:$0xff]
    %v5409 = vld [vmem:[%s6 + $0x910] sm:$0xff]
    %v5410 = vld [vmem:[%s6 + $0x918] sm:$0xff]
    %v5411 = vld [vmem:[%s6 + $0x920] sm:$0xff]
    %v5412 = vld [vmem:[%s6 + $0x928] sm:$0xff]
    %v5413 = vld [vmem:[%s6 + $0x930] sm:$0xff]
    %v5414 = vld [vmem:[%s6 + $0x938] sm:$0xff]
    %v5415 = vld [vmem:[%s6 + $0x940] sm:$0xff]
    %v5416 = vld [vmem:[%s6 + $0x948] sm:$0xff]
    %v5417 = vld [vmem:[%s6 + $0x950] sm:$0xff]
    %v5418 = vld [vmem:[%s6 + $0x958] sm:$0xff]
    %v5419 = vld [vmem:[%s6 + $0x960] sm:$0xff]
    %v5420 = vld [vmem:[%s6 + $0x968] sm:$0xff]
    %v5421 = vld [vmem:[%s6 + $0x970] sm:$0xff]
    %v5422 = vld [vmem:[%s6 + $0x978] sm:$0xff]
    %v5423 = vld [vmem:[%s6 + $0x980] sm:$0xff]
    %v5424 = vld [vmem:[%s6 + $0x988] sm:$0xff]
    %v5425 = vld [vmem:[%s6 + $0x990] sm:$0xff]
    %v5426 = vld [vmem:[%s6 + $0x998] sm:$0xff]
    %v5427 = vld [vmem:[%s6 + $0x9a0] sm:$0xff]
    %v5428 = vld [vmem:[%s6 + $0x9a8] sm:$0xff]
    %v5429 = vld [vmem:[%s6 + $0x9b0] sm:$0xff]
    %v5430 = vld [vmem:[%s6 + $0x9b8] sm:$0xff]
    %v5431 = vld [vmem:[%s6 + $0x9c0] sm:$0xff]
    %v5432 = vld [vmem:[%s6 + $0x9c8] sm:$0xff]
    %v5433 = vld [vmem:[%s6 + $0x9d0] sm:$0xff]
    %v5434 = vld [vmem:[%s6 + $0x9d8] sm:$0xff]
    %v5435 = vld [vmem:[%s6 + $0x9e0] sm:$0xff]
    %v5436 = vld [vmem:[%s6 + $0x9e8] sm:$0xff]
    %v5437 = vld [vmem:[%s6 + $0x9f0] sm:$0xff]
    %v5438 = vld [vmem:[%s6 + $0x9f8] sm:$0xff]
    %v5439 = vld [vmem:[%s6 + $0xa00] sm:$0xff]
    %v5440 = vld [vmem:[%s6 + $0xa08] sm:$0xff]
    %v5441 = vld [vmem:[%s6 + $0xa10] sm:$0xff]
    %v5442 = vld [vmem:[%s6 + $0xa18] sm:$0xff]
    %v5443 = vld [vmem:[%s6 + $0xa20] sm:$0xff]
    %v5444 = vld [vmem:[%s6 + $0xa28] sm:$0xff]
    %v5445 = vld [vmem:[%s6 + $0xa30] sm:$0xff]
    %v5446 = vld [vmem:[%s6 + $0xa38] sm:$0xff]
    %v5447 = vld [vmem:[%s6 + $0xa40] sm:$0xff]
    %v5448 = vld [vmem:[%s6 + $0xa48] sm:$0xff]
    %v5449 = vld [vmem:[%s6 + $0xa50] sm:$0xff]
    %v5450 = vld [vmem:[%s6 + $0xa58] sm:$0xff]
    %v5451 = vld [vmem:[%s6 + $0xa60] sm:$0xff]
    %v5452 = vld [vmem:[%s6 + $0xa68] sm:$0xff]
    %v5453 = vld [vmem:[%s6 + $0xa70] sm:$0xff]
    %v5454 = vld [vmem:[%s6 + $0xa78] sm:$0xff]
    %v5455 = vld [vmem:[%s6 + $0xa80] sm:$0xff]
    %v5456 = vld [vmem:[%s6 + $0xa88] sm:$0xff]
    %v5457 = vld [vmem:[%s6 + $0xa90] sm:$0xff]
    %v5458 = vld [vmem:[%s6 + $0xa98] sm:$0xff]
    %v5459 = vld [vmem:[%s6 + $0xaa0] sm:$0xff]
    %v5460 = vld [vmem:[%s6 + $0xaa8] sm:$0xff]
    %v5461 = vld [vmem:[%s6 + $0xab0] sm:$0xff]
    %v5462 = vld [vmem:[%s6 + $0xab8] sm:$0xff]
    %v5463 = vld [vmem:[%s6 + $0xac0] sm:$0xff]
    %v5464 = vld [vmem:[%s6 + $0xac8] sm:$0xff]
    %v5465 = vld [vmem:[%s6 + $0xad0] sm:$0xff]
    %v5466 = vld [vmem:[%s6 + $0xad8] sm:$0xff]
    %v5467 = vld [vmem:[%s6 + $0xae0] sm:$0xff]
    %v5468 = vld [vmem:[%s6 + $0xae8] sm:$0xff]
    %v5469 = vld [vmem:[%s6 + $0xaf0] sm:$0xff]
    %v5470 = vld [vmem:[%s6 + $0xaf8] sm:$0xff]
    %v5471 = vld [vmem:[%s6 + $0xb00] sm:$0xff]
    %v5472 = vld [vmem:[%s6 + $0xb08] sm:$0xff]
    %v5473 = vld [vmem:[%s6 + $0xb10] sm:$0xff]
    %v5474 = vld [vmem:[%s6 + $0xb18] sm:$0xff]
    %v5475 = vld [vmem:[%s6 + $0xb20] sm:$0xff]
    %v5476 = vld [vmem:[%s6 + $0xb28] sm:$0xff]
    %v5477 = vld [vmem:[%s6 + $0xb30] sm:$0xff]
    %v5478 = vld [vmem:[%s6 + $0xb38] sm:$0xff]
    %v5479 = vld [vmem:[%s6 + $0xb40] sm:$0xff]
    %v5480 = vld [vmem:[%s6 + $0xb48] sm:$0xff]
    %v5481 = vld [vmem:[%s6 + $0xb50] sm:$0xff]
    %v5482 = vld [vmem:[%s6 + $0xb58] sm:$0xff]
    %v5483 = vld [vmem:[%s6 + $0xb60] sm:$0xff]
    %v5484 = vld [vmem:[%s6 + $0xb68] sm:$0xff]
    %v5485 = vld [vmem:[%s6 + $0xb70] sm:$0xff]
    %v5486 = vld [vmem:[%s6 + $0xb78] sm:$0xff]
    %v5487 = vld [vmem:[%s6 + $0xb80] sm:$0xff]
    %v5488 = vld [vmem:[%s6 + $0xb88] sm:$0xff]
    %v5489 = vld [vmem:[%s6 + $0xb90] sm:$0xff]
    %v5490 = vld [vmem:[%s6 + $0xb98] sm:$0xff]
    %v5491 = vld [vmem:[%s6 + $0xba0] sm:$0xff]
    %v5492 = vld [vmem:[%s6 + $0xba8] sm:$0xff]
    %v5493 = vld [vmem:[%s6 + $0xbb0] sm:$0xff]
    %v5494 = vld [vmem:[%s6 + $0xbb8] sm:$0xff]
    %v5495 = vld [vmem:[%s6 + $0xbc0] sm:$0xff]
    %v5496 = vld [vmem:[%s6 + $0xbc8] sm:$0xff]
    %v5497 = vld [vmem:[%s6 + $0xbd0] sm:$0xff]
    %v5498 = vld [vmem:[%s6 + $0xbd8] sm:$0xff]
    %v5499 = vld [vmem:[%s6 + $0xbe0] sm:$0xff]
    %v5500 = vld [vmem:[%s6 + $0xbe8] sm:$0xff]
    %v5501 = vld [vmem:[%s6 + $0xbf0] sm:$0xff]
    %v5502 = vld [vmem:[%s6 + $0xbf8] sm:$0xff]
    %v5503 = vld [vmem:[%s6 + $0xc00] sm:$0xff]
    %v5504 = vld [vmem:[%s6 + $0xc08] sm:$0xff]
    %v5505 = vld [vmem:[%s6 + $0xc10] sm:$0xff]
    %v5506 = vld [vmem:[%s6 + $0xc18] sm:$0xff]
    %v5507 = vld [vmem:[%s6 + $0xc20] sm:$0xff]
    %v5508 = vld [vmem:[%s6 + $0xc28] sm:$0xff]
    %v5509 = vld [vmem:[%s6 + $0xc30] sm:$0xff]
    %v5510 = vld [vmem:[%s6 + $0xc38] sm:$0xff]
    %v5511 = vld [vmem:[%s6 + $0xc40] sm:$0xff]
    %v5512 = vld [vmem:[%s6 + $0xc48] sm:$0xff]
    %v5513 = vld [vmem:[%s6 + $0xc50] sm:$0xff]
    %v5514 = vld [vmem:[%s6 + $0xc58] sm:$0xff]
    %v5515 = vld [vmem:[%s6 + $0xc60] sm:$0xff]
    %v5516 = vld [vmem:[%s6 + $0xc68] sm:$0xff]
    %v5517 = vld [vmem:[%s6 + $0xc70] sm:$0xff]
    %v5518 = vld [vmem:[%s6 + $0xc78] sm:$0xff]
    %v5519 = vld [vmem:[%s6 + $0xc80] sm:$0xff]
    %v5520 = vld [vmem:[%s6 + $0xc88] sm:$0xff]
    %v5521 = vld [vmem:[%s6 + $0xc90] sm:$0xff]
    %v5522 = vld [vmem:[%s6 + $0xc98] sm:$0xff]
    %v5523 = vld [vmem:[%s6 + $0xca0] sm:$0xff]
    %v5524 = vld [vmem:[%s6 + $0xca8] sm:$0xff]
    %v5525 = vld [vmem:[%s6 + $0xcb0] sm:$0xff]
    %v5526 = vld [vmem:[%s6 + $0xcb8] sm:$0xff]
    %v5527 = vld [vmem:[%s6 + $0xcc0] sm:$0xff]
    %v5528 = vld [vmem:[%s6 + $0xcc8] sm:$0xff]
    %v5529 = vld [vmem:[%s6 + $0xcd0] sm:$0xff]
    %v5530 = vld [vmem:[%s6 + $0xcd8] sm:$0xff]
    %v5531 = vld [vmem:[%s6 + $0xce0] sm:$0xff]
    %v5532 = vld [vmem:[%s6 + $0xce8] sm:$0xff]
    %v5533 = vld [vmem:[%s6 + $0xcf0] sm:$0xff]
    %v5534 = vld [vmem:[%s6 + $0xcf8] sm:$0xff]
    %v5535 = vld [vmem:[%s6 + $0xd00] sm:$0xff]
    %v5536 = vld [vmem:[%s6 + $0xd08] sm:$0xff]
    %v5537 = vld [vmem:[%s6 + $0xd10] sm:$0xff]
    %v5538 = vld [vmem:[%s6 + $0xd18] sm:$0xff]
    %v5539 = vld [vmem:[%s6 + $0xd20] sm:$0xff]
    %v5540 = vld [vmem:[%s6 + $0xd28] sm:$0xff]
    %v5541 = vld [vmem:[%s6 + $0xd30] sm:$0xff]
    %v5542 = vld [vmem:[%s6 + $0xd38] sm:$0xff]
    %v5543 = vld [vmem:[%s6 + $0xd40] sm:$0xff]
    %v5544 = vld [vmem:[%s6 + $0xd48] sm:$0xff]
    %v5545 = vld [vmem:[%s6 + $0xd50] sm:$0xff]
    %v5546 = vld [vmem:[%s6 + $0xd58] sm:$0xff]
    %v5547 = vld [vmem:[%s6 + $0xd60] sm:$0xff]
    %v5548 = vld [vmem:[%s6 + $0xd68] sm:$0xff]
    %v5549 = vld [vmem:[%s6 + $0xd70] sm:$0xff]
    %v5550 = vld [vmem:[%s6 + $0xd78] sm:$0xff]
    %v5551 = vld [vmem:[%s6 + $0xd80] sm:$0xff]
    %v5552 = vld [vmem:[%s6 + $0xd88] sm:$0xff]
    %v5553 = vld [vmem:[%s6 + $0xd90] sm:$0xff]
    %v5554 = vld [vmem:[%s6 + $0xd98] sm:$0xff]
    %v5555 = vld [vmem:[%s6 + $0xda0] sm:$0xff]
    %v5556 = vld [vmem:[%s6 + $0xda8] sm:$0xff]
    %v5557 = vld [vmem:[%s6 + $0xdb0] sm:$0xff]
    %v5558 = vld [vmem:[%s6 + $0xdb8] sm:$0xff]
    %v5559 = vld [vmem:[%s6 + $0xdc0] sm:$0xff]
    %v5560 = vld [vmem:[%s6 + $0xdc8] sm:$0xff]
    %v5561 = vld [vmem:[%s6 + $0xdd0] sm:$0xff]
    %v5562 = vld [vmem:[%s6 + $0xdd8] sm:$0xff]
    %v5563 = vld [vmem:[%s6 + $0xde0] sm:$0xff]
    %v5564 = vld [vmem:[%s6 + $0xde8] sm:$0xff]
    %v5565 = vld [vmem:[%s6 + $0xdf0] sm:$0xff]
    %v5566 = vld [vmem:[%s6 + $0xdf8] sm:$0xff]
    %v5567 = vld [vmem:[%s6 + $0xe00] sm:$0xff]
    %v5568 = vld [vmem:[%s6 + $0xe08] sm:$0xff]
    %v5569 = vld [vmem:[%s6 + $0xe10] sm:$0xff]
    %v5570 = vld [vmem:[%s6 + $0xe18] sm:$0xff]
    %v5571 = vld [vmem:[%s6 + $0xe20] sm:$0xff]
    %v5572 = vld [vmem:[%s6 + $0xe28] sm:$0xff]
    %v5573 = vld [vmem:[%s6 + $0xe30] sm:$0xff]
    %v5574 = vld [vmem:[%s6 + $0xe38] sm:$0xff]
    %v5575 = vld [vmem:[%s6 + $0xe40] sm:$0xff]
    %v5576 = vld [vmem:[%s6 + $0xe48] sm:$0xff]
    %v5577 = vld [vmem:[%s6 + $0xe50] sm:$0xff]
    %v5578 = vld [vmem:[%s6 + $0xe58] sm:$0xff]
    %v5579 = vld [vmem:[%s6 + $0xe60] sm:$0xff]
    %v5580 = vld [vmem:[%s6 + $0xe68] sm:$0xff]
    %v5581 = vld [vmem:[%s6 + $0xe70] sm:$0xff]
    %v5582 = vld [vmem:[%s6 + $0xe78] sm:$0xff]
    %v5583 = vld [vmem:[%s6 + $0xe80] sm:$0xff]
    %v5584 = vld [vmem:[%s6 + $0xe88] sm:$0xff]
    %v5585 = vld [vmem:[%s6 + $0xe90] sm:$0xff]
    %v5586 = vld [vmem:[%s6 + $0xe98] sm:$0xff]
    %v5587 = vld [vmem:[%s6 + $0xea0] sm:$0xff]
    %v5588 = vld [vmem:[%s6 + $0xea8] sm:$0xff]
    %v5589 = vld [vmem:[%s6 + $0xeb0] sm:$0xff]
    %v5590 = vld [vmem:[%s6 + $0xeb8] sm:$0xff]
    %v5591 = vld [vmem:[%s6 + $0xec0] sm:$0xff]
    %v5592 = vld [vmem:[%s6 + $0xec8] sm:$0xff]
    %v5593 = vld [vmem:[%s6 + $0xed0] sm:$0xff]
    %v5594 = vld [vmem:[%s6 + $0xed8] sm:$0xff]
    %v5595 = vld [vmem:[%s6 + $0xee0] sm:$0xff]
    %v5596 = vld [vmem:[%s6 + $0xee8] sm:$0xff]
    %v5597 = vld [vmem:[%s6 + $0xef0] sm:$0xff]
    %v5598 = vld [vmem:[%s6 + $0xef8] sm:$0xff]
    %v5599 = vld [vmem:[%s6 + $0xf00] sm:$0xff]
    %v5600 = vld [vmem:[%s6 + $0xf08] sm:$0xff]
    %v5601 = vld [vmem:[%s6 + $0xf10] sm:$0xff]
    %v5602 = vld [vmem:[%s6 + $0xf18] sm:$0xff]
    %v5603 = vld [vmem:[%s6 + $0xf20] sm:$0xff]
    %v5604 = vld [vmem:[%s6 + $0xf28] sm:$0xff]
    %v5605 = vld [vmem:[%s6 + $0xf30] sm:$0xff]
    %v5606 = vld [vmem:[%s6 + $0xf38] sm:$0xff]
    %v5607 = vld [vmem:[%s6 + $0xf40] sm:$0xff]
    %v5608 = vld [vmem:[%s6 + $0xf48] sm:$0xff]
    %v5609 = vld [vmem:[%s6 + $0xf50] sm:$0xff]
    %v5610 = vld [vmem:[%s6 + $0xf58] sm:$0xff]
    %v5611 = vld [vmem:[%s6 + $0xf60] sm:$0xff]
    %v5612 = vld [vmem:[%s6 + $0xf68] sm:$0xff]
    %v5613 = vld [vmem:[%s6 + $0xf70] sm:$0xff]
    %v5614 = vld [vmem:[%s6 + $0xf78] sm:$0xff]
    %v5615 = vld [vmem:[%s6 + $0xf80] sm:$0xff]
    %v5616 = vld [vmem:[%s6 + $0xf88] sm:$0xff]
    %v5617 = vld [vmem:[%s6 + $0xf90] sm:$0xff]
    %v5618 = vld [vmem:[%s6 + $0xf98] sm:$0xff]
    %v5619 = vld [vmem:[%s6 + $0xfa0] sm:$0xff]
    %v5620 = vld [vmem:[%s6 + $0xfa8] sm:$0xff]
    %v5621 = vld [vmem:[%s6 + $0xfb0] sm:$0xff]
    %v5622 = vld [vmem:[%s6 + $0xfb8] sm:$0xff]
    %v5623 = vld [vmem:[%s6 + $0xfc0] sm:$0xff]
    %v5624 = vld [vmem:[%s6 + $0xfc8] sm:$0xff]
    %v5625 = vld [vmem:[%s6 + $0xfd0] sm:$0xff]
    %v5626 = vld [vmem:[%s6 + $0xfd8] sm:$0xff]
    %v5627 = vld [vmem:[%s6 + $0xfe0] sm:$0xff]
    %v5628 = vld [vmem:[%s6 + $0xfe8] sm:$0xff]
    %v5629 = vld [vmem:[%s6 + $0xff0] sm:$0xff]
    %v5630 = vld [vmem:[%s6 + $0xff8] sm:$0xff]
    %v5631 = vld [vmem:[%s6 + $0x1000] sm:$0xff]
    %v5632 = vld [vmem:[%s6 + $0x1008] sm:$0xff]
    %v5633 = vld [vmem:[%s6 + $0x1010] sm:$0xff]
    %v5634 = vld [vmem:[%s6 + $0x1018] sm:$0xff]
    %v5635 = vld [vmem:[%s6 + $0x1020] sm:$0xff]
    %v5636 = vld [vmem:[%s6 + $0x1028] sm:$0xff]
    %v5637 = vld [vmem:[%s6 + $0x1030] sm:$0xff]
    %v5638 = vld [vmem:[%s6 + $0x1038] sm:$0xff]
    %v5639 = vld [vmem:[%s6 + $0x1040] sm:$0xff]
    %v5640 = vld [vmem:[%s6 + $0x1048] sm:$0xff]
    %v5641 = vld [vmem:[%s6 + $0x1050] sm:$0xff]
    %v5642 = vld [vmem:[%s6 + $0x1058] sm:$0xff]
    %v5643 = vld [vmem:[%s6 + $0x1060] sm:$0xff]
    %v5644 = vld [vmem:[%s6 + $0x1068] sm:$0xff]
    %v5645 = vld [vmem:[%s6 + $0x1070] sm:$0xff]
    %v5646 = vld [vmem:[%s6 + $0x1078] sm:$0xff]
    %v5647 = vld [vmem:[%s6 + $0x1080] sm:$0xff]
    %v5648 = vld [vmem:[%s6 + $0x1088] sm:$0xff]
    %v5649 = vld [vmem:[%s6 + $0x1090] sm:$0xff]
    %v5650 = vld [vmem:[%s6 + $0x1098] sm:$0xff]
    %v5651 = vld [vmem:[%s6 + $0x10a0] sm:$0xff]
    %v5652 = vld [vmem:[%s6 + $0x10a8] sm:$0xff]
    %v5653 = vld [vmem:[%s6 + $0x10b0] sm:$0xff]
    %v5654 = vld [vmem:[%s6 + $0x10b8] sm:$0xff]
    %v5655 = vld [vmem:[%s6 + $0x10c0] sm:$0xff]
    %v5656 = vld [vmem:[%s6 + $0x10c8] sm:$0xff]
    %v5657 = vld [vmem:[%s6 + $0x10d0] sm:$0xff]
    %v5658 = vld [vmem:[%s6 + $0x10d8] sm:$0xff]
    %v5659 = vld [vmem:[%s6 + $0x10e0] sm:$0xff]
    %v5660 = vld [vmem:[%s6 + $0x10e8] sm:$0xff]
    %v5661 = vld [vmem:[%s6 + $0x10f0] sm:$0xff]
    %v5662 = vld [vmem:[%s6 + $0x10f8] sm:$0xff]
    %v5663 = vld [vmem:[%s6 + $0x1100] sm:$0xff]
    %v5664 = vld [vmem:[%s6 + $0x1108] sm:$0xff]
    %v5665 = vld [vmem:[%s6 + $0x1110] sm:$0xff]
    %v5666 = vld [vmem:[%s6 + $0x1118] sm:$0xff]
    %v5667 = vld [vmem:[%s6 + $0x1120] sm:$0xff]
    %v5668 = vld [vmem:[%s6 + $0x1128] sm:$0xff]
    %v5669 = vld [vmem:[%s6 + $0x1130] sm:$0xff]
    %v5670 = vld [vmem:[%s6 + $0x1138] sm:$0xff]
    %v5671 = vld [vmem:[%s6 + $0x1140] sm:$0xff]
    %v5672 = vld [vmem:[%s6 + $0x1148] sm:$0xff]
    %v5673 = vld [vmem:[%s6 + $0x1150] sm:$0xff]
    %v5674 = vld [vmem:[%s6 + $0x1158] sm:$0xff]
    %v5675 = vld [vmem:[%s6 + $0x1160] sm:$0xff]
    %v5676 = vld [vmem:[%s6 + $0x1168] sm:$0xff]
    %v5677 = vld [vmem:[%s6 + $0x1170] sm:$0xff]
    %v5678 = vld [vmem:[%s6 + $0x1178] sm:$0xff]
    %v5679 = vld [vmem:[%s6 + $0x1180] sm:$0xff]
    %v5680 = vld [vmem:[%s6 + $0x1188] sm:$0xff]
    %v5681 = vld [vmem:[%s6 + $0x1190] sm:$0xff]
    %v5682 = vld [vmem:[%s6 + $0x1198] sm:$0xff]
    %v5683 = vld [vmem:[%s6 + $0x11a0] sm:$0xff]
    %v5684 = vld [vmem:[%s6 + $0x11a8] sm:$0xff]
    %v5685 = vld [vmem:[%s6 + $0x11b0] sm:$0xff]
    %v5686 = vld [vmem:[%s6 + $0x11b8] sm:$0xff]
    %v5687 = vld [vmem:[%s6 + $0x11c0] sm:$0xff]
    %v5688 = vld [vmem:[%s6 + $0x11c8] sm:$0xff]
    %v5689 = vld [vmem:[%s6 + $0x11d0] sm:$0xff]
    %v5690 = vld [vmem:[%s6 + $0x11d8] sm:$0xff]
    %v5691 = vld [vmem:[%s6 + $0x11e0] sm:$0xff]
    %v5692 = vld [vmem:[%s6 + $0x11e8] sm:$0xff]
    %v5693 = vld [vmem:[%s6 + $0x11f0] sm:$0xff]
    %v5694 = vld [vmem:[%s6 + $0x11f8] sm:$0xff]
    %v5695 = vld [vmem:[%s6 + $0x1200] sm:$0xff]
    %v5696 = vld [vmem:[%s6 + $0x1208] sm:$0xff]
    %v5697 = vld [vmem:[%s6 + $0x1210] sm:$0xff]
    %v5698 = vld [vmem:[%s6 + $0x1218] sm:$0xff]
    %v5699 = vld [vmem:[%s6 + $0x1220] sm:$0xff]
    %v5700 = vld [vmem:[%s6 + $0x1228] sm:$0xff]
    %v5701 = vld [vmem:[%s6 + $0x1230] sm:$0xff]
    %v5702 = vld [vmem:[%s6 + $0x1238] sm:$0xff]
    %v5703 = vld [vmem:[%s6 + $0x1240] sm:$0xff]
    %v5704 = vld [vmem:[%s6 + $0x1248] sm:$0xff]
    %v5705 = vld [vmem:[%s6 + $0x1250] sm:$0xff]
    %v5706 = vld [vmem:[%s6 + $0x1258] sm:$0xff]
    %v5707 = vld [vmem:[%s6 + $0x1260] sm:$0xff]
    %v5708 = vld [vmem:[%s6 + $0x1268] sm:$0xff]
    %v5709 = vld [vmem:[%s6 + $0x1270] sm:$0xff]
    %v5710 = vld [vmem:[%s6 + $0x1278] sm:$0xff]
    %v5711 = vld [vmem:[%s6 + $0x1280] sm:$0xff]
    %v5712 = vld [vmem:[%s6 + $0x1288] sm:$0xff]
    %v5713 = vld [vmem:[%s6 + $0x1290] sm:$0xff]
    %v5714 = vld [vmem:[%s6 + $0x1298] sm:$0xff]
    %v5715 = vld [vmem:[%s6 + $0x12a0] sm:$0xff]
    %v5716 = vld [vmem:[%s6 + $0x12a8] sm:$0xff]
    %v5717 = vld [vmem:[%s6 + $0x12b0] sm:$0xff]
    %v5718 = vld [vmem:[%s6 + $0x12b8] sm:$0xff]
    %v5719 = vld [vmem:[%s6 + $0x12c0] sm:$0xff]
    %v5720 = vld [vmem:[%s6 + $0x12c8] sm:$0xff]
    %v5721 = vld [vmem:[%s6 + $0x12d0] sm:$0xff]
    %v5722 = vld [vmem:[%s6 + $0x12d8] sm:$0xff]
    %v5723 = vld [vmem:[%s6 + $0x12e0] sm:$0xff]
    %v5724 = vld [vmem:[%s6 + $0x12e8] sm:$0xff]
    %v5725 = vld [vmem:[%s6 + $0x12f0] sm:$0xff]
    %v5726 = vld [vmem:[%s6 + $0x12f8] sm:$0xff]
    %v5727 = vld [vmem:[%s6 + $0x1300] sm:$0xff]
    %v5728 = vld [vmem:[%s6 + $0x1308] sm:$0xff]
    %v5729 = vld [vmem:[%s6 + $0x1310] sm:$0xff]
    %v5730 = vld [vmem:[%s6 + $0x1318] sm:$0xff]
    %v5731 = vld [vmem:[%s6 + $0x1320] sm:$0xff]
    %v5732 = vld [vmem:[%s6 + $0x1328] sm:$0xff]
    %v5733 = vld [vmem:[%s6 + $0x1330] sm:$0xff]
    %v5734 = vld [vmem:[%s6 + $0x1338] sm:$0xff]
    %v5735 = vld [vmem:[%s6 + $0x1340] sm:$0xff]
    %v5736 = vld [vmem:[%s6 + $0x1348] sm:$0xff]
    %v5737 = vld [vmem:[%s6 + $0x1350] sm:$0xff]
    %v5738 = vld [vmem:[%s6 + $0x1358] sm:$0xff]
    %v5739 = vld [vmem:[%s6 + $0x1360] sm:$0xff]
    %v5740 = vld [vmem:[%s6 + $0x1368] sm:$0xff]
    %v5741 = vld [vmem:[%s6 + $0x1370] sm:$0xff]
    %v5742 = vld [vmem:[%s6 + $0x1378] sm:$0xff]
    %v5743 = vld [vmem:[%s6 + $0x1380] sm:$0xff]
    %v5744 = vld [vmem:[%s6 + $0x1388] sm:$0xff]
    %v5745 = vld [vmem:[%s6 + $0x1390] sm:$0xff]
    %v5746 = vld [vmem:[%s6 + $0x1398] sm:$0xff]
    %v5747 = vld [vmem:[%s6 + $0x13a0] sm:$0xff]
    %v5748 = vld [vmem:[%s6 + $0x13a8] sm:$0xff]
    %v5749 = vld [vmem:[%s6 + $0x13b0] sm:$0xff]
    %v5750 = vld [vmem:[%s6 + $0x13b8] sm:$0xff]
    %v5751 = vld [vmem:[%s6 + $0x13c0] sm:$0xff]
    %v5752 = vld [vmem:[%s6 + $0x13c8] sm:$0xff]
    %v5753 = vld [vmem:[%s6 + $0x13d0] sm:$0xff]
    %v5754 = vld [vmem:[%s6 + $0x13d8] sm:$0xff]
    %v5755 = vld [vmem:[%s6 + $0x13e0] sm:$0xff]
    %v5756 = vld [vmem:[%s6 + $0x13e8] sm:$0xff]
    %v5757 = vld [vmem:[%s6 + $0x13f0] sm:$0xff]
    %v5758 = vld [vmem:[%s6 + $0x13f8] sm:$0xff]
    %v5759 = vld [vmem:[%s6 + $0x1400] sm:$0xff]
    %v5760 = vld [vmem:[%s6 + $0x1408] sm:$0xff]
    %v5761 = vld [vmem:[%s6 + $0x1410] sm:$0xff]
    %v5762 = vld [vmem:[%s6 + $0x1418] sm:$0xff]
    %v5763 = vld [vmem:[%s6 + $0x1420] sm:$0xff]
    %v5764 = vld [vmem:[%s6 + $0x1428] sm:$0xff]
    %v5765 = vld [vmem:[%s6 + $0x1430] sm:$0xff]
    %v5766 = vld [vmem:[%s6 + $0x1438] sm:$0xff]
    %v5767 = vld [vmem:[%s6 + $0x1440] sm:$0xff]
    %v5768 = vld [vmem:[%s6 + $0x1448] sm:$0xff]
    %v5769 = vld [vmem:[%s6 + $0x1450] sm:$0xff]
    %v5770 = vld [vmem:[%s6 + $0x1458] sm:$0xff]
    %v5771 = vld [vmem:[%s6 + $0x1460] sm:$0xff]
    %v5772 = vld [vmem:[%s6 + $0x1468] sm:$0xff]
    %v5773 = vld [vmem:[%s6 + $0x1470] sm:$0xff]
    %v5774 = vld [vmem:[%s6 + $0x1478] sm:$0xff]
    %v5775 = vld [vmem:[%s6 + $0x1480] sm:$0xff]
    %v5776 = vld [vmem:[%s6 + $0x1488] sm:$0xff]
    %v5777 = vld [vmem:[%s6 + $0x1490] sm:$0xff]
    %v5778 = vld [vmem:[%s6 + $0x1498] sm:$0xff]
    %v5779 = vld [vmem:[%s6 + $0x14a0] sm:$0xff]
    %v5780 = vld [vmem:[%s6 + $0x14a8] sm:$0xff]
    %v5781 = vld [vmem:[%s6 + $0x14b0] sm:$0xff]
    %v5782 = vld [vmem:[%s6 + $0x14b8] sm:$0xff]
    %v5783 = vld [vmem:[%s6 + $0x14c0] sm:$0xff]
    %v5784 = vld [vmem:[%s6 + $0x14c8] sm:$0xff]
    %v5785 = vld [vmem:[%s6 + $0x14d0] sm:$0xff]
    %v5786 = vld [vmem:[%s6 + $0x14d8] sm:$0xff]
    %v5787 = vld [vmem:[%s6 + $0x14e0] sm:$0xff]
    %v5788 = vld [vmem:[%s6 + $0x14e8] sm:$0xff]
    %v5789 = vld [vmem:[%s6 + $0x14f0] sm:$0xff]
    %v5790 = vld [vmem:[%s6 + $0x14f8] sm:$0xff]
    %v5791 = vld [vmem:[%s6 + $0x1500] sm:$0xff]
    %v5792 = vld [vmem:[%s6 + $0x1508] sm:$0xff]
    %v5793 = vld [vmem:[%s6 + $0x1510] sm:$0xff]
    %v5794 = vld [vmem:[%s6 + $0x1518] sm:$0xff]
    %v5795 = vld [vmem:[%s6 + $0x1520] sm:$0xff]
    %v5796 = vld [vmem:[%s6 + $0x1528] sm:$0xff]
    %v5797 = vld [vmem:[%s6 + $0x1530] sm:$0xff]
    %v5798 = vld [vmem:[%s6 + $0x1538] sm:$0xff]
    %v5799 = vld [vmem:[%s6 + $0x1540] sm:$0xff]
    %v5800 = vld [vmem:[%s6 + $0x1548] sm:$0xff]
    %v5801 = vld [vmem:[%s6 + $0x1550] sm:$0xff]
    %v5802 = vld [vmem:[%s6 + $0x1558] sm:$0xff]
    %v5803 = vld [vmem:[%s6 + $0x1560] sm:$0xff]
    %v5804 = vld [vmem:[%s6 + $0x1568] sm:$0xff]
    %v5805 = vld [vmem:[%s6 + $0x1570] sm:$0xff]
    %v5806 = vld [vmem:[%s6 + $0x1578] sm:$0xff]
    %v5807 = vld [vmem:[%s6 + $0x1580] sm:$0xff]
    %v5808 = vld [vmem:[%s6 + $0x1588] sm:$0xff]
    %v5809 = vld [vmem:[%s6 + $0x1590] sm:$0xff]
    %v5810 = vld [vmem:[%s6 + $0x1598] sm:$0xff]
    %v5811 = vld [vmem:[%s6 + $0x15a0] sm:$0xff]
    %v5812 = vld [vmem:[%s6 + $0x15a8] sm:$0xff]
    %v5813 = vld [vmem:[%s6 + $0x15b0] sm:$0xff]
    %v5814 = vld [vmem:[%s6 + $0x15b8] sm:$0xff]
    %v5815 = vld [vmem:[%s6 + $0x15c0] sm:$0xff]
    %v5816 = vld [vmem:[%s6 + $0x15c8] sm:$0xff]
    %v5817 = vld [vmem:[%s6 + $0x15d0] sm:$0xff]
    %v5818 = vld [vmem:[%s6 + $0x15d8] sm:$0xff]
    %v5819 = vld [vmem:[%s6 + $0x15e0] sm:$0xff]
    %v5820 = vld [vmem:[%s6 + $0x15e8] sm:$0xff]
    %v5821 = vld [vmem:[%s6 + $0x15f0] sm:$0xff]
    %v5822 = vld [vmem:[%s6 + $0x15f8] sm:$0xff]
    %v5823 = vld [vmem:[%s6 + $0x1600] sm:$0xff]
    %v5824 = vld [vmem:[%s6 + $0x1608] sm:$0xff]
    %v5825 = vld [vmem:[%s6 + $0x1610] sm:$0xff]
    %v5826 = vld [vmem:[%s6 + $0x1618] sm:$0xff]
    %v5827 = vld [vmem:[%s6 + $0x1620] sm:$0xff]
    %v5828 = vld [vmem:[%s6 + $0x1628] sm:$0xff]
    %v5829 = vld [vmem:[%s6 + $0x1630] sm:$0xff]
    %v5830 = vld [vmem:[%s6 + $0x1638] sm:$0xff]
    %v5831 = vld [vmem:[%s6 + $0x1640] sm:$0xff]
    %v5832 = vld [vmem:[%s6 + $0x1648] sm:$0xff]
    %v5833 = vld [vmem:[%s6 + $0x1650] sm:$0xff]
    %v5834 = vld [vmem:[%s6 + $0x1658] sm:$0xff]
    %v5835 = vld [vmem:[%s6 + $0x1660] sm:$0xff]
    %v5836 = vld [vmem:[%s6 + $0x1668] sm:$0xff]
    %v5837 = vld [vmem:[%s6 + $0x1670] sm:$0xff]
    %v5838 = vld [vmem:[%s6 + $0x1678] sm:$0xff]
    %v5839 = vld [vmem:[%s6 + $0x1680] sm:$0xff]
    %v5840 = vld [vmem:[%s6 + $0x1688] sm:$0xff]
    %v5841 = vld [vmem:[%s6 + $0x1690] sm:$0xff]
    %v5842 = vld [vmem:[%s6 + $0x1698] sm:$0xff]
    %v5843 = vld [vmem:[%s6 + $0x16a0] sm:$0xff]
    %v5844 = vld [vmem:[%s6 + $0x16a8] sm:$0xff]
    %v5845 = vld [vmem:[%s6 + $0x16b0] sm:$0xff]
    %v5846 = vld [vmem:[%s6 + $0x16b8] sm:$0xff]
    %v5847 = vld [vmem:[%s6 + $0x16c0] sm:$0xff]
    %v5848 = vld [vmem:[%s6 + $0x16c8] sm:$0xff]
    %v5849 = vld [vmem:[%s6 + $0x16d0] sm:$0xff]
    %v5850 = vld [vmem:[%s6 + $0x16d8] sm:$0xff]
    %v5851 = vld [vmem:[%s6 + $0x16e0] sm:$0xff]
    %v5852 = vld [vmem:[%s6 + $0x16e8] sm:$0xff]
    %v5853 = vld [vmem:[%s6 + $0x16f0] sm:$0xff]
    %v5854 = vld [vmem:[%s6 + $0x16f8] sm:$0xff]
    %v5855 = vld [vmem:[%s6 + $0x1700] sm:$0xff]
    %v5856 = vld [vmem:[%s6 + $0x1708] sm:$0xff]
    %v5857 = vld [vmem:[%s6 + $0x1710] sm:$0xff]
    %v5858 = vld [vmem:[%s6 + $0x1718] sm:$0xff]
    %v5859 = vld [vmem:[%s6 + $0x1720] sm:$0xff]
    %v5860 = vld [vmem:[%s6 + $0x1728] sm:$0xff]
    %v5861 = vld [vmem:[%s6 + $0x1730] sm:$0xff]
    %v5862 = vld [vmem:[%s6 + $0x1738] sm:$0xff]
    %v5863 = vld [vmem:[%s6 + $0x1740] sm:$0xff]
    %v5864 = vld [vmem:[%s6 + $0x1748] sm:$0xff]
    %v5865 = vld [vmem:[%s6 + $0x1750] sm:$0xff]
    %v5866 = vld [vmem:[%s6 + $0x1758] sm:$0xff]
    %v5867 = vld [vmem:[%s6 + $0x1760] sm:$0xff]
    %v5868 = vld [vmem:[%s6 + $0x1768] sm:$0xff]
    %v5869 = vld [vmem:[%s6 + $0x1770] sm:$0xff]
    %v5870 = vld [vmem:[%s6 + $0x1778] sm:$0xff]
    %v5871 = vld [vmem:[%s6 + $0x1780] sm:$0xff]
    %v5872 = vld [vmem:[%s6 + $0x1788] sm:$0xff]
    %v5873 = vld [vmem:[%s6 + $0x1790] sm:$0xff]
    %v5874 = vld [vmem:[%s6 + $0x1798] sm:$0xff]
    %v5875 = vld [vmem:[%s6 + $0x17a0] sm:$0xff]
    %v5876 = vld [vmem:[%s6 + $0x17a8] sm:$0xff]
    %v5877 = vld [vmem:[%s6 + $0x17b0] sm:$0xff]
    %v5878 = vld [vmem:[%s6 + $0x17b8] sm:$0xff]
    %v5879 = vld [vmem:[%s6 + $0x17c0] sm:$0xff]
    %v5880 = vld [vmem:[%s6 + $0x17c8] sm:$0xff]
    %v5881 = vld [vmem:[%s6 + $0x17d0] sm:$0xff]
    %v5882 = vld [vmem:[%s6 + $0x17d8] sm:$0xff]
    %v5883 = vld [vmem:[%s6 + $0x17e0] sm:$0xff]
    %v5884 = vld [vmem:[%s6 + $0x17e8] sm:$0xff]
    %v5885 = vld [vmem:[%s6 + $0x17f0] sm:$0xff]
    %v5886 = vld [vmem:[%s6 + $0x17f8] sm:$0xff]
    %v5887 = vld [vmem:[%s6 + $0x1800] sm:$0xff]
    %v5888 = vld [vmem:[%s6 + $0x1808] sm:$0xff]
    %v5889 = vld [vmem:[%s6 + $0x1810] sm:$0xff]
    %v5890 = vld [vmem:[%s6 + $0x1818] sm:$0xff]
    %v5891 = vld [vmem:[%s6 + $0x1820] sm:$0xff]
    %v5892 = vld [vmem:[%s6 + $0x1828] sm:$0xff]
    %v5893 = vld [vmem:[%s6 + $0x1830] sm:$0xff]
    %v5894 = vld [vmem:[%s6 + $0x1838] sm:$0xff]
    %v5895 = vld [vmem:[%s6 + $0x1840] sm:$0xff]
    %v5896 = vld [vmem:[%s6 + $0x1848] sm:$0xff]
    %v5897 = vld [vmem:[%s6 + $0x1850] sm:$0xff]
    %v5898 = vld [vmem:[%s6 + $0x1858] sm:$0xff]
    %v5899 = vld [vmem:[%s6 + $0x1860] sm:$0xff]
    %v5900 = vld [vmem:[%s6 + $0x1868] sm:$0xff]
    %v5901 = vld [vmem:[%s6 + $0x1870] sm:$0xff]
    %v5902 = vld [vmem:[%s6 + $0x1878] sm:$0xff]
    %v5903 = vld [vmem:[%s6 + $0x1880] sm:$0xff]
    %v5904 = vld [vmem:[%s6 + $0x1888] sm:$0xff]
    %v5905 = vld [vmem:[%s6 + $0x1890] sm:$0xff]
    %v5906 = vld [vmem:[%s6 + $0x1898] sm:$0xff]
    %v5907 = vld [vmem:[%s6 + $0x18a0] sm:$0xff]
    %v5908 = vld [vmem:[%s6 + $0x18a8] sm:$0xff]
    %v5909 = vld [vmem:[%s6 + $0x18b0] sm:$0xff]
    %v5910 = vld [vmem:[%s6 + $0x18b8] sm:$0xff]
    %v5911 = vld [vmem:[%s6 + $0x18c0] sm:$0xff]
    %v5912 = vld [vmem:[%s6 + $0x18c8] sm:$0xff]
    %v5913 = vld [vmem:[%s6 + $0x18d0] sm:$0xff]
    %v5914 = vld [vmem:[%s6 + $0x18d8] sm:$0xff]
    %v5915 = vld [vmem:[%s6 + $0x18e0] sm:$0xff]
    %v5916 = vld [vmem:[%s6 + $0x18e8] sm:$0xff]
    %v5917 = vld [vmem:[%s6 + $0x18f0] sm:$0xff]
    %v5918 = vld [vmem:[%s6 + $0x18f8] sm:$0xff]
    %v5919 = vld [vmem:[%s6 + $0x1900] sm:$0xff]
    %v5920 = vld [vmem:[%s6 + $0x1908] sm:$0xff]
    %v5921 = vld [vmem:[%s6 + $0x1910] sm:$0xff]
    %v5922 = vld [vmem:[%s6 + $0x1918] sm:$0xff]
    %v5923 = vld [vmem:[%s6 + $0x1920] sm:$0xff]
    %v5924 = vld [vmem:[%s6 + $0x1928] sm:$0xff]
    %v5925 = vld [vmem:[%s6 + $0x1930] sm:$0xff]
    %v5926 = vld [vmem:[%s6 + $0x1938] sm:$0xff]
    %v5927 = vld [vmem:[%s6 + $0x1940] sm:$0xff]
    %v5928 = vld [vmem:[%s6 + $0x1948] sm:$0xff]
    %v5929 = vld [vmem:[%s6 + $0x1950] sm:$0xff]
    %v5930 = vld [vmem:[%s6 + $0x1958] sm:$0xff]
    %v5931 = vld [vmem:[%s6 + $0x1960] sm:$0xff]
    %v5932 = vld [vmem:[%s6 + $0x1968] sm:$0xff]
    %v5933 = vld [vmem:[%s6 + $0x1970] sm:$0xff]
    %v5934 = vld [vmem:[%s6 + $0x1978] sm:$0xff]
    %v5935 = vld [vmem:[%s6 + $0x1980] sm:$0xff]
    %v5936 = vld [vmem:[%s6 + $0x1988] sm:$0xff]
    %v5937 = vld [vmem:[%s6 + $0x1990] sm:$0xff]
    %v5938 = vld [vmem:[%s6 + $0x1998] sm:$0xff]
    %v5939 = vld [vmem:[%s6 + $0x19a0] sm:$0xff]
    %v5940 = vld [vmem:[%s6 + $0x19a8] sm:$0xff]
    %v5941 = vld [vmem:[%s6 + $0x19b0] sm:$0xff]
    %v5942 = vld [vmem:[%s6 + $0x19b8] sm:$0xff]
    %v5943 = vld [vmem:[%s6 + $0x19c0] sm:$0xff]
    %v5944 = vld [vmem:[%s6 + $0x19c8] sm:$0xff]
    %v5945 = vld [vmem:[%s6 + $0x19d0] sm:$0xff]
    %v5946 = vld [vmem:[%s6 + $0x19d8] sm:$0xff]
    %v5947 = vld [vmem:[%s6 + $0x19e0] sm:$0xff]
    %v5948 = vld [vmem:[%s6 + $0x19e8] sm:$0xff]
    %v5949 = vld [vmem:[%s6 + $0x19f0] sm:$0xff]
    %v5950 = vld [vmem:[%s6 + $0x19f8] sm:$0xff]
    %v5951 = vld [vmem:[%s6 + $0x1a00] sm:$0xff]
    %v5952 = vld [vmem:[%s6 + $0x1a08] sm:$0xff]
    %v5953 = vld [vmem:[%s6 + $0x1a10] sm:$0xff]
    %v5954 = vld [vmem:[%s6 + $0x1a18] sm:$0xff]
    %v5955 = vld [vmem:[%s6 + $0x1a20] sm:$0xff]
    %v5956 = vld [vmem:[%s6 + $0x1a28] sm:$0xff]
    %v5957 = vld [vmem:[%s6 + $0x1a30] sm:$0xff]
    %v5958 = vld [vmem:[%s6 + $0x1a38] sm:$0xff]
    %v5959 = vld [vmem:[%s6 + $0x1a40] sm:$0xff]
    %v5960 = vld [vmem:[%s6 + $0x1a48] sm:$0xff]
    %v5961 = vld [vmem:[%s6 + $0x1a50] sm:$0xff]
    %v5962 = vld [vmem:[%s6 + $0x1a58] sm:$0xff]
    %v5963 = vld [vmem:[%s6 + $0x1a60] sm:$0xff]
    %v5964 = vld [vmem:[%s6 + $0x1a68] sm:$0xff]
    %v5965 = vld [vmem:[%s6 + $0x1a70] sm:$0xff]
    %v5966 = vld [vmem:[%s6 + $0x1a78] sm:$0xff]
    %v5967 = vld [vmem:[%s6 + $0x1a80] sm:$0xff]
    %v5968 = vld [vmem:[%s6 + $0x1a88] sm:$0xff]
    %v5969 = vld [vmem:[%s6 + $0x1a90] sm:$0xff]
    %v5970 = vld [vmem:[%s6 + $0x1a98] sm:$0xff]
    %v5971 = vld [vmem:[%s6 + $0x1aa0] sm:$0xff]
    %v5972 = vld [vmem:[%s6 + $0x1aa8] sm:$0xff]
    %v5973 = vld [vmem:[%s6 + $0x1ab0] sm:$0xff]
    %v5974 = vld [vmem:[%s6 + $0x1ab8] sm:$0xff]
    %v5975 = vld [vmem:[%s6 + $0x1ac0] sm:$0xff]
    %v5976 = vld [vmem:[%s6 + $0x1ac8] sm:$0xff]
    %v5977 = vld [vmem:[%s6 + $0x1ad0] sm:$0xff]
    %v5978 = vld [vmem:[%s6 + $0x1ad8] sm:$0xff]
    %v5979 = vld [vmem:[%s6 + $0x1ae0] sm:$0xff]
    %v5980 = vld [vmem:[%s6 + $0x1ae8] sm:$0xff]
    %v5981 = vld [vmem:[%s6 + $0x1af0] sm:$0xff]
    %v5982 = vld [vmem:[%s6 + $0x1af8] sm:$0xff]
    %v5983 = vld [vmem:[%s6 + $0x1b00] sm:$0xff]
    %v5984 = vld [vmem:[%s6 + $0x1b08] sm:$0xff]
    %v5985 = vld [vmem:[%s6 + $0x1b10] sm:$0xff]
    %v5986 = vld [vmem:[%s6 + $0x1b18] sm:$0xff]
    %v5987 = vld [vmem:[%s6 + $0x1b20] sm:$0xff]
    %v5988 = vld [vmem:[%s6 + $0x1b28] sm:$0xff]
    %v5989 = vld [vmem:[%s6 + $0x1b30] sm:$0xff]
    %v5990 = vld [vmem:[%s6 + $0x1b38] sm:$0xff]
    %v5991 = vld [vmem:[%s6 + $0x1b40] sm:$0xff]
    %v5992 = vld [vmem:[%s6 + $0x1b48] sm:$0xff]
    %v5993 = vld [vmem:[%s6 + $0x1b50] sm:$0xff]
    %v5994 = vld [vmem:[%s6 + $0x1b58] sm:$0xff]
    %v5995 = vld [vmem:[%s6 + $0x1b60] sm:$0xff]
    %v5996 = vld [vmem:[%s6 + $0x1b68] sm:$0xff]
    %v5997 = vld [vmem:[%s6 + $0x1b70] sm:$0xff]
    %v5998 = vld [vmem:[%s6 + $0x1b78] sm:$0xff]
    %v5999 = vld [vmem:[%s6 + $0x1b80] sm:$0xff]
    %v6000 = vld [vmem:[%s6 + $0x1b88] sm:$0xff]
    %v6001 = vld [vmem:[%s6 + $0x1b90] sm:$0xff]
    %v6002 = vld [vmem:[%s6 + $0x1b98] sm:$0xff]
    %v6003 = vld [vmem:[%s6 + $0x1ba0] sm:$0xff]
    %v6004 = vld [vmem:[%s6 + $0x1ba8] sm:$0xff]
    %v6005 = vld [vmem:[%s6 + $0x1bb0] sm:$0xff]
    %v6006 = vld [vmem:[%s6 + $0x1bb8] sm:$0xff]
    %v6007 = vld [vmem:[%s6 + $0x1bc0] sm:$0xff]
    %v6008 = vld [vmem:[%s6 + $0x1bc8] sm:$0xff]
    %v6009 = vld [vmem:[%s6 + $0x1bd0] sm:$0xff]
    %v6010 = vld [vmem:[%s6 + $0x1bd8] sm:$0xff]
    %v6011 = vld [vmem:[%s6 + $0x1be0] sm:$0xff]
    %v6012 = vld [vmem:[%s6 + $0x1be8] sm:$0xff]
    %v6013 = vld [vmem:[%s6 + $0x1bf0] sm:$0xff]
    %v6014 = vld [vmem:[%s6 + $0x1bf8] sm:$0xff]
    %v6015 = vld [vmem:[%s6 + $0x1c00] sm:$0xff]
    %v6016 = vld [vmem:[%s6 + $0x1c08] sm:$0xff]
    %v6017 = vld [vmem:[%s6 + $0x1c10] sm:$0xff]
    %v6018 = vld [vmem:[%s6 + $0x1c18] sm:$0xff]
    %v6019 = vld [vmem:[%s6 + $0x1c20] sm:$0xff]
    %v6020 = vld [vmem:[%s6 + $0x1c28] sm:$0xff]
    %v6021 = vld [vmem:[%s6 + $0x1c30] sm:$0xff]
    %v6022 = vld [vmem:[%s6 + $0x1c38] sm:$0xff]
    %v6023 = vld [vmem:[%s6 + $0x1c40] sm:$0xff]
    %v6024 = vld [vmem:[%s6 + $0x1c48] sm:$0xff]
    %v6025 = vld [vmem:[%s6 + $0x1c50] sm:$0xff]
    %v6026 = vld [vmem:[%s6 + $0x1c58] sm:$0xff]
    %v6027 = vld [vmem:[%s6 + $0x1c60] sm:$0xff]
    %v6028 = vld [vmem:[%s6 + $0x1c68] sm:$0xff]
    %v6029 = vld [vmem:[%s6 + $0x1c70] sm:$0xff]
    %v6030 = vld [vmem:[%s6 + $0x1c78] sm:$0xff]
    %v6031 = vld [vmem:[%s6 + $0x1c80] sm:$0xff]
    %v6032 = vld [vmem:[%s6 + $0x1c88] sm:$0xff]
    %v6033 = vld [vmem:[%s6 + $0x1c90] sm:$0xff]
    %v6034 = vld [vmem:[%s6 + $0x1c98] sm:$0xff]
    %v6035 = vld [vmem:[%s6 + $0x1ca0] sm:$0xff]
    %v6036 = vld [vmem:[%s6 + $0x1ca8] sm:$0xff]
    %v6037 = vld [vmem:[%s6 + $0x1cb0] sm:$0xff]
    %v6038 = vld [vmem:[%s6 + $0x1cb8] sm:$0xff]
    %v6039 = vld [vmem:[%s6 + $0x1cc0] sm:$0xff]
    %v6040 = vld [vmem:[%s6 + $0x1cc8] sm:$0xff]
    %v6041 = vld [vmem:[%s6 + $0x1cd0] sm:$0xff]
    %v6042 = vld [vmem:[%s6 + $0x1cd8] sm:$0xff]
    %v6043 = vld [vmem:[%s6 + $0x1ce0] sm:$0xff]
    %v6044 = vld [vmem:[%s6 + $0x1ce8] sm:$0xff]
    %v6045 = vld [vmem:[%s6 + $0x1cf0] sm:$0xff]
    %v6046 = vld [vmem:[%s6 + $0x1cf8] sm:$0xff]
    %v6047 = vld [vmem:[%s6 + $0x1d00] sm:$0xff]
    %v6048 = vld [vmem:[%s6 + $0x1d08] sm:$0xff]
    %v6049 = vld [vmem:[%s6 + $0x1d10] sm:$0xff]
    %v6050 = vld [vmem:[%s6 + $0x1d18] sm:$0xff]
    %v6051 = vld [vmem:[%s6 + $0x1d20] sm:$0xff]
    %v6052 = vld [vmem:[%s6 + $0x1d28] sm:$0xff]
    %v6053 = vld [vmem:[%s6 + $0x1d30] sm:$0xff]
    %v6054 = vld [vmem:[%s6 + $0x1d38] sm:$0xff]
    %v6055 = vld [vmem:[%s6 + $0x1d40] sm:$0xff]
    %v6056 = vld [vmem:[%s6 + $0x1d48] sm:$0xff]
    %v6057 = vld [vmem:[%s6 + $0x1d50] sm:$0xff]
    %v6058 = vld [vmem:[%s6 + $0x1d58] sm:$0xff]
    %v6059 = vld [vmem:[%s6 + $0x1d60] sm:$0xff]
    %v6060 = vld [vmem:[%s6 + $0x1d68] sm:$0xff]
    %v6061 = vld [vmem:[%s6 + $0x1d70] sm:$0xff]
    %v6062 = vld [vmem:[%s6 + $0x1d78] sm:$0xff]
    %v6063 = vld [vmem:[%s6 + $0x1d80] sm:$0xff]
    %v6064 = vld [vmem:[%s6 + $0x1d88] sm:$0xff]
    %v6065 = vld [vmem:[%s6 + $0x1d90] sm:$0xff]
    %v6066 = vld [vmem:[%s6 + $0x1d98] sm:$0xff]
    %v6067 = vld [vmem:[%s6 + $0x1da0] sm:$0xff]
    %v6068 = vld [vmem:[%s6 + $0x1da8] sm:$0xff]
    %v6069 = vld [vmem:[%s6 + $0x1db0] sm:$0xff]
    %v6070 = vld [vmem:[%s6 + $0x1db8] sm:$0xff]
    %v6071 = vld [vmem:[%s6 + $0x1dc0] sm:$0xff]
    %v6072 = vld [vmem:[%s6 + $0x1dc8] sm:$0xff]
    %v6073 = vld [vmem:[%s6 + $0x1dd0] sm:$0xff]
    %v6074 = vld [vmem:[%s6 + $0x1dd8] sm:$0xff]
    %v6075 = vld [vmem:[%s6 + $0x1de0] sm:$0xff]
    %v6076 = vld [vmem:[%s6 + $0x1de8] sm:$0xff]
    %v6077 = vld [vmem:[%s6 + $0x1df0] sm:$0xff]
    %v6078 = vld [vmem:[%s6 + $0x1df8] sm:$0xff]
    %v6079 = vld [vmem:[%s6 + $0x1e00] sm:$0xff]
    %v6080 = vld [vmem:[%s6 + $0x1e08] sm:$0xff]
    %v6081 = vld [vmem:[%s6 + $0x1e10] sm:$0xff]
    %v6082 = vld [vmem:[%s6 + $0x1e18] sm:$0xff]
    %v6083 = vld [vmem:[%s6 + $0x1e20] sm:$0xff]
    %v6084 = vld [vmem:[%s6 + $0x1e28] sm:$0xff]
    %v6085 = vld [vmem:[%s6 + $0x1e30] sm:$0xff]
    %v6086 = vld [vmem:[%s6 + $0x1e38] sm:$0xff]
    %v6087 = vld [vmem:[%s6 + $0x1e40] sm:$0xff]
    %v6088 = vld [vmem:[%s6 + $0x1e48] sm:$0xff]
    %v6089 = vld [vmem:[%s6 + $0x1e50] sm:$0xff]
    %v6090 = vld [vmem:[%s6 + $0x1e58] sm:$0xff]
    %v6091 = vld [vmem:[%s6 + $0x1e60] sm:$0xff]
    %v6092 = vld [vmem:[%s6 + $0x1e68] sm:$0xff]
    %v6093 = vld [vmem:[%s6 + $0x1e70] sm:$0xff]
    %v6094 = vld [vmem:[%s6 + $0x1e78] sm:$0xff]
    %v6095 = vld [vmem:[%s6 + $0x1e80] sm:$0xff]
    %v6096 = vld [vmem:[%s6 + $0x1e88] sm:$0xff]
    %v6097 = vld [vmem:[%s6 + $0x1e90] sm:$0xff]
    %v6098 = vld [vmem:[%s6 + $0x1e98] sm:$0xff]
    %v6099 = vld [vmem:[%s6 + $0x1ea0] sm:$0xff]
    %v6100 = vld [vmem:[%s6 + $0x1ea8] sm:$0xff]
    %v6101 = vld [vmem:[%s6 + $0x1eb0] sm:$0xff]
    %v6102 = vld [vmem:[%s6 + $0x1eb8] sm:$0xff]
    %v6103 = vld [vmem:[%s6 + $0x1ec0] sm:$0xff]
    %v6104 = vld [vmem:[%s6 + $0x1ec8] sm:$0xff]
    %v6105 = vld [vmem:[%s6 + $0x1ed0] sm:$0xff]
    %v6106 = vld [vmem:[%s6 + $0x1ed8] sm:$0xff]
    %v6107 = vld [vmem:[%s6 + $0x1ee0] sm:$0xff]
    %v6108 = vld [vmem:[%s6 + $0x1ee8] sm:$0xff]
    %v6109 = vld [vmem:[%s6 + $0x1ef0] sm:$0xff]
    %v6110 = vld [vmem:[%s6 + $0x1ef8] sm:$0xff]
    %v6111 = vld [vmem:[%s6 + $0x1f00] sm:$0xff]
    %v6112 = vld [vmem:[%s6 + $0x1f08] sm:$0xff]
    %v6113 = vld [vmem:[%s6 + $0x1f10] sm:$0xff]
    %v6114 = vld [vmem:[%s6 + $0x1f18] sm:$0xff]
    %v6115 = vld [vmem:[%s6 + $0x1f20] sm:$0xff]
    %v6116 = vld [vmem:[%s6 + $0x1f28] sm:$0xff]
    %v6117 = vld [vmem:[%s6 + $0x1f30] sm:$0xff]
    %v6118 = vld [vmem:[%s6 + $0x1f38] sm:$0xff]
    %v6119 = vld [vmem:[%s6 + $0x1f40] sm:$0xff]
    %v6120 = vld [vmem:[%s6 + $0x1f48] sm:$0xff]
    %v6121 = vld [vmem:[%s6 + $0x1f50] sm:$0xff]
    %v6122 = vld [vmem:[%s6 + $0x1f58] sm:$0xff]
    %v6123 = vld [vmem:[%s6 + $0x1f60] sm:$0xff]
    %v6124 = vld [vmem:[%s6 + $0x1f68] sm:$0xff]
    %v6125 = vld [vmem:[%s6 + $0x1f70] sm:$0xff]
    %v6126 = vld [vmem:[%s6 + $0x1f78] sm:$0xff]
    %v6127 = vld [vmem:[%s6 + $0x1f80] sm:$0xff]
    %v6128 = vld [vmem:[%s6 + $0x1f88] sm:$0xff]
    %v6129 = vld [vmem:[%s6 + $0x1f90] sm:$0xff]
    %v6130 = vld [vmem:[%s6 + $0x1f98] sm:$0xff]
    %v6131 = vld [vmem:[%s6 + $0x1fa0] sm:$0xff]
    %v6132 = vld [vmem:[%s6 + $0x1fa8] sm:$0xff]
    %v6133 = vld [vmem:[%s6 + $0x1fb0] sm:$0xff]
    %v6134 = vld [vmem:[%s6 + $0x1fb8] sm:$0xff]
    %v6135 = vld [vmem:[%s6 + $0x1fc0] sm:$0xff]
    %v6136 = vld [vmem:[%s6 + $0x1fc8] sm:$0xff]
    %v6137 = vld [vmem:[%s6 + $0x1fd0] sm:$0xff]
    %v6138 = vld [vmem:[%s6 + $0x1fd8] sm:$0xff]
    %v6139 = vld [vmem:[%s6 + $0x1fe0] sm:$0xff]
    %v6140 = vld [vmem:[%s6 + $0x1fe8] sm:$0xff]
    %v6141 = vld [vmem:[%s6 + $0x1ff0] sm:$0xff]
    %v6142 = vld [vmem:[%s6 + $0x1ff8] sm:$0xff]
    %v6143 = vld [vmem:[%s7] sm:$0xff]
    %v6145 = vperm.slane %v6143, 0
    %v6146 = vperm.slane %v6143, 1
    %v6147 = vperm.slane %v6143, 2
    %v6148 = vperm.slane %v6143, 3
    %v6149 = vperm.slane %v6143, 4
    %v6150 = vperm.slane %v6143, 5
    %v6151 = vperm.slane %v6143, 6
    %v6152 = vperm.slane %v6143, 7
    %v7185 = vunpack.c.l.b16 %v5119
    %v7186 = vunpack.c.h.b16 %v5119
    %v7187 = vunpack.c.l.b16 %v5120
    %v7188 = vunpack.c.h.b16 %v5120
    %v7189 = vunpack.c.l.b16 %v5121
    %v7190 = vunpack.c.h.b16 %v5121
    %v7191 = vunpack.c.l.b16 %v5122
    %v7192 = vunpack.c.h.b16 %v5122
    %v7193 = vunpack.c.l.b16 %v5123
    %v7194 = vunpack.c.h.b16 %v5123
    %v7195 = vunpack.c.l.b16 %v5124
    %v7196 = vunpack.c.h.b16 %v5124
    %v7197 = vunpack.c.l.b16 %v5125
    %v7198 = vunpack.c.h.b16 %v5125
    %v7199 = vunpack.c.l.b16 %v5126
    %v7200 = vunpack.c.h.b16 %v5126
    %v7201 = vunpack.c.l.b16 %v5127
    %v7202 = vunpack.c.h.b16 %v5127
    %v7203 = vunpack.c.l.b16 %v5128
    %v7204 = vunpack.c.h.b16 %v5128
    %v7205 = vunpack.c.l.b16 %v5129
    %v7206 = vunpack.c.h.b16 %v5129
    %v7207 = vunpack.c.l.b16 %v5130
    %v7208 = vunpack.c.h.b16 %v5130
    %v7209 = vunpack.c.l.b16 %v5131
    %v7210 = vunpack.c.h.b16 %v5131
    %v7211 = vunpack.c.l.b16 %v5132
    %v7212 = vunpack.c.h.b16 %v5132
    %v7213 = vunpack.c.l.b16 %v5133
    %v7214 = vunpack.c.h.b16 %v5133
    %v7215 = vunpack.c.l.b16 %v5134
    %v7216 = vunpack.c.h.b16 %v5134
    %v7217 = vunpack.c.l.b16 %v5135
    %v7218 = vunpack.c.h.b16 %v5135
    %v7219 = vunpack.c.l.b16 %v5136
    %v7220 = vunpack.c.h.b16 %v5136
    %v7221 = vunpack.c.l.b16 %v5137
    %v7222 = vunpack.c.h.b16 %v5137
    %v7223 = vunpack.c.l.b16 %v5138
    %v7224 = vunpack.c.h.b16 %v5138
    %v7225 = vunpack.c.l.b16 %v5139
    %v7226 = vunpack.c.h.b16 %v5139
    %v7227 = vunpack.c.l.b16 %v5140
    %v7228 = vunpack.c.h.b16 %v5140
    %v7229 = vunpack.c.l.b16 %v5141
    %v7230 = vunpack.c.h.b16 %v5141
    %v7231 = vunpack.c.l.b16 %v5142
    %v7232 = vunpack.c.h.b16 %v5142
    %v7233 = vunpack.c.l.b16 %v5143
    %v7234 = vunpack.c.h.b16 %v5143
    %v7235 = vunpack.c.l.b16 %v5144
    %v7236 = vunpack.c.h.b16 %v5144
    %v7237 = vunpack.c.l.b16 %v5145
    %v7238 = vunpack.c.h.b16 %v5145
    %v7239 = vunpack.c.l.b16 %v5146
    %v7240 = vunpack.c.h.b16 %v5146
    %v7241 = vunpack.c.l.b16 %v5147
    %v7242 = vunpack.c.h.b16 %v5147
    %v7243 = vunpack.c.l.b16 %v5148
    %v7244 = vunpack.c.h.b16 %v5148
    %v7245 = vunpack.c.l.b16 %v5149
    %v7246 = vunpack.c.h.b16 %v5149
    %v7247 = vunpack.c.l.b16 %v5150
    %v7248 = vunpack.c.h.b16 %v5150
    %v7249 = vunpack.c.l.b16 %v5151
    %v7250 = vunpack.c.h.b16 %v5151
    %v7251 = vunpack.c.l.b16 %v5152
    %v7252 = vunpack.c.h.b16 %v5152
    %v7253 = vunpack.c.l.b16 %v5153
    %v7254 = vunpack.c.h.b16 %v5153
    %v7255 = vunpack.c.l.b16 %v5154
    %v7256 = vunpack.c.h.b16 %v5154
    %v7257 = vunpack.c.l.b16 %v5155
    %v7258 = vunpack.c.h.b16 %v5155
    %v7259 = vunpack.c.l.b16 %v5156
    %v7260 = vunpack.c.h.b16 %v5156
    %v7261 = vunpack.c.l.b16 %v5157
    %v7262 = vunpack.c.h.b16 %v5157
    %v7263 = vunpack.c.l.b16 %v5158
    %v7264 = vunpack.c.h.b16 %v5158
    %v7265 = vunpack.c.l.b16 %v5159
    %v7266 = vunpack.c.h.b16 %v5159
    %v7267 = vunpack.c.l.b16 %v5160
    %v7268 = vunpack.c.h.b16 %v5160
    %v7269 = vunpack.c.l.b16 %v5161
    %v7270 = vunpack.c.h.b16 %v5161
    %v7271 = vunpack.c.l.b16 %v5162
    %v7272 = vunpack.c.h.b16 %v5162
    %v7273 = vunpack.c.l.b16 %v5163
    %v7274 = vunpack.c.h.b16 %v5163
    %v7275 = vunpack.c.l.b16 %v5164
    %v7276 = vunpack.c.h.b16 %v5164
    %v7277 = vunpack.c.l.b16 %v5165
    %v7278 = vunpack.c.h.b16 %v5165
    %v7279 = vunpack.c.l.b16 %v5166
    %v7280 = vunpack.c.h.b16 %v5166
    %v7281 = vunpack.c.l.b16 %v5167
    %v7282 = vunpack.c.h.b16 %v5167
    %v7283 = vunpack.c.l.b16 %v5168
    %v7284 = vunpack.c.h.b16 %v5168
    %v7285 = vunpack.c.l.b16 %v5169
    %v7286 = vunpack.c.h.b16 %v5169
    %v7287 = vunpack.c.l.b16 %v5170
    %v7288 = vunpack.c.h.b16 %v5170
    %v7289 = vunpack.c.l.b16 %v5171
    %v7290 = vunpack.c.h.b16 %v5171
    %v7291 = vunpack.c.l.b16 %v5172
    %v7292 = vunpack.c.h.b16 %v5172
    %v7293 = vunpack.c.l.b16 %v5173
    %v7294 = vunpack.c.h.b16 %v5173
    %v7295 = vunpack.c.l.b16 %v5174
    %v7296 = vunpack.c.h.b16 %v5174
    %v7297 = vunpack.c.l.b16 %v5175
    %v7298 = vunpack.c.h.b16 %v5175
    %v7299 = vunpack.c.l.b16 %v5176
    %v7300 = vunpack.c.h.b16 %v5176
    %v7301 = vunpack.c.l.b16 %v5177
    %v7302 = vunpack.c.h.b16 %v5177
    %v7303 = vunpack.c.l.b16 %v5178
    %v7304 = vunpack.c.h.b16 %v5178
    %v7305 = vunpack.c.l.b16 %v5179
    %v7306 = vunpack.c.h.b16 %v5179
    %v7307 = vunpack.c.l.b16 %v5180
    %v7308 = vunpack.c.h.b16 %v5180
    %v7309 = vunpack.c.l.b16 %v5181
    %v7310 = vunpack.c.h.b16 %v5181
    %v7311 = vunpack.c.l.b16 %v5182
    %v7312 = vunpack.c.h.b16 %v5182
    %v7313 = vunpack.c.l.b16 %v5183
    %v7314 = vunpack.c.h.b16 %v5183
    %v7315 = vunpack.c.l.b16 %v5184
    %v7316 = vunpack.c.h.b16 %v5184
    %v7317 = vunpack.c.l.b16 %v5185
    %v7318 = vunpack.c.h.b16 %v5185
    %v7319 = vunpack.c.l.b16 %v5186
    %v7320 = vunpack.c.h.b16 %v5186
    %v7321 = vunpack.c.l.b16 %v5187
    %v7322 = vunpack.c.h.b16 %v5187
    %v7323 = vunpack.c.l.b16 %v5188
    %v7324 = vunpack.c.h.b16 %v5188
    %v7325 = vunpack.c.l.b16 %v5189
    %v7326 = vunpack.c.h.b16 %v5189
    %v7327 = vunpack.c.l.b16 %v5190
    %v7328 = vunpack.c.h.b16 %v5190
    %v7329 = vunpack.c.l.b16 %v5191
    %v7330 = vunpack.c.h.b16 %v5191
    %v7331 = vunpack.c.l.b16 %v5192
    %v7332 = vunpack.c.h.b16 %v5192
    %v7333 = vunpack.c.l.b16 %v5193
    %v7334 = vunpack.c.h.b16 %v5193
    %v7335 = vunpack.c.l.b16 %v5194
    %v7336 = vunpack.c.h.b16 %v5194
    %v7337 = vunpack.c.l.b16 %v5195
    %v7338 = vunpack.c.h.b16 %v5195
    %v7339 = vunpack.c.l.b16 %v5196
    %v7340 = vunpack.c.h.b16 %v5196
    %v7341 = vunpack.c.l.b16 %v5197
    %v7342 = vunpack.c.h.b16 %v5197
    %v7343 = vunpack.c.l.b16 %v5198
    %v7344 = vunpack.c.h.b16 %v5198
    %v7345 = vunpack.c.l.b16 %v5199
    %v7346 = vunpack.c.h.b16 %v5199
    %v7347 = vunpack.c.l.b16 %v5200
    %v7348 = vunpack.c.h.b16 %v5200
    %v7349 = vunpack.c.l.b16 %v5201
    %v7350 = vunpack.c.h.b16 %v5201
    %v7351 = vunpack.c.l.b16 %v5202
    %v7352 = vunpack.c.h.b16 %v5202
    %v7353 = vunpack.c.l.b16 %v5203
    %v7354 = vunpack.c.h.b16 %v5203
    %v7355 = vunpack.c.l.b16 %v5204
    %v7356 = vunpack.c.h.b16 %v5204
    %v7357 = vunpack.c.l.b16 %v5205
    %v7358 = vunpack.c.h.b16 %v5205
    %v7359 = vunpack.c.l.b16 %v5206
    %v7360 = vunpack.c.h.b16 %v5206
    %v7361 = vunpack.c.l.b16 %v5207
    %v7362 = vunpack.c.h.b16 %v5207
    %v7363 = vunpack.c.l.b16 %v5208
    %v7364 = vunpack.c.h.b16 %v5208
    %v7365 = vunpack.c.l.b16 %v5209
    %v7366 = vunpack.c.h.b16 %v5209
    %v7367 = vunpack.c.l.b16 %v5210
    %v7368 = vunpack.c.h.b16 %v5210
    %v7369 = vunpack.c.l.b16 %v5211
    %v7370 = vunpack.c.h.b16 %v5211
    %v7371 = vunpack.c.l.b16 %v5212
    %v7372 = vunpack.c.h.b16 %v5212
    %v7373 = vunpack.c.l.b16 %v5213
    %v7374 = vunpack.c.h.b16 %v5213
    %v7375 = vunpack.c.l.b16 %v5214
    %v7376 = vunpack.c.h.b16 %v5214
    %v7377 = vunpack.c.l.b16 %v5215
    %v7378 = vunpack.c.h.b16 %v5215
    %v7379 = vunpack.c.l.b16 %v5216
    %v7380 = vunpack.c.h.b16 %v5216
    %v7381 = vunpack.c.l.b16 %v5217
    %v7382 = vunpack.c.h.b16 %v5217
    %v7383 = vunpack.c.l.b16 %v5218
    %v7384 = vunpack.c.h.b16 %v5218
    %v7385 = vunpack.c.l.b16 %v5219
    %v7386 = vunpack.c.h.b16 %v5219
    %v7387 = vunpack.c.l.b16 %v5220
    %v7388 = vunpack.c.h.b16 %v5220
    %v7389 = vunpack.c.l.b16 %v5221
    %v7390 = vunpack.c.h.b16 %v5221
    %v7391 = vunpack.c.l.b16 %v5222
    %v7392 = vunpack.c.h.b16 %v5222
    %v7393 = vunpack.c.l.b16 %v5223
    %v7394 = vunpack.c.h.b16 %v5223
    %v7395 = vunpack.c.l.b16 %v5224
    %v7396 = vunpack.c.h.b16 %v5224
    %v7397 = vunpack.c.l.b16 %v5225
    %v7398 = vunpack.c.h.b16 %v5225
    %v7399 = vunpack.c.l.b16 %v5226
    %v7400 = vunpack.c.h.b16 %v5226
    %v7401 = vunpack.c.l.b16 %v5227
    %v7402 = vunpack.c.h.b16 %v5227
    %v7403 = vunpack.c.l.b16 %v5228
    %v7404 = vunpack.c.h.b16 %v5228
    %v7405 = vunpack.c.l.b16 %v5229
    %v7406 = vunpack.c.h.b16 %v5229
    %v7407 = vunpack.c.l.b16 %v5230
    %v7408 = vunpack.c.h.b16 %v5230
    %v7409 = vunpack.c.l.b16 %v5231
    %v7410 = vunpack.c.h.b16 %v5231
    %v7411 = vunpack.c.l.b16 %v5232
    %v7412 = vunpack.c.h.b16 %v5232
    %v7413 = vunpack.c.l.b16 %v5233
    %v7414 = vunpack.c.h.b16 %v5233
    %v7415 = vunpack.c.l.b16 %v5234
    %v7416 = vunpack.c.h.b16 %v5234
    %v7417 = vunpack.c.l.b16 %v5235
    %v7418 = vunpack.c.h.b16 %v5235
    %v7419 = vunpack.c.l.b16 %v5236
    %v7420 = vunpack.c.h.b16 %v5236
    %v7421 = vunpack.c.l.b16 %v5237
    %v7422 = vunpack.c.h.b16 %v5237
    %v7423 = vunpack.c.l.b16 %v5238
    %v7424 = vunpack.c.h.b16 %v5238
    %v7425 = vunpack.c.l.b16 %v5239
    %v7426 = vunpack.c.h.b16 %v5239
    %v7427 = vunpack.c.l.b16 %v5240
    %v7428 = vunpack.c.h.b16 %v5240
    %v7429 = vunpack.c.l.b16 %v5241
    %v7430 = vunpack.c.h.b16 %v5241
    %v7431 = vunpack.c.l.b16 %v5242
    %v7432 = vunpack.c.h.b16 %v5242
    %v7433 = vunpack.c.l.b16 %v5243
    %v7434 = vunpack.c.h.b16 %v5243
    %v7435 = vunpack.c.l.b16 %v5244
    %v7436 = vunpack.c.h.b16 %v5244
    %v7437 = vunpack.c.l.b16 %v5245
    %v7438 = vunpack.c.h.b16 %v5245
    %v7439 = vunpack.c.l.b16 %v5246
    %v7440 = vunpack.c.h.b16 %v5246
    %v7441 = vunpack.c.l.b16 %v5247
    %v7442 = vunpack.c.h.b16 %v5247
    %v7443 = vunpack.c.l.b16 %v5248
    %v7444 = vunpack.c.h.b16 %v5248
    %v7445 = vunpack.c.l.b16 %v5249
    %v7446 = vunpack.c.h.b16 %v5249
    %v7447 = vunpack.c.l.b16 %v5250
    %v7448 = vunpack.c.h.b16 %v5250
    %v7449 = vunpack.c.l.b16 %v5251
    %v7450 = vunpack.c.h.b16 %v5251
    %v7451 = vunpack.c.l.b16 %v5252
    %v7452 = vunpack.c.h.b16 %v5252
    %v7453 = vunpack.c.l.b16 %v5253
    %v7454 = vunpack.c.h.b16 %v5253
    %v7455 = vunpack.c.l.b16 %v5254
    %v7456 = vunpack.c.h.b16 %v5254
    %v7457 = vunpack.c.l.b16 %v5255
    %v7458 = vunpack.c.h.b16 %v5255
    %v7459 = vunpack.c.l.b16 %v5256
    %v7460 = vunpack.c.h.b16 %v5256
    %v7461 = vunpack.c.l.b16 %v5257
    %v7462 = vunpack.c.h.b16 %v5257
    %v7463 = vunpack.c.l.b16 %v5258
    %v7464 = vunpack.c.h.b16 %v5258
    %v7465 = vunpack.c.l.b16 %v5259
    %v7466 = vunpack.c.h.b16 %v5259
    %v7467 = vunpack.c.l.b16 %v5260
    %v7468 = vunpack.c.h.b16 %v5260
    %v7469 = vunpack.c.l.b16 %v5261
    %v7470 = vunpack.c.h.b16 %v5261
    %v7471 = vunpack.c.l.b16 %v5262
    %v7472 = vunpack.c.h.b16 %v5262
    %v7473 = vunpack.c.l.b16 %v5263
    %v7474 = vunpack.c.h.b16 %v5263
    %v7475 = vunpack.c.l.b16 %v5264
    %v7476 = vunpack.c.h.b16 %v5264
    %v7477 = vunpack.c.l.b16 %v5265
    %v7478 = vunpack.c.h.b16 %v5265
    %v7479 = vunpack.c.l.b16 %v5266
    %v7480 = vunpack.c.h.b16 %v5266
    %v7481 = vunpack.c.l.b16 %v5267
    %v7482 = vunpack.c.h.b16 %v5267
    %v7483 = vunpack.c.l.b16 %v5268
    %v7484 = vunpack.c.h.b16 %v5268
    %v7485 = vunpack.c.l.b16 %v5269
    %v7486 = vunpack.c.h.b16 %v5269
    %v7487 = vunpack.c.l.b16 %v5270
    %v7488 = vunpack.c.h.b16 %v5270
    %v7489 = vunpack.c.l.b16 %v5271
    %v7490 = vunpack.c.h.b16 %v5271
    %v7491 = vunpack.c.l.b16 %v5272
    %v7492 = vunpack.c.h.b16 %v5272
    %v7493 = vunpack.c.l.b16 %v5273
    %v7494 = vunpack.c.h.b16 %v5273
    %v7495 = vunpack.c.l.b16 %v5274
    %v7496 = vunpack.c.h.b16 %v5274
    %v7497 = vunpack.c.l.b16 %v5275
    %v7498 = vunpack.c.h.b16 %v5275
    %v7499 = vunpack.c.l.b16 %v5276
    %v7500 = vunpack.c.h.b16 %v5276
    %v7501 = vunpack.c.l.b16 %v5277
    %v7502 = vunpack.c.h.b16 %v5277
    %v7503 = vunpack.c.l.b16 %v5278
    %v7504 = vunpack.c.h.b16 %v5278
    %v7505 = vunpack.c.l.b16 %v5279
    %v7506 = vunpack.c.h.b16 %v5279
    %v7507 = vunpack.c.l.b16 %v5280
    %v7508 = vunpack.c.h.b16 %v5280
    %v7509 = vunpack.c.l.b16 %v5281
    %v7510 = vunpack.c.h.b16 %v5281
    %v7511 = vunpack.c.l.b16 %v5282
    %v7512 = vunpack.c.h.b16 %v5282
    %v7513 = vunpack.c.l.b16 %v5283
    %v7514 = vunpack.c.h.b16 %v5283
    %v7515 = vunpack.c.l.b16 %v5284
    %v7516 = vunpack.c.h.b16 %v5284
    %v7517 = vunpack.c.l.b16 %v5285
    %v7518 = vunpack.c.h.b16 %v5285
    %v7519 = vunpack.c.l.b16 %v5286
    %v7520 = vunpack.c.h.b16 %v5286
    %v7521 = vunpack.c.l.b16 %v5287
    %v7522 = vunpack.c.h.b16 %v5287
    %v7523 = vunpack.c.l.b16 %v5288
    %v7524 = vunpack.c.h.b16 %v5288
    %v7525 = vunpack.c.l.b16 %v5289
    %v7526 = vunpack.c.h.b16 %v5289
    %v7527 = vunpack.c.l.b16 %v5290
    %v7528 = vunpack.c.h.b16 %v5290
    %v7529 = vunpack.c.l.b16 %v5291
    %v7530 = vunpack.c.h.b16 %v5291
    %v7531 = vunpack.c.l.b16 %v5292
    %v7532 = vunpack.c.h.b16 %v5292
    %v7533 = vunpack.c.l.b16 %v5293
    %v7534 = vunpack.c.h.b16 %v5293
    %v7535 = vunpack.c.l.b16 %v5294
    %v7536 = vunpack.c.h.b16 %v5294
    %v7537 = vunpack.c.l.b16 %v5295
    %v7538 = vunpack.c.h.b16 %v5295
    %v7539 = vunpack.c.l.b16 %v5296
    %v7540 = vunpack.c.h.b16 %v5296
    %v7541 = vunpack.c.l.b16 %v5297
    %v7542 = vunpack.c.h.b16 %v5297
    %v7543 = vunpack.c.l.b16 %v5298
    %v7544 = vunpack.c.h.b16 %v5298
    %v7545 = vunpack.c.l.b16 %v5299
    %v7546 = vunpack.c.h.b16 %v5299
    %v7547 = vunpack.c.l.b16 %v5300
    %v7548 = vunpack.c.h.b16 %v5300
    %v7549 = vunpack.c.l.b16 %v5301
    %v7550 = vunpack.c.h.b16 %v5301
    %v7551 = vunpack.c.l.b16 %v5302
    %v7552 = vunpack.c.h.b16 %v5302
    %v7553 = vunpack.c.l.b16 %v5303
    %v7554 = vunpack.c.h.b16 %v5303
    %v7555 = vunpack.c.l.b16 %v5304
    %v7556 = vunpack.c.h.b16 %v5304
    %v7557 = vunpack.c.l.b16 %v5305
    %v7558 = vunpack.c.h.b16 %v5305
    %v7559 = vunpack.c.l.b16 %v5306
    %v7560 = vunpack.c.h.b16 %v5306
    %v7561 = vunpack.c.l.b16 %v5307
    %v7562 = vunpack.c.h.b16 %v5307
    %v7563 = vunpack.c.l.b16 %v5308
    %v7564 = vunpack.c.h.b16 %v5308
    %v7565 = vunpack.c.l.b16 %v5309
    %v7566 = vunpack.c.h.b16 %v5309
    %v7567 = vunpack.c.l.b16 %v5310
    %v7568 = vunpack.c.h.b16 %v5310
    %v7569 = vunpack.c.l.b16 %v5311
    %v7570 = vunpack.c.h.b16 %v5311
    %v7571 = vunpack.c.l.b16 %v5312
    %v7572 = vunpack.c.h.b16 %v5312
    %v7573 = vunpack.c.l.b16 %v5313
    %v7574 = vunpack.c.h.b16 %v5313
    %v7575 = vunpack.c.l.b16 %v5314
    %v7576 = vunpack.c.h.b16 %v5314
    %v7577 = vunpack.c.l.b16 %v5315
    %v7578 = vunpack.c.h.b16 %v5315
    %v7579 = vunpack.c.l.b16 %v5316
    %v7580 = vunpack.c.h.b16 %v5316
    %v7581 = vunpack.c.l.b16 %v5317
    %v7582 = vunpack.c.h.b16 %v5317
    %v7583 = vunpack.c.l.b16 %v5318
    %v7584 = vunpack.c.h.b16 %v5318
    %v7585 = vunpack.c.l.b16 %v5319
    %v7586 = vunpack.c.h.b16 %v5319
    %v7587 = vunpack.c.l.b16 %v5320
    %v7588 = vunpack.c.h.b16 %v5320
    %v7589 = vunpack.c.l.b16 %v5321
    %v7590 = vunpack.c.h.b16 %v5321
    %v7591 = vunpack.c.l.b16 %v5322
    %v7592 = vunpack.c.h.b16 %v5322
    %v7593 = vunpack.c.l.b16 %v5323
    %v7594 = vunpack.c.h.b16 %v5323
    %v7595 = vunpack.c.l.b16 %v5324
    %v7596 = vunpack.c.h.b16 %v5324
    %v7597 = vunpack.c.l.b16 %v5325
    %v7598 = vunpack.c.h.b16 %v5325
    %v7599 = vunpack.c.l.b16 %v5326
    %v7600 = vunpack.c.h.b16 %v5326
    %v7601 = vunpack.c.l.b16 %v5327
    %v7602 = vunpack.c.h.b16 %v5327
    %v7603 = vunpack.c.l.b16 %v5328
    %v7604 = vunpack.c.h.b16 %v5328
    %v7605 = vunpack.c.l.b16 %v5329
    %v7606 = vunpack.c.h.b16 %v5329
    %v7607 = vunpack.c.l.b16 %v5330
    %v7608 = vunpack.c.h.b16 %v5330
    %v7609 = vunpack.c.l.b16 %v5331
    %v7610 = vunpack.c.h.b16 %v5331
    %v7611 = vunpack.c.l.b16 %v5332
    %v7612 = vunpack.c.h.b16 %v5332
    %v7613 = vunpack.c.l.b16 %v5333
    %v7614 = vunpack.c.h.b16 %v5333
    %v7615 = vunpack.c.l.b16 %v5334
    %v7616 = vunpack.c.h.b16 %v5334
    %v7617 = vunpack.c.l.b16 %v5335
    %v7618 = vunpack.c.h.b16 %v5335
    %v7619 = vunpack.c.l.b16 %v5336
    %v7620 = vunpack.c.h.b16 %v5336
    %v7621 = vunpack.c.l.b16 %v5337
    %v7622 = vunpack.c.h.b16 %v5337
    %v7623 = vunpack.c.l.b16 %v5338
    %v7624 = vunpack.c.h.b16 %v5338
    %v7625 = vunpack.c.l.b16 %v5339
    %v7626 = vunpack.c.h.b16 %v5339
    %v7627 = vunpack.c.l.b16 %v5340
    %v7628 = vunpack.c.h.b16 %v5340
    %v7629 = vunpack.c.l.b16 %v5341
    %v7630 = vunpack.c.h.b16 %v5341
    %v7631 = vunpack.c.l.b16 %v5342
    %v7632 = vunpack.c.h.b16 %v5342
    %v7633 = vunpack.c.l.b16 %v5343
    %v7634 = vunpack.c.h.b16 %v5343
    %v7635 = vunpack.c.l.b16 %v5344
    %v7636 = vunpack.c.h.b16 %v5344
    %v7637 = vunpack.c.l.b16 %v5345
    %v7638 = vunpack.c.h.b16 %v5345
    %v7639 = vunpack.c.l.b16 %v5346
    %v7640 = vunpack.c.h.b16 %v5346
    %v7641 = vunpack.c.l.b16 %v5347
    %v7642 = vunpack.c.h.b16 %v5347
    %v7643 = vunpack.c.l.b16 %v5348
    %v7644 = vunpack.c.h.b16 %v5348
    %v7645 = vunpack.c.l.b16 %v5349
    %v7646 = vunpack.c.h.b16 %v5349
    %v7647 = vunpack.c.l.b16 %v5350
    %v7648 = vunpack.c.h.b16 %v5350
    %v7649 = vunpack.c.l.b16 %v5351
    %v7650 = vunpack.c.h.b16 %v5351
    %v7651 = vunpack.c.l.b16 %v5352
    %v7652 = vunpack.c.h.b16 %v5352
    %v7653 = vunpack.c.l.b16 %v5353
    %v7654 = vunpack.c.h.b16 %v5353
    %v7655 = vunpack.c.l.b16 %v5354
    %v7656 = vunpack.c.h.b16 %v5354
    %v7657 = vunpack.c.l.b16 %v5355
    %v7658 = vunpack.c.h.b16 %v5355
    %v7659 = vunpack.c.l.b16 %v5356
    %v7660 = vunpack.c.h.b16 %v5356
    %v7661 = vunpack.c.l.b16 %v5357
    %v7662 = vunpack.c.h.b16 %v5357
    %v7663 = vunpack.c.l.b16 %v5358
    %v7664 = vunpack.c.h.b16 %v5358
    %v7665 = vunpack.c.l.b16 %v5359
    %v7666 = vunpack.c.h.b16 %v5359
    %v7667 = vunpack.c.l.b16 %v5360
    %v7668 = vunpack.c.h.b16 %v5360
    %v7669 = vunpack.c.l.b16 %v5361
    %v7670 = vunpack.c.h.b16 %v5361
    %v7671 = vunpack.c.l.b16 %v5362
    %v7672 = vunpack.c.h.b16 %v5362
    %v7673 = vunpack.c.l.b16 %v5363
    %v7674 = vunpack.c.h.b16 %v5363
    %v7675 = vunpack.c.l.b16 %v5364
    %v7676 = vunpack.c.h.b16 %v5364
    %v7677 = vunpack.c.l.b16 %v5365
    %v7678 = vunpack.c.h.b16 %v5365
    %v7679 = vunpack.c.l.b16 %v5366
    %v7680 = vunpack.c.h.b16 %v5366
    %v7681 = vunpack.c.l.b16 %v5367
    %v7682 = vunpack.c.h.b16 %v5367
    %v7683 = vunpack.c.l.b16 %v5368
    %v7684 = vunpack.c.h.b16 %v5368
    %v7685 = vunpack.c.l.b16 %v5369
    %v7686 = vunpack.c.h.b16 %v5369
    %v7687 = vunpack.c.l.b16 %v5370
    %v7688 = vunpack.c.h.b16 %v5370
    %v7689 = vunpack.c.l.b16 %v5371
    %v7690 = vunpack.c.h.b16 %v5371
    %v7691 = vunpack.c.l.b16 %v5372
    %v7692 = vunpack.c.h.b16 %v5372
    %v7693 = vunpack.c.l.b16 %v5373
    %v7694 = vunpack.c.h.b16 %v5373
    %v7695 = vunpack.c.l.b16 %v5374
    %v7696 = vunpack.c.h.b16 %v5374
    %v7697 = vunpack.c.l.b16 %v5375
    %v7698 = vunpack.c.h.b16 %v5375
    %v7699 = vunpack.c.l.b16 %v5376
    %v7700 = vunpack.c.h.b16 %v5376
    %v7701 = vunpack.c.l.b16 %v5377
    %v7702 = vunpack.c.h.b16 %v5377
    %v7703 = vunpack.c.l.b16 %v5378
    %v7704 = vunpack.c.h.b16 %v5378
    %v7705 = vunpack.c.l.b16 %v5379
    %v7706 = vunpack.c.h.b16 %v5379
    %v7707 = vunpack.c.l.b16 %v5380
    %v7708 = vunpack.c.h.b16 %v5380
    %v7709 = vunpack.c.l.b16 %v5381
    %v7710 = vunpack.c.h.b16 %v5381
    %v7711 = vunpack.c.l.b16 %v5382
    %v7712 = vunpack.c.h.b16 %v5382
    %v7713 = vunpack.c.l.b16 %v5383
    %v7714 = vunpack.c.h.b16 %v5383
    %v7715 = vunpack.c.l.b16 %v5384
    %v7716 = vunpack.c.h.b16 %v5384
    %v7717 = vunpack.c.l.b16 %v5385
    %v7718 = vunpack.c.h.b16 %v5385
    %v7719 = vunpack.c.l.b16 %v5386
    %v7720 = vunpack.c.h.b16 %v5386
    %v7721 = vunpack.c.l.b16 %v5387
    %v7722 = vunpack.c.h.b16 %v5387
    %v7723 = vunpack.c.l.b16 %v5388
    %v7724 = vunpack.c.h.b16 %v5388
    %v7725 = vunpack.c.l.b16 %v5389
    %v7726 = vunpack.c.h.b16 %v5389
    %v7727 = vunpack.c.l.b16 %v5390
    %v7728 = vunpack.c.h.b16 %v5390
    %v7729 = vunpack.c.l.b16 %v5391
    %v7730 = vunpack.c.h.b16 %v5391
    %v7731 = vunpack.c.l.b16 %v5392
    %v7732 = vunpack.c.h.b16 %v5392
    %v7733 = vunpack.c.l.b16 %v5393
    %v7734 = vunpack.c.h.b16 %v5393
    %v7735 = vunpack.c.l.b16 %v5394
    %v7736 = vunpack.c.h.b16 %v5394
    %v7737 = vunpack.c.l.b16 %v5395
    %v7738 = vunpack.c.h.b16 %v5395
    %v7739 = vunpack.c.l.b16 %v5396
    %v7740 = vunpack.c.h.b16 %v5396
    %v7741 = vunpack.c.l.b16 %v5397
    %v7742 = vunpack.c.h.b16 %v5397
    %v7743 = vunpack.c.l.b16 %v5398
    %v7744 = vunpack.c.h.b16 %v5398
    %v7745 = vunpack.c.l.b16 %v5399
    %v7746 = vunpack.c.h.b16 %v5399
    %v7747 = vunpack.c.l.b16 %v5400
    %v7748 = vunpack.c.h.b16 %v5400
    %v7749 = vunpack.c.l.b16 %v5401
    %v7750 = vunpack.c.h.b16 %v5401
    %v7751 = vunpack.c.l.b16 %v5402
    %v7752 = vunpack.c.h.b16 %v5402
    %v7753 = vunpack.c.l.b16 %v5403
    %v7754 = vunpack.c.h.b16 %v5403
    %v7755 = vunpack.c.l.b16 %v5404
    %v7756 = vunpack.c.h.b16 %v5404
    %v7757 = vunpack.c.l.b16 %v5405
    %v7758 = vunpack.c.h.b16 %v5405
    %v7759 = vunpack.c.l.b16 %v5406
    %v7760 = vunpack.c.h.b16 %v5406
    %v7761 = vunpack.c.l.b16 %v5407
    %v7762 = vunpack.c.h.b16 %v5407
    %v7763 = vunpack.c.l.b16 %v5408
    %v7764 = vunpack.c.h.b16 %v5408
    %v7765 = vunpack.c.l.b16 %v5409
    %v7766 = vunpack.c.h.b16 %v5409
    %v7767 = vunpack.c.l.b16 %v5410
    %v7768 = vunpack.c.h.b16 %v5410
    %v7769 = vunpack.c.l.b16 %v5411
    %v7770 = vunpack.c.h.b16 %v5411
    %v7771 = vunpack.c.l.b16 %v5412
    %v7772 = vunpack.c.h.b16 %v5412
    %v7773 = vunpack.c.l.b16 %v5413
    %v7774 = vunpack.c.h.b16 %v5413
    %v7775 = vunpack.c.l.b16 %v5414
    %v7776 = vunpack.c.h.b16 %v5414
    %v7777 = vunpack.c.l.b16 %v5415
    %v7778 = vunpack.c.h.b16 %v5415
    %v7779 = vunpack.c.l.b16 %v5416
    %v7780 = vunpack.c.h.b16 %v5416
    %v7781 = vunpack.c.l.b16 %v5417
    %v7782 = vunpack.c.h.b16 %v5417
    %v7783 = vunpack.c.l.b16 %v5418
    %v7784 = vunpack.c.h.b16 %v5418
    %v7785 = vunpack.c.l.b16 %v5419
    %v7786 = vunpack.c.h.b16 %v5419
    %v7787 = vunpack.c.l.b16 %v5420
    %v7788 = vunpack.c.h.b16 %v5420
    %v7789 = vunpack.c.l.b16 %v5421
    %v7790 = vunpack.c.h.b16 %v5421
    %v7791 = vunpack.c.l.b16 %v5422
    %v7792 = vunpack.c.h.b16 %v5422
    %v7793 = vunpack.c.l.b16 %v5423
    %v7794 = vunpack.c.h.b16 %v5423
    %v7795 = vunpack.c.l.b16 %v5424
    %v7796 = vunpack.c.h.b16 %v5424
    %v7797 = vunpack.c.l.b16 %v5425
    %v7798 = vunpack.c.h.b16 %v5425
    %v7799 = vunpack.c.l.b16 %v5426
    %v7800 = vunpack.c.h.b16 %v5426
    %v7801 = vunpack.c.l.b16 %v5427
    %v7802 = vunpack.c.h.b16 %v5427
    %v7803 = vunpack.c.l.b16 %v5428
    %v7804 = vunpack.c.h.b16 %v5428
    %v7805 = vunpack.c.l.b16 %v5429
    %v7806 = vunpack.c.h.b16 %v5429
    %v7807 = vunpack.c.l.b16 %v5430
    %v7808 = vunpack.c.h.b16 %v5430
    %v7809 = vunpack.c.l.b16 %v5431
    %v7810 = vunpack.c.h.b16 %v5431
    %v7811 = vunpack.c.l.b16 %v5432
    %v7812 = vunpack.c.h.b16 %v5432
    %v7813 = vunpack.c.l.b16 %v5433
    %v7814 = vunpack.c.h.b16 %v5433
    %v7815 = vunpack.c.l.b16 %v5434
    %v7816 = vunpack.c.h.b16 %v5434
    %v7817 = vunpack.c.l.b16 %v5435
    %v7818 = vunpack.c.h.b16 %v5435
    %v7819 = vunpack.c.l.b16 %v5436
    %v7820 = vunpack.c.h.b16 %v5436
    %v7821 = vunpack.c.l.b16 %v5437
    %v7822 = vunpack.c.h.b16 %v5437
    %v7823 = vunpack.c.l.b16 %v5438
    %v7824 = vunpack.c.h.b16 %v5438
    %v7825 = vunpack.c.l.b16 %v5439
    %v7826 = vunpack.c.h.b16 %v5439
    %v7827 = vunpack.c.l.b16 %v5440
    %v7828 = vunpack.c.h.b16 %v5440
    %v7829 = vunpack.c.l.b16 %v5441
    %v7830 = vunpack.c.h.b16 %v5441
    %v7831 = vunpack.c.l.b16 %v5442
    %v7832 = vunpack.c.h.b16 %v5442
    %v7833 = vunpack.c.l.b16 %v5443
    %v7834 = vunpack.c.h.b16 %v5443
    %v7835 = vunpack.c.l.b16 %v5444
    %v7836 = vunpack.c.h.b16 %v5444
    %v7837 = vunpack.c.l.b16 %v5445
    %v7838 = vunpack.c.h.b16 %v5445
    %v7839 = vunpack.c.l.b16 %v5446
    %v7840 = vunpack.c.h.b16 %v5446
    %v7841 = vunpack.c.l.b16 %v5447
    %v7842 = vunpack.c.h.b16 %v5447
    %v7843 = vunpack.c.l.b16 %v5448
    %v7844 = vunpack.c.h.b16 %v5448
    %v7845 = vunpack.c.l.b16 %v5449
    %v7846 = vunpack.c.h.b16 %v5449
    %v7847 = vunpack.c.l.b16 %v5450
    %v7848 = vunpack.c.h.b16 %v5450
    %v7849 = vunpack.c.l.b16 %v5451
    %v7850 = vunpack.c.h.b16 %v5451
    %v7851 = vunpack.c.l.b16 %v5452
    %v7852 = vunpack.c.h.b16 %v5452
    %v7853 = vunpack.c.l.b16 %v5453
    %v7854 = vunpack.c.h.b16 %v5453
    %v7855 = vunpack.c.l.b16 %v5454
    %v7856 = vunpack.c.h.b16 %v5454
    %v7857 = vunpack.c.l.b16 %v5455
    %v7858 = vunpack.c.h.b16 %v5455
    %v7859 = vunpack.c.l.b16 %v5456
    %v7860 = vunpack.c.h.b16 %v5456
    %v7861 = vunpack.c.l.b16 %v5457
    %v7862 = vunpack.c.h.b16 %v5457
    %v7863 = vunpack.c.l.b16 %v5458
    %v7864 = vunpack.c.h.b16 %v5458
    %v7865 = vunpack.c.l.b16 %v5459
    %v7866 = vunpack.c.h.b16 %v5459
    %v7867 = vunpack.c.l.b16 %v5460
    %v7868 = vunpack.c.h.b16 %v5460
    %v7869 = vunpack.c.l.b16 %v5461
    %v7870 = vunpack.c.h.b16 %v5461
    %v7871 = vunpack.c.l.b16 %v5462
    %v7872 = vunpack.c.h.b16 %v5462
    %v7873 = vunpack.c.l.b16 %v5463
    %v7874 = vunpack.c.h.b16 %v5463
    %v7875 = vunpack.c.l.b16 %v5464
    %v7876 = vunpack.c.h.b16 %v5464
    %v7877 = vunpack.c.l.b16 %v5465
    %v7878 = vunpack.c.h.b16 %v5465
    %v7879 = vunpack.c.l.b16 %v5466
    %v7880 = vunpack.c.h.b16 %v5466
    %v7881 = vunpack.c.l.b16 %v5467
    %v7882 = vunpack.c.h.b16 %v5467
    %v7883 = vunpack.c.l.b16 %v5468
    %v7884 = vunpack.c.h.b16 %v5468
    %v7885 = vunpack.c.l.b16 %v5469
    %v7886 = vunpack.c.h.b16 %v5469
    %v7887 = vunpack.c.l.b16 %v5470
    %v7888 = vunpack.c.h.b16 %v5470
    %v7889 = vunpack.c.l.b16 %v5471
    %v7890 = vunpack.c.h.b16 %v5471
    %v7891 = vunpack.c.l.b16 %v5472
    %v7892 = vunpack.c.h.b16 %v5472
    %v7893 = vunpack.c.l.b16 %v5473
    %v7894 = vunpack.c.h.b16 %v5473
    %v7895 = vunpack.c.l.b16 %v5474
    %v7896 = vunpack.c.h.b16 %v5474
    %v7897 = vunpack.c.l.b16 %v5475
    %v7898 = vunpack.c.h.b16 %v5475
    %v7899 = vunpack.c.l.b16 %v5476
    %v7900 = vunpack.c.h.b16 %v5476
    %v7901 = vunpack.c.l.b16 %v5477
    %v7902 = vunpack.c.h.b16 %v5477
    %v7903 = vunpack.c.l.b16 %v5478
    %v7904 = vunpack.c.h.b16 %v5478
    %v7905 = vunpack.c.l.b16 %v5479
    %v7906 = vunpack.c.h.b16 %v5479
    %v7907 = vunpack.c.l.b16 %v5480
    %v7908 = vunpack.c.h.b16 %v5480
    %v7909 = vunpack.c.l.b16 %v5481
    %v7910 = vunpack.c.h.b16 %v5481
    %v7911 = vunpack.c.l.b16 %v5482
    %v7912 = vunpack.c.h.b16 %v5482
    %v7913 = vunpack.c.l.b16 %v5483
    %v7914 = vunpack.c.h.b16 %v5483
    %v7915 = vunpack.c.l.b16 %v5484
    %v7916 = vunpack.c.h.b16 %v5484
    %v7917 = vunpack.c.l.b16 %v5485
    %v7918 = vunpack.c.h.b16 %v5485
    %v7919 = vunpack.c.l.b16 %v5486
    %v7920 = vunpack.c.h.b16 %v5486
    %v7921 = vunpack.c.l.b16 %v5487
    %v7922 = vunpack.c.h.b16 %v5487
    %v7923 = vunpack.c.l.b16 %v5488
    %v7924 = vunpack.c.h.b16 %v5488
    %v7925 = vunpack.c.l.b16 %v5489
    %v7926 = vunpack.c.h.b16 %v5489
    %v7927 = vunpack.c.l.b16 %v5490
    %v7928 = vunpack.c.h.b16 %v5490
    %v7929 = vunpack.c.l.b16 %v5491
    %v7930 = vunpack.c.h.b16 %v5491
    %v7931 = vunpack.c.l.b16 %v5492
    %v7932 = vunpack.c.h.b16 %v5492
    %v7933 = vunpack.c.l.b16 %v5493
    %v7934 = vunpack.c.h.b16 %v5493
    %v7935 = vunpack.c.l.b16 %v5494
    %v7936 = vunpack.c.h.b16 %v5494
    %v7937 = vunpack.c.l.b16 %v5495
    %v7938 = vunpack.c.h.b16 %v5495
    %v7939 = vunpack.c.l.b16 %v5496
    %v7940 = vunpack.c.h.b16 %v5496
    %v7941 = vunpack.c.l.b16 %v5497
    %v7942 = vunpack.c.h.b16 %v5497
    %v7943 = vunpack.c.l.b16 %v5498
    %v7944 = vunpack.c.h.b16 %v5498
    %v7945 = vunpack.c.l.b16 %v5499
    %v7946 = vunpack.c.h.b16 %v5499
    %v7947 = vunpack.c.l.b16 %v5500
    %v7948 = vunpack.c.h.b16 %v5500
    %v7949 = vunpack.c.l.b16 %v5501
    %v7950 = vunpack.c.h.b16 %v5501
    %v7951 = vunpack.c.l.b16 %v5502
    %v7952 = vunpack.c.h.b16 %v5502
    %v7953 = vunpack.c.l.b16 %v5503
    %v7954 = vunpack.c.h.b16 %v5503
    %v7955 = vunpack.c.l.b16 %v5504
    %v7956 = vunpack.c.h.b16 %v5504
    %v7957 = vunpack.c.l.b16 %v5505
    %v7958 = vunpack.c.h.b16 %v5505
    %v7959 = vunpack.c.l.b16 %v5506
    %v7960 = vunpack.c.h.b16 %v5506
    %v7961 = vunpack.c.l.b16 %v5507
    %v7962 = vunpack.c.h.b16 %v5507
    %v7963 = vunpack.c.l.b16 %v5508
    %v7964 = vunpack.c.h.b16 %v5508
    %v7965 = vunpack.c.l.b16 %v5509
    %v7966 = vunpack.c.h.b16 %v5509
    %v7967 = vunpack.c.l.b16 %v5510
    %v7968 = vunpack.c.h.b16 %v5510
    %v7969 = vunpack.c.l.b16 %v5511
    %v7970 = vunpack.c.h.b16 %v5511
    %v7971 = vunpack.c.l.b16 %v5512
    %v7972 = vunpack.c.h.b16 %v5512
    %v7973 = vunpack.c.l.b16 %v5513
    %v7974 = vunpack.c.h.b16 %v5513
    %v7975 = vunpack.c.l.b16 %v5514
    %v7976 = vunpack.c.h.b16 %v5514
    %v7977 = vunpack.c.l.b16 %v5515
    %v7978 = vunpack.c.h.b16 %v5515
    %v7979 = vunpack.c.l.b16 %v5516
    %v7980 = vunpack.c.h.b16 %v5516
    %v7981 = vunpack.c.l.b16 %v5517
    %v7982 = vunpack.c.h.b16 %v5517
    %v7983 = vunpack.c.l.b16 %v5518
    %v7984 = vunpack.c.h.b16 %v5518
    %v7985 = vunpack.c.l.b16 %v5519
    %v7986 = vunpack.c.h.b16 %v5519
    %v7987 = vunpack.c.l.b16 %v5520
    %v7988 = vunpack.c.h.b16 %v5520
    %v7989 = vunpack.c.l.b16 %v5521
    %v7990 = vunpack.c.h.b16 %v5521
    %v7991 = vunpack.c.l.b16 %v5522
    %v7992 = vunpack.c.h.b16 %v5522
    %v7993 = vunpack.c.l.b16 %v5523
    %v7994 = vunpack.c.h.b16 %v5523
    %v7995 = vunpack.c.l.b16 %v5524
    %v7996 = vunpack.c.h.b16 %v5524
    %v7997 = vunpack.c.l.b16 %v5525
    %v7998 = vunpack.c.h.b16 %v5525
    %v7999 = vunpack.c.l.b16 %v5526
    %v8000 = vunpack.c.h.b16 %v5526
    %v8001 = vunpack.c.l.b16 %v5527
    %v8002 = vunpack.c.h.b16 %v5527
    %v8003 = vunpack.c.l.b16 %v5528
    %v8004 = vunpack.c.h.b16 %v5528
    %v8005 = vunpack.c.l.b16 %v5529
    %v8006 = vunpack.c.h.b16 %v5529
    %v8007 = vunpack.c.l.b16 %v5530
    %v8008 = vunpack.c.h.b16 %v5530
    %v8009 = vunpack.c.l.b16 %v5531
    %v8010 = vunpack.c.h.b16 %v5531
    %v8011 = vunpack.c.l.b16 %v5532
    %v8012 = vunpack.c.h.b16 %v5532
    %v8013 = vunpack.c.l.b16 %v5533
    %v8014 = vunpack.c.h.b16 %v5533
    %v8015 = vunpack.c.l.b16 %v5534
    %v8016 = vunpack.c.h.b16 %v5534
    %v8017 = vunpack.c.l.b16 %v5535
    %v8018 = vunpack.c.h.b16 %v5535
    %v8019 = vunpack.c.l.b16 %v5536
    %v8020 = vunpack.c.h.b16 %v5536
    %v8021 = vunpack.c.l.b16 %v5537
    %v8022 = vunpack.c.h.b16 %v5537
    %v8023 = vunpack.c.l.b16 %v5538
    %v8024 = vunpack.c.h.b16 %v5538
    %v8025 = vunpack.c.l.b16 %v5539
    %v8026 = vunpack.c.h.b16 %v5539
    %v8027 = vunpack.c.l.b16 %v5540
    %v8028 = vunpack.c.h.b16 %v5540
    %v8029 = vunpack.c.l.b16 %v5541
    %v8030 = vunpack.c.h.b16 %v5541
    %v8031 = vunpack.c.l.b16 %v5542
    %v8032 = vunpack.c.h.b16 %v5542
    %v8033 = vunpack.c.l.b16 %v5543
    %v8034 = vunpack.c.h.b16 %v5543
    %v8035 = vunpack.c.l.b16 %v5544
    %v8036 = vunpack.c.h.b16 %v5544
    %v8037 = vunpack.c.l.b16 %v5545
    %v8038 = vunpack.c.h.b16 %v5545
    %v8039 = vunpack.c.l.b16 %v5546
    %v8040 = vunpack.c.h.b16 %v5546
    %v8041 = vunpack.c.l.b16 %v5547
    %v8042 = vunpack.c.h.b16 %v5547
    %v8043 = vunpack.c.l.b16 %v5548
    %v8044 = vunpack.c.h.b16 %v5548
    %v8045 = vunpack.c.l.b16 %v5549
    %v8046 = vunpack.c.h.b16 %v5549
    %v8047 = vunpack.c.l.b16 %v5550
    %v8048 = vunpack.c.h.b16 %v5550
    %v8049 = vunpack.c.l.b16 %v5551
    %v8050 = vunpack.c.h.b16 %v5551
    %v8051 = vunpack.c.l.b16 %v5552
    %v8052 = vunpack.c.h.b16 %v5552
    %v8053 = vunpack.c.l.b16 %v5553
    %v8054 = vunpack.c.h.b16 %v5553
    %v8055 = vunpack.c.l.b16 %v5554
    %v8056 = vunpack.c.h.b16 %v5554
    %v8057 = vunpack.c.l.b16 %v5555
    %v8058 = vunpack.c.h.b16 %v5555
    %v8059 = vunpack.c.l.b16 %v5556
    %v8060 = vunpack.c.h.b16 %v5556
    %v8061 = vunpack.c.l.b16 %v5557
    %v8062 = vunpack.c.h.b16 %v5557
    %v8063 = vunpack.c.l.b16 %v5558
    %v8064 = vunpack.c.h.b16 %v5558
    %v8065 = vunpack.c.l.b16 %v5559
    %v8066 = vunpack.c.h.b16 %v5559
    %v8067 = vunpack.c.l.b16 %v5560
    %v8068 = vunpack.c.h.b16 %v5560
    %v8069 = vunpack.c.l.b16 %v5561
    %v8070 = vunpack.c.h.b16 %v5561
    %v8071 = vunpack.c.l.b16 %v5562
    %v8072 = vunpack.c.h.b16 %v5562
    %v8073 = vunpack.c.l.b16 %v5563
    %v8074 = vunpack.c.h.b16 %v5563
    %v8075 = vunpack.c.l.b16 %v5564
    %v8076 = vunpack.c.h.b16 %v5564
    %v8077 = vunpack.c.l.b16 %v5565
    %v8078 = vunpack.c.h.b16 %v5565
    %v8079 = vunpack.c.l.b16 %v5566
    %v8080 = vunpack.c.h.b16 %v5566
    %v8081 = vunpack.c.l.b16 %v5567
    %v8082 = vunpack.c.h.b16 %v5567
    %v8083 = vunpack.c.l.b16 %v5568
    %v8084 = vunpack.c.h.b16 %v5568
    %v8085 = vunpack.c.l.b16 %v5569
    %v8086 = vunpack.c.h.b16 %v5569
    %v8087 = vunpack.c.l.b16 %v5570
    %v8088 = vunpack.c.h.b16 %v5570
    %v8089 = vunpack.c.l.b16 %v5571
    %v8090 = vunpack.c.h.b16 %v5571
    %v8091 = vunpack.c.l.b16 %v5572
    %v8092 = vunpack.c.h.b16 %v5572
    %v8093 = vunpack.c.l.b16 %v5573
    %v8094 = vunpack.c.h.b16 %v5573
    %v8095 = vunpack.c.l.b16 %v5574
    %v8096 = vunpack.c.h.b16 %v5574
    %v8097 = vunpack.c.l.b16 %v5575
    %v8098 = vunpack.c.h.b16 %v5575
    %v8099 = vunpack.c.l.b16 %v5576
    %v8100 = vunpack.c.h.b16 %v5576
    %v8101 = vunpack.c.l.b16 %v5577
    %v8102 = vunpack.c.h.b16 %v5577
    %v8103 = vunpack.c.l.b16 %v5578
    %v8104 = vunpack.c.h.b16 %v5578
    %v8105 = vunpack.c.l.b16 %v5579
    %v8106 = vunpack.c.h.b16 %v5579
    %v8107 = vunpack.c.l.b16 %v5580
    %v8108 = vunpack.c.h.b16 %v5580
    %v8109 = vunpack.c.l.b16 %v5581
    %v8110 = vunpack.c.h.b16 %v5581
    %v8111 = vunpack.c.l.b16 %v5582
    %v8112 = vunpack.c.h.b16 %v5582
    %v8113 = vunpack.c.l.b16 %v5583
    %v8114 = vunpack.c.h.b16 %v5583
    %v8115 = vunpack.c.l.b16 %v5584
    %v8116 = vunpack.c.h.b16 %v5584
    %v8117 = vunpack.c.l.b16 %v5585
    %v8118 = vunpack.c.h.b16 %v5585
    %v8119 = vunpack.c.l.b16 %v5586
    %v8120 = vunpack.c.h.b16 %v5586
    %v8121 = vunpack.c.l.b16 %v5587
    %v8122 = vunpack.c.h.b16 %v5587
    %v8123 = vunpack.c.l.b16 %v5588
    %v8124 = vunpack.c.h.b16 %v5588
    %v8125 = vunpack.c.l.b16 %v5589
    %v8126 = vunpack.c.h.b16 %v5589
    %v8127 = vunpack.c.l.b16 %v5590
    %v8128 = vunpack.c.h.b16 %v5590
    %v8129 = vunpack.c.l.b16 %v5591
    %v8130 = vunpack.c.h.b16 %v5591
    %v8131 = vunpack.c.l.b16 %v5592
    %v8132 = vunpack.c.h.b16 %v5592
    %v8133 = vunpack.c.l.b16 %v5593
    %v8134 = vunpack.c.h.b16 %v5593
    %v8135 = vunpack.c.l.b16 %v5594
    %v8136 = vunpack.c.h.b16 %v5594
    %v8137 = vunpack.c.l.b16 %v5595
    %v8138 = vunpack.c.h.b16 %v5595
    %v8139 = vunpack.c.l.b16 %v5596
    %v8140 = vunpack.c.h.b16 %v5596
    %v8141 = vunpack.c.l.b16 %v5597
    %v8142 = vunpack.c.h.b16 %v5597
    %v8143 = vunpack.c.l.b16 %v5598
    %v8144 = vunpack.c.h.b16 %v5598
    %v8145 = vunpack.c.l.b16 %v5599
    %v8146 = vunpack.c.h.b16 %v5599
    %v8147 = vunpack.c.l.b16 %v5600
    %v8148 = vunpack.c.h.b16 %v5600
    %v8149 = vunpack.c.l.b16 %v5601
    %v8150 = vunpack.c.h.b16 %v5601
    %v8151 = vunpack.c.l.b16 %v5602
    %v8152 = vunpack.c.h.b16 %v5602
    %v8153 = vunpack.c.l.b16 %v5603
    %v8154 = vunpack.c.h.b16 %v5603
    %v8155 = vunpack.c.l.b16 %v5604
    %v8156 = vunpack.c.h.b16 %v5604
    %v8157 = vunpack.c.l.b16 %v5605
    %v8158 = vunpack.c.h.b16 %v5605
    %v8159 = vunpack.c.l.b16 %v5606
    %v8160 = vunpack.c.h.b16 %v5606
    %v8161 = vunpack.c.l.b16 %v5607
    %v8162 = vunpack.c.h.b16 %v5607
    %v8163 = vunpack.c.l.b16 %v5608
    %v8164 = vunpack.c.h.b16 %v5608
    %v8165 = vunpack.c.l.b16 %v5609
    %v8166 = vunpack.c.h.b16 %v5609
    %v8167 = vunpack.c.l.b16 %v5610
    %v8168 = vunpack.c.h.b16 %v5610
    %v8169 = vunpack.c.l.b16 %v5611
    %v8170 = vunpack.c.h.b16 %v5611
    %v8171 = vunpack.c.l.b16 %v5612
    %v8172 = vunpack.c.h.b16 %v5612
    %v8173 = vunpack.c.l.b16 %v5613
    %v8174 = vunpack.c.h.b16 %v5613
    %v8175 = vunpack.c.l.b16 %v5614
    %v8176 = vunpack.c.h.b16 %v5614
    %v8177 = vunpack.c.l.b16 %v5615
    %v8178 = vunpack.c.h.b16 %v5615
    %v8179 = vunpack.c.l.b16 %v5616
    %v8180 = vunpack.c.h.b16 %v5616
    %v8181 = vunpack.c.l.b16 %v5617
    %v8182 = vunpack.c.h.b16 %v5617
    %v8183 = vunpack.c.l.b16 %v5618
    %v8184 = vunpack.c.h.b16 %v5618
    %v8185 = vunpack.c.l.b16 %v5619
    %v8186 = vunpack.c.h.b16 %v5619
    %v8187 = vunpack.c.l.b16 %v5620
    %v8188 = vunpack.c.h.b16 %v5620
    %v8189 = vunpack.c.l.b16 %v5621
    %v8190 = vunpack.c.h.b16 %v5621
    %v8191 = vunpack.c.l.b16 %v5622
    %v8192 = vunpack.c.h.b16 %v5622
    %v8193 = vunpack.c.l.b16 %v5623
    %v8194 = vunpack.c.h.b16 %v5623
    %v8195 = vunpack.c.l.b16 %v5624
    %v8196 = vunpack.c.h.b16 %v5624
    %v8197 = vunpack.c.l.b16 %v5625
    %v8198 = vunpack.c.h.b16 %v5625
    %v8199 = vunpack.c.l.b16 %v5626
    %v8200 = vunpack.c.h.b16 %v5626
    %v8201 = vunpack.c.l.b16 %v5627
    %v8202 = vunpack.c.h.b16 %v5627
    %v8203 = vunpack.c.l.b16 %v5628
    %v8204 = vunpack.c.h.b16 %v5628
    %v8205 = vunpack.c.l.b16 %v5629
    %v8206 = vunpack.c.h.b16 %v5629
    %v8207 = vunpack.c.l.b16 %v5630
    %v8208 = vunpack.c.h.b16 %v5630
    %v8209 = vunpack.c.l.b16 %v5631
    %v8210 = vunpack.c.h.b16 %v5631
    %v8211 = vunpack.c.l.b16 %v5632
    %v8212 = vunpack.c.h.b16 %v5632
    %v8213 = vunpack.c.l.b16 %v5633
    %v8214 = vunpack.c.h.b16 %v5633
    %v8215 = vunpack.c.l.b16 %v5634
    %v8216 = vunpack.c.h.b16 %v5634
    %v8217 = vunpack.c.l.b16 %v5635
    %v8218 = vunpack.c.h.b16 %v5635
    %v8219 = vunpack.c.l.b16 %v5636
    %v8220 = vunpack.c.h.b16 %v5636
    %v8221 = vunpack.c.l.b16 %v5637
    %v8222 = vunpack.c.h.b16 %v5637
    %v8223 = vunpack.c.l.b16 %v5638
    %v8224 = vunpack.c.h.b16 %v5638
    %v8225 = vunpack.c.l.b16 %v5639
    %v8226 = vunpack.c.h.b16 %v5639
    %v8227 = vunpack.c.l.b16 %v5640
    %v8228 = vunpack.c.h.b16 %v5640
    %v8229 = vunpack.c.l.b16 %v5641
    %v8230 = vunpack.c.h.b16 %v5641
    %v8231 = vunpack.c.l.b16 %v5642
    %v8232 = vunpack.c.h.b16 %v5642
    %v8233 = vunpack.c.l.b16 %v5643
    %v8234 = vunpack.c.h.b16 %v5643
    %v8235 = vunpack.c.l.b16 %v5644
    %v8236 = vunpack.c.h.b16 %v5644
    %v8237 = vunpack.c.l.b16 %v5645
    %v8238 = vunpack.c.h.b16 %v5645
    %v8239 = vunpack.c.l.b16 %v5646
    %v8240 = vunpack.c.h.b16 %v5646
    %v8241 = vunpack.c.l.b16 %v5647
    %v8242 = vunpack.c.h.b16 %v5647
    %v8243 = vunpack.c.l.b16 %v5648
    %v8244 = vunpack.c.h.b16 %v5648
    %v8245 = vunpack.c.l.b16 %v5649
    %v8246 = vunpack.c.h.b16 %v5649
    %v8247 = vunpack.c.l.b16 %v5650
    %v8248 = vunpack.c.h.b16 %v5650
    %v8249 = vunpack.c.l.b16 %v5651
    %v8250 = vunpack.c.h.b16 %v5651
    %v8251 = vunpack.c.l.b16 %v5652
    %v8252 = vunpack.c.h.b16 %v5652
    %v8253 = vunpack.c.l.b16 %v5653
    %v8254 = vunpack.c.h.b16 %v5653
    %v8255 = vunpack.c.l.b16 %v5654
    %v8256 = vunpack.c.h.b16 %v5654
    %v8257 = vunpack.c.l.b16 %v5655
    %v8258 = vunpack.c.h.b16 %v5655
    %v8259 = vunpack.c.l.b16 %v5656
    %v8260 = vunpack.c.h.b16 %v5656
    %v8261 = vunpack.c.l.b16 %v5657
    %v8262 = vunpack.c.h.b16 %v5657
    %v8263 = vunpack.c.l.b16 %v5658
    %v8264 = vunpack.c.h.b16 %v5658
    %v8265 = vunpack.c.l.b16 %v5659
    %v8266 = vunpack.c.h.b16 %v5659
    %v8267 = vunpack.c.l.b16 %v5660
    %v8268 = vunpack.c.h.b16 %v5660
    %v8269 = vunpack.c.l.b16 %v5661
    %v8270 = vunpack.c.h.b16 %v5661
    %v8271 = vunpack.c.l.b16 %v5662
    %v8272 = vunpack.c.h.b16 %v5662
    %v8273 = vunpack.c.l.b16 %v5663
    %v8274 = vunpack.c.h.b16 %v5663
    %v8275 = vunpack.c.l.b16 %v5664
    %v8276 = vunpack.c.h.b16 %v5664
    %v8277 = vunpack.c.l.b16 %v5665
    %v8278 = vunpack.c.h.b16 %v5665
    %v8279 = vunpack.c.l.b16 %v5666
    %v8280 = vunpack.c.h.b16 %v5666
    %v8281 = vunpack.c.l.b16 %v5667
    %v8282 = vunpack.c.h.b16 %v5667
    %v8283 = vunpack.c.l.b16 %v5668
    %v8284 = vunpack.c.h.b16 %v5668
    %v8285 = vunpack.c.l.b16 %v5669
    %v8286 = vunpack.c.h.b16 %v5669
    %v8287 = vunpack.c.l.b16 %v5670
    %v8288 = vunpack.c.h.b16 %v5670
    %v8289 = vunpack.c.l.b16 %v5671
    %v8290 = vunpack.c.h.b16 %v5671
    %v8291 = vunpack.c.l.b16 %v5672
    %v8292 = vunpack.c.h.b16 %v5672
    %v8293 = vunpack.c.l.b16 %v5673
    %v8294 = vunpack.c.h.b16 %v5673
    %v8295 = vunpack.c.l.b16 %v5674
    %v8296 = vunpack.c.h.b16 %v5674
    %v8297 = vunpack.c.l.b16 %v5675
    %v8298 = vunpack.c.h.b16 %v5675
    %v8299 = vunpack.c.l.b16 %v5676
    %v8300 = vunpack.c.h.b16 %v5676
    %v8301 = vunpack.c.l.b16 %v5677
    %v8302 = vunpack.c.h.b16 %v5677
    %v8303 = vunpack.c.l.b16 %v5678
    %v8304 = vunpack.c.h.b16 %v5678
    %v8305 = vunpack.c.l.b16 %v5679
    %v8306 = vunpack.c.h.b16 %v5679
    %v8307 = vunpack.c.l.b16 %v5680
    %v8308 = vunpack.c.h.b16 %v5680
    %v8309 = vunpack.c.l.b16 %v5681
    %v8310 = vunpack.c.h.b16 %v5681
    %v8311 = vunpack.c.l.b16 %v5682
    %v8312 = vunpack.c.h.b16 %v5682
    %v8313 = vunpack.c.l.b16 %v5683
    %v8314 = vunpack.c.h.b16 %v5683
    %v8315 = vunpack.c.l.b16 %v5684
    %v8316 = vunpack.c.h.b16 %v5684
    %v8317 = vunpack.c.l.b16 %v5685
    %v8318 = vunpack.c.h.b16 %v5685
    %v8319 = vunpack.c.l.b16 %v5686
    %v8320 = vunpack.c.h.b16 %v5686
    %v8321 = vunpack.c.l.b16 %v5687
    %v8322 = vunpack.c.h.b16 %v5687
    %v8323 = vunpack.c.l.b16 %v5688
    %v8324 = vunpack.c.h.b16 %v5688
    %v8325 = vunpack.c.l.b16 %v5689
    %v8326 = vunpack.c.h.b16 %v5689
    %v8327 = vunpack.c.l.b16 %v5690
    %v8328 = vunpack.c.h.b16 %v5690
    %v8329 = vunpack.c.l.b16 %v5691
    %v8330 = vunpack.c.h.b16 %v5691
    %v8331 = vunpack.c.l.b16 %v5692
    %v8332 = vunpack.c.h.b16 %v5692
    %v8333 = vunpack.c.l.b16 %v5693
    %v8334 = vunpack.c.h.b16 %v5693
    %v8335 = vunpack.c.l.b16 %v5694
    %v8336 = vunpack.c.h.b16 %v5694
    %v8337 = vunpack.c.l.b16 %v5695
    %v8338 = vunpack.c.h.b16 %v5695
    %v8339 = vunpack.c.l.b16 %v5696
    %v8340 = vunpack.c.h.b16 %v5696
    %v8341 = vunpack.c.l.b16 %v5697
    %v8342 = vunpack.c.h.b16 %v5697
    %v8343 = vunpack.c.l.b16 %v5698
    %v8344 = vunpack.c.h.b16 %v5698
    %v8345 = vunpack.c.l.b16 %v5699
    %v8346 = vunpack.c.h.b16 %v5699
    %v8347 = vunpack.c.l.b16 %v5700
    %v8348 = vunpack.c.h.b16 %v5700
    %v8349 = vunpack.c.l.b16 %v5701
    %v8350 = vunpack.c.h.b16 %v5701
    %v8351 = vunpack.c.l.b16 %v5702
    %v8352 = vunpack.c.h.b16 %v5702
    %v8353 = vunpack.c.l.b16 %v5703
    %v8354 = vunpack.c.h.b16 %v5703
    %v8355 = vunpack.c.l.b16 %v5704
    %v8356 = vunpack.c.h.b16 %v5704
    %v8357 = vunpack.c.l.b16 %v5705
    %v8358 = vunpack.c.h.b16 %v5705
    %v8359 = vunpack.c.l.b16 %v5706
    %v8360 = vunpack.c.h.b16 %v5706
    %v8361 = vunpack.c.l.b16 %v5707
    %v8362 = vunpack.c.h.b16 %v5707
    %v8363 = vunpack.c.l.b16 %v5708
    %v8364 = vunpack.c.h.b16 %v5708
    %v8365 = vunpack.c.l.b16 %v5709
    %v8366 = vunpack.c.h.b16 %v5709
    %v8367 = vunpack.c.l.b16 %v5710
    %v8368 = vunpack.c.h.b16 %v5710
    %v8369 = vunpack.c.l.b16 %v5711
    %v8370 = vunpack.c.h.b16 %v5711
    %v8371 = vunpack.c.l.b16 %v5712
    %v8372 = vunpack.c.h.b16 %v5712
    %v8373 = vunpack.c.l.b16 %v5713
    %v8374 = vunpack.c.h.b16 %v5713
    %v8375 = vunpack.c.l.b16 %v5714
    %v8376 = vunpack.c.h.b16 %v5714
    %v8377 = vunpack.c.l.b16 %v5715
    %v8378 = vunpack.c.h.b16 %v5715
    %v8379 = vunpack.c.l.b16 %v5716
    %v8380 = vunpack.c.h.b16 %v5716
    %v8381 = vunpack.c.l.b16 %v5717
    %v8382 = vunpack.c.h.b16 %v5717
    %v8383 = vunpack.c.l.b16 %v5718
    %v8384 = vunpack.c.h.b16 %v5718
    %v8385 = vunpack.c.l.b16 %v5719
    %v8386 = vunpack.c.h.b16 %v5719
    %v8387 = vunpack.c.l.b16 %v5720
    %v8388 = vunpack.c.h.b16 %v5720
    %v8389 = vunpack.c.l.b16 %v5721
    %v8390 = vunpack.c.h.b16 %v5721
    %v8391 = vunpack.c.l.b16 %v5722
    %v8392 = vunpack.c.h.b16 %v5722
    %v8393 = vunpack.c.l.b16 %v5723
    %v8394 = vunpack.c.h.b16 %v5723
    %v8395 = vunpack.c.l.b16 %v5724
    %v8396 = vunpack.c.h.b16 %v5724
    %v8397 = vunpack.c.l.b16 %v5725
    %v8398 = vunpack.c.h.b16 %v5725
    %v8399 = vunpack.c.l.b16 %v5726
    %v8400 = vunpack.c.h.b16 %v5726
    %v8401 = vunpack.c.l.b16 %v5727
    %v8402 = vunpack.c.h.b16 %v5727
    %v8403 = vunpack.c.l.b16 %v5728
    %v8404 = vunpack.c.h.b16 %v5728
    %v8405 = vunpack.c.l.b16 %v5729
    %v8406 = vunpack.c.h.b16 %v5729
    %v8407 = vunpack.c.l.b16 %v5730
    %v8408 = vunpack.c.h.b16 %v5730
    %v8409 = vunpack.c.l.b16 %v5731
    %v8410 = vunpack.c.h.b16 %v5731
    %v8411 = vunpack.c.l.b16 %v5732
    %v8412 = vunpack.c.h.b16 %v5732
    %v8413 = vunpack.c.l.b16 %v5733
    %v8414 = vunpack.c.h.b16 %v5733
    %v8415 = vunpack.c.l.b16 %v5734
    %v8416 = vunpack.c.h.b16 %v5734
    %v8417 = vunpack.c.l.b16 %v5735
    %v8418 = vunpack.c.h.b16 %v5735
    %v8419 = vunpack.c.l.b16 %v5736
    %v8420 = vunpack.c.h.b16 %v5736
    %v8421 = vunpack.c.l.b16 %v5737
    %v8422 = vunpack.c.h.b16 %v5737
    %v8423 = vunpack.c.l.b16 %v5738
    %v8424 = vunpack.c.h.b16 %v5738
    %v8425 = vunpack.c.l.b16 %v5739
    %v8426 = vunpack.c.h.b16 %v5739
    %v8427 = vunpack.c.l.b16 %v5740
    %v8428 = vunpack.c.h.b16 %v5740
    %v8429 = vunpack.c.l.b16 %v5741
    %v8430 = vunpack.c.h.b16 %v5741
    %v8431 = vunpack.c.l.b16 %v5742
    %v8432 = vunpack.c.h.b16 %v5742
    %v8433 = vunpack.c.l.b16 %v5743
    %v8434 = vunpack.c.h.b16 %v5743
    %v8435 = vunpack.c.l.b16 %v5744
    %v8436 = vunpack.c.h.b16 %v5744
    %v8437 = vunpack.c.l.b16 %v5745
    %v8438 = vunpack.c.h.b16 %v5745
    %v8439 = vunpack.c.l.b16 %v5746
    %v8440 = vunpack.c.h.b16 %v5746
    %v8441 = vunpack.c.l.b16 %v5747
    %v8442 = vunpack.c.h.b16 %v5747
    %v8443 = vunpack.c.l.b16 %v5748
    %v8444 = vunpack.c.h.b16 %v5748
    %v8445 = vunpack.c.l.b16 %v5749
    %v8446 = vunpack.c.h.b16 %v5749
    %v8447 = vunpack.c.l.b16 %v5750
    %v8448 = vunpack.c.h.b16 %v5750
    %v8449 = vunpack.c.l.b16 %v5751
    %v8450 = vunpack.c.h.b16 %v5751
    %v8451 = vunpack.c.l.b16 %v5752
    %v8452 = vunpack.c.h.b16 %v5752
    %v8453 = vunpack.c.l.b16 %v5753
    %v8454 = vunpack.c.h.b16 %v5753
    %v8455 = vunpack.c.l.b16 %v5754
    %v8456 = vunpack.c.h.b16 %v5754
    %v8457 = vunpack.c.l.b16 %v5755
    %v8458 = vunpack.c.h.b16 %v5755
    %v8459 = vunpack.c.l.b16 %v5756
    %v8460 = vunpack.c.h.b16 %v5756
    %v8461 = vunpack.c.l.b16 %v5757
    %v8462 = vunpack.c.h.b16 %v5757
    %v8463 = vunpack.c.l.b16 %v5758
    %v8464 = vunpack.c.h.b16 %v5758
    %v8465 = vunpack.c.l.b16 %v5759
    %v8466 = vunpack.c.h.b16 %v5759
    %v8467 = vunpack.c.l.b16 %v5760
    %v8468 = vunpack.c.h.b16 %v5760
    %v8469 = vunpack.c.l.b16 %v5761
    %v8470 = vunpack.c.h.b16 %v5761
    %v8471 = vunpack.c.l.b16 %v5762
    %v8472 = vunpack.c.h.b16 %v5762
    %v8473 = vunpack.c.l.b16 %v5763
    %v8474 = vunpack.c.h.b16 %v5763
    %v8475 = vunpack.c.l.b16 %v5764
    %v8476 = vunpack.c.h.b16 %v5764
    %v8477 = vunpack.c.l.b16 %v5765
    %v8478 = vunpack.c.h.b16 %v5765
    %v8479 = vunpack.c.l.b16 %v5766
    %v8480 = vunpack.c.h.b16 %v5766
    %v8481 = vunpack.c.l.b16 %v5767
    %v8482 = vunpack.c.h.b16 %v5767
    %v8483 = vunpack.c.l.b16 %v5768
    %v8484 = vunpack.c.h.b16 %v5768
    %v8485 = vunpack.c.l.b16 %v5769
    %v8486 = vunpack.c.h.b16 %v5769
    %v8487 = vunpack.c.l.b16 %v5770
    %v8488 = vunpack.c.h.b16 %v5770
    %v8489 = vunpack.c.l.b16 %v5771
    %v8490 = vunpack.c.h.b16 %v5771
    %v8491 = vunpack.c.l.b16 %v5772
    %v8492 = vunpack.c.h.b16 %v5772
    %v8493 = vunpack.c.l.b16 %v5773
    %v8494 = vunpack.c.h.b16 %v5773
    %v8495 = vunpack.c.l.b16 %v5774
    %v8496 = vunpack.c.h.b16 %v5774
    %v8497 = vunpack.c.l.b16 %v5775
    %v8498 = vunpack.c.h.b16 %v5775
    %v8499 = vunpack.c.l.b16 %v5776
    %v8500 = vunpack.c.h.b16 %v5776
    %v8501 = vunpack.c.l.b16 %v5777
    %v8502 = vunpack.c.h.b16 %v5777
    %v8503 = vunpack.c.l.b16 %v5778
    %v8504 = vunpack.c.h.b16 %v5778
    %v8505 = vunpack.c.l.b16 %v5779
    %v8506 = vunpack.c.h.b16 %v5779
    %v8507 = vunpack.c.l.b16 %v5780
    %v8508 = vunpack.c.h.b16 %v5780
    %v8509 = vunpack.c.l.b16 %v5781
    %v8510 = vunpack.c.h.b16 %v5781
    %v8511 = vunpack.c.l.b16 %v5782
    %v8512 = vunpack.c.h.b16 %v5782
    %v8513 = vunpack.c.l.b16 %v5783
    %v8514 = vunpack.c.h.b16 %v5783
    %v8515 = vunpack.c.l.b16 %v5784
    %v8516 = vunpack.c.h.b16 %v5784
    %v8517 = vunpack.c.l.b16 %v5785
    %v8518 = vunpack.c.h.b16 %v5785
    %v8519 = vunpack.c.l.b16 %v5786
    %v8520 = vunpack.c.h.b16 %v5786
    %v8521 = vunpack.c.l.b16 %v5787
    %v8522 = vunpack.c.h.b16 %v5787
    %v8523 = vunpack.c.l.b16 %v5788
    %v8524 = vunpack.c.h.b16 %v5788
    %v8525 = vunpack.c.l.b16 %v5789
    %v8526 = vunpack.c.h.b16 %v5789
    %v8527 = vunpack.c.l.b16 %v5790
    %v8528 = vunpack.c.h.b16 %v5790
    %v8529 = vunpack.c.l.b16 %v5791
    %v8530 = vunpack.c.h.b16 %v5791
    %v8531 = vunpack.c.l.b16 %v5792
    %v8532 = vunpack.c.h.b16 %v5792
    %v8533 = vunpack.c.l.b16 %v5793
    %v8534 = vunpack.c.h.b16 %v5793
    %v8535 = vunpack.c.l.b16 %v5794
    %v8536 = vunpack.c.h.b16 %v5794
    %v8537 = vunpack.c.l.b16 %v5795
    %v8538 = vunpack.c.h.b16 %v5795
    %v8539 = vunpack.c.l.b16 %v5796
    %v8540 = vunpack.c.h.b16 %v5796
    %v8541 = vunpack.c.l.b16 %v5797
    %v8542 = vunpack.c.h.b16 %v5797
    %v8543 = vunpack.c.l.b16 %v5798
    %v8544 = vunpack.c.h.b16 %v5798
    %v8545 = vunpack.c.l.b16 %v5799
    %v8546 = vunpack.c.h.b16 %v5799
    %v8547 = vunpack.c.l.b16 %v5800
    %v8548 = vunpack.c.h.b16 %v5800
    %v8549 = vunpack.c.l.b16 %v5801
    %v8550 = vunpack.c.h.b16 %v5801
    %v8551 = vunpack.c.l.b16 %v5802
    %v8552 = vunpack.c.h.b16 %v5802
    %v8553 = vunpack.c.l.b16 %v5803
    %v8554 = vunpack.c.h.b16 %v5803
    %v8555 = vunpack.c.l.b16 %v5804
    %v8556 = vunpack.c.h.b16 %v5804
    %v8557 = vunpack.c.l.b16 %v5805
    %v8558 = vunpack.c.h.b16 %v5805
    %v8559 = vunpack.c.l.b16 %v5806
    %v8560 = vunpack.c.h.b16 %v5806
    %v8561 = vunpack.c.l.b16 %v5807
    %v8562 = vunpack.c.h.b16 %v5807
    %v8563 = vunpack.c.l.b16 %v5808
    %v8564 = vunpack.c.h.b16 %v5808
    %v8565 = vunpack.c.l.b16 %v5809
    %v8566 = vunpack.c.h.b16 %v5809
    %v8567 = vunpack.c.l.b16 %v5810
    %v8568 = vunpack.c.h.b16 %v5810
    %v8569 = vunpack.c.l.b16 %v5811
    %v8570 = vunpack.c.h.b16 %v5811
    %v8571 = vunpack.c.l.b16 %v5812
    %v8572 = vunpack.c.h.b16 %v5812
    %v8573 = vunpack.c.l.b16 %v5813
    %v8574 = vunpack.c.h.b16 %v5813
    %v8575 = vunpack.c.l.b16 %v5814
    %v8576 = vunpack.c.h.b16 %v5814
    %v8577 = vunpack.c.l.b16 %v5815
    %v8578 = vunpack.c.h.b16 %v5815
    %v8579 = vunpack.c.l.b16 %v5816
    %v8580 = vunpack.c.h.b16 %v5816
    %v8581 = vunpack.c.l.b16 %v5817
    %v8582 = vunpack.c.h.b16 %v5817
    %v8583 = vunpack.c.l.b16 %v5818
    %v8584 = vunpack.c.h.b16 %v5818
    %v8585 = vunpack.c.l.b16 %v5819
    %v8586 = vunpack.c.h.b16 %v5819
    %v8587 = vunpack.c.l.b16 %v5820
    %v8588 = vunpack.c.h.b16 %v5820
    %v8589 = vunpack.c.l.b16 %v5821
    %v8590 = vunpack.c.h.b16 %v5821
    %v8591 = vunpack.c.l.b16 %v5822
    %v8592 = vunpack.c.h.b16 %v5822
    %v8593 = vunpack.c.l.b16 %v5823
    %v8594 = vunpack.c.h.b16 %v5823
    %v8595 = vunpack.c.l.b16 %v5824
    %v8596 = vunpack.c.h.b16 %v5824
    %v8597 = vunpack.c.l.b16 %v5825
    %v8598 = vunpack.c.h.b16 %v5825
    %v8599 = vunpack.c.l.b16 %v5826
    %v8600 = vunpack.c.h.b16 %v5826
    %v8601 = vunpack.c.l.b16 %v5827
    %v8602 = vunpack.c.h.b16 %v5827
    %v8603 = vunpack.c.l.b16 %v5828
    %v8604 = vunpack.c.h.b16 %v5828
    %v8605 = vunpack.c.l.b16 %v5829
    %v8606 = vunpack.c.h.b16 %v5829
    %v8607 = vunpack.c.l.b16 %v5830
    %v8608 = vunpack.c.h.b16 %v5830
    %v8609 = vunpack.c.l.b16 %v5831
    %v8610 = vunpack.c.h.b16 %v5831
    %v8611 = vunpack.c.l.b16 %v5832
    %v8612 = vunpack.c.h.b16 %v5832
    %v8613 = vunpack.c.l.b16 %v5833
    %v8614 = vunpack.c.h.b16 %v5833
    %v8615 = vunpack.c.l.b16 %v5834
    %v8616 = vunpack.c.h.b16 %v5834
    %v8617 = vunpack.c.l.b16 %v5835
    %v8618 = vunpack.c.h.b16 %v5835
    %v8619 = vunpack.c.l.b16 %v5836
    %v8620 = vunpack.c.h.b16 %v5836
    %v8621 = vunpack.c.l.b16 %v5837
    %v8622 = vunpack.c.h.b16 %v5837
    %v8623 = vunpack.c.l.b16 %v5838
    %v8624 = vunpack.c.h.b16 %v5838
    %v8625 = vunpack.c.l.b16 %v5839
    %v8626 = vunpack.c.h.b16 %v5839
    %v8627 = vunpack.c.l.b16 %v5840
    %v8628 = vunpack.c.h.b16 %v5840
    %v8629 = vunpack.c.l.b16 %v5841
    %v8630 = vunpack.c.h.b16 %v5841
    %v8631 = vunpack.c.l.b16 %v5842
    %v8632 = vunpack.c.h.b16 %v5842
    %v8633 = vunpack.c.l.b16 %v5843
    %v8634 = vunpack.c.h.b16 %v5843
    %v8635 = vunpack.c.l.b16 %v5844
    %v8636 = vunpack.c.h.b16 %v5844
    %v8637 = vunpack.c.l.b16 %v5845
    %v8638 = vunpack.c.h.b16 %v5845
    %v8639 = vunpack.c.l.b16 %v5846
    %v8640 = vunpack.c.h.b16 %v5846
    %v8641 = vunpack.c.l.b16 %v5847
    %v8642 = vunpack.c.h.b16 %v5847
    %v8643 = vunpack.c.l.b16 %v5848
    %v8644 = vunpack.c.h.b16 %v5848
    %v8645 = vunpack.c.l.b16 %v5849
    %v8646 = vunpack.c.h.b16 %v5849
    %v8647 = vunpack.c.l.b16 %v5850
    %v8648 = vunpack.c.h.b16 %v5850
    %v8649 = vunpack.c.l.b16 %v5851
    %v8650 = vunpack.c.h.b16 %v5851
    %v8651 = vunpack.c.l.b16 %v5852
    %v8652 = vunpack.c.h.b16 %v5852
    %v8653 = vunpack.c.l.b16 %v5853
    %v8654 = vunpack.c.h.b16 %v5853
    %v8655 = vunpack.c.l.b16 %v5854
    %v8656 = vunpack.c.h.b16 %v5854
    %v8657 = vunpack.c.l.b16 %v5855
    %v8658 = vunpack.c.h.b16 %v5855
    %v8659 = vunpack.c.l.b16 %v5856
    %v8660 = vunpack.c.h.b16 %v5856
    %v8661 = vunpack.c.l.b16 %v5857
    %v8662 = vunpack.c.h.b16 %v5857
    %v8663 = vunpack.c.l.b16 %v5858
    %v8664 = vunpack.c.h.b16 %v5858
    %v8665 = vunpack.c.l.b16 %v5859
    %v8666 = vunpack.c.h.b16 %v5859
    %v8667 = vunpack.c.l.b16 %v5860
    %v8668 = vunpack.c.h.b16 %v5860
    %v8669 = vunpack.c.l.b16 %v5861
    %v8670 = vunpack.c.h.b16 %v5861
    %v8671 = vunpack.c.l.b16 %v5862
    %v8672 = vunpack.c.h.b16 %v5862
    %v8673 = vunpack.c.l.b16 %v5863
    %v8674 = vunpack.c.h.b16 %v5863
    %v8675 = vunpack.c.l.b16 %v5864
    %v8676 = vunpack.c.h.b16 %v5864
    %v8677 = vunpack.c.l.b16 %v5865
    %v8678 = vunpack.c.h.b16 %v5865
    %v8679 = vunpack.c.l.b16 %v5866
    %v8680 = vunpack.c.h.b16 %v5866
    %v8681 = vunpack.c.l.b16 %v5867
    %v8682 = vunpack.c.h.b16 %v5867
    %v8683 = vunpack.c.l.b16 %v5868
    %v8684 = vunpack.c.h.b16 %v5868
    %v8685 = vunpack.c.l.b16 %v5869
    %v8686 = vunpack.c.h.b16 %v5869
    %v8687 = vunpack.c.l.b16 %v5870
    %v8688 = vunpack.c.h.b16 %v5870
    %v8689 = vunpack.c.l.b16 %v5871
    %v8690 = vunpack.c.h.b16 %v5871
    %v8691 = vunpack.c.l.b16 %v5872
    %v8692 = vunpack.c.h.b16 %v5872
    %v8693 = vunpack.c.l.b16 %v5873
    %v8694 = vunpack.c.h.b16 %v5873
    %v8695 = vunpack.c.l.b16 %v5874
    %v8696 = vunpack.c.h.b16 %v5874
    %v8697 = vunpack.c.l.b16 %v5875
    %v8698 = vunpack.c.h.b16 %v5875
    %v8699 = vunpack.c.l.b16 %v5876
    %v8700 = vunpack.c.h.b16 %v5876
    %v8701 = vunpack.c.l.b16 %v5877
    %v8702 = vunpack.c.h.b16 %v5877
    %v8703 = vunpack.c.l.b16 %v5878
    %v8704 = vunpack.c.h.b16 %v5878
    %v8705 = vunpack.c.l.b16 %v5879
    %v8706 = vunpack.c.h.b16 %v5879
    %v8707 = vunpack.c.l.b16 %v5880
    %v8708 = vunpack.c.h.b16 %v5880
    %v8709 = vunpack.c.l.b16 %v5881
    %v8710 = vunpack.c.h.b16 %v5881
    %v8711 = vunpack.c.l.b16 %v5882
    %v8712 = vunpack.c.h.b16 %v5882
    %v8713 = vunpack.c.l.b16 %v5883
    %v8714 = vunpack.c.h.b16 %v5883
    %v8715 = vunpack.c.l.b16 %v5884
    %v8716 = vunpack.c.h.b16 %v5884
    %v8717 = vunpack.c.l.b16 %v5885
    %v8718 = vunpack.c.h.b16 %v5885
    %v8719 = vunpack.c.l.b16 %v5886
    %v8720 = vunpack.c.h.b16 %v5886
    %v8721 = vunpack.c.l.b16 %v5887
    %v8722 = vunpack.c.h.b16 %v5887
    %v8723 = vunpack.c.l.b16 %v5888
    %v8724 = vunpack.c.h.b16 %v5888
    %v8725 = vunpack.c.l.b16 %v5889
    %v8726 = vunpack.c.h.b16 %v5889
    %v8727 = vunpack.c.l.b16 %v5890
    %v8728 = vunpack.c.h.b16 %v5890
    %v8729 = vunpack.c.l.b16 %v5891
    %v8730 = vunpack.c.h.b16 %v5891
    %v8731 = vunpack.c.l.b16 %v5892
    %v8732 = vunpack.c.h.b16 %v5892
    %v8733 = vunpack.c.l.b16 %v5893
    %v8734 = vunpack.c.h.b16 %v5893
    %v8735 = vunpack.c.l.b16 %v5894
    %v8736 = vunpack.c.h.b16 %v5894
    %v8737 = vunpack.c.l.b16 %v5895
    %v8738 = vunpack.c.h.b16 %v5895
    %v8739 = vunpack.c.l.b16 %v5896
    %v8740 = vunpack.c.h.b16 %v5896
    %v8741 = vunpack.c.l.b16 %v5897
    %v8742 = vunpack.c.h.b16 %v5897
    %v8743 = vunpack.c.l.b16 %v5898
    %v8744 = vunpack.c.h.b16 %v5898
    %v8745 = vunpack.c.l.b16 %v5899
    %v8746 = vunpack.c.h.b16 %v5899
    %v8747 = vunpack.c.l.b16 %v5900
    %v8748 = vunpack.c.h.b16 %v5900
    %v8749 = vunpack.c.l.b16 %v5901
    %v8750 = vunpack.c.h.b16 %v5901
    %v8751 = vunpack.c.l.b16 %v5902
    %v8752 = vunpack.c.h.b16 %v5902
    %v8753 = vunpack.c.l.b16 %v5903
    %v8754 = vunpack.c.h.b16 %v5903
    %v8755 = vunpack.c.l.b16 %v5904
    %v8756 = vunpack.c.h.b16 %v5904
    %v8757 = vunpack.c.l.b16 %v5905
    %v8758 = vunpack.c.h.b16 %v5905
    %v8759 = vunpack.c.l.b16 %v5906
    %v8760 = vunpack.c.h.b16 %v5906
    %v8761 = vunpack.c.l.b16 %v5907
    %v8762 = vunpack.c.h.b16 %v5907
    %v8763 = vunpack.c.l.b16 %v5908
    %v8764 = vunpack.c.h.b16 %v5908
    %v8765 = vunpack.c.l.b16 %v5909
    %v8766 = vunpack.c.h.b16 %v5909
    %v8767 = vunpack.c.l.b16 %v5910
    %v8768 = vunpack.c.h.b16 %v5910
    %v8769 = vunpack.c.l.b16 %v5911
    %v8770 = vunpack.c.h.b16 %v5911
    %v8771 = vunpack.c.l.b16 %v5912
    %v8772 = vunpack.c.h.b16 %v5912
    %v8773 = vunpack.c.l.b16 %v5913
    %v8774 = vunpack.c.h.b16 %v5913
    %v8775 = vunpack.c.l.b16 %v5914
    %v8776 = vunpack.c.h.b16 %v5914
    %v8777 = vunpack.c.l.b16 %v5915
    %v8778 = vunpack.c.h.b16 %v5915
    %v8779 = vunpack.c.l.b16 %v5916
    %v8780 = vunpack.c.h.b16 %v5916
    %v8781 = vunpack.c.l.b16 %v5917
    %v8782 = vunpack.c.h.b16 %v5917
    %v8783 = vunpack.c.l.b16 %v5918
    %v8784 = vunpack.c.h.b16 %v5918
    %v8785 = vunpack.c.l.b16 %v5919
    %v8786 = vunpack.c.h.b16 %v5919
    %v8787 = vunpack.c.l.b16 %v5920
    %v8788 = vunpack.c.h.b16 %v5920
    %v8789 = vunpack.c.l.b16 %v5921
    %v8790 = vunpack.c.h.b16 %v5921
    %v8791 = vunpack.c.l.b16 %v5922
    %v8792 = vunpack.c.h.b16 %v5922
    %v8793 = vunpack.c.l.b16 %v5923
    %v8794 = vunpack.c.h.b16 %v5923
    %v8795 = vunpack.c.l.b16 %v5924
    %v8796 = vunpack.c.h.b16 %v5924
    %v8797 = vunpack.c.l.b16 %v5925
    %v8798 = vunpack.c.h.b16 %v5925
    %v8799 = vunpack.c.l.b16 %v5926
    %v8800 = vunpack.c.h.b16 %v5926
    %v8801 = vunpack.c.l.b16 %v5927
    %v8802 = vunpack.c.h.b16 %v5927
    %v8803 = vunpack.c.l.b16 %v5928
    %v8804 = vunpack.c.h.b16 %v5928
    %v8805 = vunpack.c.l.b16 %v5929
    %v8806 = vunpack.c.h.b16 %v5929
    %v8807 = vunpack.c.l.b16 %v5930
    %v8808 = vunpack.c.h.b16 %v5930
    %v8809 = vunpack.c.l.b16 %v5931
    %v8810 = vunpack.c.h.b16 %v5931
    %v8811 = vunpack.c.l.b16 %v5932
    %v8812 = vunpack.c.h.b16 %v5932
    %v8813 = vunpack.c.l.b16 %v5933
    %v8814 = vunpack.c.h.b16 %v5933
    %v8815 = vunpack.c.l.b16 %v5934
    %v8816 = vunpack.c.h.b16 %v5934
    %v8817 = vunpack.c.l.b16 %v5935
    %v8818 = vunpack.c.h.b16 %v5935
    %v8819 = vunpack.c.l.b16 %v5936
    %v8820 = vunpack.c.h.b16 %v5936
    %v8821 = vunpack.c.l.b16 %v5937
    %v8822 = vunpack.c.h.b16 %v5937
    %v8823 = vunpack.c.l.b16 %v5938
    %v8824 = vunpack.c.h.b16 %v5938
    %v8825 = vunpack.c.l.b16 %v5939
    %v8826 = vunpack.c.h.b16 %v5939
    %v8827 = vunpack.c.l.b16 %v5940
    %v8828 = vunpack.c.h.b16 %v5940
    %v8829 = vunpack.c.l.b16 %v5941
    %v8830 = vunpack.c.h.b16 %v5941
    %v8831 = vunpack.c.l.b16 %v5942
    %v8832 = vunpack.c.h.b16 %v5942
    %v8833 = vunpack.c.l.b16 %v5943
    %v8834 = vunpack.c.h.b16 %v5943
    %v8835 = vunpack.c.l.b16 %v5944
    %v8836 = vunpack.c.h.b16 %v5944
    %v8837 = vunpack.c.l.b16 %v5945
    %v8838 = vunpack.c.h.b16 %v5945
    %v8839 = vunpack.c.l.b16 %v5946
    %v8840 = vunpack.c.h.b16 %v5946
    %v8841 = vunpack.c.l.b16 %v5947
    %v8842 = vunpack.c.h.b16 %v5947
    %v8843 = vunpack.c.l.b16 %v5948
    %v8844 = vunpack.c.h.b16 %v5948
    %v8845 = vunpack.c.l.b16 %v5949
    %v8846 = vunpack.c.h.b16 %v5949
    %v8847 = vunpack.c.l.b16 %v5950
    %v8848 = vunpack.c.h.b16 %v5950
    %v8849 = vunpack.c.l.b16 %v5951
    %v8850 = vunpack.c.h.b16 %v5951
    %v8851 = vunpack.c.l.b16 %v5952
    %v8852 = vunpack.c.h.b16 %v5952
    %v8853 = vunpack.c.l.b16 %v5953
    %v8854 = vunpack.c.h.b16 %v5953
    %v8855 = vunpack.c.l.b16 %v5954
    %v8856 = vunpack.c.h.b16 %v5954
    %v8857 = vunpack.c.l.b16 %v5955
    %v8858 = vunpack.c.h.b16 %v5955
    %v8859 = vunpack.c.l.b16 %v5956
    %v8860 = vunpack.c.h.b16 %v5956
    %v8861 = vunpack.c.l.b16 %v5957
    %v8862 = vunpack.c.h.b16 %v5957
    %v8863 = vunpack.c.l.b16 %v5958
    %v8864 = vunpack.c.h.b16 %v5958
    %v8865 = vunpack.c.l.b16 %v5959
    %v8866 = vunpack.c.h.b16 %v5959
    %v8867 = vunpack.c.l.b16 %v5960
    %v8868 = vunpack.c.h.b16 %v5960
    %v8869 = vunpack.c.l.b16 %v5961
    %v8870 = vunpack.c.h.b16 %v5961
    %v8871 = vunpack.c.l.b16 %v5962
    %v8872 = vunpack.c.h.b16 %v5962
    %v8873 = vunpack.c.l.b16 %v5963
    %v8874 = vunpack.c.h.b16 %v5963
    %v8875 = vunpack.c.l.b16 %v5964
    %v8876 = vunpack.c.h.b16 %v5964
    %v8877 = vunpack.c.l.b16 %v5965
    %v8878 = vunpack.c.h.b16 %v5965
    %v8879 = vunpack.c.l.b16 %v5966
    %v8880 = vunpack.c.h.b16 %v5966
    %v8881 = vunpack.c.l.b16 %v5967
    %v8882 = vunpack.c.h.b16 %v5967
    %v8883 = vunpack.c.l.b16 %v5968
    %v8884 = vunpack.c.h.b16 %v5968
    %v8885 = vunpack.c.l.b16 %v5969
    %v8886 = vunpack.c.h.b16 %v5969
    %v8887 = vunpack.c.l.b16 %v5970
    %v8888 = vunpack.c.h.b16 %v5970
    %v8889 = vunpack.c.l.b16 %v5971
    %v8890 = vunpack.c.h.b16 %v5971
    %v8891 = vunpack.c.l.b16 %v5972
    %v8892 = vunpack.c.h.b16 %v5972
    %v8893 = vunpack.c.l.b16 %v5973
    %v8894 = vunpack.c.h.b16 %v5973
    %v8895 = vunpack.c.l.b16 %v5974
    %v8896 = vunpack.c.h.b16 %v5974
    %v8897 = vunpack.c.l.b16 %v5975
    %v8898 = vunpack.c.h.b16 %v5975
    %v8899 = vunpack.c.l.b16 %v5976
    %v8900 = vunpack.c.h.b16 %v5976
    %v8901 = vunpack.c.l.b16 %v5977
    %v8902 = vunpack.c.h.b16 %v5977
    %v8903 = vunpack.c.l.b16 %v5978
    %v8904 = vunpack.c.h.b16 %v5978
    %v8905 = vunpack.c.l.b16 %v5979
    %v8906 = vunpack.c.h.b16 %v5979
    %v8907 = vunpack.c.l.b16 %v5980
    %v8908 = vunpack.c.h.b16 %v5980
    %v8909 = vunpack.c.l.b16 %v5981
    %v8910 = vunpack.c.h.b16 %v5981
    %v8911 = vunpack.c.l.b16 %v5982
    %v8912 = vunpack.c.h.b16 %v5982
    %v8913 = vunpack.c.l.b16 %v5983
    %v8914 = vunpack.c.h.b16 %v5983
    %v8915 = vunpack.c.l.b16 %v5984
    %v8916 = vunpack.c.h.b16 %v5984
    %v8917 = vunpack.c.l.b16 %v5985
    %v8918 = vunpack.c.h.b16 %v5985
    %v8919 = vunpack.c.l.b16 %v5986
    %v8920 = vunpack.c.h.b16 %v5986
    %v8921 = vunpack.c.l.b16 %v5987
    %v8922 = vunpack.c.h.b16 %v5987
    %v8923 = vunpack.c.l.b16 %v5988
    %v8924 = vunpack.c.h.b16 %v5988
    %v8925 = vunpack.c.l.b16 %v5989
    %v8926 = vunpack.c.h.b16 %v5989
    %v8927 = vunpack.c.l.b16 %v5990
    %v8928 = vunpack.c.h.b16 %v5990
    %v8929 = vunpack.c.l.b16 %v5991
    %v8930 = vunpack.c.h.b16 %v5991
    %v8931 = vunpack.c.l.b16 %v5992
    %v8932 = vunpack.c.h.b16 %v5992
    %v8933 = vunpack.c.l.b16 %v5993
    %v8934 = vunpack.c.h.b16 %v5993
    %v8935 = vunpack.c.l.b16 %v5994
    %v8936 = vunpack.c.h.b16 %v5994
    %v8937 = vunpack.c.l.b16 %v5995
    %v8938 = vunpack.c.h.b16 %v5995
    %v8939 = vunpack.c.l.b16 %v5996
    %v8940 = vunpack.c.h.b16 %v5996
    %v8941 = vunpack.c.l.b16 %v5997
    %v8942 = vunpack.c.h.b16 %v5997
    %v8943 = vunpack.c.l.b16 %v5998
    %v8944 = vunpack.c.h.b16 %v5998
    %v8945 = vunpack.c.l.b16 %v5999
    %v8946 = vunpack.c.h.b16 %v5999
    %v8947 = vunpack.c.l.b16 %v6000
    %v8948 = vunpack.c.h.b16 %v6000
    %v8949 = vunpack.c.l.b16 %v6001
    %v8950 = vunpack.c.h.b16 %v6001
    %v8951 = vunpack.c.l.b16 %v6002
    %v8952 = vunpack.c.h.b16 %v6002
    %v8953 = vunpack.c.l.b16 %v6003
    %v8954 = vunpack.c.h.b16 %v6003
    %v8955 = vunpack.c.l.b16 %v6004
    %v8956 = vunpack.c.h.b16 %v6004
    %v8957 = vunpack.c.l.b16 %v6005
    %v8958 = vunpack.c.h.b16 %v6005
    %v8959 = vunpack.c.l.b16 %v6006
    %v8960 = vunpack.c.h.b16 %v6006
    %v8961 = vunpack.c.l.b16 %v6007
    %v8962 = vunpack.c.h.b16 %v6007
    %v8963 = vunpack.c.l.b16 %v6008
    %v8964 = vunpack.c.h.b16 %v6008
    %v8965 = vunpack.c.l.b16 %v6009
    %v8966 = vunpack.c.h.b16 %v6009
    %v8967 = vunpack.c.l.b16 %v6010
    %v8968 = vunpack.c.h.b16 %v6010
    %v8969 = vunpack.c.l.b16 %v6011
    %v8970 = vunpack.c.h.b16 %v6011
    %v8971 = vunpack.c.l.b16 %v6012
    %v8972 = vunpack.c.h.b16 %v6012
    %v8973 = vunpack.c.l.b16 %v6013
    %v8974 = vunpack.c.h.b16 %v6013
    %v8975 = vunpack.c.l.b16 %v6014
    %v8976 = vunpack.c.h.b16 %v6014
    %v8977 = vunpack.c.l.b16 %v6015
    %v8978 = vunpack.c.h.b16 %v6015
    %v8979 = vunpack.c.l.b16 %v6016
    %v8980 = vunpack.c.h.b16 %v6016
    %v8981 = vunpack.c.l.b16 %v6017
    %v8982 = vunpack.c.h.b16 %v6017
    %v8983 = vunpack.c.l.b16 %v6018
    %v8984 = vunpack.c.h.b16 %v6018
    %v8985 = vunpack.c.l.b16 %v6019
    %v8986 = vunpack.c.h.b16 %v6019
    %v8987 = vunpack.c.l.b16 %v6020
    %v8988 = vunpack.c.h.b16 %v6020
    %v8989 = vunpack.c.l.b16 %v6021
    %v8990 = vunpack.c.h.b16 %v6021
    %v8991 = vunpack.c.l.b16 %v6022
    %v8992 = vunpack.c.h.b16 %v6022
    %v8993 = vunpack.c.l.b16 %v6023
    %v8994 = vunpack.c.h.b16 %v6023
    %v8995 = vunpack.c.l.b16 %v6024
    %v8996 = vunpack.c.h.b16 %v6024
    %v8997 = vunpack.c.l.b16 %v6025
    %v8998 = vunpack.c.h.b16 %v6025
    %v8999 = vunpack.c.l.b16 %v6026
    %v9000 = vunpack.c.h.b16 %v6026
    %v9001 = vunpack.c.l.b16 %v6027
    %v9002 = vunpack.c.h.b16 %v6027
    %v9003 = vunpack.c.l.b16 %v6028
    %v9004 = vunpack.c.h.b16 %v6028
    %v9005 = vunpack.c.l.b16 %v6029
    %v9006 = vunpack.c.h.b16 %v6029
    %v9007 = vunpack.c.l.b16 %v6030
    %v9008 = vunpack.c.h.b16 %v6030
    %v9009 = vunpack.c.l.b16 %v6031
    %v9010 = vunpack.c.h.b16 %v6031
    %v9011 = vunpack.c.l.b16 %v6032
    %v9012 = vunpack.c.h.b16 %v6032
    %v9013 = vunpack.c.l.b16 %v6033
    %v9014 = vunpack.c.h.b16 %v6033
    %v9015 = vunpack.c.l.b16 %v6034
    %v9016 = vunpack.c.h.b16 %v6034
    %v9017 = vunpack.c.l.b16 %v6035
    %v9018 = vunpack.c.h.b16 %v6035
    %v9019 = vunpack.c.l.b16 %v6036
    %v9020 = vunpack.c.h.b16 %v6036
    %v9021 = vunpack.c.l.b16 %v6037
    %v9022 = vunpack.c.h.b16 %v6037
    %v9023 = vunpack.c.l.b16 %v6038
    %v9024 = vunpack.c.h.b16 %v6038
    %v9025 = vunpack.c.l.b16 %v6039
    %v9026 = vunpack.c.h.b16 %v6039
    %v9027 = vunpack.c.l.b16 %v6040
    %v9028 = vunpack.c.h.b16 %v6040
    %v9029 = vunpack.c.l.b16 %v6041
    %v9030 = vunpack.c.h.b16 %v6041
    %v9031 = vunpack.c.l.b16 %v6042
    %v9032 = vunpack.c.h.b16 %v6042
    %v9033 = vunpack.c.l.b16 %v6043
    %v9034 = vunpack.c.h.b16 %v6043
    %v9035 = vunpack.c.l.b16 %v6044
    %v9036 = vunpack.c.h.b16 %v6044
    %v9037 = vunpack.c.l.b16 %v6045
    %v9038 = vunpack.c.h.b16 %v6045
    %v9039 = vunpack.c.l.b16 %v6046
    %v9040 = vunpack.c.h.b16 %v6046
    %v9041 = vunpack.c.l.b16 %v6047
    %v9042 = vunpack.c.h.b16 %v6047
    %v9043 = vunpack.c.l.b16 %v6048
    %v9044 = vunpack.c.h.b16 %v6048
    %v9045 = vunpack.c.l.b16 %v6049
    %v9046 = vunpack.c.h.b16 %v6049
    %v9047 = vunpack.c.l.b16 %v6050
    %v9048 = vunpack.c.h.b16 %v6050
    %v9049 = vunpack.c.l.b16 %v6051
    %v9050 = vunpack.c.h.b16 %v6051
    %v9051 = vunpack.c.l.b16 %v6052
    %v9052 = vunpack.c.h.b16 %v6052
    %v9053 = vunpack.c.l.b16 %v6053
    %v9054 = vunpack.c.h.b16 %v6053
    %v9055 = vunpack.c.l.b16 %v6054
    %v9056 = vunpack.c.h.b16 %v6054
    %v9057 = vunpack.c.l.b16 %v6055
    %v9058 = vunpack.c.h.b16 %v6055
    %v9059 = vunpack.c.l.b16 %v6056
    %v9060 = vunpack.c.h.b16 %v6056
    %v9061 = vunpack.c.l.b16 %v6057
    %v9062 = vunpack.c.h.b16 %v6057
    %v9063 = vunpack.c.l.b16 %v6058
    %v9064 = vunpack.c.h.b16 %v6058
    %v9065 = vunpack.c.l.b16 %v6059
    %v9066 = vunpack.c.h.b16 %v6059
    %v9067 = vunpack.c.l.b16 %v6060
    %v9068 = vunpack.c.h.b16 %v6060
    %v9069 = vunpack.c.l.b16 %v6061
    %v9070 = vunpack.c.h.b16 %v6061
    %v9071 = vunpack.c.l.b16 %v6062
    %v9072 = vunpack.c.h.b16 %v6062
    %v9073 = vunpack.c.l.b16 %v6063
    %v9074 = vunpack.c.h.b16 %v6063
    %v9075 = vunpack.c.l.b16 %v6064
    %v9076 = vunpack.c.h.b16 %v6064
    %v9077 = vunpack.c.l.b16 %v6065
    %v9078 = vunpack.c.h.b16 %v6065
    %v9079 = vunpack.c.l.b16 %v6066
    %v9080 = vunpack.c.h.b16 %v6066
    %v9081 = vunpack.c.l.b16 %v6067
    %v9082 = vunpack.c.h.b16 %v6067
    %v9083 = vunpack.c.l.b16 %v6068
    %v9084 = vunpack.c.h.b16 %v6068
    %v9085 = vunpack.c.l.b16 %v6069
    %v9086 = vunpack.c.h.b16 %v6069
    %v9087 = vunpack.c.l.b16 %v6070
    %v9088 = vunpack.c.h.b16 %v6070
    %v9089 = vunpack.c.l.b16 %v6071
    %v9090 = vunpack.c.h.b16 %v6071
    %v9091 = vunpack.c.l.b16 %v6072
    %v9092 = vunpack.c.h.b16 %v6072
    %v9093 = vunpack.c.l.b16 %v6073
    %v9094 = vunpack.c.h.b16 %v6073
    %v9095 = vunpack.c.l.b16 %v6074
    %v9096 = vunpack.c.h.b16 %v6074
    %v9097 = vunpack.c.l.b16 %v6075
    %v9098 = vunpack.c.h.b16 %v6075
    %v9099 = vunpack.c.l.b16 %v6076
    %v9100 = vunpack.c.h.b16 %v6076
    %v9101 = vunpack.c.l.b16 %v6077
    %v9102 = vunpack.c.h.b16 %v6077
    %v9103 = vunpack.c.l.b16 %v6078
    %v9104 = vunpack.c.h.b16 %v6078
    %v9105 = vunpack.c.l.b16 %v6079
    %v9106 = vunpack.c.h.b16 %v6079
    %v9107 = vunpack.c.l.b16 %v6080
    %v9108 = vunpack.c.h.b16 %v6080
    %v9109 = vunpack.c.l.b16 %v6081
    %v9110 = vunpack.c.h.b16 %v6081
    %v9111 = vunpack.c.l.b16 %v6082
    %v9112 = vunpack.c.h.b16 %v6082
    %v9113 = vunpack.c.l.b16 %v6083
    %v9114 = vunpack.c.h.b16 %v6083
    %v9115 = vunpack.c.l.b16 %v6084
    %v9116 = vunpack.c.h.b16 %v6084
    %v9117 = vunpack.c.l.b16 %v6085
    %v9118 = vunpack.c.h.b16 %v6085
    %v9119 = vunpack.c.l.b16 %v6086
    %v9120 = vunpack.c.h.b16 %v6086
    %v9121 = vunpack.c.l.b16 %v6087
    %v9122 = vunpack.c.h.b16 %v6087
    %v9123 = vunpack.c.l.b16 %v6088
    %v9124 = vunpack.c.h.b16 %v6088
    %v9125 = vunpack.c.l.b16 %v6089
    %v9126 = vunpack.c.h.b16 %v6089
    %v9127 = vunpack.c.l.b16 %v6090
    %v9128 = vunpack.c.h.b16 %v6090
    %v9129 = vunpack.c.l.b16 %v6091
    %v9130 = vunpack.c.h.b16 %v6091
    %v9131 = vunpack.c.l.b16 %v6092
    %v9132 = vunpack.c.h.b16 %v6092
    %v9133 = vunpack.c.l.b16 %v6093
    %v9134 = vunpack.c.h.b16 %v6093
    %v9135 = vunpack.c.l.b16 %v6094
    %v9136 = vunpack.c.h.b16 %v6094
    %v9137 = vunpack.c.l.b16 %v6095
    %v9138 = vunpack.c.h.b16 %v6095
    %v9139 = vunpack.c.l.b16 %v6096
    %v9140 = vunpack.c.h.b16 %v6096
    %v9141 = vunpack.c.l.b16 %v6097
    %v9142 = vunpack.c.h.b16 %v6097
    %v9143 = vunpack.c.l.b16 %v6098
    %v9144 = vunpack.c.h.b16 %v6098
    %v9145 = vunpack.c.l.b16 %v6099
    %v9146 = vunpack.c.h.b16 %v6099
    %v9147 = vunpack.c.l.b16 %v6100
    %v9148 = vunpack.c.h.b16 %v6100
    %v9149 = vunpack.c.l.b16 %v6101
    %v9150 = vunpack.c.h.b16 %v6101
    %v9151 = vunpack.c.l.b16 %v6102
    %v9152 = vunpack.c.h.b16 %v6102
    %v9153 = vunpack.c.l.b16 %v6103
    %v9154 = vunpack.c.h.b16 %v6103
    %v9155 = vunpack.c.l.b16 %v6104
    %v9156 = vunpack.c.h.b16 %v6104
    %v9157 = vunpack.c.l.b16 %v6105
    %v9158 = vunpack.c.h.b16 %v6105
    %v9159 = vunpack.c.l.b16 %v6106
    %v9160 = vunpack.c.h.b16 %v6106
    %v9161 = vunpack.c.l.b16 %v6107
    %v9162 = vunpack.c.h.b16 %v6107
    %v9163 = vunpack.c.l.b16 %v6108
    %v9164 = vunpack.c.h.b16 %v6108
    %v9165 = vunpack.c.l.b16 %v6109
    %v9166 = vunpack.c.h.b16 %v6109
    %v9167 = vunpack.c.l.b16 %v6110
    %v9168 = vunpack.c.h.b16 %v6110
    %v9169 = vunpack.c.l.b16 %v6111
    %v9170 = vunpack.c.h.b16 %v6111
    %v9171 = vunpack.c.l.b16 %v6112
    %v9172 = vunpack.c.h.b16 %v6112
    %v9173 = vunpack.c.l.b16 %v6113
    %v9174 = vunpack.c.h.b16 %v6113
    %v9175 = vunpack.c.l.b16 %v6114
    %v9176 = vunpack.c.h.b16 %v6114
    %v9177 = vunpack.c.l.b16 %v6115
    %v9178 = vunpack.c.h.b16 %v6115
    %v9179 = vunpack.c.l.b16 %v6116
    %v9180 = vunpack.c.h.b16 %v6116
    %v9181 = vunpack.c.l.b16 %v6117
    %v9182 = vunpack.c.h.b16 %v6117
    %v9183 = vunpack.c.l.b16 %v6118
    %v9184 = vunpack.c.h.b16 %v6118
    %v9185 = vunpack.c.l.b16 %v6119
    %v9186 = vunpack.c.h.b16 %v6119
    %v9187 = vunpack.c.l.b16 %v6120
    %v9188 = vunpack.c.h.b16 %v6120
    %v9189 = vunpack.c.l.b16 %v6121
    %v9190 = vunpack.c.h.b16 %v6121
    %v9191 = vunpack.c.l.b16 %v6122
    %v9192 = vunpack.c.h.b16 %v6122
    %v9193 = vunpack.c.l.b16 %v6123
    %v9194 = vunpack.c.h.b16 %v6123
    %v9195 = vunpack.c.l.b16 %v6124
    %v9196 = vunpack.c.h.b16 %v6124
    %v9197 = vunpack.c.l.b16 %v6125
    %v9198 = vunpack.c.h.b16 %v6125
    %v9199 = vunpack.c.l.b16 %v6126
    %v9200 = vunpack.c.h.b16 %v6126
    %v9201 = vunpack.c.l.b16 %v6127
    %v9202 = vunpack.c.h.b16 %v6127
    %v9203 = vunpack.c.l.b16 %v6128
    %v9204 = vunpack.c.h.b16 %v6128
    %v9205 = vunpack.c.l.b16 %v6129
    %v9206 = vunpack.c.h.b16 %v6129
    %v9207 = vunpack.c.l.b16 %v6130
    %v9208 = vunpack.c.h.b16 %v6130
    %v9209 = vunpack.c.l.b16 %v6131
    %v9210 = vunpack.c.h.b16 %v6131
    %v9211 = vunpack.c.l.b16 %v6132
    %v9212 = vunpack.c.h.b16 %v6132
    %v9213 = vunpack.c.l.b16 %v6133
    %v9214 = vunpack.c.h.b16 %v6133
    %v9215 = vunpack.c.l.b16 %v6134
    %v9216 = vunpack.c.h.b16 %v6134
    %v9217 = vunpack.c.l.b16 %v6135
    %v9218 = vunpack.c.h.b16 %v6135
    %v9219 = vunpack.c.l.b16 %v6136
    %v9220 = vunpack.c.h.b16 %v6136
    %v9221 = vunpack.c.l.b16 %v6137
    %v9222 = vunpack.c.h.b16 %v6137
    %v9223 = vunpack.c.l.b16 %v6138
    %v9224 = vunpack.c.h.b16 %v6138
    %v9225 = vunpack.c.l.b16 %v6139
    %v9226 = vunpack.c.h.b16 %v6139
    %v9227 = vunpack.c.l.b16 %v6140
    %v9228 = vunpack.c.h.b16 %v6140
    %v9229 = vunpack.c.l.b16 %v6141
    %v9230 = vunpack.c.h.b16 %v6141
    %v9231 = vunpack.c.l.b16 %v6142
    %v9232 = vunpack.c.h.b16 %v6142
    %v9233 = vpack.c.b16 %v7193, %v7185
    %v9234 = vpack.c.b16 %v7194, %v7186
    %v9235 = vpack.c.b16 %v7195, %v7187
    %v9236 = vpack.c.b16 %v7196, %v7188
    %v9237 = vpack.c.b16 %v7197, %v7189
    %v9238 = vpack.c.b16 %v7198, %v7190
    %v9239 = vpack.c.b16 %v7199, %v7191
    %v9240 = vpack.c.b16 %v7200, %v7192
    %v9241 = vpack.c.b16 %v7209, %v7201
    %v9242 = vpack.c.b16 %v7210, %v7202
    %v9243 = vpack.c.b16 %v7211, %v7203
    %v9244 = vpack.c.b16 %v7212, %v7204
    %v9245 = vpack.c.b16 %v7213, %v7205
    %v9246 = vpack.c.b16 %v7214, %v7206
    %v9247 = vpack.c.b16 %v7215, %v7207
    %v9248 = vpack.c.b16 %v7216, %v7208
    %v9249 = vpack.c.b16 %v7225, %v7217
    %v9250 = vpack.c.b16 %v7226, %v7218
    %v9251 = vpack.c.b16 %v7227, %v7219
    %v9252 = vpack.c.b16 %v7228, %v7220
    %v9253 = vpack.c.b16 %v7229, %v7221
    %v9254 = vpack.c.b16 %v7230, %v7222
    %v9255 = vpack.c.b16 %v7231, %v7223
    %v9256 = vpack.c.b16 %v7232, %v7224
    %v9257 = vpack.c.b16 %v7241, %v7233
    %v9258 = vpack.c.b16 %v7242, %v7234
    %v9259 = vpack.c.b16 %v7243, %v7235
    %v9260 = vpack.c.b16 %v7244, %v7236
    %v9261 = vpack.c.b16 %v7245, %v7237
    %v9262 = vpack.c.b16 %v7246, %v7238
    %v9263 = vpack.c.b16 %v7247, %v7239
    %v9264 = vpack.c.b16 %v7248, %v7240
    %v9265 = vpack.c.b16 %v7257, %v7249
    %v9266 = vpack.c.b16 %v7258, %v7250
    %v9267 = vpack.c.b16 %v7259, %v7251
    %v9268 = vpack.c.b16 %v7260, %v7252
    %v9269 = vpack.c.b16 %v7261, %v7253
    %v9270 = vpack.c.b16 %v7262, %v7254
    %v9271 = vpack.c.b16 %v7263, %v7255
    %v9272 = vpack.c.b16 %v7264, %v7256
    %v9273 = vpack.c.b16 %v7273, %v7265
    %v9274 = vpack.c.b16 %v7274, %v7266
    %v9275 = vpack.c.b16 %v7275, %v7267
    %v9276 = vpack.c.b16 %v7276, %v7268
    %v9277 = vpack.c.b16 %v7277, %v7269
    %v9278 = vpack.c.b16 %v7278, %v7270
    %v9279 = vpack.c.b16 %v7279, %v7271
    %v9280 = vpack.c.b16 %v7280, %v7272
    %v9281 = vpack.c.b16 %v7289, %v7281
    %v9282 = vpack.c.b16 %v7290, %v7282
    %v9283 = vpack.c.b16 %v7291, %v7283
    %v9284 = vpack.c.b16 %v7292, %v7284
    %v9285 = vpack.c.b16 %v7293, %v7285
    %v9286 = vpack.c.b16 %v7294, %v7286
    %v9287 = vpack.c.b16 %v7295, %v7287
    %v9288 = vpack.c.b16 %v7296, %v7288
    %v9289 = vpack.c.b16 %v7305, %v7297
    %v9290 = vpack.c.b16 %v7306, %v7298
    %v9291 = vpack.c.b16 %v7307, %v7299
    %v9292 = vpack.c.b16 %v7308, %v7300
    %v9293 = vpack.c.b16 %v7309, %v7301
    %v9294 = vpack.c.b16 %v7310, %v7302
    %v9295 = vpack.c.b16 %v7311, %v7303
    %v9296 = vpack.c.b16 %v7312, %v7304
    %v9297 = vpack.c.b16 %v7321, %v7313
    %v9298 = vpack.c.b16 %v7322, %v7314
    %v9299 = vpack.c.b16 %v7323, %v7315
    %v9300 = vpack.c.b16 %v7324, %v7316
    %v9301 = vpack.c.b16 %v7325, %v7317
    %v9302 = vpack.c.b16 %v7326, %v7318
    %v9303 = vpack.c.b16 %v7327, %v7319
    %v9304 = vpack.c.b16 %v7328, %v7320
    %v9305 = vpack.c.b16 %v7337, %v7329
    %v9306 = vpack.c.b16 %v7338, %v7330
    %v9307 = vpack.c.b16 %v7339, %v7331
    %v9308 = vpack.c.b16 %v7340, %v7332
    %v9309 = vpack.c.b16 %v7341, %v7333
    %v9310 = vpack.c.b16 %v7342, %v7334
    %v9311 = vpack.c.b16 %v7343, %v7335
    %v9312 = vpack.c.b16 %v7344, %v7336
    %v9313 = vpack.c.b16 %v7353, %v7345
    %v9314 = vpack.c.b16 %v7354, %v7346
    %v9315 = vpack.c.b16 %v7355, %v7347
    %v9316 = vpack.c.b16 %v7356, %v7348
    %v9317 = vpack.c.b16 %v7357, %v7349
    %v9318 = vpack.c.b16 %v7358, %v7350
    %v9319 = vpack.c.b16 %v7359, %v7351
    %v9320 = vpack.c.b16 %v7360, %v7352
    %v9321 = vpack.c.b16 %v7369, %v7361
    %v9322 = vpack.c.b16 %v7370, %v7362
    %v9323 = vpack.c.b16 %v7371, %v7363
    %v9324 = vpack.c.b16 %v7372, %v7364
    %v9325 = vpack.c.b16 %v7373, %v7365
    %v9326 = vpack.c.b16 %v7374, %v7366
    %v9327 = vpack.c.b16 %v7375, %v7367
    %v9328 = vpack.c.b16 %v7376, %v7368
    %v9329 = vpack.c.b16 %v7385, %v7377
    %v9330 = vpack.c.b16 %v7386, %v7378
    %v9331 = vpack.c.b16 %v7387, %v7379
    %v9332 = vpack.c.b16 %v7388, %v7380
    %v9333 = vpack.c.b16 %v7389, %v7381
    %v9334 = vpack.c.b16 %v7390, %v7382
    %v9335 = vpack.c.b16 %v7391, %v7383
    %v9336 = vpack.c.b16 %v7392, %v7384
    %v9337 = vpack.c.b16 %v7401, %v7393
    %v9338 = vpack.c.b16 %v7402, %v7394
    %v9339 = vpack.c.b16 %v7403, %v7395
    %v9340 = vpack.c.b16 %v7404, %v7396
    %v9341 = vpack.c.b16 %v7405, %v7397
    %v9342 = vpack.c.b16 %v7406, %v7398
    %v9343 = vpack.c.b16 %v7407, %v7399
    %v9344 = vpack.c.b16 %v7408, %v7400
    %v9345 = vpack.c.b16 %v7417, %v7409
    %v9346 = vpack.c.b16 %v7418, %v7410
    %v9347 = vpack.c.b16 %v7419, %v7411
    %v9348 = vpack.c.b16 %v7420, %v7412
    %v9349 = vpack.c.b16 %v7421, %v7413
    %v9350 = vpack.c.b16 %v7422, %v7414
    %v9351 = vpack.c.b16 %v7423, %v7415
    %v9352 = vpack.c.b16 %v7424, %v7416
    %v9353 = vpack.c.b16 %v7433, %v7425
    %v9354 = vpack.c.b16 %v7434, %v7426
    %v9355 = vpack.c.b16 %v7435, %v7427
    %v9356 = vpack.c.b16 %v7436, %v7428
    %v9357 = vpack.c.b16 %v7437, %v7429
    %v9358 = vpack.c.b16 %v7438, %v7430
    %v9359 = vpack.c.b16 %v7439, %v7431
    %v9360 = vpack.c.b16 %v7440, %v7432
    %v9361 = vpack.c.b16 %v7449, %v7441
    %v9362 = vpack.c.b16 %v7450, %v7442
    %v9363 = vpack.c.b16 %v7451, %v7443
    %v9364 = vpack.c.b16 %v7452, %v7444
    %v9365 = vpack.c.b16 %v7453, %v7445
    %v9366 = vpack.c.b16 %v7454, %v7446
    %v9367 = vpack.c.b16 %v7455, %v7447
    %v9368 = vpack.c.b16 %v7456, %v7448
    %v9369 = vpack.c.b16 %v7465, %v7457
    %v9370 = vpack.c.b16 %v7466, %v7458
    %v9371 = vpack.c.b16 %v7467, %v7459
    %v9372 = vpack.c.b16 %v7468, %v7460
    %v9373 = vpack.c.b16 %v7469, %v7461
    %v9374 = vpack.c.b16 %v7470, %v7462
    %v9375 = vpack.c.b16 %v7471, %v7463
    %v9376 = vpack.c.b16 %v7472, %v7464
    %v9377 = vpack.c.b16 %v7481, %v7473
    %v9378 = vpack.c.b16 %v7482, %v7474
    %v9379 = vpack.c.b16 %v7483, %v7475
    %v9380 = vpack.c.b16 %v7484, %v7476
    %v9381 = vpack.c.b16 %v7485, %v7477
    %v9382 = vpack.c.b16 %v7486, %v7478
    %v9383 = vpack.c.b16 %v7487, %v7479
    %v9384 = vpack.c.b16 %v7488, %v7480
    %v9385 = vpack.c.b16 %v7497, %v7489
    %v9386 = vpack.c.b16 %v7498, %v7490
    %v9387 = vpack.c.b16 %v7499, %v7491
    %v9388 = vpack.c.b16 %v7500, %v7492
    %v9389 = vpack.c.b16 %v7501, %v7493
    %v9390 = vpack.c.b16 %v7502, %v7494
    %v9391 = vpack.c.b16 %v7503, %v7495
    %v9392 = vpack.c.b16 %v7504, %v7496
    %v9393 = vpack.c.b16 %v7513, %v7505
    %v9394 = vpack.c.b16 %v7514, %v7506
    %v9395 = vpack.c.b16 %v7515, %v7507
    %v9396 = vpack.c.b16 %v7516, %v7508
    %v9397 = vpack.c.b16 %v7517, %v7509
    %v9398 = vpack.c.b16 %v7518, %v7510
    %v9399 = vpack.c.b16 %v7519, %v7511
    %v9400 = vpack.c.b16 %v7520, %v7512
    %v9401 = vpack.c.b16 %v7529, %v7521
    %v9402 = vpack.c.b16 %v7530, %v7522
    %v9403 = vpack.c.b16 %v7531, %v7523
    %v9404 = vpack.c.b16 %v7532, %v7524
    %v9405 = vpack.c.b16 %v7533, %v7525
    %v9406 = vpack.c.b16 %v7534, %v7526
    %v9407 = vpack.c.b16 %v7535, %v7527
    %v9408 = vpack.c.b16 %v7536, %v7528
    %v9409 = vpack.c.b16 %v7545, %v7537
    %v9410 = vpack.c.b16 %v7546, %v7538
    %v9411 = vpack.c.b16 %v7547, %v7539
    %v9412 = vpack.c.b16 %v7548, %v7540
    %v9413 = vpack.c.b16 %v7549, %v7541
    %v9414 = vpack.c.b16 %v7550, %v7542
    %v9415 = vpack.c.b16 %v7551, %v7543
    %v9416 = vpack.c.b16 %v7552, %v7544
    %v9417 = vpack.c.b16 %v7561, %v7553
    %v9418 = vpack.c.b16 %v7562, %v7554
    %v9419 = vpack.c.b16 %v7563, %v7555
    %v9420 = vpack.c.b16 %v7564, %v7556
    %v9421 = vpack.c.b16 %v7565, %v7557
    %v9422 = vpack.c.b16 %v7566, %v7558
    %v9423 = vpack.c.b16 %v7567, %v7559
    %v9424 = vpack.c.b16 %v7568, %v7560
    %v9425 = vpack.c.b16 %v7577, %v7569
    %v9426 = vpack.c.b16 %v7578, %v7570
    %v9427 = vpack.c.b16 %v7579, %v7571
    %v9428 = vpack.c.b16 %v7580, %v7572
    %v9429 = vpack.c.b16 %v7581, %v7573
    %v9430 = vpack.c.b16 %v7582, %v7574
    %v9431 = vpack.c.b16 %v7583, %v7575
    %v9432 = vpack.c.b16 %v7584, %v7576
    %v9433 = vpack.c.b16 %v7593, %v7585
    %v9434 = vpack.c.b16 %v7594, %v7586
    %v9435 = vpack.c.b16 %v7595, %v7587
    %v9436 = vpack.c.b16 %v7596, %v7588
    %v9437 = vpack.c.b16 %v7597, %v7589
    %v9438 = vpack.c.b16 %v7598, %v7590
    %v9439 = vpack.c.b16 %v7599, %v7591
    %v9440 = vpack.c.b16 %v7600, %v7592
    %v9441 = vpack.c.b16 %v7609, %v7601
    %v9442 = vpack.c.b16 %v7610, %v7602
    %v9443 = vpack.c.b16 %v7611, %v7603
    %v9444 = vpack.c.b16 %v7612, %v7604
    %v9445 = vpack.c.b16 %v7613, %v7605
    %v9446 = vpack.c.b16 %v7614, %v7606
    %v9447 = vpack.c.b16 %v7615, %v7607
    %v9448 = vpack.c.b16 %v7616, %v7608
    %v9449 = vpack.c.b16 %v7625, %v7617
    %v9450 = vpack.c.b16 %v7626, %v7618
    %v9451 = vpack.c.b16 %v7627, %v7619
    %v9452 = vpack.c.b16 %v7628, %v7620
    %v9453 = vpack.c.b16 %v7629, %v7621
    %v9454 = vpack.c.b16 %v7630, %v7622
    %v9455 = vpack.c.b16 %v7631, %v7623
    %v9456 = vpack.c.b16 %v7632, %v7624
    %v9457 = vpack.c.b16 %v7641, %v7633
    %v9458 = vpack.c.b16 %v7642, %v7634
    %v9459 = vpack.c.b16 %v7643, %v7635
    %v9460 = vpack.c.b16 %v7644, %v7636
    %v9461 = vpack.c.b16 %v7645, %v7637
    %v9462 = vpack.c.b16 %v7646, %v7638
    %v9463 = vpack.c.b16 %v7647, %v7639
    %v9464 = vpack.c.b16 %v7648, %v7640
    %v9465 = vpack.c.b16 %v7657, %v7649
    %v9466 = vpack.c.b16 %v7658, %v7650
    %v9467 = vpack.c.b16 %v7659, %v7651
    %v9468 = vpack.c.b16 %v7660, %v7652
    %v9469 = vpack.c.b16 %v7661, %v7653
    %v9470 = vpack.c.b16 %v7662, %v7654
    %v9471 = vpack.c.b16 %v7663, %v7655
    %v9472 = vpack.c.b16 %v7664, %v7656
    %v9473 = vpack.c.b16 %v7673, %v7665
    %v9474 = vpack.c.b16 %v7674, %v7666
    %v9475 = vpack.c.b16 %v7675, %v7667
    %v9476 = vpack.c.b16 %v7676, %v7668
    %v9477 = vpack.c.b16 %v7677, %v7669
    %v9478 = vpack.c.b16 %v7678, %v7670
    %v9479 = vpack.c.b16 %v7679, %v7671
    %v9480 = vpack.c.b16 %v7680, %v7672
    %v9481 = vpack.c.b16 %v7689, %v7681
    %v9482 = vpack.c.b16 %v7690, %v7682
    %v9483 = vpack.c.b16 %v7691, %v7683
    %v9484 = vpack.c.b16 %v7692, %v7684
    %v9485 = vpack.c.b16 %v7693, %v7685
    %v9486 = vpack.c.b16 %v7694, %v7686
    %v9487 = vpack.c.b16 %v7695, %v7687
    %v9488 = vpack.c.b16 %v7696, %v7688
    %v9489 = vpack.c.b16 %v7705, %v7697
    %v9490 = vpack.c.b16 %v7706, %v7698
    %v9491 = vpack.c.b16 %v7707, %v7699
    %v9492 = vpack.c.b16 %v7708, %v7700
    %v9493 = vpack.c.b16 %v7709, %v7701
    %v9494 = vpack.c.b16 %v7710, %v7702
    %v9495 = vpack.c.b16 %v7711, %v7703
    %v9496 = vpack.c.b16 %v7712, %v7704
    %v9497 = vpack.c.b16 %v7721, %v7713
    %v9498 = vpack.c.b16 %v7722, %v7714
    %v9499 = vpack.c.b16 %v7723, %v7715
    %v9500 = vpack.c.b16 %v7724, %v7716
    %v9501 = vpack.c.b16 %v7725, %v7717
    %v9502 = vpack.c.b16 %v7726, %v7718
    %v9503 = vpack.c.b16 %v7727, %v7719
    %v9504 = vpack.c.b16 %v7728, %v7720
    %v9505 = vpack.c.b16 %v7737, %v7729
    %v9506 = vpack.c.b16 %v7738, %v7730
    %v9507 = vpack.c.b16 %v7739, %v7731
    %v9508 = vpack.c.b16 %v7740, %v7732
    %v9509 = vpack.c.b16 %v7741, %v7733
    %v9510 = vpack.c.b16 %v7742, %v7734
    %v9511 = vpack.c.b16 %v7743, %v7735
    %v9512 = vpack.c.b16 %v7744, %v7736
    %v9513 = vpack.c.b16 %v7753, %v7745
    %v9514 = vpack.c.b16 %v7754, %v7746
    %v9515 = vpack.c.b16 %v7755, %v7747
    %v9516 = vpack.c.b16 %v7756, %v7748
    %v9517 = vpack.c.b16 %v7757, %v7749
    %v9518 = vpack.c.b16 %v7758, %v7750
    %v9519 = vpack.c.b16 %v7759, %v7751
    %v9520 = vpack.c.b16 %v7760, %v7752
    %v9521 = vpack.c.b16 %v7769, %v7761
    %v9522 = vpack.c.b16 %v7770, %v7762
    %v9523 = vpack.c.b16 %v7771, %v7763
    %v9524 = vpack.c.b16 %v7772, %v7764
    %v9525 = vpack.c.b16 %v7773, %v7765
    %v9526 = vpack.c.b16 %v7774, %v7766
    %v9527 = vpack.c.b16 %v7775, %v7767
    %v9528 = vpack.c.b16 %v7776, %v7768
    %v9529 = vpack.c.b16 %v7785, %v7777
    %v9530 = vpack.c.b16 %v7786, %v7778
    %v9531 = vpack.c.b16 %v7787, %v7779
    %v9532 = vpack.c.b16 %v7788, %v7780
    %v9533 = vpack.c.b16 %v7789, %v7781
    %v9534 = vpack.c.b16 %v7790, %v7782
    %v9535 = vpack.c.b16 %v7791, %v7783
    %v9536 = vpack.c.b16 %v7792, %v7784
    %v9537 = vpack.c.b16 %v7801, %v7793
    %v9538 = vpack.c.b16 %v7802, %v7794
    %v9539 = vpack.c.b16 %v7803, %v7795
    %v9540 = vpack.c.b16 %v7804, %v7796
    %v9541 = vpack.c.b16 %v7805, %v7797
    %v9542 = vpack.c.b16 %v7806, %v7798
    %v9543 = vpack.c.b16 %v7807, %v7799
    %v9544 = vpack.c.b16 %v7808, %v7800
    %v9545 = vpack.c.b16 %v7817, %v7809
    %v9546 = vpack.c.b16 %v7818, %v7810
    %v9547 = vpack.c.b16 %v7819, %v7811
    %v9548 = vpack.c.b16 %v7820, %v7812
    %v9549 = vpack.c.b16 %v7821, %v7813
    %v9550 = vpack.c.b16 %v7822, %v7814
    %v9551 = vpack.c.b16 %v7823, %v7815
    %v9552 = vpack.c.b16 %v7824, %v7816
    %v9553 = vpack.c.b16 %v7833, %v7825
    %v9554 = vpack.c.b16 %v7834, %v7826
    %v9555 = vpack.c.b16 %v7835, %v7827
    %v9556 = vpack.c.b16 %v7836, %v7828
    %v9557 = vpack.c.b16 %v7837, %v7829
    %v9558 = vpack.c.b16 %v7838, %v7830
    %v9559 = vpack.c.b16 %v7839, %v7831
    %v9560 = vpack.c.b16 %v7840, %v7832
    %v9561 = vpack.c.b16 %v7849, %v7841
    %v9562 = vpack.c.b16 %v7850, %v7842
    %v9563 = vpack.c.b16 %v7851, %v7843
    %v9564 = vpack.c.b16 %v7852, %v7844
    %v9565 = vpack.c.b16 %v7853, %v7845
    %v9566 = vpack.c.b16 %v7854, %v7846
    %v9567 = vpack.c.b16 %v7855, %v7847
    %v9568 = vpack.c.b16 %v7856, %v7848
    %v9569 = vpack.c.b16 %v7865, %v7857
    %v9570 = vpack.c.b16 %v7866, %v7858
    %v9571 = vpack.c.b16 %v7867, %v7859
    %v9572 = vpack.c.b16 %v7868, %v7860
    %v9573 = vpack.c.b16 %v7869, %v7861
    %v9574 = vpack.c.b16 %v7870, %v7862
    %v9575 = vpack.c.b16 %v7871, %v7863
    %v9576 = vpack.c.b16 %v7872, %v7864
    %v9577 = vpack.c.b16 %v7881, %v7873
    %v9578 = vpack.c.b16 %v7882, %v7874
    %v9579 = vpack.c.b16 %v7883, %v7875
    %v9580 = vpack.c.b16 %v7884, %v7876
    %v9581 = vpack.c.b16 %v7885, %v7877
    %v9582 = vpack.c.b16 %v7886, %v7878
    %v9583 = vpack.c.b16 %v7887, %v7879
    %v9584 = vpack.c.b16 %v7888, %v7880
    %v9585 = vpack.c.b16 %v7897, %v7889
    %v9586 = vpack.c.b16 %v7898, %v7890
    %v9587 = vpack.c.b16 %v7899, %v7891
    %v9588 = vpack.c.b16 %v7900, %v7892
    %v9589 = vpack.c.b16 %v7901, %v7893
    %v9590 = vpack.c.b16 %v7902, %v7894
    %v9591 = vpack.c.b16 %v7903, %v7895
    %v9592 = vpack.c.b16 %v7904, %v7896
    %v9593 = vpack.c.b16 %v7913, %v7905
    %v9594 = vpack.c.b16 %v7914, %v7906
    %v9595 = vpack.c.b16 %v7915, %v7907
    %v9596 = vpack.c.b16 %v7916, %v7908
    %v9597 = vpack.c.b16 %v7917, %v7909
    %v9598 = vpack.c.b16 %v7918, %v7910
    %v9599 = vpack.c.b16 %v7919, %v7911
    %v9600 = vpack.c.b16 %v7920, %v7912
    %v9601 = vpack.c.b16 %v7929, %v7921
    %v9602 = vpack.c.b16 %v7930, %v7922
    %v9603 = vpack.c.b16 %v7931, %v7923
    %v9604 = vpack.c.b16 %v7932, %v7924
    %v9605 = vpack.c.b16 %v7933, %v7925
    %v9606 = vpack.c.b16 %v7934, %v7926
    %v9607 = vpack.c.b16 %v7935, %v7927
    %v9608 = vpack.c.b16 %v7936, %v7928
    %v9609 = vpack.c.b16 %v7945, %v7937
    %v9610 = vpack.c.b16 %v7946, %v7938
    %v9611 = vpack.c.b16 %v7947, %v7939
    %v9612 = vpack.c.b16 %v7948, %v7940
    %v9613 = vpack.c.b16 %v7949, %v7941
    %v9614 = vpack.c.b16 %v7950, %v7942
    %v9615 = vpack.c.b16 %v7951, %v7943
    %v9616 = vpack.c.b16 %v7952, %v7944
    %v9617 = vpack.c.b16 %v7961, %v7953
    %v9618 = vpack.c.b16 %v7962, %v7954
    %v9619 = vpack.c.b16 %v7963, %v7955
    %v9620 = vpack.c.b16 %v7964, %v7956
    %v9621 = vpack.c.b16 %v7965, %v7957
    %v9622 = vpack.c.b16 %v7966, %v7958
    %v9623 = vpack.c.b16 %v7967, %v7959
    %v9624 = vpack.c.b16 %v7968, %v7960
    %v9625 = vpack.c.b16 %v7977, %v7969
    %v9626 = vpack.c.b16 %v7978, %v7970
    %v9627 = vpack.c.b16 %v7979, %v7971
    %v9628 = vpack.c.b16 %v7980, %v7972
    %v9629 = vpack.c.b16 %v7981, %v7973
    %v9630 = vpack.c.b16 %v7982, %v7974
    %v9631 = vpack.c.b16 %v7983, %v7975
    %v9632 = vpack.c.b16 %v7984, %v7976
    %v9633 = vpack.c.b16 %v7993, %v7985
    %v9634 = vpack.c.b16 %v7994, %v7986
    %v9635 = vpack.c.b16 %v7995, %v7987
    %v9636 = vpack.c.b16 %v7996, %v7988
    %v9637 = vpack.c.b16 %v7997, %v7989
    %v9638 = vpack.c.b16 %v7998, %v7990
    %v9639 = vpack.c.b16 %v7999, %v7991
    %v9640 = vpack.c.b16 %v8000, %v7992
    %v9641 = vpack.c.b16 %v8009, %v8001
    %v9642 = vpack.c.b16 %v8010, %v8002
    %v9643 = vpack.c.b16 %v8011, %v8003
    %v9644 = vpack.c.b16 %v8012, %v8004
    %v9645 = vpack.c.b16 %v8013, %v8005
    %v9646 = vpack.c.b16 %v8014, %v8006
    %v9647 = vpack.c.b16 %v8015, %v8007
    %v9648 = vpack.c.b16 %v8016, %v8008
    %v9649 = vpack.c.b16 %v8025, %v8017
    %v9650 = vpack.c.b16 %v8026, %v8018
    %v9651 = vpack.c.b16 %v8027, %v8019
    %v9652 = vpack.c.b16 %v8028, %v8020
    %v9653 = vpack.c.b16 %v8029, %v8021
    %v9654 = vpack.c.b16 %v8030, %v8022
    %v9655 = vpack.c.b16 %v8031, %v8023
    %v9656 = vpack.c.b16 %v8032, %v8024
    %v9657 = vpack.c.b16 %v8041, %v8033
    %v9658 = vpack.c.b16 %v8042, %v8034
    %v9659 = vpack.c.b16 %v8043, %v8035
    %v9660 = vpack.c.b16 %v8044, %v8036
    %v9661 = vpack.c.b16 %v8045, %v8037
    %v9662 = vpack.c.b16 %v8046, %v8038
    %v9663 = vpack.c.b16 %v8047, %v8039
    %v9664 = vpack.c.b16 %v8048, %v8040
    %v9665 = vpack.c.b16 %v8057, %v8049
    %v9666 = vpack.c.b16 %v8058, %v8050
    %v9667 = vpack.c.b16 %v8059, %v8051
    %v9668 = vpack.c.b16 %v8060, %v8052
    %v9669 = vpack.c.b16 %v8061, %v8053
    %v9670 = vpack.c.b16 %v8062, %v8054
    %v9671 = vpack.c.b16 %v8063, %v8055
    %v9672 = vpack.c.b16 %v8064, %v8056
    %v9673 = vpack.c.b16 %v8073, %v8065
    %v9674 = vpack.c.b16 %v8074, %v8066
    %v9675 = vpack.c.b16 %v8075, %v8067
    %v9676 = vpack.c.b16 %v8076, %v8068
    %v9677 = vpack.c.b16 %v8077, %v8069
    %v9678 = vpack.c.b16 %v8078, %v8070
    %v9679 = vpack.c.b16 %v8079, %v8071
    %v9680 = vpack.c.b16 %v8080, %v8072
    %v9681 = vpack.c.b16 %v8089, %v8081
    %v9682 = vpack.c.b16 %v8090, %v8082
    %v9683 = vpack.c.b16 %v8091, %v8083
    %v9684 = vpack.c.b16 %v8092, %v8084
    %v9685 = vpack.c.b16 %v8093, %v8085
    %v9686 = vpack.c.b16 %v8094, %v8086
    %v9687 = vpack.c.b16 %v8095, %v8087
    %v9688 = vpack.c.b16 %v8096, %v8088
    %v9689 = vpack.c.b16 %v8105, %v8097
    %v9690 = vpack.c.b16 %v8106, %v8098
    %v9691 = vpack.c.b16 %v8107, %v8099
    %v9692 = vpack.c.b16 %v8108, %v8100
    %v9693 = vpack.c.b16 %v8109, %v8101
    %v9694 = vpack.c.b16 %v8110, %v8102
    %v9695 = vpack.c.b16 %v8111, %v8103
    %v9696 = vpack.c.b16 %v8112, %v8104
    %v9697 = vpack.c.b16 %v8121, %v8113
    %v9698 = vpack.c.b16 %v8122, %v8114
    %v9699 = vpack.c.b16 %v8123, %v8115
    %v9700 = vpack.c.b16 %v8124, %v8116
    %v9701 = vpack.c.b16 %v8125, %v8117
    %v9702 = vpack.c.b16 %v8126, %v8118
    %v9703 = vpack.c.b16 %v8127, %v8119
    %v9704 = vpack.c.b16 %v8128, %v8120
    %v9705 = vpack.c.b16 %v8137, %v8129
    %v9706 = vpack.c.b16 %v8138, %v8130
    %v9707 = vpack.c.b16 %v8139, %v8131
    %v9708 = vpack.c.b16 %v8140, %v8132
    %v9709 = vpack.c.b16 %v8141, %v8133
    %v9710 = vpack.c.b16 %v8142, %v8134
    %v9711 = vpack.c.b16 %v8143, %v8135
    %v9712 = vpack.c.b16 %v8144, %v8136
    %v9713 = vpack.c.b16 %v8153, %v8145
    %v9714 = vpack.c.b16 %v8154, %v8146
    %v9715 = vpack.c.b16 %v8155, %v8147
    %v9716 = vpack.c.b16 %v8156, %v8148
    %v9717 = vpack.c.b16 %v8157, %v8149
    %v9718 = vpack.c.b16 %v8158, %v8150
    %v9719 = vpack.c.b16 %v8159, %v8151
    %v9720 = vpack.c.b16 %v8160, %v8152
    %v9721 = vpack.c.b16 %v8169, %v8161
    %v9722 = vpack.c.b16 %v8170, %v8162
    %v9723 = vpack.c.b16 %v8171, %v8163
    %v9724 = vpack.c.b16 %v8172, %v8164
    %v9725 = vpack.c.b16 %v8173, %v8165
    %v9726 = vpack.c.b16 %v8174, %v8166
    %v9727 = vpack.c.b16 %v8175, %v8167
    %v9728 = vpack.c.b16 %v8176, %v8168
    %v9729 = vpack.c.b16 %v8185, %v8177
    %v9730 = vpack.c.b16 %v8186, %v8178
    %v9731 = vpack.c.b16 %v8187, %v8179
    %v9732 = vpack.c.b16 %v8188, %v8180
    %v9733 = vpack.c.b16 %v8189, %v8181
    %v9734 = vpack.c.b16 %v8190, %v8182
    %v9735 = vpack.c.b16 %v8191, %v8183
    %v9736 = vpack.c.b16 %v8192, %v8184
    %v9737 = vpack.c.b16 %v8201, %v8193
    %v9738 = vpack.c.b16 %v8202, %v8194
    %v9739 = vpack.c.b16 %v8203, %v8195
    %v9740 = vpack.c.b16 %v8204, %v8196
    %v9741 = vpack.c.b16 %v8205, %v8197
    %v9742 = vpack.c.b16 %v8206, %v8198
    %v9743 = vpack.c.b16 %v8207, %v8199
    %v9744 = vpack.c.b16 %v8208, %v8200
    %v9745 = vpack.c.b16 %v8217, %v8209
    %v9746 = vpack.c.b16 %v8218, %v8210
    %v9747 = vpack.c.b16 %v8219, %v8211
    %v9748 = vpack.c.b16 %v8220, %v8212
    %v9749 = vpack.c.b16 %v8221, %v8213
    %v9750 = vpack.c.b16 %v8222, %v8214
    %v9751 = vpack.c.b16 %v8223, %v8215
    %v9752 = vpack.c.b16 %v8224, %v8216
    %v9753 = vpack.c.b16 %v8233, %v8225
    %v9754 = vpack.c.b16 %v8234, %v8226
    %v9755 = vpack.c.b16 %v8235, %v8227
    %v9756 = vpack.c.b16 %v8236, %v8228
    %v9757 = vpack.c.b16 %v8237, %v8229
    %v9758 = vpack.c.b16 %v8238, %v8230
    %v9759 = vpack.c.b16 %v8239, %v8231
    %v9760 = vpack.c.b16 %v8240, %v8232
    %v9761 = vpack.c.b16 %v8249, %v8241
    %v9762 = vpack.c.b16 %v8250, %v8242
    %v9763 = vpack.c.b16 %v8251, %v8243
    %v9764 = vpack.c.b16 %v8252, %v8244
    %v9765 = vpack.c.b16 %v8253, %v8245
    %v9766 = vpack.c.b16 %v8254, %v8246
    %v9767 = vpack.c.b16 %v8255, %v8247
    %v9768 = vpack.c.b16 %v8256, %v8248
    %v9769 = vpack.c.b16 %v8265, %v8257
    %v9770 = vpack.c.b16 %v8266, %v8258
    %v9771 = vpack.c.b16 %v8267, %v8259
    %v9772 = vpack.c.b16 %v8268, %v8260
    %v9773 = vpack.c.b16 %v8269, %v8261
    %v9774 = vpack.c.b16 %v8270, %v8262
    %v9775 = vpack.c.b16 %v8271, %v8263
    %v9776 = vpack.c.b16 %v8272, %v8264
    %v9777 = vpack.c.b16 %v8281, %v8273
    %v9778 = vpack.c.b16 %v8282, %v8274
    %v9779 = vpack.c.b16 %v8283, %v8275
    %v9780 = vpack.c.b16 %v8284, %v8276
    %v9781 = vpack.c.b16 %v8285, %v8277
    %v9782 = vpack.c.b16 %v8286, %v8278
    %v9783 = vpack.c.b16 %v8287, %v8279
    %v9784 = vpack.c.b16 %v8288, %v8280
    %v9785 = vpack.c.b16 %v8297, %v8289
    %v9786 = vpack.c.b16 %v8298, %v8290
    %v9787 = vpack.c.b16 %v8299, %v8291
    %v9788 = vpack.c.b16 %v8300, %v8292
    %v9789 = vpack.c.b16 %v8301, %v8293
    %v9790 = vpack.c.b16 %v8302, %v8294
    %v9791 = vpack.c.b16 %v8303, %v8295
    %v9792 = vpack.c.b16 %v8304, %v8296
    %v9793 = vpack.c.b16 %v8313, %v8305
    %v9794 = vpack.c.b16 %v8314, %v8306
    %v9795 = vpack.c.b16 %v8315, %v8307
    %v9796 = vpack.c.b16 %v8316, %v8308
    %v9797 = vpack.c.b16 %v8317, %v8309
    %v9798 = vpack.c.b16 %v8318, %v8310
    %v9799 = vpack.c.b16 %v8319, %v8311
    %v9800 = vpack.c.b16 %v8320, %v8312
    %v9801 = vpack.c.b16 %v8329, %v8321
    %v9802 = vpack.c.b16 %v8330, %v8322
    %v9803 = vpack.c.b16 %v8331, %v8323
    %v9804 = vpack.c.b16 %v8332, %v8324
    %v9805 = vpack.c.b16 %v8333, %v8325
    %v9806 = vpack.c.b16 %v8334, %v8326
    %v9807 = vpack.c.b16 %v8335, %v8327
    %v9808 = vpack.c.b16 %v8336, %v8328
    %v9809 = vpack.c.b16 %v8345, %v8337
    %v9810 = vpack.c.b16 %v8346, %v8338
    %v9811 = vpack.c.b16 %v8347, %v8339
    %v9812 = vpack.c.b16 %v8348, %v8340
    %v9813 = vpack.c.b16 %v8349, %v8341
    %v9814 = vpack.c.b16 %v8350, %v8342
    %v9815 = vpack.c.b16 %v8351, %v8343
    %v9816 = vpack.c.b16 %v8352, %v8344
    %v9817 = vpack.c.b16 %v8361, %v8353
    %v9818 = vpack.c.b16 %v8362, %v8354
    %v9819 = vpack.c.b16 %v8363, %v8355
    %v9820 = vpack.c.b16 %v8364, %v8356
    %v9821 = vpack.c.b16 %v8365, %v8357
    %v9822 = vpack.c.b16 %v8366, %v8358
    %v9823 = vpack.c.b16 %v8367, %v8359
    %v9824 = vpack.c.b16 %v8368, %v8360
    %v9825 = vpack.c.b16 %v8377, %v8369
    %v9826 = vpack.c.b16 %v8378, %v8370
    %v9827 = vpack.c.b16 %v8379, %v8371
    %v9828 = vpack.c.b16 %v8380, %v8372
    %v9829 = vpack.c.b16 %v8381, %v8373
    %v9830 = vpack.c.b16 %v8382, %v8374
    %v9831 = vpack.c.b16 %v8383, %v8375
    %v9832 = vpack.c.b16 %v8384, %v8376
    %v9833 = vpack.c.b16 %v8393, %v8385
    %v9834 = vpack.c.b16 %v8394, %v8386
    %v9835 = vpack.c.b16 %v8395, %v8387
    %v9836 = vpack.c.b16 %v8396, %v8388
    %v9837 = vpack.c.b16 %v8397, %v8389
    %v9838 = vpack.c.b16 %v8398, %v8390
    %v9839 = vpack.c.b16 %v8399, %v8391
    %v9840 = vpack.c.b16 %v8400, %v8392
    %v9841 = vpack.c.b16 %v8409, %v8401
    %v9842 = vpack.c.b16 %v8410, %v8402
    %v9843 = vpack.c.b16 %v8411, %v8403
    %v9844 = vpack.c.b16 %v8412, %v8404
    %v9845 = vpack.c.b16 %v8413, %v8405
    %v9846 = vpack.c.b16 %v8414, %v8406
    %v9847 = vpack.c.b16 %v8415, %v8407
    %v9848 = vpack.c.b16 %v8416, %v8408
    %v9849 = vpack.c.b16 %v8425, %v8417
    %v9850 = vpack.c.b16 %v8426, %v8418
    %v9851 = vpack.c.b16 %v8427, %v8419
    %v9852 = vpack.c.b16 %v8428, %v8420
    %v9853 = vpack.c.b16 %v8429, %v8421
    %v9854 = vpack.c.b16 %v8430, %v8422
    %v9855 = vpack.c.b16 %v8431, %v8423
    %v9856 = vpack.c.b16 %v8432, %v8424
    %v9857 = vpack.c.b16 %v8441, %v8433
    %v9858 = vpack.c.b16 %v8442, %v8434
    %v9859 = vpack.c.b16 %v8443, %v8435
    %v9860 = vpack.c.b16 %v8444, %v8436
    %v9861 = vpack.c.b16 %v8445, %v8437
    %v9862 = vpack.c.b16 %v8446, %v8438
    %v9863 = vpack.c.b16 %v8447, %v8439
    %v9864 = vpack.c.b16 %v8448, %v8440
    %v9865 = vpack.c.b16 %v8457, %v8449
    %v9866 = vpack.c.b16 %v8458, %v8450
    %v9867 = vpack.c.b16 %v8459, %v8451
    %v9868 = vpack.c.b16 %v8460, %v8452
    %v9869 = vpack.c.b16 %v8461, %v8453
    %v9870 = vpack.c.b16 %v8462, %v8454
    %v9871 = vpack.c.b16 %v8463, %v8455
    %v9872 = vpack.c.b16 %v8464, %v8456
    %v9873 = vpack.c.b16 %v8473, %v8465
    %v9874 = vpack.c.b16 %v8474, %v8466
    %v9875 = vpack.c.b16 %v8475, %v8467
    %v9876 = vpack.c.b16 %v8476, %v8468
    %v9877 = vpack.c.b16 %v8477, %v8469
    %v9878 = vpack.c.b16 %v8478, %v8470
    %v9879 = vpack.c.b16 %v8479, %v8471
    %v9880 = vpack.c.b16 %v8480, %v8472
    %v9881 = vpack.c.b16 %v8489, %v8481
    %v9882 = vpack.c.b16 %v8490, %v8482
    %v9883 = vpack.c.b16 %v8491, %v8483
    %v9884 = vpack.c.b16 %v8492, %v8484
    %v9885 = vpack.c.b16 %v8493, %v8485
    %v9886 = vpack.c.b16 %v8494, %v8486
    %v9887 = vpack.c.b16 %v8495, %v8487
    %v9888 = vpack.c.b16 %v8496, %v8488
    %v9889 = vpack.c.b16 %v8505, %v8497
    %v9890 = vpack.c.b16 %v8506, %v8498
    %v9891 = vpack.c.b16 %v8507, %v8499
    %v9892 = vpack.c.b16 %v8508, %v8500
    %v9893 = vpack.c.b16 %v8509, %v8501
    %v9894 = vpack.c.b16 %v8510, %v8502
    %v9895 = vpack.c.b16 %v8511, %v8503
    %v9896 = vpack.c.b16 %v8512, %v8504
    %v9897 = vpack.c.b16 %v8521, %v8513
    %v9898 = vpack.c.b16 %v8522, %v8514
    %v9899 = vpack.c.b16 %v8523, %v8515
    %v9900 = vpack.c.b16 %v8524, %v8516
    %v9901 = vpack.c.b16 %v8525, %v8517
    %v9902 = vpack.c.b16 %v8526, %v8518
    %v9903 = vpack.c.b16 %v8527, %v8519
    %v9904 = vpack.c.b16 %v8528, %v8520
    %v9905 = vpack.c.b16 %v8537, %v8529
    %v9906 = vpack.c.b16 %v8538, %v8530
    %v9907 = vpack.c.b16 %v8539, %v8531
    %v9908 = vpack.c.b16 %v8540, %v8532
    %v9909 = vpack.c.b16 %v8541, %v8533
    %v9910 = vpack.c.b16 %v8542, %v8534
    %v9911 = vpack.c.b16 %v8543, %v8535
    %v9912 = vpack.c.b16 %v8544, %v8536
    %v9913 = vpack.c.b16 %v8553, %v8545
    %v9914 = vpack.c.b16 %v8554, %v8546
    %v9915 = vpack.c.b16 %v8555, %v8547
    %v9916 = vpack.c.b16 %v8556, %v8548
    %v9917 = vpack.c.b16 %v8557, %v8549
    %v9918 = vpack.c.b16 %v8558, %v8550
    %v9919 = vpack.c.b16 %v8559, %v8551
    %v9920 = vpack.c.b16 %v8560, %v8552
    %v9921 = vpack.c.b16 %v8569, %v8561
    %v9922 = vpack.c.b16 %v8570, %v8562
    %v9923 = vpack.c.b16 %v8571, %v8563
    %v9924 = vpack.c.b16 %v8572, %v8564
    %v9925 = vpack.c.b16 %v8573, %v8565
    %v9926 = vpack.c.b16 %v8574, %v8566
    %v9927 = vpack.c.b16 %v8575, %v8567
    %v9928 = vpack.c.b16 %v8576, %v8568
    %v9929 = vpack.c.b16 %v8585, %v8577
    %v9930 = vpack.c.b16 %v8586, %v8578
    %v9931 = vpack.c.b16 %v8587, %v8579
    %v9932 = vpack.c.b16 %v8588, %v8580
    %v9933 = vpack.c.b16 %v8589, %v8581
    %v9934 = vpack.c.b16 %v8590, %v8582
    %v9935 = vpack.c.b16 %v8591, %v8583
    %v9936 = vpack.c.b16 %v8592, %v8584
    %v9937 = vpack.c.b16 %v8601, %v8593
    %v9938 = vpack.c.b16 %v8602, %v8594
    %v9939 = vpack.c.b16 %v8603, %v8595
    %v9940 = vpack.c.b16 %v8604, %v8596
    %v9941 = vpack.c.b16 %v8605, %v8597
    %v9942 = vpack.c.b16 %v8606, %v8598
    %v9943 = vpack.c.b16 %v8607, %v8599
    %v9944 = vpack.c.b16 %v8608, %v8600
    %v9945 = vpack.c.b16 %v8617, %v8609
    %v9946 = vpack.c.b16 %v8618, %v8610
    %v9947 = vpack.c.b16 %v8619, %v8611
    %v9948 = vpack.c.b16 %v8620, %v8612
    %v9949 = vpack.c.b16 %v8621, %v8613
    %v9950 = vpack.c.b16 %v8622, %v8614
    %v9951 = vpack.c.b16 %v8623, %v8615
    %v9952 = vpack.c.b16 %v8624, %v8616
    %v9953 = vpack.c.b16 %v8633, %v8625
    %v9954 = vpack.c.b16 %v8634, %v8626
    %v9955 = vpack.c.b16 %v8635, %v8627
    %v9956 = vpack.c.b16 %v8636, %v8628
    %v9957 = vpack.c.b16 %v8637, %v8629
    %v9958 = vpack.c.b16 %v8638, %v8630
    %v9959 = vpack.c.b16 %v8639, %v8631
    %v9960 = vpack.c.b16 %v8640, %v8632
    %v9961 = vpack.c.b16 %v8649, %v8641
    %v9962 = vpack.c.b16 %v8650, %v8642
    %v9963 = vpack.c.b16 %v8651, %v8643
    %v9964 = vpack.c.b16 %v8652, %v8644
    %v9965 = vpack.c.b16 %v8653, %v8645
    %v9966 = vpack.c.b16 %v8654, %v8646
    %v9967 = vpack.c.b16 %v8655, %v8647
    %v9968 = vpack.c.b16 %v8656, %v8648
    %v9969 = vpack.c.b16 %v8665, %v8657
    %v9970 = vpack.c.b16 %v8666, %v8658
    %v9971 = vpack.c.b16 %v8667, %v8659
    %v9972 = vpack.c.b16 %v8668, %v8660
    %v9973 = vpack.c.b16 %v8669, %v8661
    %v9974 = vpack.c.b16 %v8670, %v8662
    %v9975 = vpack.c.b16 %v8671, %v8663
    %v9976 = vpack.c.b16 %v8672, %v8664
    %v9977 = vpack.c.b16 %v8681, %v8673
    %v9978 = vpack.c.b16 %v8682, %v8674
    %v9979 = vpack.c.b16 %v8683, %v8675
    %v9980 = vpack.c.b16 %v8684, %v8676
    %v9981 = vpack.c.b16 %v8685, %v8677
    %v9982 = vpack.c.b16 %v8686, %v8678
    %v9983 = vpack.c.b16 %v8687, %v8679
    %v9984 = vpack.c.b16 %v8688, %v8680
    %v9985 = vpack.c.b16 %v8697, %v8689
    %v9986 = vpack.c.b16 %v8698, %v8690
    %v9987 = vpack.c.b16 %v8699, %v8691
    %v9988 = vpack.c.b16 %v8700, %v8692
    %v9989 = vpack.c.b16 %v8701, %v8693
    %v9990 = vpack.c.b16 %v8702, %v8694
    %v9991 = vpack.c.b16 %v8703, %v8695
    %v9992 = vpack.c.b16 %v8704, %v8696
    %v9993 = vpack.c.b16 %v8713, %v8705
    %v9994 = vpack.c.b16 %v8714, %v8706
    %v9995 = vpack.c.b16 %v8715, %v8707
    %v9996 = vpack.c.b16 %v8716, %v8708
    %v9997 = vpack.c.b16 %v8717, %v8709
    %v9998 = vpack.c.b16 %v8718, %v8710
    %v9999 = vpack.c.b16 %v8719, %v8711
    %v10000 = vpack.c.b16 %v8720, %v8712
    %v10001 = vpack.c.b16 %v8729, %v8721
    %v10002 = vpack.c.b16 %v8730, %v8722
    %v10003 = vpack.c.b16 %v8731, %v8723
    %v10004 = vpack.c.b16 %v8732, %v8724
    %v10005 = vpack.c.b16 %v8733, %v8725
    %v10006 = vpack.c.b16 %v8734, %v8726
    %v10007 = vpack.c.b16 %v8735, %v8727
    %v10008 = vpack.c.b16 %v8736, %v8728
    %v10009 = vpack.c.b16 %v8745, %v8737
    %v10010 = vpack.c.b16 %v8746, %v8738
    %v10011 = vpack.c.b16 %v8747, %v8739
    %v10012 = vpack.c.b16 %v8748, %v8740
    %v10013 = vpack.c.b16 %v8749, %v8741
    %v10014 = vpack.c.b16 %v8750, %v8742
    %v10015 = vpack.c.b16 %v8751, %v8743
    %v10016 = vpack.c.b16 %v8752, %v8744
    %v10017 = vpack.c.b16 %v8761, %v8753
    %v10018 = vpack.c.b16 %v8762, %v8754
    %v10019 = vpack.c.b16 %v8763, %v8755
    %v10020 = vpack.c.b16 %v8764, %v8756
    %v10021 = vpack.c.b16 %v8765, %v8757
    %v10022 = vpack.c.b16 %v8766, %v8758
    %v10023 = vpack.c.b16 %v8767, %v8759
    %v10024 = vpack.c.b16 %v8768, %v8760
    %v10025 = vpack.c.b16 %v8777, %v8769
    %v10026 = vpack.c.b16 %v8778, %v8770
    %v10027 = vpack.c.b16 %v8779, %v8771
    %v10028 = vpack.c.b16 %v8780, %v8772
    %v10029 = vpack.c.b16 %v8781, %v8773
    %v10030 = vpack.c.b16 %v8782, %v8774
    %v10031 = vpack.c.b16 %v8783, %v8775
    %v10032 = vpack.c.b16 %v8784, %v8776
    %v10033 = vpack.c.b16 %v8793, %v8785
    %v10034 = vpack.c.b16 %v8794, %v8786
    %v10035 = vpack.c.b16 %v8795, %v8787
    %v10036 = vpack.c.b16 %v8796, %v8788
    %v10037 = vpack.c.b16 %v8797, %v8789
    %v10038 = vpack.c.b16 %v8798, %v8790
    %v10039 = vpack.c.b16 %v8799, %v8791
    %v10040 = vpack.c.b16 %v8800, %v8792
    %v10041 = vpack.c.b16 %v8809, %v8801
    %v10042 = vpack.c.b16 %v8810, %v8802
    %v10043 = vpack.c.b16 %v8811, %v8803
    %v10044 = vpack.c.b16 %v8812, %v8804
    %v10045 = vpack.c.b16 %v8813, %v8805
    %v10046 = vpack.c.b16 %v8814, %v8806
    %v10047 = vpack.c.b16 %v8815, %v8807
    %v10048 = vpack.c.b16 %v8816, %v8808
    %v10049 = vpack.c.b16 %v8825, %v8817
    %v10050 = vpack.c.b16 %v8826, %v8818
    %v10051 = vpack.c.b16 %v8827, %v8819
    %v10052 = vpack.c.b16 %v8828, %v8820
    %v10053 = vpack.c.b16 %v8829, %v8821
    %v10054 = vpack.c.b16 %v8830, %v8822
    %v10055 = vpack.c.b16 %v8831, %v8823
    %v10056 = vpack.c.b16 %v8832, %v8824
    %v10057 = vpack.c.b16 %v8841, %v8833
    %v10058 = vpack.c.b16 %v8842, %v8834
    %v10059 = vpack.c.b16 %v8843, %v8835
    %v10060 = vpack.c.b16 %v8844, %v8836
    %v10061 = vpack.c.b16 %v8845, %v8837
    %v10062 = vpack.c.b16 %v8846, %v8838
    %v10063 = vpack.c.b16 %v8847, %v8839
    %v10064 = vpack.c.b16 %v8848, %v8840
    %v10065 = vpack.c.b16 %v8857, %v8849
    %v10066 = vpack.c.b16 %v8858, %v8850
    %v10067 = vpack.c.b16 %v8859, %v8851
    %v10068 = vpack.c.b16 %v8860, %v8852
    %v10069 = vpack.c.b16 %v8861, %v8853
    %v10070 = vpack.c.b16 %v8862, %v8854
    %v10071 = vpack.c.b16 %v8863, %v8855
    %v10072 = vpack.c.b16 %v8864, %v8856
    %v10073 = vpack.c.b16 %v8873, %v8865
    %v10074 = vpack.c.b16 %v8874, %v8866
    %v10075 = vpack.c.b16 %v8875, %v8867
    %v10076 = vpack.c.b16 %v8876, %v8868
    %v10077 = vpack.c.b16 %v8877, %v8869
    %v10078 = vpack.c.b16 %v8878, %v8870
    %v10079 = vpack.c.b16 %v8879, %v8871
    %v10080 = vpack.c.b16 %v8880, %v8872
    %v10081 = vpack.c.b16 %v8889, %v8881
    %v10082 = vpack.c.b16 %v8890, %v8882
    %v10083 = vpack.c.b16 %v8891, %v8883
    %v10084 = vpack.c.b16 %v8892, %v8884
    %v10085 = vpack.c.b16 %v8893, %v8885
    %v10086 = vpack.c.b16 %v8894, %v8886
    %v10087 = vpack.c.b16 %v8895, %v8887
    %v10088 = vpack.c.b16 %v8896, %v8888
    %v10089 = vpack.c.b16 %v8905, %v8897
    %v10090 = vpack.c.b16 %v8906, %v8898
    %v10091 = vpack.c.b16 %v8907, %v8899
    %v10092 = vpack.c.b16 %v8908, %v8900
    %v10093 = vpack.c.b16 %v8909, %v8901
    %v10094 = vpack.c.b16 %v8910, %v8902
    %v10095 = vpack.c.b16 %v8911, %v8903
    %v10096 = vpack.c.b16 %v8912, %v8904
    %v10097 = vpack.c.b16 %v8921, %v8913
    %v10098 = vpack.c.b16 %v8922, %v8914
    %v10099 = vpack.c.b16 %v8923, %v8915
    %v10100 = vpack.c.b16 %v8924, %v8916
    %v10101 = vpack.c.b16 %v8925, %v8917
    %v10102 = vpack.c.b16 %v8926, %v8918
    %v10103 = vpack.c.b16 %v8927, %v8919
    %v10104 = vpack.c.b16 %v8928, %v8920
    %v10105 = vpack.c.b16 %v8937, %v8929
    %v10106 = vpack.c.b16 %v8938, %v8930
    %v10107 = vpack.c.b16 %v8939, %v8931
    %v10108 = vpack.c.b16 %v8940, %v8932
    %v10109 = vpack.c.b16 %v8941, %v8933
    %v10110 = vpack.c.b16 %v8942, %v8934
    %v10111 = vpack.c.b16 %v8943, %v8935
    %v10112 = vpack.c.b16 %v8944, %v8936
    %v10113 = vpack.c.b16 %v8953, %v8945
    %v10114 = vpack.c.b16 %v8954, %v8946
    %v10115 = vpack.c.b16 %v8955, %v8947
    %v10116 = vpack.c.b16 %v8956, %v8948
    %v10117 = vpack.c.b16 %v8957, %v8949
    %v10118 = vpack.c.b16 %v8958, %v8950
    %v10119 = vpack.c.b16 %v8959, %v8951
    %v10120 = vpack.c.b16 %v8960, %v8952
    %v10121 = vpack.c.b16 %v8969, %v8961
    %v10122 = vpack.c.b16 %v8970, %v8962
    %v10123 = vpack.c.b16 %v8971, %v8963
    %v10124 = vpack.c.b16 %v8972, %v8964
    %v10125 = vpack.c.b16 %v8973, %v8965
    %v10126 = vpack.c.b16 %v8974, %v8966
    %v10127 = vpack.c.b16 %v8975, %v8967
    %v10128 = vpack.c.b16 %v8976, %v8968
    %v10129 = vpack.c.b16 %v8985, %v8977
    %v10130 = vpack.c.b16 %v8986, %v8978
    %v10131 = vpack.c.b16 %v8987, %v8979
    %v10132 = vpack.c.b16 %v8988, %v8980
    %v10133 = vpack.c.b16 %v8989, %v8981
    %v10134 = vpack.c.b16 %v8990, %v8982
    %v10135 = vpack.c.b16 %v8991, %v8983
    %v10136 = vpack.c.b16 %v8992, %v8984
    %v10137 = vpack.c.b16 %v9001, %v8993
    %v10138 = vpack.c.b16 %v9002, %v8994
    %v10139 = vpack.c.b16 %v9003, %v8995
    %v10140 = vpack.c.b16 %v9004, %v8996
    %v10141 = vpack.c.b16 %v9005, %v8997
    %v10142 = vpack.c.b16 %v9006, %v8998
    %v10143 = vpack.c.b16 %v9007, %v8999
    %v10144 = vpack.c.b16 %v9008, %v9000
    %v10145 = vpack.c.b16 %v9017, %v9009
    %v10146 = vpack.c.b16 %v9018, %v9010
    %v10147 = vpack.c.b16 %v9019, %v9011
    %v10148 = vpack.c.b16 %v9020, %v9012
    %v10149 = vpack.c.b16 %v9021, %v9013
    %v10150 = vpack.c.b16 %v9022, %v9014
    %v10151 = vpack.c.b16 %v9023, %v9015
    %v10152 = vpack.c.b16 %v9024, %v9016
    %v10153 = vpack.c.b16 %v9033, %v9025
    %v10154 = vpack.c.b16 %v9034, %v9026
    %v10155 = vpack.c.b16 %v9035, %v9027
    %v10156 = vpack.c.b16 %v9036, %v9028
    %v10157 = vpack.c.b16 %v9037, %v9029
    %v10158 = vpack.c.b16 %v9038, %v9030
    %v10159 = vpack.c.b16 %v9039, %v9031
    %v10160 = vpack.c.b16 %v9040, %v9032
    %v10161 = vpack.c.b16 %v9049, %v9041
    %v10162 = vpack.c.b16 %v9050, %v9042
    %v10163 = vpack.c.b16 %v9051, %v9043
    %v10164 = vpack.c.b16 %v9052, %v9044
    %v10165 = vpack.c.b16 %v9053, %v9045
    %v10166 = vpack.c.b16 %v9054, %v9046
    %v10167 = vpack.c.b16 %v9055, %v9047
    %v10168 = vpack.c.b16 %v9056, %v9048
    %v10169 = vpack.c.b16 %v9065, %v9057
    %v10170 = vpack.c.b16 %v9066, %v9058
    %v10171 = vpack.c.b16 %v9067, %v9059
    %v10172 = vpack.c.b16 %v9068, %v9060
    %v10173 = vpack.c.b16 %v9069, %v9061
    %v10174 = vpack.c.b16 %v9070, %v9062
    %v10175 = vpack.c.b16 %v9071, %v9063
    %v10176 = vpack.c.b16 %v9072, %v9064
    %v10177 = vpack.c.b16 %v9081, %v9073
    %v10178 = vpack.c.b16 %v9082, %v9074
    %v10179 = vpack.c.b16 %v9083, %v9075
    %v10180 = vpack.c.b16 %v9084, %v9076
    %v10181 = vpack.c.b16 %v9085, %v9077
    %v10182 = vpack.c.b16 %v9086, %v9078
    %v10183 = vpack.c.b16 %v9087, %v9079
    %v10184 = vpack.c.b16 %v9088, %v9080
    %v10185 = vpack.c.b16 %v9097, %v9089
    %v10186 = vpack.c.b16 %v9098, %v9090
    %v10187 = vpack.c.b16 %v9099, %v9091
    %v10188 = vpack.c.b16 %v9100, %v9092
    %v10189 = vpack.c.b16 %v9101, %v9093
    %v10190 = vpack.c.b16 %v9102, %v9094
    %v10191 = vpack.c.b16 %v9103, %v9095
    %v10192 = vpack.c.b16 %v9104, %v9096
    %v10193 = vpack.c.b16 %v9113, %v9105
    %v10194 = vpack.c.b16 %v9114, %v9106
    %v10195 = vpack.c.b16 %v9115, %v9107
    %v10196 = vpack.c.b16 %v9116, %v9108
    %v10197 = vpack.c.b16 %v9117, %v9109
    %v10198 = vpack.c.b16 %v9118, %v9110
    %v10199 = vpack.c.b16 %v9119, %v9111
    %v10200 = vpack.c.b16 %v9120, %v9112
    %v10201 = vpack.c.b16 %v9129, %v9121
    %v10202 = vpack.c.b16 %v9130, %v9122
    %v10203 = vpack.c.b16 %v9131, %v9123
    %v10204 = vpack.c.b16 %v9132, %v9124
    %v10205 = vpack.c.b16 %v9133, %v9125
    %v10206 = vpack.c.b16 %v9134, %v9126
    %v10207 = vpack.c.b16 %v9135, %v9127
    %v10208 = vpack.c.b16 %v9136, %v9128
    %v10209 = vpack.c.b16 %v9145, %v9137
    %v10210 = vpack.c.b16 %v9146, %v9138
    %v10211 = vpack.c.b16 %v9147, %v9139
    %v10212 = vpack.c.b16 %v9148, %v9140
    %v10213 = vpack.c.b16 %v9149, %v9141
    %v10214 = vpack.c.b16 %v9150, %v9142
    %v10215 = vpack.c.b16 %v9151, %v9143
    %v10216 = vpack.c.b16 %v9152, %v9144
    %v10217 = vpack.c.b16 %v9161, %v9153
    %v10218 = vpack.c.b16 %v9162, %v9154
    %v10219 = vpack.c.b16 %v9163, %v9155
    %v10220 = vpack.c.b16 %v9164, %v9156
    %v10221 = vpack.c.b16 %v9165, %v9157
    %v10222 = vpack.c.b16 %v9166, %v9158
    %v10223 = vpack.c.b16 %v9167, %v9159
    %v10224 = vpack.c.b16 %v9168, %v9160
    %v10225 = vpack.c.b16 %v9177, %v9169
    %v10226 = vpack.c.b16 %v9178, %v9170
    %v10227 = vpack.c.b16 %v9179, %v9171
    %v10228 = vpack.c.b16 %v9180, %v9172
    %v10229 = vpack.c.b16 %v9181, %v9173
    %v10230 = vpack.c.b16 %v9182, %v9174
    %v10231 = vpack.c.b16 %v9183, %v9175
    %v10232 = vpack.c.b16 %v9184, %v9176
    %v10233 = vpack.c.b16 %v9193, %v9185
    %v10234 = vpack.c.b16 %v9194, %v9186
    %v10235 = vpack.c.b16 %v9195, %v9187
    %v10236 = vpack.c.b16 %v9196, %v9188
    %v10237 = vpack.c.b16 %v9197, %v9189
    %v10238 = vpack.c.b16 %v9198, %v9190
    %v10239 = vpack.c.b16 %v9199, %v9191
    %v10240 = vpack.c.b16 %v9200, %v9192
    %v10241 = vpack.c.b16 %v9209, %v9201
    %v10242 = vpack.c.b16 %v9210, %v9202
    %v10243 = vpack.c.b16 %v9211, %v9203
    %v10244 = vpack.c.b16 %v9212, %v9204
    %v10245 = vpack.c.b16 %v9213, %v9205
    %v10246 = vpack.c.b16 %v9214, %v9206
    %v10247 = vpack.c.b16 %v9215, %v9207
    %v10248 = vpack.c.b16 %v9216, %v9208
    %v10249 = vpack.c.b16 %v9225, %v9217
    %v10250 = vpack.c.b16 %v9226, %v9218
    %v10251 = vpack.c.b16 %v9227, %v9219
    %v10252 = vpack.c.b16 %v9228, %v9220
    %v10253 = vpack.c.b16 %v9229, %v9221
    %v10254 = vpack.c.b16 %v9230, %v9222
    %v10255 = vpack.c.b16 %v9231, %v9223
    %v10256 = vpack.c.b16 %v9232, %v9224
    %11281 = vmatpush.bf16.msra.mxu0 %v9289
    %11282 = vmatpush.bf16.msra.mxu0 %v9281
    %11283 = vmatpush.bf16.msra.mxu0 %v9273
    %11284 = vmatpush.bf16.msra.mxu0 %v9265
    %11285 = vmatpush.bf16.msra.mxu0 %v9257
    %11286 = vmatpush.bf16.msra.mxu0 %v9249
    %11287 = vmatpush.bf16.msra.mxu0 %v9241
    %11288 = vmatpush.bf16.msra.mxu0 %v9233
    %11289 = vmatmul.bf16.gmra.mxu0 %v5103
    %v11290 = vpop.f32.mrf.mxu0
    %v11291 = vadd.f32 %v6145, %v11290
    %v11292 = vpop.f32.mrf.mxu0
    %11293 = vdwg.mxu0
    %11294 = vmatpush.bf16.msra.mxu0 %v9353
    %11295 = vmatpush.bf16.msra.mxu0 %v9345
    %11296 = vmatpush.bf16.msra.mxu0 %v9337
    %11297 = vmatpush.bf16.msra.mxu0 %v9329
    %11298 = vmatpush.bf16.msra.mxu0 %v9321
    %11299 = vmatpush.bf16.msra.mxu0 %v9313
    %11300 = vmatpush.bf16.msra.mxu0 %v9305
    %11301 = vmatpush.bf16.msra.mxu0 %v9297
    %11302 = vmatmul.bf16.gmra.mxu0 %v5104
    %v11303 = vpop.f32.mrf.mxu0
    %v11304 = vadd.f32 %v11291, %v11303
    %v11305 = vpop.f32.mrf.mxu0
    %11306 = vdwg.mxu0
    %11307 = vmatpush.bf16.msra.mxu0 %v9417
    %11308 = vmatpush.bf16.msra.mxu0 %v9409
    %11309 = vmatpush.bf16.msra.mxu0 %v9401
    %11310 = vmatpush.bf16.msra.mxu0 %v9393
    %11311 = vmatpush.bf16.msra.mxu0 %v9385
    %11312 = vmatpush.bf16.msra.mxu0 %v9377
    %11313 = vmatpush.bf16.msra.mxu0 %v9369
    %11314 = vmatpush.bf16.msra.mxu0 %v9361
    %11315 = vmatmul.bf16.gmra.mxu0 %v5105
    %v11316 = vpop.f32.mrf.mxu0
    %v11317 = vadd.f32 %v11304, %v11316
    %v11318 = vpop.f32.mrf.mxu0
    %11319 = vdwg.mxu0
    %11320 = vmatpush.bf16.msra.mxu0 %v9481
    %11321 = vmatpush.bf16.msra.mxu0 %v9473
    %11322 = vmatpush.bf16.msra.mxu0 %v9465
    %11323 = vmatpush.bf16.msra.mxu0 %v9457
    %11324 = vmatpush.bf16.msra.mxu0 %v9449
    %11325 = vmatpush.bf16.msra.mxu0 %v9441
    %11326 = vmatpush.bf16.msra.mxu0 %v9433
    %11327 = vmatpush.bf16.msra.mxu0 %v9425
    %11328 = vmatmul.bf16.gmra.mxu0 %v5106
    %v11329 = vpop.f32.mrf.mxu0
    %v11330 = vadd.f32 %v11317, %v11329
    %v11331 = vpop.f32.mrf.mxu0
    %11332 = vdwg.mxu0
    %11333 = vmatpush.bf16.msra.mxu0 %v9545
    %11334 = vmatpush.bf16.msra.mxu0 %v9537
    %11335 = vmatpush.bf16.msra.mxu0 %v9529
    %11336 = vmatpush.bf16.msra.mxu0 %v9521
    %11337 = vmatpush.bf16.msra.mxu0 %v9513
    %11338 = vmatpush.bf16.msra.mxu0 %v9505
    %11339 = vmatpush.bf16.msra.mxu0 %v9497
    %11340 = vmatpush.bf16.msra.mxu0 %v9489
    %11341 = vmatmul.bf16.gmra.mxu0 %v5107
    %v11342 = vpop.f32.mrf.mxu0
    %v11343 = vadd.f32 %v11330, %v11342
    %v11344 = vpop.f32.mrf.mxu0
    %11345 = vdwg.mxu0
    %11346 = vmatpush.bf16.msra.mxu0 %v9609
    %11347 = vmatpush.bf16.msra.mxu0 %v9601
    %11348 = vmatpush.bf16.msra.mxu0 %v9593
    %11349 = vmatpush.bf16.msra.mxu0 %v9585
    %11350 = vmatpush.bf16.msra.mxu0 %v9577
    %11351 = vmatpush.bf16.msra.mxu0 %v9569
    %11352 = vmatpush.bf16.msra.mxu0 %v9561
    %11353 = vmatpush.bf16.msra.mxu0 %v9553
    %11354 = vmatmul.bf16.gmra.mxu0 %v5108
    %v11355 = vpop.f32.mrf.mxu0
    %v11356 = vadd.f32 %v11343, %v11355
    %v11357 = vpop.f32.mrf.mxu0
    %11358 = vdwg.mxu0
    %11359 = vmatpush.bf16.msra.mxu0 %v9673
    %11360 = vmatpush.bf16.msra.mxu0 %v9665
    %11361 = vmatpush.bf16.msra.mxu0 %v9657
    %11362 = vmatpush.bf16.msra.mxu0 %v9649
    %11363 = vmatpush.bf16.msra.mxu0 %v9641
    %11364 = vmatpush.bf16.msra.mxu0 %v9633
    %11365 = vmatpush.bf16.msra.mxu0 %v9625
    %11366 = vmatpush.bf16.msra.mxu0 %v9617
    %11367 = vmatmul.bf16.gmra.mxu0 %v5109
    %v11368 = vpop.f32.mrf.mxu0
    %v11369 = vadd.f32 %v11356, %v11368
    %v11370 = vpop.f32.mrf.mxu0
    %11371 = vdwg.mxu0
    %11372 = vmatpush.bf16.msra.mxu0 %v9737
    %11373 = vmatpush.bf16.msra.mxu0 %v9729
    %11374 = vmatpush.bf16.msra.mxu0 %v9721
    %11375 = vmatpush.bf16.msra.mxu0 %v9713
    %11376 = vmatpush.bf16.msra.mxu0 %v9705
    %11377 = vmatpush.bf16.msra.mxu0 %v9697
    %11378 = vmatpush.bf16.msra.mxu0 %v9689
    %11379 = vmatpush.bf16.msra.mxu0 %v9681
    %11380 = vmatmul.bf16.gmra.mxu0 %v5110
    %v11381 = vpop.f32.mrf.mxu0
    %v11382 = vadd.f32 %v11369, %v11381
    %v11383 = vpop.f32.mrf.mxu0
    %11384 = vdwg.mxu0
    %11385 = vmatpush.bf16.msra.mxu0 %v9801
    %11386 = vmatpush.bf16.msra.mxu0 %v9793
    %11387 = vmatpush.bf16.msra.mxu0 %v9785
    %11388 = vmatpush.bf16.msra.mxu0 %v9777
    %11389 = vmatpush.bf16.msra.mxu0 %v9769
    %11390 = vmatpush.bf16.msra.mxu0 %v9761
    %11391 = vmatpush.bf16.msra.mxu0 %v9753
    %11392 = vmatpush.bf16.msra.mxu0 %v9745
    %11393 = vmatmul.bf16.gmra.mxu0 %v5111
    %v11394 = vpop.f32.mrf.mxu0
    %v11395 = vadd.f32 %v11382, %v11394
    %v11396 = vpop.f32.mrf.mxu0
    %11397 = vdwg.mxu0
    %11398 = vmatpush.bf16.msra.mxu0 %v9865
    %11399 = vmatpush.bf16.msra.mxu0 %v9857
    %11400 = vmatpush.bf16.msra.mxu0 %v9849
    %11401 = vmatpush.bf16.msra.mxu0 %v9841
    %11402 = vmatpush.bf16.msra.mxu0 %v9833
    %11403 = vmatpush.bf16.msra.mxu0 %v9825
    %11404 = vmatpush.bf16.msra.mxu0 %v9817
    %11405 = vmatpush.bf16.msra.mxu0 %v9809
    %11406 = vmatmul.bf16.gmra.mxu0 %v5112
    %v11407 = vpop.f32.mrf.mxu0
    %v11408 = vadd.f32 %v11395, %v11407
    %v11409 = vpop.f32.mrf.mxu0
    %11410 = vdwg.mxu0
    %11411 = vmatpush.bf16.msra.mxu0 %v9929
    %11412 = vmatpush.bf16.msra.mxu0 %v9921
    %11413 = vmatpush.bf16.msra.mxu0 %v9913
    %11414 = vmatpush.bf16.msra.mxu0 %v9905
    %11415 = vmatpush.bf16.msra.mxu0 %v9897
    %11416 = vmatpush.bf16.msra.mxu0 %v9889
    %11417 = vmatpush.bf16.msra.mxu0 %v9881
    %11418 = vmatpush.bf16.msra.mxu0 %v9873
    %11419 = vmatmul.bf16.gmra.mxu0 %v5113
    %v11420 = vpop.f32.mrf.mxu0
    %v11421 = vadd.f32 %v11408, %v11420
    %v11422 = vpop.f32.mrf.mxu0
    %11423 = vdwg.mxu0
    %11424 = vmatpush.bf16.msra.mxu0 %v9993
    %11425 = vmatpush.bf16.msra.mxu0 %v9985
    %11426 = vmatpush.bf16.msra.mxu0 %v9977
    %11427 = vmatpush.bf16.msra.mxu0 %v9969
    %11428 = vmatpush.bf16.msra.mxu0 %v9961
    %11429 = vmatpush.bf16.msra.mxu0 %v9953
    %11430 = vmatpush.bf16.msra.mxu0 %v9945
    %11431 = vmatpush.bf16.msra.mxu0 %v9937
    %11432 = vmatmul.bf16.gmra.mxu0 %v5114
    %v11433 = vpop.f32.mrf.mxu0
    %v11434 = vadd.f32 %v11421, %v11433
    %v11435 = vpop.f32.mrf.mxu0
    %11436 = vdwg.mxu0
    %11437 = vmatpush.bf16.msra.mxu0 %v10057
    %11438 = vmatpush.bf16.msra.mxu0 %v10049
    %11439 = vmatpush.bf16.msra.mxu0 %v10041
    %11440 = vmatpush.bf16.msra.mxu0 %v10033
    %11441 = vmatpush.bf16.msra.mxu0 %v10025
    %11442 = vmatpush.bf16.msra.mxu0 %v10017
    %11443 = vmatpush.bf16.msra.mxu0 %v10009
    %11444 = vmatpush.bf16.msra.mxu0 %v10001
    %11445 = vmatmul.bf16.gmra.mxu0 %v5115
    %v11446 = vpop.f32.mrf.mxu0
    %v11447 = vadd.f32 %v11434, %v11446
    %v11448 = vpop.f32.mrf.mxu0
    %11449 = vdwg.mxu0
    %11450 = vmatpush.bf16.msra.mxu0 %v10121
    %11451 = vmatpush.bf16.msra.mxu0 %v10113
    %11452 = vmatpush.bf16.msra.mxu0 %v10105
    %11453 = vmatpush.bf16.msra.mxu0 %v10097
    %11454 = vmatpush.bf16.msra.mxu0 %v10089
    %11455 = vmatpush.bf16.msra.mxu0 %v10081
    %11456 = vmatpush.bf16.msra.mxu0 %v10073
    %11457 = vmatpush.bf16.msra.mxu0 %v10065
    %11458 = vmatmul.bf16.gmra.mxu0 %v5116
    %v11459 = vpop.f32.mrf.mxu0
    %v11460 = vadd.f32 %v11447, %v11459
    %v11461 = vpop.f32.mrf.mxu0
    %11462 = vdwg.mxu0
    %11463 = vmatpush.bf16.msra.mxu0 %v10185
    %11464 = vmatpush.bf16.msra.mxu0 %v10177
    %11465 = vmatpush.bf16.msra.mxu0 %v10169
    %11466 = vmatpush.bf16.msra.mxu0 %v10161
    %11467 = vmatpush.bf16.msra.mxu0 %v10153
    %11468 = vmatpush.bf16.msra.mxu0 %v10145
    %11469 = vmatpush.bf16.msra.mxu0 %v10137
    %11470 = vmatpush.bf16.msra.mxu0 %v10129
    %11471 = vmatmul.bf16.gmra.mxu0 %v5117
    %v11472 = vpop.f32.mrf.mxu0
    %v11473 = vadd.f32 %v11460, %v11472
    %v11474 = vpop.f32.mrf.mxu0
    %11475 = vdwg.mxu0
    %11476 = vmatpush.bf16.msra.mxu0 %v10249
    %11477 = vmatpush.bf16.msra.mxu0 %v10241
    %11478 = vmatpush.bf16.msra.mxu0 %v10233
    %11479 = vmatpush.bf16.msra.mxu0 %v10225
    %11480 = vmatpush.bf16.msra.mxu0 %v10217
    %11481 = vmatpush.bf16.msra.mxu0 %v10209
    %11482 = vmatpush.bf16.msra.mxu0 %v10201
    %11483 = vmatpush.bf16.msra.mxu0 %v10193
    %11484 = vmatmul.bf16.gmra.mxu0 %v5118
    %v11485 = vpop.f32.mrf.mxu0
    %v11486 = vadd.f32 %v11473, %v11485
    %v11487 = vpop.f32.mrf.mxu0
    %11488 = vdwg.mxu0
    %11489 = vmatpush.bf16.msra.mxu0 %v9290
    %11490 = vmatpush.bf16.msra.mxu0 %v9282
    %11491 = vmatpush.bf16.msra.mxu0 %v9274
    %11492 = vmatpush.bf16.msra.mxu0 %v9266
    %11493 = vmatpush.bf16.msra.mxu0 %v9258
    %11494 = vmatpush.bf16.msra.mxu0 %v9250
    %11495 = vmatpush.bf16.msra.mxu0 %v9242
    %11496 = vmatpush.bf16.msra.mxu0 %v9234
    %11497 = vmatmul.bf16.gmra.mxu0 %v5103
    %v11498 = vpop.f32.mrf.mxu0
    %v11499 = vadd.f32 %v6146, %v11498
    %v11500 = vpop.f32.mrf.mxu0
    %11501 = vdwg.mxu0
    %11502 = vmatpush.bf16.msra.mxu0 %v9354
    %11503 = vmatpush.bf16.msra.mxu0 %v9346
    %11504 = vmatpush.bf16.msra.mxu0 %v9338
    %11505 = vmatpush.bf16.msra.mxu0 %v9330
    %11506 = vmatpush.bf16.msra.mxu0 %v9322
    %11507 = vmatpush.bf16.msra.mxu0 %v9314
    %11508 = vmatpush.bf16.msra.mxu0 %v9306
    %11509 = vmatpush.bf16.msra.mxu0 %v9298
    %11510 = vmatmul.bf16.gmra.mxu0 %v5104
    %v11511 = vpop.f32.mrf.mxu0
    %v11512 = vadd.f32 %v11499, %v11511
    %v11513 = vpop.f32.mrf.mxu0
    %11514 = vdwg.mxu0
    %11515 = vmatpush.bf16.msra.mxu0 %v9418
    %11516 = vmatpush.bf16.msra.mxu0 %v9410
    %11517 = vmatpush.bf16.msra.mxu0 %v9402
    %11518 = vmatpush.bf16.msra.mxu0 %v9394
    %11519 = vmatpush.bf16.msra.mxu0 %v9386
    %11520 = vmatpush.bf16.msra.mxu0 %v9378
    %11521 = vmatpush.bf16.msra.mxu0 %v9370
    %11522 = vmatpush.bf16.msra.mxu0 %v9362
    %11523 = vmatmul.bf16.gmra.mxu0 %v5105
    %v11524 = vpop.f32.mrf.mxu0
    %v11525 = vadd.f32 %v11512, %v11524
    %v11526 = vpop.f32.mrf.mxu0
    %11527 = vdwg.mxu0
    %11528 = vmatpush.bf16.msra.mxu0 %v9482
    %11529 = vmatpush.bf16.msra.mxu0 %v9474
    %11530 = vmatpush.bf16.msra.mxu0 %v9466
    %11531 = vmatpush.bf16.msra.mxu0 %v9458
    %11532 = vmatpush.bf16.msra.mxu0 %v9450
    %11533 = vmatpush.bf16.msra.mxu0 %v9442
    %11534 = vmatpush.bf16.msra.mxu0 %v9434
    %11535 = vmatpush.bf16.msra.mxu0 %v9426
    %11536 = vmatmul.bf16.gmra.mxu0 %v5106
    %v11537 = vpop.f32.mrf.mxu0
    %v11538 = vadd.f32 %v11525, %v11537
    %v11539 = vpop.f32.mrf.mxu0
    %11540 = vdwg.mxu0
    %11541 = vmatpush.bf16.msra.mxu0 %v9546
    %11542 = vmatpush.bf16.msra.mxu0 %v9538
    %11543 = vmatpush.bf16.msra.mxu0 %v9530
    %11544 = vmatpush.bf16.msra.mxu0 %v9522
    %11545 = vmatpush.bf16.msra.mxu0 %v9514
    %11546 = vmatpush.bf16.msra.mxu0 %v9506
    %11547 = vmatpush.bf16.msra.mxu0 %v9498
    %11548 = vmatpush.bf16.msra.mxu0 %v9490
    %11549 = vmatmul.bf16.gmra.mxu0 %v5107
    %v11550 = vpop.f32.mrf.mxu0
    %v11551 = vadd.f32 %v11538, %v11550
    %v11552 = vpop.f32.mrf.mxu0
    %11553 = vdwg.mxu0
    %11554 = vmatpush.bf16.msra.mxu0 %v9610
    %11555 = vmatpush.bf16.msra.mxu0 %v9602
    %11556 = vmatpush.bf16.msra.mxu0 %v9594
    %11557 = vmatpush.bf16.msra.mxu0 %v9586
    %11558 = vmatpush.bf16.msra.mxu0 %v9578
    %11559 = vmatpush.bf16.msra.mxu0 %v9570
    %11560 = vmatpush.bf16.msra.mxu0 %v9562
    %11561 = vmatpush.bf16.msra.mxu0 %v9554
    %11562 = vmatmul.bf16.gmra.mxu0 %v5108
    %v11563 = vpop.f32.mrf.mxu0
    %v11564 = vadd.f32 %v11551, %v11563
    %v11565 = vpop.f32.mrf.mxu0
    %11566 = vdwg.mxu0
    %11567 = vmatpush.bf16.msra.mxu0 %v9674
    %11568 = vmatpush.bf16.msra.mxu0 %v9666
    %11569 = vmatpush.bf16.msra.mxu0 %v9658
    %11570 = vmatpush.bf16.msra.mxu0 %v9650
    %11571 = vmatpush.bf16.msra.mxu0 %v9642
    %11572 = vmatpush.bf16.msra.mxu0 %v9634
    %11573 = vmatpush.bf16.msra.mxu0 %v9626
    %11574 = vmatpush.bf16.msra.mxu0 %v9618
    %11575 = vmatmul.bf16.gmra.mxu0 %v5109
    %v11576 = vpop.f32.mrf.mxu0
    %v11577 = vadd.f32 %v11564, %v11576
    %v11578 = vpop.f32.mrf.mxu0
    %11579 = vdwg.mxu0
    %11580 = vmatpush.bf16.msra.mxu0 %v9738
    %11581 = vmatpush.bf16.msra.mxu0 %v9730
    %11582 = vmatpush.bf16.msra.mxu0 %v9722
    %11583 = vmatpush.bf16.msra.mxu0 %v9714
    %11584 = vmatpush.bf16.msra.mxu0 %v9706
    %11585 = vmatpush.bf16.msra.mxu0 %v9698
    %11586 = vmatpush.bf16.msra.mxu0 %v9690
    %11587 = vmatpush.bf16.msra.mxu0 %v9682
    %11588 = vmatmul.bf16.gmra.mxu0 %v5110
    %v11589 = vpop.f32.mrf.mxu0
    %v11590 = vadd.f32 %v11577, %v11589
    %v11591 = vpop.f32.mrf.mxu0
    %11592 = vdwg.mxu0
    %11593 = vmatpush.bf16.msra.mxu0 %v9802
    %11594 = vmatpush.bf16.msra.mxu0 %v9794
    %11595 = vmatpush.bf16.msra.mxu0 %v9786
    %11596 = vmatpush.bf16.msra.mxu0 %v9778
    %11597 = vmatpush.bf16.msra.mxu0 %v9770
    %11598 = vmatpush.bf16.msra.mxu0 %v9762
    %11599 = vmatpush.bf16.msra.mxu0 %v9754
    %11600 = vmatpush.bf16.msra.mxu0 %v9746
    %11601 = vmatmul.bf16.gmra.mxu0 %v5111
    %v11602 = vpop.f32.mrf.mxu0
    %v11603 = vadd.f32 %v11590, %v11602
    %v11604 = vpop.f32.mrf.mxu0
    %11605 = vdwg.mxu0
    %11606 = vmatpush.bf16.msra.mxu0 %v9866
    %11607 = vmatpush.bf16.msra.mxu0 %v9858
    %11608 = vmatpush.bf16.msra.mxu0 %v9850
    %11609 = vmatpush.bf16.msra.mxu0 %v9842
    %11610 = vmatpush.bf16.msra.mxu0 %v9834
    %11611 = vmatpush.bf16.msra.mxu0 %v9826
    %11612 = vmatpush.bf16.msra.mxu0 %v9818
    %11613 = vmatpush.bf16.msra.mxu0 %v9810
    %11614 = vmatmul.bf16.gmra.mxu0 %v5112
    %v11615 = vpop.f32.mrf.mxu0
    %v11616 = vadd.f32 %v11603, %v11615
    %v11617 = vpop.f32.mrf.mxu0
    %11618 = vdwg.mxu0
    %11619 = vmatpush.bf16.msra.mxu0 %v9930
    %11620 = vmatpush.bf16.msra.mxu0 %v9922
    %11621 = vmatpush.bf16.msra.mxu0 %v9914
    %11622 = vmatpush.bf16.msra.mxu0 %v9906
    %11623 = vmatpush.bf16.msra.mxu0 %v9898
    %11624 = vmatpush.bf16.msra.mxu0 %v9890
    %11625 = vmatpush.bf16.msra.mxu0 %v9882
    %11626 = vmatpush.bf16.msra.mxu0 %v9874
    %11627 = vmatmul.bf16.gmra.mxu0 %v5113
    %v11628 = vpop.f32.mrf.mxu0
    %v11629 = vadd.f32 %v11616, %v11628
    %v11630 = vpop.f32.mrf.mxu0
    %11631 = vdwg.mxu0
    %11632 = vmatpush.bf16.msra.mxu0 %v9994
    %11633 = vmatpush.bf16.msra.mxu0 %v9986
    %11634 = vmatpush.bf16.msra.mxu0 %v9978
    %11635 = vmatpush.bf16.msra.mxu0 %v9970
    %11636 = vmatpush.bf16.msra.mxu0 %v9962
    %11637 = vmatpush.bf16.msra.mxu0 %v9954
    %11638 = vmatpush.bf16.msra.mxu0 %v9946
    %11639 = vmatpush.bf16.msra.mxu0 %v9938
    %11640 = vmatmul.bf16.gmra.mxu0 %v5114
    %v11641 = vpop.f32.mrf.mxu0
    %v11642 = vadd.f32 %v11629, %v11641
    %v11643 = vpop.f32.mrf.mxu0
    %11644 = vdwg.mxu0
    %11645 = vmatpush.bf16.msra.mxu0 %v10058
    %11646 = vmatpush.bf16.msra.mxu0 %v10050
    %11647 = vmatpush.bf16.msra.mxu0 %v10042
    %11648 = vmatpush.bf16.msra.mxu0 %v10034
    %11649 = vmatpush.bf16.msra.mxu0 %v10026
    %11650 = vmatpush.bf16.msra.mxu0 %v10018
    %11651 = vmatpush.bf16.msra.mxu0 %v10010
    %11652 = vmatpush.bf16.msra.mxu0 %v10002
    %11653 = vmatmul.bf16.gmra.mxu0 %v5115
    %v11654 = vpop.f32.mrf.mxu0
    %v11655 = vadd.f32 %v11642, %v11654
    %v11656 = vpop.f32.mrf.mxu0
    %11657 = vdwg.mxu0
    %11658 = vmatpush.bf16.msra.mxu0 %v10122
    %11659 = vmatpush.bf16.msra.mxu0 %v10114
    %11660 = vmatpush.bf16.msra.mxu0 %v10106
    %11661 = vmatpush.bf16.msra.mxu0 %v10098
    %11662 = vmatpush.bf16.msra.mxu0 %v10090
    %11663 = vmatpush.bf16.msra.mxu0 %v10082
    %11664 = vmatpush.bf16.msra.mxu0 %v10074
    %11665 = vmatpush.bf16.msra.mxu0 %v10066
    %11666 = vmatmul.bf16.gmra.mxu0 %v5116
    %v11667 = vpop.f32.mrf.mxu0
    %v11668 = vadd.f32 %v11655, %v11667
    %v11669 = vpop.f32.mrf.mxu0
    %11670 = vdwg.mxu0
    %11671 = vmatpush.bf16.msra.mxu0 %v10186
    %11672 = vmatpush.bf16.msra.mxu0 %v10178
    %11673 = vmatpush.bf16.msra.mxu0 %v10170
    %11674 = vmatpush.bf16.msra.mxu0 %v10162
    %11675 = vmatpush.bf16.msra.mxu0 %v10154
    %11676 = vmatpush.bf16.msra.mxu0 %v10146
    %11677 = vmatpush.bf16.msra.mxu0 %v10138
    %11678 = vmatpush.bf16.msra.mxu0 %v10130
    %11679 = vmatmul.bf16.gmra.mxu0 %v5117
    %v11680 = vpop.f32.mrf.mxu0
    %v11681 = vadd.f32 %v11668, %v11680
    %v11682 = vpop.f32.mrf.mxu0
    %11683 = vdwg.mxu0
    %11684 = vmatpush.bf16.msra.mxu0 %v10250
    %11685 = vmatpush.bf16.msra.mxu0 %v10242
    %11686 = vmatpush.bf16.msra.mxu0 %v10234
    %11687 = vmatpush.bf16.msra.mxu0 %v10226
    %11688 = vmatpush.bf16.msra.mxu0 %v10218
    %11689 = vmatpush.bf16.msra.mxu0 %v10210
    %11690 = vmatpush.bf16.msra.mxu0 %v10202
    %11691 = vmatpush.bf16.msra.mxu0 %v10194
    %11692 = vmatmul.bf16.gmra.mxu0 %v5118
    %v11693 = vpop.f32.mrf.mxu0
    %v11694 = vadd.f32 %v11681, %v11693
    %v11695 = vpop.f32.mrf.mxu0
    %11696 = vdwg.mxu0
    %11697 = vmatpush.bf16.msra.mxu0 %v9291
    %11698 = vmatpush.bf16.msra.mxu0 %v9283
    %11699 = vmatpush.bf16.msra.mxu0 %v9275
    %11700 = vmatpush.bf16.msra.mxu0 %v9267
    %11701 = vmatpush.bf16.msra.mxu0 %v9259
    %11702 = vmatpush.bf16.msra.mxu0 %v9251
    %11703 = vmatpush.bf16.msra.mxu0 %v9243
    %11704 = vmatpush.bf16.msra.mxu0 %v9235
    %11705 = vmatmul.bf16.gmra.mxu0 %v5103
    %v11706 = vpop.f32.mrf.mxu0
    %v11707 = vadd.f32 %v6147, %v11706
    %v11708 = vpop.f32.mrf.mxu0
    %11709 = vdwg.mxu0
    %11710 = vmatpush.bf16.msra.mxu0 %v9355
    %11711 = vmatpush.bf16.msra.mxu0 %v9347
    %11712 = vmatpush.bf16.msra.mxu0 %v9339
    %11713 = vmatpush.bf16.msra.mxu0 %v9331
    %11714 = vmatpush.bf16.msra.mxu0 %v9323
    %11715 = vmatpush.bf16.msra.mxu0 %v9315
    %11716 = vmatpush.bf16.msra.mxu0 %v9307
    %11717 = vmatpush.bf16.msra.mxu0 %v9299
    %11718 = vmatmul.bf16.gmra.mxu0 %v5104
    %v11719 = vpop.f32.mrf.mxu0
    %v11720 = vadd.f32 %v11707, %v11719
    %v11721 = vpop.f32.mrf.mxu0
    %11722 = vdwg.mxu0
    %11723 = vmatpush.bf16.msra.mxu0 %v9419
    %11724 = vmatpush.bf16.msra.mxu0 %v9411
    %11725 = vmatpush.bf16.msra.mxu0 %v9403
    %11726 = vmatpush.bf16.msra.mxu0 %v9395
    %11727 = vmatpush.bf16.msra.mxu0 %v9387
    %11728 = vmatpush.bf16.msra.mxu0 %v9379
    %11729 = vmatpush.bf16.msra.mxu0 %v9371
    %11730 = vmatpush.bf16.msra.mxu0 %v9363
    %11731 = vmatmul.bf16.gmra.mxu0 %v5105
    %v11732 = vpop.f32.mrf.mxu0
    %v11733 = vadd.f32 %v11720, %v11732
    %v11734 = vpop.f32.mrf.mxu0
    %11735 = vdwg.mxu0
    %11736 = vmatpush.bf16.msra.mxu0 %v9483
    %11737 = vmatpush.bf16.msra.mxu0 %v9475
    %11738 = vmatpush.bf16.msra.mxu0 %v9467
    %11739 = vmatpush.bf16.msra.mxu0 %v9459
    %11740 = vmatpush.bf16.msra.mxu0 %v9451
    %11741 = vmatpush.bf16.msra.mxu0 %v9443
    %11742 = vmatpush.bf16.msra.mxu0 %v9435
    %11743 = vmatpush.bf16.msra.mxu0 %v9427
    %11744 = vmatmul.bf16.gmra.mxu0 %v5106
    %v11745 = vpop.f32.mrf.mxu0
    %v11746 = vadd.f32 %v11733, %v11745
    %v11747 = vpop.f32.mrf.mxu0
    %11748 = vdwg.mxu0
    %11749 = vmatpush.bf16.msra.mxu0 %v9547
    %11750 = vmatpush.bf16.msra.mxu0 %v9539
    %11751 = vmatpush.bf16.msra.mxu0 %v9531
    %11752 = vmatpush.bf16.msra.mxu0 %v9523
    %11753 = vmatpush.bf16.msra.mxu0 %v9515
    %11754 = vmatpush.bf16.msra.mxu0 %v9507
    %11755 = vmatpush.bf16.msra.mxu0 %v9499
    %11756 = vmatpush.bf16.msra.mxu0 %v9491
    %11757 = vmatmul.bf16.gmra.mxu0 %v5107
    %v11758 = vpop.f32.mrf.mxu0
    %v11759 = vadd.f32 %v11746, %v11758
    %v11760 = vpop.f32.mrf.mxu0
    %11761 = vdwg.mxu0
    %11762 = vmatpush.bf16.msra.mxu0 %v9611
    %11763 = vmatpush.bf16.msra.mxu0 %v9603
    %11764 = vmatpush.bf16.msra.mxu0 %v9595
    %11765 = vmatpush.bf16.msra.mxu0 %v9587
    %11766 = vmatpush.bf16.msra.mxu0 %v9579
    %11767 = vmatpush.bf16.msra.mxu0 %v9571
    %11768 = vmatpush.bf16.msra.mxu0 %v9563
    %11769 = vmatpush.bf16.msra.mxu0 %v9555
    %11770 = vmatmul.bf16.gmra.mxu0 %v5108
    %v11771 = vpop.f32.mrf.mxu0
    %v11772 = vadd.f32 %v11759, %v11771
    %v11773 = vpop.f32.mrf.mxu0
    %11774 = vdwg.mxu0
    %11775 = vmatpush.bf16.msra.mxu0 %v9675
    %11776 = vmatpush.bf16.msra.mxu0 %v9667
    %11777 = vmatpush.bf16.msra.mxu0 %v9659
    %11778 = vmatpush.bf16.msra.mxu0 %v9651
    %11779 = vmatpush.bf16.msra.mxu0 %v9643
    %11780 = vmatpush.bf16.msra.mxu0 %v9635
    %11781 = vmatpush.bf16.msra.mxu0 %v9627
    %11782 = vmatpush.bf16.msra.mxu0 %v9619
    %11783 = vmatmul.bf16.gmra.mxu0 %v5109
    %v11784 = vpop.f32.mrf.mxu0
    %v11785 = vadd.f32 %v11772, %v11784
    %v11786 = vpop.f32.mrf.mxu0
    %11787 = vdwg.mxu0
    %11788 = vmatpush.bf16.msra.mxu0 %v9739
    %11789 = vmatpush.bf16.msra.mxu0 %v9731
    %11790 = vmatpush.bf16.msra.mxu0 %v9723
    %11791 = vmatpush.bf16.msra.mxu0 %v9715
    %11792 = vmatpush.bf16.msra.mxu0 %v9707
    %11793 = vmatpush.bf16.msra.mxu0 %v9699
    %11794 = vmatpush.bf16.msra.mxu0 %v9691
    %11795 = vmatpush.bf16.msra.mxu0 %v9683
    %11796 = vmatmul.bf16.gmra.mxu0 %v5110
    %v11797 = vpop.f32.mrf.mxu0
    %v11798 = vadd.f32 %v11785, %v11797
    %v11799 = vpop.f32.mrf.mxu0
    %11800 = vdwg.mxu0
    %11801 = vmatpush.bf16.msra.mxu0 %v9803
    %11802 = vmatpush.bf16.msra.mxu0 %v9795
    %11803 = vmatpush.bf16.msra.mxu0 %v9787
    %11804 = vmatpush.bf16.msra.mxu0 %v9779
    %11805 = vmatpush.bf16.msra.mxu0 %v9771
    %11806 = vmatpush.bf16.msra.mxu0 %v9763
    %11807 = vmatpush.bf16.msra.mxu0 %v9755
    %11808 = vmatpush.bf16.msra.mxu0 %v9747
    %11809 = vmatmul.bf16.gmra.mxu0 %v5111
    %v11810 = vpop.f32.mrf.mxu0
    %v11811 = vadd.f32 %v11798, %v11810
    %v11812 = vpop.f32.mrf.mxu0
    %11813 = vdwg.mxu0
    %11814 = vmatpush.bf16.msra.mxu0 %v9867
    %11815 = vmatpush.bf16.msra.mxu0 %v9859
    %11816 = vmatpush.bf16.msra.mxu0 %v9851
    %11817 = vmatpush.bf16.msra.mxu0 %v9843
    %11818 = vmatpush.bf16.msra.mxu0 %v9835
    %11819 = vmatpush.bf16.msra.mxu0 %v9827
    %11820 = vmatpush.bf16.msra.mxu0 %v9819
    %11821 = vmatpush.bf16.msra.mxu0 %v9811
    %11822 = vmatmul.bf16.gmra.mxu0 %v5112
    %v11823 = vpop.f32.mrf.mxu0
    %v11824 = vadd.f32 %v11811, %v11823
    %v11825 = vpop.f32.mrf.mxu0
    %11826 = vdwg.mxu0
    %11827 = vmatpush.bf16.msra.mxu0 %v9931
    %11828 = vmatpush.bf16.msra.mxu0 %v9923
    %11829 = vmatpush.bf16.msra.mxu0 %v9915
    %11830 = vmatpush.bf16.msra.mxu0 %v9907
    %11831 = vmatpush.bf16.msra.mxu0 %v9899
    %11832 = vmatpush.bf16.msra.mxu0 %v9891
    %11833 = vmatpush.bf16.msra.mxu0 %v9883
    %11834 = vmatpush.bf16.msra.mxu0 %v9875
    %11835 = vmatmul.bf16.gmra.mxu0 %v5113
    %v11836 = vpop.f32.mrf.mxu0
    %v11837 = vadd.f32 %v11824, %v11836
    %v11838 = vpop.f32.mrf.mxu0
    %11839 = vdwg.mxu0
    %11840 = vmatpush.bf16.msra.mxu0 %v9995
    %11841 = vmatpush.bf16.msra.mxu0 %v9987
    %11842 = vmatpush.bf16.msra.mxu0 %v9979
    %11843 = vmatpush.bf16.msra.mxu0 %v9971
    %11844 = vmatpush.bf16.msra.mxu0 %v9963
    %11845 = vmatpush.bf16.msra.mxu0 %v9955
    %11846 = vmatpush.bf16.msra.mxu0 %v9947
    %11847 = vmatpush.bf16.msra.mxu0 %v9939
    %11848 = vmatmul.bf16.gmra.mxu0 %v5114
    %v11849 = vpop.f32.mrf.mxu0
    %v11850 = vadd.f32 %v11837, %v11849
    %v11851 = vpop.f32.mrf.mxu0
    %11852 = vdwg.mxu0
    %11853 = vmatpush.bf16.msra.mxu0 %v10059
    %11854 = vmatpush.bf16.msra.mxu0 %v10051
    %11855 = vmatpush.bf16.msra.mxu0 %v10043
    %11856 = vmatpush.bf16.msra.mxu0 %v10035
    %11857 = vmatpush.bf16.msra.mxu0 %v10027
    %11858 = vmatpush.bf16.msra.mxu0 %v10019
    %11859 = vmatpush.bf16.msra.mxu0 %v10011
    %11860 = vmatpush.bf16.msra.mxu0 %v10003
    %11861 = vmatmul.bf16.gmra.mxu0 %v5115
    %v11862 = vpop.f32.mrf.mxu0
    %v11863 = vadd.f32 %v11850, %v11862
    %v11864 = vpop.f32.mrf.mxu0
    %11865 = vdwg.mxu0
    %11866 = vmatpush.bf16.msra.mxu0 %v10123
    %11867 = vmatpush.bf16.msra.mxu0 %v10115
    %11868 = vmatpush.bf16.msra.mxu0 %v10107
    %11869 = vmatpush.bf16.msra.mxu0 %v10099
    %11870 = vmatpush.bf16.msra.mxu0 %v10091
    %11871 = vmatpush.bf16.msra.mxu0 %v10083
    %11872 = vmatpush.bf16.msra.mxu0 %v10075
    %11873 = vmatpush.bf16.msra.mxu0 %v10067
    %11874 = vmatmul.bf16.gmra.mxu0 %v5116
    %v11875 = vpop.f32.mrf.mxu0
    %v11876 = vadd.f32 %v11863, %v11875
    %v11877 = vpop.f32.mrf.mxu0
    %11878 = vdwg.mxu0
    %11879 = vmatpush.bf16.msra.mxu0 %v10187
    %11880 = vmatpush.bf16.msra.mxu0 %v10179
    %11881 = vmatpush.bf16.msra.mxu0 %v10171
    %11882 = vmatpush.bf16.msra.mxu0 %v10163
    %11883 = vmatpush.bf16.msra.mxu0 %v10155
    %11884 = vmatpush.bf16.msra.mxu0 %v10147
    %11885 = vmatpush.bf16.msra.mxu0 %v10139
    %11886 = vmatpush.bf16.msra.mxu0 %v10131
    %11887 = vmatmul.bf16.gmra.mxu0 %v5117
    %v11888 = vpop.f32.mrf.mxu0
    %v11889 = vadd.f32 %v11876, %v11888
    %v11890 = vpop.f32.mrf.mxu0
    %11891 = vdwg.mxu0
    %11892 = vmatpush.bf16.msra.mxu0 %v10251
    %11893 = vmatpush.bf16.msra.mxu0 %v10243
    %11894 = vmatpush.bf16.msra.mxu0 %v10235
    %11895 = vmatpush.bf16.msra.mxu0 %v10227
    %11896 = vmatpush.bf16.msra.mxu0 %v10219
    %11897 = vmatpush.bf16.msra.mxu0 %v10211
    %11898 = vmatpush.bf16.msra.mxu0 %v10203
    %11899 = vmatpush.bf16.msra.mxu0 %v10195
    %11900 = vmatmul.bf16.gmra.mxu0 %v5118
    %v11901 = vpop.f32.mrf.mxu0
    %v11902 = vadd.f32 %v11889, %v11901
    %v11903 = vpop.f32.mrf.mxu0
    %11904 = vdwg.mxu0
    %11905 = vmatpush.bf16.msra.mxu0 %v9292
    %11906 = vmatpush.bf16.msra.mxu0 %v9284
    %11907 = vmatpush.bf16.msra.mxu0 %v9276
    %11908 = vmatpush.bf16.msra.mxu0 %v9268
    %11909 = vmatpush.bf16.msra.mxu0 %v9260
    %11910 = vmatpush.bf16.msra.mxu0 %v9252
    %11911 = vmatpush.bf16.msra.mxu0 %v9244
    %11912 = vmatpush.bf16.msra.mxu0 %v9236
    %11913 = vmatmul.bf16.gmra.mxu0 %v5103
    %v11914 = vpop.f32.mrf.mxu0
    %v11915 = vadd.f32 %v6148, %v11914
    %v11916 = vpop.f32.mrf.mxu0
    %11917 = vdwg.mxu0
    %11918 = vmatpush.bf16.msra.mxu0 %v9356
    %11919 = vmatpush.bf16.msra.mxu0 %v9348
    %11920 = vmatpush.bf16.msra.mxu0 %v9340
    %11921 = vmatpush.bf16.msra.mxu0 %v9332
    %11922 = vmatpush.bf16.msra.mxu0 %v9324
    %11923 = vmatpush.bf16.msra.mxu0 %v9316
    %11924 = vmatpush.bf16.msra.mxu0 %v9308
    %11925 = vmatpush.bf16.msra.mxu0 %v9300
    %11926 = vmatmul.bf16.gmra.mxu0 %v5104
    %v11927 = vpop.f32.mrf.mxu0
    %v11928 = vadd.f32 %v11915, %v11927
    %v11929 = vpop.f32.mrf.mxu0
    %11930 = vdwg.mxu0
    %11931 = vmatpush.bf16.msra.mxu0 %v9420
    %11932 = vmatpush.bf16.msra.mxu0 %v9412
    %11933 = vmatpush.bf16.msra.mxu0 %v9404
    %11934 = vmatpush.bf16.msra.mxu0 %v9396
    %11935 = vmatpush.bf16.msra.mxu0 %v9388
    %11936 = vmatpush.bf16.msra.mxu0 %v9380
    %11937 = vmatpush.bf16.msra.mxu0 %v9372
    %11938 = vmatpush.bf16.msra.mxu0 %v9364
    %11939 = vmatmul.bf16.gmra.mxu0 %v5105
    %v11940 = vpop.f32.mrf.mxu0
    %v11941 = vadd.f32 %v11928, %v11940
    %v11942 = vpop.f32.mrf.mxu0
    %11943 = vdwg.mxu0
    %11944 = vmatpush.bf16.msra.mxu0 %v9484
    %11945 = vmatpush.bf16.msra.mxu0 %v9476
    %11946 = vmatpush.bf16.msra.mxu0 %v9468
    %11947 = vmatpush.bf16.msra.mxu0 %v9460
    %11948 = vmatpush.bf16.msra.mxu0 %v9452
    %11949 = vmatpush.bf16.msra.mxu0 %v9444
    %11950 = vmatpush.bf16.msra.mxu0 %v9436
    %11951 = vmatpush.bf16.msra.mxu0 %v9428
    %11952 = vmatmul.bf16.gmra.mxu0 %v5106
    %v11953 = vpop.f32.mrf.mxu0
    %v11954 = vadd.f32 %v11941, %v11953
    %v11955 = vpop.f32.mrf.mxu0
    %11956 = vdwg.mxu0
    %11957 = vmatpush.bf16.msra.mxu0 %v9548
    %11958 = vmatpush.bf16.msra.mxu0 %v9540
    %11959 = vmatpush.bf16.msra.mxu0 %v9532
    %11960 = vmatpush.bf16.msra.mxu0 %v9524
    %11961 = vmatpush.bf16.msra.mxu0 %v9516
    %11962 = vmatpush.bf16.msra.mxu0 %v9508
    %11963 = vmatpush.bf16.msra.mxu0 %v9500
    %11964 = vmatpush.bf16.msra.mxu0 %v9492
    %11965 = vmatmul.bf16.gmra.mxu0 %v5107
    %v11966 = vpop.f32.mrf.mxu0
    %v11967 = vadd.f32 %v11954, %v11966
    %v11968 = vpop.f32.mrf.mxu0
    %11969 = vdwg.mxu0
    %11970 = vmatpush.bf16.msra.mxu0 %v9612
    %11971 = vmatpush.bf16.msra.mxu0 %v9604
    %11972 = vmatpush.bf16.msra.mxu0 %v9596
    %11973 = vmatpush.bf16.msra.mxu0 %v9588
    %11974 = vmatpush.bf16.msra.mxu0 %v9580
    %11975 = vmatpush.bf16.msra.mxu0 %v9572
    %11976 = vmatpush.bf16.msra.mxu0 %v9564
    %11977 = vmatpush.bf16.msra.mxu0 %v9556
    %11978 = vmatmul.bf16.gmra.mxu0 %v5108
    %v11979 = vpop.f32.mrf.mxu0
    %v11980 = vadd.f32 %v11967, %v11979
    %v11981 = vpop.f32.mrf.mxu0
    %11982 = vdwg.mxu0
    %11983 = vmatpush.bf16.msra.mxu0 %v9676
    %11984 = vmatpush.bf16.msra.mxu0 %v9668
    %11985 = vmatpush.bf16.msra.mxu0 %v9660
    %11986 = vmatpush.bf16.msra.mxu0 %v9652
    %11987 = vmatpush.bf16.msra.mxu0 %v9644
    %11988 = vmatpush.bf16.msra.mxu0 %v9636
    %11989 = vmatpush.bf16.msra.mxu0 %v9628
    %11990 = vmatpush.bf16.msra.mxu0 %v9620
    %11991 = vmatmul.bf16.gmra.mxu0 %v5109
    %v11992 = vpop.f32.mrf.mxu0
    %v11993 = vadd.f32 %v11980, %v11992
    %v11994 = vpop.f32.mrf.mxu0
    %11995 = vdwg.mxu0
    %11996 = vmatpush.bf16.msra.mxu0 %v9740
    %11997 = vmatpush.bf16.msra.mxu0 %v9732
    %11998 = vmatpush.bf16.msra.mxu0 %v9724
    %11999 = vmatpush.bf16.msra.mxu0 %v9716
    %12000 = vmatpush.bf16.msra.mxu0 %v9708
    %12001 = vmatpush.bf16.msra.mxu0 %v9700
    %12002 = vmatpush.bf16.msra.mxu0 %v9692
    %12003 = vmatpush.bf16.msra.mxu0 %v9684
    %12004 = vmatmul.bf16.gmra.mxu0 %v5110
    %v12005 = vpop.f32.mrf.mxu0
    %v12006 = vadd.f32 %v11993, %v12005
    %v12007 = vpop.f32.mrf.mxu0
    %12008 = vdwg.mxu0
    %12009 = vmatpush.bf16.msra.mxu0 %v9804
    %12010 = vmatpush.bf16.msra.mxu0 %v9796
    %12011 = vmatpush.bf16.msra.mxu0 %v9788
    %12012 = vmatpush.bf16.msra.mxu0 %v9780
    %12013 = vmatpush.bf16.msra.mxu0 %v9772
    %12014 = vmatpush.bf16.msra.mxu0 %v9764
    %12015 = vmatpush.bf16.msra.mxu0 %v9756
    %12016 = vmatpush.bf16.msra.mxu0 %v9748
    %12017 = vmatmul.bf16.gmra.mxu0 %v5111
    %v12018 = vpop.f32.mrf.mxu0
    %v12019 = vadd.f32 %v12006, %v12018
    %v12020 = vpop.f32.mrf.mxu0
    %12021 = vdwg.mxu0
    %12022 = vmatpush.bf16.msra.mxu0 %v9868
    %12023 = vmatpush.bf16.msra.mxu0 %v9860
    %12024 = vmatpush.bf16.msra.mxu0 %v9852
    %12025 = vmatpush.bf16.msra.mxu0 %v9844
    %12026 = vmatpush.bf16.msra.mxu0 %v9836
    %12027 = vmatpush.bf16.msra.mxu0 %v9828
    %12028 = vmatpush.bf16.msra.mxu0 %v9820
    %12029 = vmatpush.bf16.msra.mxu0 %v9812
    %12030 = vmatmul.bf16.gmra.mxu0 %v5112
    %v12031 = vpop.f32.mrf.mxu0
    %v12032 = vadd.f32 %v12019, %v12031
    %v12033 = vpop.f32.mrf.mxu0
    %12034 = vdwg.mxu0
    %12035 = vmatpush.bf16.msra.mxu0 %v9932
    %12036 = vmatpush.bf16.msra.mxu0 %v9924
    %12037 = vmatpush.bf16.msra.mxu0 %v9916
    %12038 = vmatpush.bf16.msra.mxu0 %v9908
    %12039 = vmatpush.bf16.msra.mxu0 %v9900
    %12040 = vmatpush.bf16.msra.mxu0 %v9892
    %12041 = vmatpush.bf16.msra.mxu0 %v9884
    %12042 = vmatpush.bf16.msra.mxu0 %v9876
    %12043 = vmatmul.bf16.gmra.mxu0 %v5113
    %v12044 = vpop.f32.mrf.mxu0
    %v12045 = vadd.f32 %v12032, %v12044
    %v12046 = vpop.f32.mrf.mxu0
    %12047 = vdwg.mxu0
    %12048 = vmatpush.bf16.msra.mxu0 %v9996
    %12049 = vmatpush.bf16.msra.mxu0 %v9988
    %12050 = vmatpush.bf16.msra.mxu0 %v9980
    %12051 = vmatpush.bf16.msra.mxu0 %v9972
    %12052 = vmatpush.bf16.msra.mxu0 %v9964
    %12053 = vmatpush.bf16.msra.mxu0 %v9956
    %12054 = vmatpush.bf16.msra.mxu0 %v9948
    %12055 = vmatpush.bf16.msra.mxu0 %v9940
    %12056 = vmatmul.bf16.gmra.mxu0 %v5114
    %v12057 = vpop.f32.mrf.mxu0
    %v12058 = vadd.f32 %v12045, %v12057
    %v12059 = vpop.f32.mrf.mxu0
    %12060 = vdwg.mxu0
    %12061 = vmatpush.bf16.msra.mxu0 %v10060
    %12062 = vmatpush.bf16.msra.mxu0 %v10052
    %12063 = vmatpush.bf16.msra.mxu0 %v10044
    %12064 = vmatpush.bf16.msra.mxu0 %v10036
    %12065 = vmatpush.bf16.msra.mxu0 %v10028
    %12066 = vmatpush.bf16.msra.mxu0 %v10020
    %12067 = vmatpush.bf16.msra.mxu0 %v10012
    %12068 = vmatpush.bf16.msra.mxu0 %v10004
    %12069 = vmatmul.bf16.gmra.mxu0 %v5115
    %v12070 = vpop.f32.mrf.mxu0
    %v12071 = vadd.f32 %v12058, %v12070
    %v12072 = vpop.f32.mrf.mxu0
    %12073 = vdwg.mxu0
    %12074 = vmatpush.bf16.msra.mxu0 %v10124
    %12075 = vmatpush.bf16.msra.mxu0 %v10116
    %12076 = vmatpush.bf16.msra.mxu0 %v10108
    %12077 = vmatpush.bf16.msra.mxu0 %v10100
    %12078 = vmatpush.bf16.msra.mxu0 %v10092
    %12079 = vmatpush.bf16.msra.mxu0 %v10084
    %12080 = vmatpush.bf16.msra.mxu0 %v10076
    %12081 = vmatpush.bf16.msra.mxu0 %v10068
    %12082 = vmatmul.bf16.gmra.mxu0 %v5116
    %v12083 = vpop.f32.mrf.mxu0
    %v12084 = vadd.f32 %v12071, %v12083
    %v12085 = vpop.f32.mrf.mxu0
    %12086 = vdwg.mxu0
    %12087 = vmatpush.bf16.msra.mxu0 %v10188
    %12088 = vmatpush.bf16.msra.mxu0 %v10180
    %12089 = vmatpush.bf16.msra.mxu0 %v10172
    %12090 = vmatpush.bf16.msra.mxu0 %v10164
    %12091 = vmatpush.bf16.msra.mxu0 %v10156
    %12092 = vmatpush.bf16.msra.mxu0 %v10148
    %12093 = vmatpush.bf16.msra.mxu0 %v10140
    %12094 = vmatpush.bf16.msra.mxu0 %v10132
    %12095 = vmatmul.bf16.gmra.mxu0 %v5117
    %v12096 = vpop.f32.mrf.mxu0
    %v12097 = vadd.f32 %v12084, %v12096
    %v12098 = vpop.f32.mrf.mxu0
    %12099 = vdwg.mxu0
    %12100 = vmatpush.bf16.msra.mxu0 %v10252
    %12101 = vmatpush.bf16.msra.mxu0 %v10244
    %12102 = vmatpush.bf16.msra.mxu0 %v10236
    %12103 = vmatpush.bf16.msra.mxu0 %v10228
    %12104 = vmatpush.bf16.msra.mxu0 %v10220
    %12105 = vmatpush.bf16.msra.mxu0 %v10212
    %12106 = vmatpush.bf16.msra.mxu0 %v10204
    %12107 = vmatpush.bf16.msra.mxu0 %v10196
    %12108 = vmatmul.bf16.gmra.mxu0 %v5118
    %v12109 = vpop.f32.mrf.mxu0
    %v12110 = vadd.f32 %v12097, %v12109
    %v12111 = vpop.f32.mrf.mxu0
    %12112 = vdwg.mxu0
    %12113 = vmatpush.bf16.msra.mxu0 %v9293
    %12114 = vmatpush.bf16.msra.mxu0 %v9285
    %12115 = vmatpush.bf16.msra.mxu0 %v9277
    %12116 = vmatpush.bf16.msra.mxu0 %v9269
    %12117 = vmatpush.bf16.msra.mxu0 %v9261
    %12118 = vmatpush.bf16.msra.mxu0 %v9253
    %12119 = vmatpush.bf16.msra.mxu0 %v9245
    %12120 = vmatpush.bf16.msra.mxu0 %v9237
    %12121 = vmatmul.bf16.gmra.mxu0 %v5103
    %v12122 = vpop.f32.mrf.mxu0
    %v12123 = vadd.f32 %v6149, %v12122
    %v12124 = vpop.f32.mrf.mxu0
    %12125 = vdwg.mxu0
    %12126 = vmatpush.bf16.msra.mxu0 %v9357
    %12127 = vmatpush.bf16.msra.mxu0 %v9349
    %12128 = vmatpush.bf16.msra.mxu0 %v9341
    %12129 = vmatpush.bf16.msra.mxu0 %v9333
    %12130 = vmatpush.bf16.msra.mxu0 %v9325
    %12131 = vmatpush.bf16.msra.mxu0 %v9317
    %12132 = vmatpush.bf16.msra.mxu0 %v9309
    %12133 = vmatpush.bf16.msra.mxu0 %v9301
    %12134 = vmatmul.bf16.gmra.mxu0 %v5104
    %v12135 = vpop.f32.mrf.mxu0
    %v12136 = vadd.f32 %v12123, %v12135
    %v12137 = vpop.f32.mrf.mxu0
    %12138 = vdwg.mxu0
    %12139 = vmatpush.bf16.msra.mxu0 %v9421
    %12140 = vmatpush.bf16.msra.mxu0 %v9413
    %12141 = vmatpush.bf16.msra.mxu0 %v9405
    %12142 = vmatpush.bf16.msra.mxu0 %v9397
    %12143 = vmatpush.bf16.msra.mxu0 %v9389
    %12144 = vmatpush.bf16.msra.mxu0 %v9381
    %12145 = vmatpush.bf16.msra.mxu0 %v9373
    %12146 = vmatpush.bf16.msra.mxu0 %v9365
    %12147 = vmatmul.bf16.gmra.mxu0 %v5105
    %v12148 = vpop.f32.mrf.mxu0
    %v12149 = vadd.f32 %v12136, %v12148
    %v12150 = vpop.f32.mrf.mxu0
    %12151 = vdwg.mxu0
    %12152 = vmatpush.bf16.msra.mxu0 %v9485
    %12153 = vmatpush.bf16.msra.mxu0 %v9477
    %12154 = vmatpush.bf16.msra.mxu0 %v9469
    %12155 = vmatpush.bf16.msra.mxu0 %v9461
    %12156 = vmatpush.bf16.msra.mxu0 %v9453
    %12157 = vmatpush.bf16.msra.mxu0 %v9445
    %12158 = vmatpush.bf16.msra.mxu0 %v9437
    %12159 = vmatpush.bf16.msra.mxu0 %v9429
    %12160 = vmatmul.bf16.gmra.mxu0 %v5106
    %v12161 = vpop.f32.mrf.mxu0
    %v12162 = vadd.f32 %v12149, %v12161
    %v12163 = vpop.f32.mrf.mxu0
    %12164 = vdwg.mxu0
    %12165 = vmatpush.bf16.msra.mxu0 %v9549
    %12166 = vmatpush.bf16.msra.mxu0 %v9541
    %12167 = vmatpush.bf16.msra.mxu0 %v9533
    %12168 = vmatpush.bf16.msra.mxu0 %v9525
    %12169 = vmatpush.bf16.msra.mxu0 %v9517
    %12170 = vmatpush.bf16.msra.mxu0 %v9509
    %12171 = vmatpush.bf16.msra.mxu0 %v9501
    %12172 = vmatpush.bf16.msra.mxu0 %v9493
    %12173 = vmatmul.bf16.gmra.mxu0 %v5107
    %v12174 = vpop.f32.mrf.mxu0
    %v12175 = vadd.f32 %v12162, %v12174
    %v12176 = vpop.f32.mrf.mxu0
    %12177 = vdwg.mxu0
    %12178 = vmatpush.bf16.msra.mxu0 %v9613
    %12179 = vmatpush.bf16.msra.mxu0 %v9605
    %12180 = vmatpush.bf16.msra.mxu0 %v9597
    %12181 = vmatpush.bf16.msra.mxu0 %v9589
    %12182 = vmatpush.bf16.msra.mxu0 %v9581
    %12183 = vmatpush.bf16.msra.mxu0 %v9573
    %12184 = vmatpush.bf16.msra.mxu0 %v9565
    %12185 = vmatpush.bf16.msra.mxu0 %v9557
    %12186 = vmatmul.bf16.gmra.mxu0 %v5108
    %v12187 = vpop.f32.mrf.mxu0
    %v12188 = vadd.f32 %v12175, %v12187
    %v12189 = vpop.f32.mrf.mxu0
    %12190 = vdwg.mxu0
    %12191 = vmatpush.bf16.msra.mxu0 %v9677
    %12192 = vmatpush.bf16.msra.mxu0 %v9669
    %12193 = vmatpush.bf16.msra.mxu0 %v9661
    %12194 = vmatpush.bf16.msra.mxu0 %v9653
    %12195 = vmatpush.bf16.msra.mxu0 %v9645
    %12196 = vmatpush.bf16.msra.mxu0 %v9637
    %12197 = vmatpush.bf16.msra.mxu0 %v9629
    %12198 = vmatpush.bf16.msra.mxu0 %v9621
    %12199 = vmatmul.bf16.gmra.mxu0 %v5109
    %v12200 = vpop.f32.mrf.mxu0
    %v12201 = vadd.f32 %v12188, %v12200
    %v12202 = vpop.f32.mrf.mxu0
    %12203 = vdwg.mxu0
    %12204 = vmatpush.bf16.msra.mxu0 %v9741
    %12205 = vmatpush.bf16.msra.mxu0 %v9733
    %12206 = vmatpush.bf16.msra.mxu0 %v9725
    %12207 = vmatpush.bf16.msra.mxu0 %v9717
    %12208 = vmatpush.bf16.msra.mxu0 %v9709
    %12209 = vmatpush.bf16.msra.mxu0 %v9701
    %12210 = vmatpush.bf16.msra.mxu0 %v9693
    %12211 = vmatpush.bf16.msra.mxu0 %v9685
    %12212 = vmatmul.bf16.gmra.mxu0 %v5110
    %v12213 = vpop.f32.mrf.mxu0
    %v12214 = vadd.f32 %v12201, %v12213
    %v12215 = vpop.f32.mrf.mxu0
    %12216 = vdwg.mxu0
    %12217 = vmatpush.bf16.msra.mxu0 %v9805
    %12218 = vmatpush.bf16.msra.mxu0 %v9797
    %12219 = vmatpush.bf16.msra.mxu0 %v9789
    %12220 = vmatpush.bf16.msra.mxu0 %v9781
    %12221 = vmatpush.bf16.msra.mxu0 %v9773
    %12222 = vmatpush.bf16.msra.mxu0 %v9765
    %12223 = vmatpush.bf16.msra.mxu0 %v9757
    %12224 = vmatpush.bf16.msra.mxu0 %v9749
    %12225 = vmatmul.bf16.gmra.mxu0 %v5111
    %v12226 = vpop.f32.mrf.mxu0
    %v12227 = vadd.f32 %v12214, %v12226
    %v12228 = vpop.f32.mrf.mxu0
    %12229 = vdwg.mxu0
    %12230 = vmatpush.bf16.msra.mxu0 %v9869
    %12231 = vmatpush.bf16.msra.mxu0 %v9861
    %12232 = vmatpush.bf16.msra.mxu0 %v9853
    %12233 = vmatpush.bf16.msra.mxu0 %v9845
    %12234 = vmatpush.bf16.msra.mxu0 %v9837
    %12235 = vmatpush.bf16.msra.mxu0 %v9829
    %12236 = vmatpush.bf16.msra.mxu0 %v9821
    %12237 = vmatpush.bf16.msra.mxu0 %v9813
    %12238 = vmatmul.bf16.gmra.mxu0 %v5112
    %v12239 = vpop.f32.mrf.mxu0
    %v12240 = vadd.f32 %v12227, %v12239
    %v12241 = vpop.f32.mrf.mxu0
    %12242 = vdwg.mxu0
    %12243 = vmatpush.bf16.msra.mxu0 %v9933
    %12244 = vmatpush.bf16.msra.mxu0 %v9925
    %12245 = vmatpush.bf16.msra.mxu0 %v9917
    %12246 = vmatpush.bf16.msra.mxu0 %v9909
    %12247 = vmatpush.bf16.msra.mxu0 %v9901
    %12248 = vmatpush.bf16.msra.mxu0 %v9893
    %12249 = vmatpush.bf16.msra.mxu0 %v9885
    %12250 = vmatpush.bf16.msra.mxu0 %v9877
    %12251 = vmatmul.bf16.gmra.mxu0 %v5113
    %v12252 = vpop.f32.mrf.mxu0
    %v12253 = vadd.f32 %v12240, %v12252
    %v12254 = vpop.f32.mrf.mxu0
    %12255 = vdwg.mxu0
    %12256 = vmatpush.bf16.msra.mxu0 %v9997
    %12257 = vmatpush.bf16.msra.mxu0 %v9989
    %12258 = vmatpush.bf16.msra.mxu0 %v9981
    %12259 = vmatpush.bf16.msra.mxu0 %v9973
    %12260 = vmatpush.bf16.msra.mxu0 %v9965
    %12261 = vmatpush.bf16.msra.mxu0 %v9957
    %12262 = vmatpush.bf16.msra.mxu0 %v9949
    %12263 = vmatpush.bf16.msra.mxu0 %v9941
    %12264 = vmatmul.bf16.gmra.mxu0 %v5114
    %v12265 = vpop.f32.mrf.mxu0
    %v12266 = vadd.f32 %v12253, %v12265
    %v12267 = vpop.f32.mrf.mxu0
    %12268 = vdwg.mxu0
    %12269 = vmatpush.bf16.msra.mxu0 %v10061
    %12270 = vmatpush.bf16.msra.mxu0 %v10053
    %12271 = vmatpush.bf16.msra.mxu0 %v10045
    %12272 = vmatpush.bf16.msra.mxu0 %v10037
    %12273 = vmatpush.bf16.msra.mxu0 %v10029
    %12274 = vmatpush.bf16.msra.mxu0 %v10021
    %12275 = vmatpush.bf16.msra.mxu0 %v10013
    %12276 = vmatpush.bf16.msra.mxu0 %v10005
    %12277 = vmatmul.bf16.gmra.mxu0 %v5115
    %v12278 = vpop.f32.mrf.mxu0
    %v12279 = vadd.f32 %v12266, %v12278
    %v12280 = vpop.f32.mrf.mxu0
    %12281 = vdwg.mxu0
    %12282 = vmatpush.bf16.msra.mxu0 %v10125
    %12283 = vmatpush.bf16.msra.mxu0 %v10117
    %12284 = vmatpush.bf16.msra.mxu0 %v10109
    %12285 = vmatpush.bf16.msra.mxu0 %v10101
    %12286 = vmatpush.bf16.msra.mxu0 %v10093
    %12287 = vmatpush.bf16.msra.mxu0 %v10085
    %12288 = vmatpush.bf16.msra.mxu0 %v10077
    %12289 = vmatpush.bf16.msra.mxu0 %v10069
    %12290 = vmatmul.bf16.gmra.mxu0 %v5116
    %v12291 = vpop.f32.mrf.mxu0
    %v12292 = vadd.f32 %v12279, %v12291
    %v12293 = vpop.f32.mrf.mxu0
    %12294 = vdwg.mxu0
    %12295 = vmatpush.bf16.msra.mxu0 %v10189
    %12296 = vmatpush.bf16.msra.mxu0 %v10181
    %12297 = vmatpush.bf16.msra.mxu0 %v10173
    %12298 = vmatpush.bf16.msra.mxu0 %v10165
    %12299 = vmatpush.bf16.msra.mxu0 %v10157
    %12300 = vmatpush.bf16.msra.mxu0 %v10149
    %12301 = vmatpush.bf16.msra.mxu0 %v10141
    %12302 = vmatpush.bf16.msra.mxu0 %v10133
    %12303 = vmatmul.bf16.gmra.mxu0 %v5117
    %v12304 = vpop.f32.mrf.mxu0
    %v12305 = vadd.f32 %v12292, %v12304
    %v12306 = vpop.f32.mrf.mxu0
    %12307 = vdwg.mxu0
    %12308 = vmatpush.bf16.msra.mxu0 %v10253
    %12309 = vmatpush.bf16.msra.mxu0 %v10245
    %12310 = vmatpush.bf16.msra.mxu0 %v10237
    %12311 = vmatpush.bf16.msra.mxu0 %v10229
    %12312 = vmatpush.bf16.msra.mxu0 %v10221
    %12313 = vmatpush.bf16.msra.mxu0 %v10213
    %12314 = vmatpush.bf16.msra.mxu0 %v10205
    %12315 = vmatpush.bf16.msra.mxu0 %v10197
    %12316 = vmatmul.bf16.gmra.mxu0 %v5118
    %v12317 = vpop.f32.mrf.mxu0
    %v12318 = vadd.f32 %v12305, %v12317
    %v12319 = vpop.f32.mrf.mxu0
    %12320 = vdwg.mxu0
    %12321 = vmatpush.bf16.msra.mxu0 %v9294
    %12322 = vmatpush.bf16.msra.mxu0 %v9286
    %12323 = vmatpush.bf16.msra.mxu0 %v9278
    %12324 = vmatpush.bf16.msra.mxu0 %v9270
    %12325 = vmatpush.bf16.msra.mxu0 %v9262
    %12326 = vmatpush.bf16.msra.mxu0 %v9254
    %12327 = vmatpush.bf16.msra.mxu0 %v9246
    %12328 = vmatpush.bf16.msra.mxu0 %v9238
    %12329 = vmatmul.bf16.gmra.mxu0 %v5103
    %v12330 = vpop.f32.mrf.mxu0
    %v12331 = vadd.f32 %v6150, %v12330
    %v12332 = vpop.f32.mrf.mxu0
    %12333 = vdwg.mxu0
    %12334 = vmatpush.bf16.msra.mxu0 %v9358
    %12335 = vmatpush.bf16.msra.mxu0 %v9350
    %12336 = vmatpush.bf16.msra.mxu0 %v9342
    %12337 = vmatpush.bf16.msra.mxu0 %v9334
    %12338 = vmatpush.bf16.msra.mxu0 %v9326
    %12339 = vmatpush.bf16.msra.mxu0 %v9318
    %12340 = vmatpush.bf16.msra.mxu0 %v9310
    %12341 = vmatpush.bf16.msra.mxu0 %v9302
    %12342 = vmatmul.bf16.gmra.mxu0 %v5104
    %v12343 = vpop.f32.mrf.mxu0
    %v12344 = vadd.f32 %v12331, %v12343
    %v12345 = vpop.f32.mrf.mxu0
    %12346 = vdwg.mxu0
    %12347 = vmatpush.bf16.msra.mxu0 %v9422
    %12348 = vmatpush.bf16.msra.mxu0 %v9414
    %12349 = vmatpush.bf16.msra.mxu0 %v9406
    %12350 = vmatpush.bf16.msra.mxu0 %v9398
    %12351 = vmatpush.bf16.msra.mxu0 %v9390
    %12352 = vmatpush.bf16.msra.mxu0 %v9382
    %12353 = vmatpush.bf16.msra.mxu0 %v9374
    %12354 = vmatpush.bf16.msra.mxu0 %v9366
    %12355 = vmatmul.bf16.gmra.mxu0 %v5105
    %v12356 = vpop.f32.mrf.mxu0
    %v12357 = vadd.f32 %v12344, %v12356
    %v12358 = vpop.f32.mrf.mxu0
    %12359 = vdwg.mxu0
    %12360 = vmatpush.bf16.msra.mxu0 %v9486
    %12361 = vmatpush.bf16.msra.mxu0 %v9478
    %12362 = vmatpush.bf16.msra.mxu0 %v9470
    %12363 = vmatpush.bf16.msra.mxu0 %v9462
    %12364 = vmatpush.bf16.msra.mxu0 %v9454
    %12365 = vmatpush.bf16.msra.mxu0 %v9446
    %12366 = vmatpush.bf16.msra.mxu0 %v9438
    %12367 = vmatpush.bf16.msra.mxu0 %v9430
    %12368 = vmatmul.bf16.gmra.mxu0 %v5106
    %v12369 = vpop.f32.mrf.mxu0
    %v12370 = vadd.f32 %v12357, %v12369
    %v12371 = vpop.f32.mrf.mxu0
    %12372 = vdwg.mxu0
    %12373 = vmatpush.bf16.msra.mxu0 %v9550
    %12374 = vmatpush.bf16.msra.mxu0 %v9542
    %12375 = vmatpush.bf16.msra.mxu0 %v9534
    %12376 = vmatpush.bf16.msra.mxu0 %v9526
    %12377 = vmatpush.bf16.msra.mxu0 %v9518
    %12378 = vmatpush.bf16.msra.mxu0 %v9510
    %12379 = vmatpush.bf16.msra.mxu0 %v9502
    %12380 = vmatpush.bf16.msra.mxu0 %v9494
    %12381 = vmatmul.bf16.gmra.mxu0 %v5107
    %v12382 = vpop.f32.mrf.mxu0
    %v12383 = vadd.f32 %v12370, %v12382
    %v12384 = vpop.f32.mrf.mxu0
    %12385 = vdwg.mxu0
    %12386 = vmatpush.bf16.msra.mxu0 %v9614
    %12387 = vmatpush.bf16.msra.mxu0 %v9606
    %12388 = vmatpush.bf16.msra.mxu0 %v9598
    %12389 = vmatpush.bf16.msra.mxu0 %v9590
    %12390 = vmatpush.bf16.msra.mxu0 %v9582
    %12391 = vmatpush.bf16.msra.mxu0 %v9574
    %12392 = vmatpush.bf16.msra.mxu0 %v9566
    %12393 = vmatpush.bf16.msra.mxu0 %v9558
    %12394 = vmatmul.bf16.gmra.mxu0 %v5108
    %v12395 = vpop.f32.mrf.mxu0
    %v12396 = vadd.f32 %v12383, %v12395
    %v12397 = vpop.f32.mrf.mxu0
    %12398 = vdwg.mxu0
    %12399 = vmatpush.bf16.msra.mxu0 %v9678
    %12400 = vmatpush.bf16.msra.mxu0 %v9670
    %12401 = vmatpush.bf16.msra.mxu0 %v9662
    %12402 = vmatpush.bf16.msra.mxu0 %v9654
    %12403 = vmatpush.bf16.msra.mxu0 %v9646
    %12404 = vmatpush.bf16.msra.mxu0 %v9638
    %12405 = vmatpush.bf16.msra.mxu0 %v9630
    %12406 = vmatpush.bf16.msra.mxu0 %v9622
    %12407 = vmatmul.bf16.gmra.mxu0 %v5109
    %v12408 = vpop.f32.mrf.mxu0
    %v12409 = vadd.f32 %v12396, %v12408
    %v12410 = vpop.f32.mrf.mxu0
    %12411 = vdwg.mxu0
    %12412 = vmatpush.bf16.msra.mxu0 %v9742
    %12413 = vmatpush.bf16.msra.mxu0 %v9734
    %12414 = vmatpush.bf16.msra.mxu0 %v9726
    %12415 = vmatpush.bf16.msra.mxu0 %v9718
    %12416 = vmatpush.bf16.msra.mxu0 %v9710
    %12417 = vmatpush.bf16.msra.mxu0 %v9702
    %12418 = vmatpush.bf16.msra.mxu0 %v9694
    %12419 = vmatpush.bf16.msra.mxu0 %v9686
    %12420 = vmatmul.bf16.gmra.mxu0 %v5110
    %v12421 = vpop.f32.mrf.mxu0
    %v12422 = vadd.f32 %v12409, %v12421
    %v12423 = vpop.f32.mrf.mxu0
    %12424 = vdwg.mxu0
    %12425 = vmatpush.bf16.msra.mxu0 %v9806
    %12426 = vmatpush.bf16.msra.mxu0 %v9798
    %12427 = vmatpush.bf16.msra.mxu0 %v9790
    %12428 = vmatpush.bf16.msra.mxu0 %v9782
    %12429 = vmatpush.bf16.msra.mxu0 %v9774
    %12430 = vmatpush.bf16.msra.mxu0 %v9766
    %12431 = vmatpush.bf16.msra.mxu0 %v9758
    %12432 = vmatpush.bf16.msra.mxu0 %v9750
    %12433 = vmatmul.bf16.gmra.mxu0 %v5111
    %v12434 = vpop.f32.mrf.mxu0
    %v12435 = vadd.f32 %v12422, %v12434
    %v12436 = vpop.f32.mrf.mxu0
    %12437 = vdwg.mxu0
    %12438 = vmatpush.bf16.msra.mxu0 %v9870
    %12439 = vmatpush.bf16.msra.mxu0 %v9862
    %12440 = vmatpush.bf16.msra.mxu0 %v9854
    %12441 = vmatpush.bf16.msra.mxu0 %v9846
    %12442 = vmatpush.bf16.msra.mxu0 %v9838
    %12443 = vmatpush.bf16.msra.mxu0 %v9830
    %12444 = vmatpush.bf16.msra.mxu0 %v9822
    %12445 = vmatpush.bf16.msra.mxu0 %v9814
    %12446 = vmatmul.bf16.gmra.mxu0 %v5112
    %v12447 = vpop.f32.mrf.mxu0
    %v12448 = vadd.f32 %v12435, %v12447
    %v12449 = vpop.f32.mrf.mxu0
    %12450 = vdwg.mxu0
    %12451 = vmatpush.bf16.msra.mxu0 %v9934
    %12452 = vmatpush.bf16.msra.mxu0 %v9926
    %12453 = vmatpush.bf16.msra.mxu0 %v9918
    %12454 = vmatpush.bf16.msra.mxu0 %v9910
    %12455 = vmatpush.bf16.msra.mxu0 %v9902
    %12456 = vmatpush.bf16.msra.mxu0 %v9894
    %12457 = vmatpush.bf16.msra.mxu0 %v9886
    %12458 = vmatpush.bf16.msra.mxu0 %v9878
    %12459 = vmatmul.bf16.gmra.mxu0 %v5113
    %v12460 = vpop.f32.mrf.mxu0
    %v12461 = vadd.f32 %v12448, %v12460
    %v12462 = vpop.f32.mrf.mxu0
    %12463 = vdwg.mxu0
    %12464 = vmatpush.bf16.msra.mxu0 %v9998
    %12465 = vmatpush.bf16.msra.mxu0 %v9990
    %12466 = vmatpush.bf16.msra.mxu0 %v9982
    %12467 = vmatpush.bf16.msra.mxu0 %v9974
    %12468 = vmatpush.bf16.msra.mxu0 %v9966
    %12469 = vmatpush.bf16.msra.mxu0 %v9958
    %12470 = vmatpush.bf16.msra.mxu0 %v9950
    %12471 = vmatpush.bf16.msra.mxu0 %v9942
    %12472 = vmatmul.bf16.gmra.mxu0 %v5114
    %v12473 = vpop.f32.mrf.mxu0
    %v12474 = vadd.f32 %v12461, %v12473
    %v12475 = vpop.f32.mrf.mxu0
    %12476 = vdwg.mxu0
    %12477 = vmatpush.bf16.msra.mxu0 %v10062
    %12478 = vmatpush.bf16.msra.mxu0 %v10054
    %12479 = vmatpush.bf16.msra.mxu0 %v10046
    %12480 = vmatpush.bf16.msra.mxu0 %v10038
    %12481 = vmatpush.bf16.msra.mxu0 %v10030
    %12482 = vmatpush.bf16.msra.mxu0 %v10022
    %12483 = vmatpush.bf16.msra.mxu0 %v10014
    %12484 = vmatpush.bf16.msra.mxu0 %v10006
    %12485 = vmatmul.bf16.gmra.mxu0 %v5115
    %v12486 = vpop.f32.mrf.mxu0
    %v12487 = vadd.f32 %v12474, %v12486
    %v12488 = vpop.f32.mrf.mxu0
    %12489 = vdwg.mxu0
    %12490 = vmatpush.bf16.msra.mxu0 %v10126
    %12491 = vmatpush.bf16.msra.mxu0 %v10118
    %12492 = vmatpush.bf16.msra.mxu0 %v10110
    %12493 = vmatpush.bf16.msra.mxu0 %v10102
    %12494 = vmatpush.bf16.msra.mxu0 %v10094
    %12495 = vmatpush.bf16.msra.mxu0 %v10086
    %12496 = vmatpush.bf16.msra.mxu0 %v10078
    %12497 = vmatpush.bf16.msra.mxu0 %v10070
    %12498 = vmatmul.bf16.gmra.mxu0 %v5116
    %v12499 = vpop.f32.mrf.mxu0
    %v12500 = vadd.f32 %v12487, %v12499
    %v12501 = vpop.f32.mrf.mxu0
    %12502 = vdwg.mxu0
    %12503 = vmatpush.bf16.msra.mxu0 %v10190
    %12504 = vmatpush.bf16.msra.mxu0 %v10182
    %12505 = vmatpush.bf16.msra.mxu0 %v10174
    %12506 = vmatpush.bf16.msra.mxu0 %v10166
    %12507 = vmatpush.bf16.msra.mxu0 %v10158
    %12508 = vmatpush.bf16.msra.mxu0 %v10150
    %12509 = vmatpush.bf16.msra.mxu0 %v10142
    %12510 = vmatpush.bf16.msra.mxu0 %v10134
    %12511 = vmatmul.bf16.gmra.mxu0 %v5117
    %v12512 = vpop.f32.mrf.mxu0
    %v12513 = vadd.f32 %v12500, %v12512
    %v12514 = vpop.f32.mrf.mxu0
    %12515 = vdwg.mxu0
    %12516 = vmatpush.bf16.msra.mxu0 %v10254
    %12517 = vmatpush.bf16.msra.mxu0 %v10246
    %12518 = vmatpush.bf16.msra.mxu0 %v10238
    %12519 = vmatpush.bf16.msra.mxu0 %v10230
    %12520 = vmatpush.bf16.msra.mxu0 %v10222
    %12521 = vmatpush.bf16.msra.mxu0 %v10214
    %12522 = vmatpush.bf16.msra.mxu0 %v10206
    %12523 = vmatpush.bf16.msra.mxu0 %v10198
    %12524 = vmatmul.bf16.gmra.mxu0 %v5118
    %v12525 = vpop.f32.mrf.mxu0
    %v12526 = vadd.f32 %v12513, %v12525
    %v12527 = vpop.f32.mrf.mxu0
    %12528 = vdwg.mxu0
    %12529 = vmatpush.bf16.msra.mxu0 %v9295
    %12530 = vmatpush.bf16.msra.mxu0 %v9287
    %12531 = vmatpush.bf16.msra.mxu0 %v9279
    %12532 = vmatpush.bf16.msra.mxu0 %v9271
    %12533 = vmatpush.bf16.msra.mxu0 %v9263
    %12534 = vmatpush.bf16.msra.mxu0 %v9255
    %12535 = vmatpush.bf16.msra.mxu0 %v9247
    %12536 = vmatpush.bf16.msra.mxu0 %v9239
    %12537 = vmatmul.bf16.gmra.mxu0 %v5103
    %v12538 = vpop.f32.mrf.mxu0
    %v12539 = vadd.f32 %v6151, %v12538
    %v12540 = vpop.f32.mrf.mxu0
    %12541 = vdwg.mxu0
    %12542 = vmatpush.bf16.msra.mxu0 %v9359
    %12543 = vmatpush.bf16.msra.mxu0 %v9351
    %12544 = vmatpush.bf16.msra.mxu0 %v9343
    %12545 = vmatpush.bf16.msra.mxu0 %v9335
    %12546 = vmatpush.bf16.msra.mxu0 %v9327
    %12547 = vmatpush.bf16.msra.mxu0 %v9319
    %12548 = vmatpush.bf16.msra.mxu0 %v9311
    %12549 = vmatpush.bf16.msra.mxu0 %v9303
    %12550 = vmatmul.bf16.gmra.mxu0 %v5104
    %v12551 = vpop.f32.mrf.mxu0
    %v12552 = vadd.f32 %v12539, %v12551
    %v12553 = vpop.f32.mrf.mxu0
    %12554 = vdwg.mxu0
    %12555 = vmatpush.bf16.msra.mxu0 %v9423
    %12556 = vmatpush.bf16.msra.mxu0 %v9415
    %12557 = vmatpush.bf16.msra.mxu0 %v9407
    %12558 = vmatpush.bf16.msra.mxu0 %v9399
    %12559 = vmatpush.bf16.msra.mxu0 %v9391
    %12560 = vmatpush.bf16.msra.mxu0 %v9383
    %12561 = vmatpush.bf16.msra.mxu0 %v9375
    %12562 = vmatpush.bf16.msra.mxu0 %v9367
    %12563 = vmatmul.bf16.gmra.mxu0 %v5105
    %v12564 = vpop.f32.mrf.mxu0
    %v12565 = vadd.f32 %v12552, %v12564
    %v12566 = vpop.f32.mrf.mxu0
    %12567 = vdwg.mxu0
    %12568 = vmatpush.bf16.msra.mxu0 %v9487
    %12569 = vmatpush.bf16.msra.mxu0 %v9479
    %12570 = vmatpush.bf16.msra.mxu0 %v9471
    %12571 = vmatpush.bf16.msra.mxu0 %v9463
    %12572 = vmatpush.bf16.msra.mxu0 %v9455
    %12573 = vmatpush.bf16.msra.mxu0 %v9447
    %12574 = vmatpush.bf16.msra.mxu0 %v9439
    %12575 = vmatpush.bf16.msra.mxu0 %v9431
    %12576 = vmatmul.bf16.gmra.mxu0 %v5106
    %v12577 = vpop.f32.mrf.mxu0
    %v12578 = vadd.f32 %v12565, %v12577
    %v12579 = vpop.f32.mrf.mxu0
    %12580 = vdwg.mxu0
    %12581 = vmatpush.bf16.msra.mxu0 %v9551
    %12582 = vmatpush.bf16.msra.mxu0 %v9543
    %12583 = vmatpush.bf16.msra.mxu0 %v9535
    %12584 = vmatpush.bf16.msra.mxu0 %v9527
    %12585 = vmatpush.bf16.msra.mxu0 %v9519
    %12586 = vmatpush.bf16.msra.mxu0 %v9511
    %12587 = vmatpush.bf16.msra.mxu0 %v9503
    %12588 = vmatpush.bf16.msra.mxu0 %v9495
    %12589 = vmatmul.bf16.gmra.mxu0 %v5107
    %v12590 = vpop.f32.mrf.mxu0
    %v12591 = vadd.f32 %v12578, %v12590
    %v12592 = vpop.f32.mrf.mxu0
    %12593 = vdwg.mxu0
    %12594 = vmatpush.bf16.msra.mxu0 %v9615
    %12595 = vmatpush.bf16.msra.mxu0 %v9607
    %12596 = vmatpush.bf16.msra.mxu0 %v9599
    %12597 = vmatpush.bf16.msra.mxu0 %v9591
    %12598 = vmatpush.bf16.msra.mxu0 %v9583
    %12599 = vmatpush.bf16.msra.mxu0 %v9575
    %12600 = vmatpush.bf16.msra.mxu0 %v9567
    %12601 = vmatpush.bf16.msra.mxu0 %v9559
    %12602 = vmatmul.bf16.gmra.mxu0 %v5108
    %v12603 = vpop.f32.mrf.mxu0
    %v12604 = vadd.f32 %v12591, %v12603
    %v12605 = vpop.f32.mrf.mxu0
    %12606 = vdwg.mxu0
    %12607 = vmatpush.bf16.msra.mxu0 %v9679
    %12608 = vmatpush.bf16.msra.mxu0 %v9671
    %12609 = vmatpush.bf16.msra.mxu0 %v9663
    %12610 = vmatpush.bf16.msra.mxu0 %v9655
    %12611 = vmatpush.bf16.msra.mxu0 %v9647
    %12612 = vmatpush.bf16.msra.mxu0 %v9639
    %12613 = vmatpush.bf16.msra.mxu0 %v9631
    %12614 = vmatpush.bf16.msra.mxu0 %v9623
    %12615 = vmatmul.bf16.gmra.mxu0 %v5109
    %v12616 = vpop.f32.mrf.mxu0
    %v12617 = vadd.f32 %v12604, %v12616
    %v12618 = vpop.f32.mrf.mxu0
    %12619 = vdwg.mxu0
    %12620 = vmatpush.bf16.msra.mxu0 %v9743
    %12621 = vmatpush.bf16.msra.mxu0 %v9735
    %12622 = vmatpush.bf16.msra.mxu0 %v9727
    %12623 = vmatpush.bf16.msra.mxu0 %v9719
    %12624 = vmatpush.bf16.msra.mxu0 %v9711
    %12625 = vmatpush.bf16.msra.mxu0 %v9703
    %12626 = vmatpush.bf16.msra.mxu0 %v9695
    %12627 = vmatpush.bf16.msra.mxu0 %v9687
    %12628 = vmatmul.bf16.gmra.mxu0 %v5110
    %v12629 = vpop.f32.mrf.mxu0
    %v12630 = vadd.f32 %v12617, %v12629
    %v12631 = vpop.f32.mrf.mxu0
    %12632 = vdwg.mxu0
    %12633 = vmatpush.bf16.msra.mxu0 %v9807
    %12634 = vmatpush.bf16.msra.mxu0 %v9799
    %12635 = vmatpush.bf16.msra.mxu0 %v9791
    %12636 = vmatpush.bf16.msra.mxu0 %v9783
    %12637 = vmatpush.bf16.msra.mxu0 %v9775
    %12638 = vmatpush.bf16.msra.mxu0 %v9767
    %12639 = vmatpush.bf16.msra.mxu0 %v9759
    %12640 = vmatpush.bf16.msra.mxu0 %v9751
    %12641 = vmatmul.bf16.gmra.mxu0 %v5111
    %v12642 = vpop.f32.mrf.mxu0
    %v12643 = vadd.f32 %v12630, %v12642
    %v12644 = vpop.f32.mrf.mxu0
    %12645 = vdwg.mxu0
    %12646 = vmatpush.bf16.msra.mxu0 %v9871
    %12647 = vmatpush.bf16.msra.mxu0 %v9863
    %12648 = vmatpush.bf16.msra.mxu0 %v9855
    %12649 = vmatpush.bf16.msra.mxu0 %v9847
    %12650 = vmatpush.bf16.msra.mxu0 %v9839
    %12651 = vmatpush.bf16.msra.mxu0 %v9831
    %12652 = vmatpush.bf16.msra.mxu0 %v9823
    %12653 = vmatpush.bf16.msra.mxu0 %v9815
    %12654 = vmatmul.bf16.gmra.mxu0 %v5112
    %v12655 = vpop.f32.mrf.mxu0
    %v12656 = vadd.f32 %v12643, %v12655
    %v12657 = vpop.f32.mrf.mxu0
    %12658 = vdwg.mxu0
    %12659 = vmatpush.bf16.msra.mxu0 %v9935
    %12660 = vmatpush.bf16.msra.mxu0 %v9927
    %12661 = vmatpush.bf16.msra.mxu0 %v9919
    %12662 = vmatpush.bf16.msra.mxu0 %v9911
    %12663 = vmatpush.bf16.msra.mxu0 %v9903
    %12664 = vmatpush.bf16.msra.mxu0 %v9895
    %12665 = vmatpush.bf16.msra.mxu0 %v9887
    %12666 = vmatpush.bf16.msra.mxu0 %v9879
    %12667 = vmatmul.bf16.gmra.mxu0 %v5113
    %v12668 = vpop.f32.mrf.mxu0
    %v12669 = vadd.f32 %v12656, %v12668
    %v12670 = vpop.f32.mrf.mxu0
    %12671 = vdwg.mxu0
    %12672 = vmatpush.bf16.msra.mxu0 %v9999
    %12673 = vmatpush.bf16.msra.mxu0 %v9991
    %12674 = vmatpush.bf16.msra.mxu0 %v9983
    %12675 = vmatpush.bf16.msra.mxu0 %v9975
    %12676 = vmatpush.bf16.msra.mxu0 %v9967
    %12677 = vmatpush.bf16.msra.mxu0 %v9959
    %12678 = vmatpush.bf16.msra.mxu0 %v9951
    %12679 = vmatpush.bf16.msra.mxu0 %v9943
    %12680 = vmatmul.bf16.gmra.mxu0 %v5114
    %v12681 = vpop.f32.mrf.mxu0
    %v12682 = vadd.f32 %v12669, %v12681
    %v12683 = vpop.f32.mrf.mxu0
    %12684 = vdwg.mxu0
    %12685 = vmatpush.bf16.msra.mxu0 %v10063
    %12686 = vmatpush.bf16.msra.mxu0 %v10055
    %12687 = vmatpush.bf16.msra.mxu0 %v10047
    %12688 = vmatpush.bf16.msra.mxu0 %v10039
    %12689 = vmatpush.bf16.msra.mxu0 %v10031
    %12690 = vmatpush.bf16.msra.mxu0 %v10023
    %12691 = vmatpush.bf16.msra.mxu0 %v10015
    %12692 = vmatpush.bf16.msra.mxu0 %v10007
    %12693 = vmatmul.bf16.gmra.mxu0 %v5115
    %v12694 = vpop.f32.mrf.mxu0
    %v12695 = vadd.f32 %v12682, %v12694
    %v12696 = vpop.f32.mrf.mxu0
    %12697 = vdwg.mxu0
    %12698 = vmatpush.bf16.msra.mxu0 %v10127
    %12699 = vmatpush.bf16.msra.mxu0 %v10119
    %12700 = vmatpush.bf16.msra.mxu0 %v10111
    %12701 = vmatpush.bf16.msra.mxu0 %v10103
    %12702 = vmatpush.bf16.msra.mxu0 %v10095
    %12703 = vmatpush.bf16.msra.mxu0 %v10087
    %12704 = vmatpush.bf16.msra.mxu0 %v10079
    %12705 = vmatpush.bf16.msra.mxu0 %v10071
    %12706 = vmatmul.bf16.gmra.mxu0 %v5116
    %v12707 = vpop.f32.mrf.mxu0
    %v12708 = vadd.f32 %v12695, %v12707
    %v12709 = vpop.f32.mrf.mxu0
    %12710 = vdwg.mxu0
    %12711 = vmatpush.bf16.msra.mxu0 %v10191
    %12712 = vmatpush.bf16.msra.mxu0 %v10183
    %12713 = vmatpush.bf16.msra.mxu0 %v10175
    %12714 = vmatpush.bf16.msra.mxu0 %v10167
    %12715 = vmatpush.bf16.msra.mxu0 %v10159
    %12716 = vmatpush.bf16.msra.mxu0 %v10151
    %12717 = vmatpush.bf16.msra.mxu0 %v10143
    %12718 = vmatpush.bf16.msra.mxu0 %v10135
    %12719 = vmatmul.bf16.gmra.mxu0 %v5117
    %v12720 = vpop.f32.mrf.mxu0
    %v12721 = vadd.f32 %v12708, %v12720
    %v12722 = vpop.f32.mrf.mxu0
    %12723 = vdwg.mxu0
    %12724 = vmatpush.bf16.msra.mxu0 %v10255
    %12725 = vmatpush.bf16.msra.mxu0 %v10247
    %12726 = vmatpush.bf16.msra.mxu0 %v10239
    %12727 = vmatpush.bf16.msra.mxu0 %v10231
    %12728 = vmatpush.bf16.msra.mxu0 %v10223
    %12729 = vmatpush.bf16.msra.mxu0 %v10215
    %12730 = vmatpush.bf16.msra.mxu0 %v10207
    %12731 = vmatpush.bf16.msra.mxu0 %v10199
    %12732 = vmatmul.bf16.gmra.mxu0 %v5118
    %v12733 = vpop.f32.mrf.mxu0
    %v12734 = vadd.f32 %v12721, %v12733
    %v12735 = vpop.f32.mrf.mxu0
    %12736 = vdwg.mxu0
    %12737 = vmatpush.bf16.msra.mxu0 %v9296
    %12738 = vmatpush.bf16.msra.mxu0 %v9288
    %12739 = vmatpush.bf16.msra.mxu0 %v9280
    %12740 = vmatpush.bf16.msra.mxu0 %v9272
    %12741 = vmatpush.bf16.msra.mxu0 %v9264
    %12742 = vmatpush.bf16.msra.mxu0 %v9256
    %12743 = vmatpush.bf16.msra.mxu0 %v9248
    %12744 = vmatpush.bf16.msra.mxu0 %v9240
    %12745 = vmatmul.bf16.gmra.mxu0 %v5103
    %v12746 = vpop.f32.mrf.mxu0
    %v12747 = vadd.f32 %v6152, %v12746
    %v12748 = vpop.f32.mrf.mxu0
    %12749 = vdwg.mxu0
    %12750 = vmatpush.bf16.msra.mxu0 %v9360
    %12751 = vmatpush.bf16.msra.mxu0 %v9352
    %12752 = vmatpush.bf16.msra.mxu0 %v9344
    %12753 = vmatpush.bf16.msra.mxu0 %v9336
    %12754 = vmatpush.bf16.msra.mxu0 %v9328
    %12755 = vmatpush.bf16.msra.mxu0 %v9320
    %12756 = vmatpush.bf16.msra.mxu0 %v9312
    %12757 = vmatpush.bf16.msra.mxu0 %v9304
    %12758 = vmatmul.bf16.gmra.mxu0 %v5104
    %v12759 = vpop.f32.mrf.mxu0
    %v12760 = vadd.f32 %v12747, %v12759
    %v12761 = vpop.f32.mrf.mxu0
    %12762 = vdwg.mxu0
    %12763 = vmatpush.bf16.msra.mxu0 %v9424
    %12764 = vmatpush.bf16.msra.mxu0 %v9416
    %12765 = vmatpush.bf16.msra.mxu0 %v9408
    %12766 = vmatpush.bf16.msra.mxu0 %v9400
    %12767 = vmatpush.bf16.msra.mxu0 %v9392
    %12768 = vmatpush.bf16.msra.mxu0 %v9384
    %12769 = vmatpush.bf16.msra.mxu0 %v9376
    %12770 = vmatpush.bf16.msra.mxu0 %v9368
    %12771 = vmatmul.bf16.gmra.mxu0 %v5105
    %v12772 = vpop.f32.mrf.mxu0
    %v12773 = vadd.f32 %v12760, %v12772
    %v12774 = vpop.f32.mrf.mxu0
    %12775 = vdwg.mxu0
    %12776 = vmatpush.bf16.msra.mxu0 %v9488
    %12777 = vmatpush.bf16.msra.mxu0 %v9480
    %12778 = vmatpush.bf16.msra.mxu0 %v9472
    %12779 = vmatpush.bf16.msra.mxu0 %v9464
    %12780 = vmatpush.bf16.msra.mxu0 %v9456
    %12781 = vmatpush.bf16.msra.mxu0 %v9448
    %12782 = vmatpush.bf16.msra.mxu0 %v9440
    %12783 = vmatpush.bf16.msra.mxu0 %v9432
    %12784 = vmatmul.bf16.gmra.mxu0 %v5106
    %v12785 = vpop.f32.mrf.mxu0
    %v12786 = vadd.f32 %v12773, %v12785
    %v12787 = vpop.f32.mrf.mxu0
    %12788 = vdwg.mxu0
    %12789 = vmatpush.bf16.msra.mxu0 %v9552
    %12790 = vmatpush.bf16.msra.mxu0 %v9544
    %12791 = vmatpush.bf16.msra.mxu0 %v9536
    %12792 = vmatpush.bf16.msra.mxu0 %v9528
    %12793 = vmatpush.bf16.msra.mxu0 %v9520
    %12794 = vmatpush.bf16.msra.mxu0 %v9512
    %12795 = vmatpush.bf16.msra.mxu0 %v9504
    %12796 = vmatpush.bf16.msra.mxu0 %v9496
    %12797 = vmatmul.bf16.gmra.mxu0 %v5107
    %v12798 = vpop.f32.mrf.mxu0
    %v12799 = vadd.f32 %v12786, %v12798
    %v12800 = vpop.f32.mrf.mxu0
    %12801 = vdwg.mxu0
    %12802 = vmatpush.bf16.msra.mxu0 %v9616
    %12803 = vmatpush.bf16.msra.mxu0 %v9608
    %12804 = vmatpush.bf16.msra.mxu0 %v9600
    %12805 = vmatpush.bf16.msra.mxu0 %v9592
    %12806 = vmatpush.bf16.msra.mxu0 %v9584
    %12807 = vmatpush.bf16.msra.mxu0 %v9576
    %12808 = vmatpush.bf16.msra.mxu0 %v9568
    %12809 = vmatpush.bf16.msra.mxu0 %v9560
    %12810 = vmatmul.bf16.gmra.mxu0 %v5108
    %v12811 = vpop.f32.mrf.mxu0
    %v12812 = vadd.f32 %v12799, %v12811
    %v12813 = vpop.f32.mrf.mxu0
    %12814 = vdwg.mxu0
    %12815 = vmatpush.bf16.msra.mxu0 %v9680
    %12816 = vmatpush.bf16.msra.mxu0 %v9672
    %12817 = vmatpush.bf16.msra.mxu0 %v9664
    %12818 = vmatpush.bf16.msra.mxu0 %v9656
    %12819 = vmatpush.bf16.msra.mxu0 %v9648
    %12820 = vmatpush.bf16.msra.mxu0 %v9640
    %12821 = vmatpush.bf16.msra.mxu0 %v9632
    %12822 = vmatpush.bf16.msra.mxu0 %v9624
    %12823 = vmatmul.bf16.gmra.mxu0 %v5109
    %v12824 = vpop.f32.mrf.mxu0
    %v12825 = vadd.f32 %v12812, %v12824
    %v12826 = vpop.f32.mrf.mxu0
    %12827 = vdwg.mxu0
    %12828 = vmatpush.bf16.msra.mxu0 %v9744
    %12829 = vmatpush.bf16.msra.mxu0 %v9736
    %12830 = vmatpush.bf16.msra.mxu0 %v9728
    %12831 = vmatpush.bf16.msra.mxu0 %v9720
    %12832 = vmatpush.bf16.msra.mxu0 %v9712
    %12833 = vmatpush.bf16.msra.mxu0 %v9704
    %12834 = vmatpush.bf16.msra.mxu0 %v9696
    %12835 = vmatpush.bf16.msra.mxu0 %v9688
    %12836 = vmatmul.bf16.gmra.mxu0 %v5110
    %v12837 = vpop.f32.mrf.mxu0
    %v12838 = vadd.f32 %v12825, %v12837
    %v12839 = vpop.f32.mrf.mxu0
    %12840 = vdwg.mxu0
    %12841 = vmatpush.bf16.msra.mxu0 %v9808
    %12842 = vmatpush.bf16.msra.mxu0 %v9800
    %12843 = vmatpush.bf16.msra.mxu0 %v9792
    %12844 = vmatpush.bf16.msra.mxu0 %v9784
    %12845 = vmatpush.bf16.msra.mxu0 %v9776
    %12846 = vmatpush.bf16.msra.mxu0 %v9768
    %12847 = vmatpush.bf16.msra.mxu0 %v9760
    %12848 = vmatpush.bf16.msra.mxu0 %v9752
    %12849 = vmatmul.bf16.gmra.mxu0 %v5111
    %v12850 = vpop.f32.mrf.mxu0
    %v12851 = vadd.f32 %v12838, %v12850
    %v12852 = vpop.f32.mrf.mxu0
    %12853 = vdwg.mxu0
    %12854 = vmatpush.bf16.msra.mxu0 %v9872
    %12855 = vmatpush.bf16.msra.mxu0 %v9864
    %12856 = vmatpush.bf16.msra.mxu0 %v9856
    %12857 = vmatpush.bf16.msra.mxu0 %v9848
    %12858 = vmatpush.bf16.msra.mxu0 %v9840
    %12859 = vmatpush.bf16.msra.mxu0 %v9832
    %12860 = vmatpush.bf16.msra.mxu0 %v9824
    %12861 = vmatpush.bf16.msra.mxu0 %v9816
    %12862 = vmatmul.bf16.gmra.mxu0 %v5112
    %v12863 = vpop.f32.mrf.mxu0
    %v12864 = vadd.f32 %v12851, %v12863
    %v12865 = vpop.f32.mrf.mxu0
    %12866 = vdwg.mxu0
    %12867 = vmatpush.bf16.msra.mxu0 %v9936
    %12868 = vmatpush.bf16.msra.mxu0 %v9928
    %12869 = vmatpush.bf16.msra.mxu0 %v9920
    %12870 = vmatpush.bf16.msra.mxu0 %v9912
    %12871 = vmatpush.bf16.msra.mxu0 %v9904
    %12872 = vmatpush.bf16.msra.mxu0 %v9896
    %12873 = vmatpush.bf16.msra.mxu0 %v9888
    %12874 = vmatpush.bf16.msra.mxu0 %v9880
    %12875 = vmatmul.bf16.gmra.mxu0 %v5113
    %v12876 = vpop.f32.mrf.mxu0
    %v12877 = vadd.f32 %v12864, %v12876
    %v12878 = vpop.f32.mrf.mxu0
    %12879 = vdwg.mxu0
    %12880 = vmatpush.bf16.msra.mxu0 %v10000
    %12881 = vmatpush.bf16.msra.mxu0 %v9992
    %12882 = vmatpush.bf16.msra.mxu0 %v9984
    %12883 = vmatpush.bf16.msra.mxu0 %v9976
    %12884 = vmatpush.bf16.msra.mxu0 %v9968
    %12885 = vmatpush.bf16.msra.mxu0 %v9960
    %12886 = vmatpush.bf16.msra.mxu0 %v9952
    %12887 = vmatpush.bf16.msra.mxu0 %v9944
    %12888 = vmatmul.bf16.gmra.mxu0 %v5114
    %v12889 = vpop.f32.mrf.mxu0
    %v12890 = vadd.f32 %v12877, %v12889
    %v12891 = vpop.f32.mrf.mxu0
    %12892 = vdwg.mxu0
    %12893 = vmatpush.bf16.msra.mxu0 %v10064
    %12894 = vmatpush.bf16.msra.mxu0 %v10056
    %12895 = vmatpush.bf16.msra.mxu0 %v10048
    %12896 = vmatpush.bf16.msra.mxu0 %v10040
    %12897 = vmatpush.bf16.msra.mxu0 %v10032
    %12898 = vmatpush.bf16.msra.mxu0 %v10024
    %12899 = vmatpush.bf16.msra.mxu0 %v10016
    %12900 = vmatpush.bf16.msra.mxu0 %v10008
    %12901 = vmatmul.bf16.gmra.mxu0 %v5115
    %v12902 = vpop.f32.mrf.mxu0
    %v12903 = vadd.f32 %v12890, %v12902
    %v12904 = vpop.f32.mrf.mxu0
    %12905 = vdwg.mxu0
    %12906 = vmatpush.bf16.msra.mxu0 %v10128
    %12907 = vmatpush.bf16.msra.mxu0 %v10120
    %12908 = vmatpush.bf16.msra.mxu0 %v10112
    %12909 = vmatpush.bf16.msra.mxu0 %v10104
    %12910 = vmatpush.bf16.msra.mxu0 %v10096
    %12911 = vmatpush.bf16.msra.mxu0 %v10088
    %12912 = vmatpush.bf16.msra.mxu0 %v10080
    %12913 = vmatpush.bf16.msra.mxu0 %v10072
    %12914 = vmatmul.bf16.gmra.mxu0 %v5116
    %v12915 = vpop.f32.mrf.mxu0
    %v12916 = vadd.f32 %v12903, %v12915
    %v12917 = vpop.f32.mrf.mxu0
    %12918 = vdwg.mxu0
    %12919 = vmatpush.bf16.msra.mxu0 %v10192
    %12920 = vmatpush.bf16.msra.mxu0 %v10184
    %12921 = vmatpush.bf16.msra.mxu0 %v10176
    %12922 = vmatpush.bf16.msra.mxu0 %v10168
    %12923 = vmatpush.bf16.msra.mxu0 %v10160
    %12924 = vmatpush.bf16.msra.mxu0 %v10152
    %12925 = vmatpush.bf16.msra.mxu0 %v10144
    %12926 = vmatpush.bf16.msra.mxu0 %v10136
    %12927 = vmatmul.bf16.gmra.mxu0 %v5117
    %v12928 = vpop.f32.mrf.mxu0
    %v12929 = vadd.f32 %v12916, %v12928
    %v12930 = vpop.f32.mrf.mxu0
    %12931 = vdwg.mxu0
    %12932 = vmatpush.bf16.msra.mxu0 %v10256
    %12933 = vmatpush.bf16.msra.mxu0 %v10248
    %12934 = vmatpush.bf16.msra.mxu0 %v10240
    %12935 = vmatpush.bf16.msra.mxu0 %v10232
    %12936 = vmatpush.bf16.msra.mxu0 %v10224
    %12937 = vmatpush.bf16.msra.mxu0 %v10216
    %12938 = vmatpush.bf16.msra.mxu0 %v10208
    %12939 = vmatpush.bf16.msra.mxu0 %v10200
    %12940 = vmatmul.bf16.gmra.mxu0 %v5118
    %v12941 = vpop.f32.mrf.mxu0
    %v12942 = vadd.f32 %v12929, %v12941
    %v12943 = vpop.f32.mrf.mxu0
    %12944 = vdwg.mxu0
    %v12945 = vld [vmem:[%s8] sm:$0xff]
    %v12947 = vperm.slane %v12945, 0
    %v12948 = vperm.slane %v12945, 1
    %v12949 = vperm.slane %v12945, 2
    %v12950 = vperm.slane %v12945, 3
    %v12951 = vperm.slane %v12945, 4
    %v12952 = vperm.slane %v12945, 5
    %v12953 = vperm.slane %v12945, 6
    %v12954 = vperm.slane %v12945, 7
    %v12963 = vmul.f32 %v11486, %v12947
    %v12964 = vmul.f32 %v11694, %v12948
    %v12965 = vmul.f32 %v11902, %v12949
    %v12966 = vmul.f32 %v12110, %v12950
    %v12967 = vmul.f32 %v12318, %v12951
    %v12968 = vmul.f32 %v12526, %v12952
    %v12969 = vmul.f32 %v12734, %v12953
    %v12970 = vmul.f32 %v12942, %v12954
    %v12971 = vld [vmem:[%s9] sm:$0xff]
    %v12973 = vperm.slane %v12971, 0
    %v12974 = vperm.slane %v12971, 1
    %v12975 = vperm.slane %v12971, 2
    %v12976 = vperm.slane %v12971, 3
    %v12977 = vperm.slane %v12971, 4
    %v12978 = vperm.slane %v12971, 5
    %v12979 = vperm.slane %v12971, 6
    %v12980 = vperm.slane %v12971, 7
    %v12989 = vadd.f32 %v12963, %v12973
    %v12990 = vadd.f32 %v12964, %v12974
    %v12991 = vadd.f32 %v12965, %v12975
    %v12992 = vadd.f32 %v12966, %v12976
    %v12993 = vadd.f32 %v12967, %v12977
    %v12994 = vadd.f32 %v12968, %v12978
    %v12995 = vadd.f32 %v12969, %v12979
    %v12996 = vadd.f32 %v12970, %v12980
    %v12997 = vmax.f32 %v12989, 0.0
    %v12998 = vmax.f32 %v12990, 0.0
    %v12999 = vmax.f32 %v12991, 0.0
    %v13000 = vmax.f32 %v12992, 0.0
    %v13001 = vmax.f32 %v12993, 0.0
    %v13002 = vmax.f32 %v12994, 0.0
    %v13003 = vmax.f32 %v12995, 0.0
    %v13004 = vmax.f32 %v12996, 0.0
    %v13005 = vpack.c.bf16 %v12997, %v12997
    %v13006 = vpack.c.bf16 %v12998, %v12998
    %v13007 = vpack.c.bf16 %v12999, %v12999
    %v13008 = vpack.c.bf16 %v13000, %v13000
    %v13009 = vpack.c.bf16 %v13001, %v13001
    %v13010 = vpack.c.bf16 %v13002, %v13002
    %v13011 = vpack.c.bf16 %v13003, %v13003
    %v13012 = vpack.c.bf16 %v13004, %v13004
    %v13013 = vld [vmem:[%s10] sm:$0xff]
    %v13014 = vld [vmem:[%s10 + $0x8] sm:$0xff]
    %v13015 = vld [vmem:[%s10 + $0x10] sm:$0xff]
    %v13016 = vld [vmem:[%s10 + $0x18] sm:$0xff]
    %v13017 = vld [vmem:[%s10 + $0x20] sm:$0xff]
    %v13018 = vld [vmem:[%s10 + $0x28] sm:$0xff]
    %v13019 = vld [vmem:[%s10 + $0x30] sm:$0xff]
    %v13020 = vld [vmem:[%s10 + $0x38] sm:$0xff]
    %v13021 = vld [vmem:[%s10 + $0x40] sm:$0xff]
    %v13022 = vld [vmem:[%s10 + $0x48] sm:$0xff]
    %v13023 = vld [vmem:[%s10 + $0x50] sm:$0xff]
    %v13024 = vld [vmem:[%s10 + $0x58] sm:$0xff]
    %v13025 = vld [vmem:[%s10 + $0x60] sm:$0xff]
    %v13026 = vld [vmem:[%s10 + $0x68] sm:$0xff]
    %v13027 = vld [vmem:[%s10 + $0x70] sm:$0xff]
    %v13028 = vld [vmem:[%s10 + $0x78] sm:$0xff]
    %v13029 = vld [vmem:[%s10 + $0x80] sm:$0xff]
    %v13030 = vld [vmem:[%s10 + $0x88] sm:$0xff]
    %v13031 = vld [vmem:[%s10 + $0x90] sm:$0xff]
    %v13032 = vld [vmem:[%s10 + $0x98] sm:$0xff]
    %v13033 = vld [vmem:[%s10 + $0xa0] sm:$0xff]
    %v13034 = vld [vmem:[%s10 + $0xa8] sm:$0xff]
    %v13035 = vld [vmem:[%s10 + $0xb0] sm:$0xff]
    %v13036 = vld [vmem:[%s10 + $0xb8] sm:$0xff]
    %v13037 = vld [vmem:[%s10 + $0xc0] sm:$0xff]
    %v13038 = vld [vmem:[%s10 + $0xc8] sm:$0xff]
    %v13039 = vld [vmem:[%s10 + $0xd0] sm:$0xff]
    %v13040 = vld [vmem:[%s10 + $0xd8] sm:$0xff]
    %v13041 = vld [vmem:[%s10 + $0xe0] sm:$0xff]
    %v13042 = vld [vmem:[%s10 + $0xe8] sm:$0xff]
    %v13043 = vld [vmem:[%s10 + $0xf0] sm:$0xff]
    %v13044 = vld [vmem:[%s10 + $0xf8] sm:$0xff]
    %v13045 = vld [vmem:[%s10 + $0x100] sm:$0xff]
    %v13046 = vld [vmem:[%s10 + $0x108] sm:$0xff]
    %v13047 = vld [vmem:[%s10 + $0x110] sm:$0xff]
    %v13048 = vld [vmem:[%s10 + $0x118] sm:$0xff]
    %v13049 = vld [vmem:[%s10 + $0x120] sm:$0xff]
    %v13050 = vld [vmem:[%s10 + $0x128] sm:$0xff]
    %v13051 = vld [vmem:[%s10 + $0x130] sm:$0xff]
    %v13052 = vld [vmem:[%s10 + $0x138] sm:$0xff]
    %v13053 = vld [vmem:[%s10 + $0x140] sm:$0xff]
    %v13054 = vld [vmem:[%s10 + $0x148] sm:$0xff]
    %v13055 = vld [vmem:[%s10 + $0x150] sm:$0xff]
    %v13056 = vld [vmem:[%s10 + $0x158] sm:$0xff]
    %v13057 = vld [vmem:[%s10 + $0x160] sm:$0xff]
    %v13058 = vld [vmem:[%s10 + $0x168] sm:$0xff]
    %v13059 = vld [vmem:[%s10 + $0x170] sm:$0xff]
    %v13060 = vld [vmem:[%s10 + $0x178] sm:$0xff]
    %v13061 = vld [vmem:[%s10 + $0x180] sm:$0xff]
    %v13062 = vld [vmem:[%s10 + $0x188] sm:$0xff]
    %v13063 = vld [vmem:[%s10 + $0x190] sm:$0xff]
    %v13064 = vld [vmem:[%s10 + $0x198] sm:$0xff]
    %v13065 = vld [vmem:[%s10 + $0x1a0] sm:$0xff]
    %v13066 = vld [vmem:[%s10 + $0x1a8] sm:$0xff]
    %v13067 = vld [vmem:[%s10 + $0x1b0] sm:$0xff]
    %v13068 = vld [vmem:[%s10 + $0x1b8] sm:$0xff]
    %v13069 = vld [vmem:[%s10 + $0x1c0] sm:$0xff]
    %v13070 = vld [vmem:[%s10 + $0x1c8] sm:$0xff]
    %v13071 = vld [vmem:[%s10 + $0x1d0] sm:$0xff]
    %v13072 = vld [vmem:[%s10 + $0x1d8] sm:$0xff]
    %v13073 = vld [vmem:[%s10 + $0x1e0] sm:$0xff]
    %v13074 = vld [vmem:[%s10 + $0x1e8] sm:$0xff]
    %v13075 = vld [vmem:[%s10 + $0x1f0] sm:$0xff]
    %v13076 = vld [vmem:[%s10 + $0x1f8] sm:$0xff]
    %v13077 = vld [vmem:[%s10 + $0x200] sm:$0xff]
    %v13078 = vld [vmem:[%s10 + $0x208] sm:$0xff]
    %v13079 = vld [vmem:[%s10 + $0x210] sm:$0xff]
    %v13080 = vld [vmem:[%s10 + $0x218] sm:$0xff]
    %v13081 = vld [vmem:[%s10 + $0x220] sm:$0xff]
    %v13082 = vld [vmem:[%s10 + $0x228] sm:$0xff]
    %v13083 = vld [vmem:[%s10 + $0x230] sm:$0xff]
    %v13084 = vld [vmem:[%s10 + $0x238] sm:$0xff]
    %v13085 = vld [vmem:[%s10 + $0x240] sm:$0xff]
    %v13086 = vld [vmem:[%s10 + $0x248] sm:$0xff]
    %v13087 = vld [vmem:[%s10 + $0x250] sm:$0xff]
    %v13088 = vld [vmem:[%s10 + $0x258] sm:$0xff]
    %v13089 = vld [vmem:[%s10 + $0x260] sm:$0xff]
    %v13090 = vld [vmem:[%s10 + $0x268] sm:$0xff]
    %v13091 = vld [vmem:[%s10 + $0x270] sm:$0xff]
    %v13092 = vld [vmem:[%s10 + $0x278] sm:$0xff]
    %v13093 = vld [vmem:[%s10 + $0x280] sm:$0xff]
    %v13094 = vld [vmem:[%s10 + $0x288] sm:$0xff]
    %v13095 = vld [vmem:[%s10 + $0x290] sm:$0xff]
    %v13096 = vld [vmem:[%s10 + $0x298] sm:$0xff]
    %v13097 = vld [vmem:[%s10 + $0x2a0] sm:$0xff]
    %v13098 = vld [vmem:[%s10 + $0x2a8] sm:$0xff]
    %v13099 = vld [vmem:[%s10 + $0x2b0] sm:$0xff]
    %v13100 = vld [vmem:[%s10 + $0x2b8] sm:$0xff]
    %v13101 = vld [vmem:[%s10 + $0x2c0] sm:$0xff]
    %v13102 = vld [vmem:[%s10 + $0x2c8] sm:$0xff]
    %v13103 = vld [vmem:[%s10 + $0x2d0] sm:$0xff]
    %v13104 = vld [vmem:[%s10 + $0x2d8] sm:$0xff]
    %v13105 = vld [vmem:[%s10 + $0x2e0] sm:$0xff]
    %v13106 = vld [vmem:[%s10 + $0x2e8] sm:$0xff]
    %v13107 = vld [vmem:[%s10 + $0x2f0] sm:$0xff]
    %v13108 = vld [vmem:[%s10 + $0x2f8] sm:$0xff]
    %v13109 = vld [vmem:[%s10 + $0x300] sm:$0xff]
    %v13110 = vld [vmem:[%s10 + $0x308] sm:$0xff]
    %v13111 = vld [vmem:[%s10 + $0x310] sm:$0xff]
    %v13112 = vld [vmem:[%s10 + $0x318] sm:$0xff]
    %v13113 = vld [vmem:[%s10 + $0x320] sm:$0xff]
    %v13114 = vld [vmem:[%s10 + $0x328] sm:$0xff]
    %v13115 = vld [vmem:[%s10 + $0x330] sm:$0xff]
    %v13116 = vld [vmem:[%s10 + $0x338] sm:$0xff]
    %v13117 = vld [vmem:[%s10 + $0x340] sm:$0xff]
    %v13118 = vld [vmem:[%s10 + $0x348] sm:$0xff]
    %v13119 = vld [vmem:[%s10 + $0x350] sm:$0xff]
    %v13120 = vld [vmem:[%s10 + $0x358] sm:$0xff]
    %v13121 = vld [vmem:[%s10 + $0x360] sm:$0xff]
    %v13122 = vld [vmem:[%s10 + $0x368] sm:$0xff]
    %v13123 = vld [vmem:[%s10 + $0x370] sm:$0xff]
    %v13124 = vld [vmem:[%s10 + $0x378] sm:$0xff]
    %v13125 = vld [vmem:[%s10 + $0x380] sm:$0xff]
    %v13126 = vld [vmem:[%s10 + $0x388] sm:$0xff]
    %v13127 = vld [vmem:[%s10 + $0x390] sm:$0xff]
    %v13128 = vld [vmem:[%s10 + $0x398] sm:$0xff]
    %v13129 = vld [vmem:[%s10 + $0x3a0] sm:$0xff]
    %v13130 = vld [vmem:[%s10 + $0x3a8] sm:$0xff]
    %v13131 = vld [vmem:[%s10 + $0x3b0] sm:$0xff]
    %v13132 = vld [vmem:[%s10 + $0x3b8] sm:$0xff]
    %v13133 = vld [vmem:[%s10 + $0x3c0] sm:$0xff]
    %v13134 = vld [vmem:[%s10 + $0x3c8] sm:$0xff]
    %v13135 = vld [vmem:[%s10 + $0x3d0] sm:$0xff]
    %v13136 = vld [vmem:[%s10 + $0x3d8] sm:$0xff]
    %v13137 = vld [vmem:[%s10 + $0x3e0] sm:$0xff]
    %v13138 = vld [vmem:[%s10 + $0x3e8] sm:$0xff]
    %v13139 = vld [vmem:[%s10 + $0x3f0] sm:$0xff]
    %v13140 = vld [vmem:[%s10 + $0x3f8] sm:$0xff]
    %v13141 = vld [vmem:[%s11] sm:$0x3]
    %v13143 = vperm.slane %v13141, 0
    %v13144 = vperm.slane %v13141, 1
    %v13275 = vunpack.c.l.b16 %v13013
    %v13276 = vunpack.c.h.b16 %v13013
    %v13277 = vunpack.c.l.b16 %v13014
    %v13278 = vunpack.c.h.b16 %v13014
    %v13279 = vunpack.c.l.b16 %v13015
    %v13280 = vunpack.c.h.b16 %v13015
    %v13281 = vunpack.c.l.b16 %v13016
    %v13282 = vunpack.c.h.b16 %v13016
    %v13283 = vunpack.c.l.b16 %v13017
    %v13284 = vunpack.c.h.b16 %v13017
    %v13285 = vunpack.c.l.b16 %v13018
    %v13286 = vunpack.c.h.b16 %v13018
    %v13287 = vunpack.c.l.b16 %v13019
    %v13288 = vunpack.c.h.b16 %v13019
    %v13289 = vunpack.c.l.b16 %v13020
    %v13290 = vunpack.c.h.b16 %v13020
    %v13291 = vunpack.c.l.b16 %v13021
    %v13292 = vunpack.c.h.b16 %v13021
    %v13293 = vunpack.c.l.b16 %v13022
    %v13294 = vunpack.c.h.b16 %v13022
    %v13295 = vunpack.c.l.b16 %v13023
    %v13296 = vunpack.c.h.b16 %v13023
    %v13297 = vunpack.c.l.b16 %v13024
    %v13298 = vunpack.c.h.b16 %v13024
    %v13299 = vunpack.c.l.b16 %v13025
    %v13300 = vunpack.c.h.b16 %v13025
    %v13301 = vunpack.c.l.b16 %v13026
    %v13302 = vunpack.c.h.b16 %v13026
    %v13303 = vunpack.c.l.b16 %v13027
    %v13304 = vunpack.c.h.b16 %v13027
    %v13305 = vunpack.c.l.b16 %v13028
    %v13306 = vunpack.c.h.b16 %v13028
    %v13307 = vunpack.c.l.b16 %v13029
    %v13308 = vunpack.c.h.b16 %v13029
    %v13309 = vunpack.c.l.b16 %v13030
    %v13310 = vunpack.c.h.b16 %v13030
    %v13311 = vunpack.c.l.b16 %v13031
    %v13312 = vunpack.c.h.b16 %v13031
    %v13313 = vunpack.c.l.b16 %v13032
    %v13314 = vunpack.c.h.b16 %v13032
    %v13315 = vunpack.c.l.b16 %v13033
    %v13316 = vunpack.c.h.b16 %v13033
    %v13317 = vunpack.c.l.b16 %v13034
    %v13318 = vunpack.c.h.b16 %v13034
    %v13319 = vunpack.c.l.b16 %v13035
    %v13320 = vunpack.c.h.b16 %v13035
    %v13321 = vunpack.c.l.b16 %v13036
    %v13322 = vunpack.c.h.b16 %v13036
    %v13323 = vunpack.c.l.b16 %v13037
    %v13324 = vunpack.c.h.b16 %v13037
    %v13325 = vunpack.c.l.b16 %v13038
    %v13326 = vunpack.c.h.b16 %v13038
    %v13327 = vunpack.c.l.b16 %v13039
    %v13328 = vunpack.c.h.b16 %v13039
    %v13329 = vunpack.c.l.b16 %v13040
    %v13330 = vunpack.c.h.b16 %v13040
    %v13331 = vunpack.c.l.b16 %v13041
    %v13332 = vunpack.c.h.b16 %v13041
    %v13333 = vunpack.c.l.b16 %v13042
    %v13334 = vunpack.c.h.b16 %v13042
    %v13335 = vunpack.c.l.b16 %v13043
    %v13336 = vunpack.c.h.b16 %v13043
    %v13337 = vunpack.c.l.b16 %v13044
    %v13338 = vunpack.c.h.b16 %v13044
    %v13339 = vunpack.c.l.b16 %v13045
    %v13340 = vunpack.c.h.b16 %v13045
    %v13341 = vunpack.c.l.b16 %v13046
    %v13342 = vunpack.c.h.b16 %v13046
    %v13343 = vunpack.c.l.b16 %v13047
    %v13344 = vunpack.c.h.b16 %v13047
    %v13345 = vunpack.c.l.b16 %v13048
    %v13346 = vunpack.c.h.b16 %v13048
    %v13347 = vunpack.c.l.b16 %v13049
    %v13348 = vunpack.c.h.b16 %v13049
    %v13349 = vunpack.c.l.b16 %v13050
    %v13350 = vunpack.c.h.b16 %v13050
    %v13351 = vunpack.c.l.b16 %v13051
    %v13352 = vunpack.c.h.b16 %v13051
    %v13353 = vunpack.c.l.b16 %v13052
    %v13354 = vunpack.c.h.b16 %v13052
    %v13355 = vunpack.c.l.b16 %v13053
    %v13356 = vunpack.c.h.b16 %v13053
    %v13357 = vunpack.c.l.b16 %v13054
    %v13358 = vunpack.c.h.b16 %v13054
    %v13359 = vunpack.c.l.b16 %v13055
    %v13360 = vunpack.c.h.b16 %v13055
    %v13361 = vunpack.c.l.b16 %v13056
    %v13362 = vunpack.c.h.b16 %v13056
    %v13363 = vunpack.c.l.b16 %v13057
    %v13364 = vunpack.c.h.b16 %v13057
    %v13365 = vunpack.c.l.b16 %v13058
    %v13366 = vunpack.c.h.b16 %v13058
    %v13367 = vunpack.c.l.b16 %v13059
    %v13368 = vunpack.c.h.b16 %v13059
    %v13369 = vunpack.c.l.b16 %v13060
    %v13370 = vunpack.c.h.b16 %v13060
    %v13371 = vunpack.c.l.b16 %v13061
    %v13372 = vunpack.c.h.b16 %v13061
    %v13373 = vunpack.c.l.b16 %v13062
    %v13374 = vunpack.c.h.b16 %v13062
    %v13375 = vunpack.c.l.b16 %v13063
    %v13376 = vunpack.c.h.b16 %v13063
    %v13377 = vunpack.c.l.b16 %v13064
    %v13378 = vunpack.c.h.b16 %v13064
    %v13379 = vunpack.c.l.b16 %v13065
    %v13380 = vunpack.c.h.b16 %v13065
    %v13381 = vunpack.c.l.b16 %v13066
    %v13382 = vunpack.c.h.b16 %v13066
    %v13383 = vunpack.c.l.b16 %v13067
    %v13384 = vunpack.c.h.b16 %v13067
    %v13385 = vunpack.c.l.b16 %v13068
    %v13386 = vunpack.c.h.b16 %v13068
    %v13387 = vunpack.c.l.b16 %v13069
    %v13388 = vunpack.c.h.b16 %v13069
    %v13389 = vunpack.c.l.b16 %v13070
    %v13390 = vunpack.c.h.b16 %v13070
    %v13391 = vunpack.c.l.b16 %v13071
    %v13392 = vunpack.c.h.b16 %v13071
    %v13393 = vunpack.c.l.b16 %v13072
    %v13394 = vunpack.c.h.b16 %v13072
    %v13395 = vunpack.c.l.b16 %v13073
    %v13396 = vunpack.c.h.b16 %v13073
    %v13397 = vunpack.c.l.b16 %v13074
    %v13398 = vunpack.c.h.b16 %v13074
    %v13399 = vunpack.c.l.b16 %v13075
    %v13400 = vunpack.c.h.b16 %v13075
    %v13401 = vunpack.c.l.b16 %v13076
    %v13402 = vunpack.c.h.b16 %v13076
    %v13403 = vunpack.c.l.b16 %v13077
    %v13404 = vunpack.c.h.b16 %v13077
    %v13405 = vunpack.c.l.b16 %v13078
    %v13406 = vunpack.c.h.b16 %v13078
    %v13407 = vunpack.c.l.b16 %v13079
    %v13408 = vunpack.c.h.b16 %v13079
    %v13409 = vunpack.c.l.b16 %v13080
    %v13410 = vunpack.c.h.b16 %v13080
    %v13411 = vunpack.c.l.b16 %v13081
    %v13412 = vunpack.c.h.b16 %v13081
    %v13413 = vunpack.c.l.b16 %v13082
    %v13414 = vunpack.c.h.b16 %v13082
    %v13415 = vunpack.c.l.b16 %v13083
    %v13416 = vunpack.c.h.b16 %v13083
    %v13417 = vunpack.c.l.b16 %v13084
    %v13418 = vunpack.c.h.b16 %v13084
    %v13419 = vunpack.c.l.b16 %v13085
    %v13420 = vunpack.c.h.b16 %v13085
    %v13421 = vunpack.c.l.b16 %v13086
    %v13422 = vunpack.c.h.b16 %v13086
    %v13423 = vunpack.c.l.b16 %v13087
    %v13424 = vunpack.c.h.b16 %v13087
    %v13425 = vunpack.c.l.b16 %v13088
    %v13426 = vunpack.c.h.b16 %v13088
    %v13427 = vunpack.c.l.b16 %v13089
    %v13428 = vunpack.c.h.b16 %v13089
    %v13429 = vunpack.c.l.b16 %v13090
    %v13430 = vunpack.c.h.b16 %v13090
    %v13431 = vunpack.c.l.b16 %v13091
    %v13432 = vunpack.c.h.b16 %v13091
    %v13433 = vunpack.c.l.b16 %v13092
    %v13434 = vunpack.c.h.b16 %v13092
    %v13435 = vunpack.c.l.b16 %v13093
    %v13436 = vunpack.c.h.b16 %v13093
    %v13437 = vunpack.c.l.b16 %v13094
    %v13438 = vunpack.c.h.b16 %v13094
    %v13439 = vunpack.c.l.b16 %v13095
    %v13440 = vunpack.c.h.b16 %v13095
    %v13441 = vunpack.c.l.b16 %v13096
    %v13442 = vunpack.c.h.b16 %v13096
    %v13443 = vunpack.c.l.b16 %v13097
    %v13444 = vunpack.c.h.b16 %v13097
    %v13445 = vunpack.c.l.b16 %v13098
    %v13446 = vunpack.c.h.b16 %v13098
    %v13447 = vunpack.c.l.b16 %v13099
    %v13448 = vunpack.c.h.b16 %v13099
    %v13449 = vunpack.c.l.b16 %v13100
    %v13450 = vunpack.c.h.b16 %v13100
    %v13451 = vunpack.c.l.b16 %v13101
    %v13452 = vunpack.c.h.b16 %v13101
    %v13453 = vunpack.c.l.b16 %v13102
    %v13454 = vunpack.c.h.b16 %v13102
    %v13455 = vunpack.c.l.b16 %v13103
    %v13456 = vunpack.c.h.b16 %v13103
    %v13457 = vunpack.c.l.b16 %v13104
    %v13458 = vunpack.c.h.b16 %v13104
    %v13459 = vunpack.c.l.b16 %v13105
    %v13460 = vunpack.c.h.b16 %v13105
    %v13461 = vunpack.c.l.b16 %v13106
    %v13462 = vunpack.c.h.b16 %v13106
    %v13463 = vunpack.c.l.b16 %v13107
    %v13464 = vunpack.c.h.b16 %v13107
    %v13465 = vunpack.c.l.b16 %v13108
    %v13466 = vunpack.c.h.b16 %v13108
    %v13467 = vunpack.c.l.b16 %v13109
    %v13468 = vunpack.c.h.b16 %v13109
    %v13469 = vunpack.c.l.b16 %v13110
    %v13470 = vunpack.c.h.b16 %v13110
    %v13471 = vunpack.c.l.b16 %v13111
    %v13472 = vunpack.c.h.b16 %v13111
    %v13473 = vunpack.c.l.b16 %v13112
    %v13474 = vunpack.c.h.b16 %v13112
    %v13475 = vunpack.c.l.b16 %v13113
    %v13476 = vunpack.c.h.b16 %v13113
    %v13477 = vunpack.c.l.b16 %v13114
    %v13478 = vunpack.c.h.b16 %v13114
    %v13479 = vunpack.c.l.b16 %v13115
    %v13480 = vunpack.c.h.b16 %v13115
    %v13481 = vunpack.c.l.b16 %v13116
    %v13482 = vunpack.c.h.b16 %v13116
    %v13483 = vunpack.c.l.b16 %v13117
    %v13484 = vunpack.c.h.b16 %v13117
    %v13485 = vunpack.c.l.b16 %v13118
    %v13486 = vunpack.c.h.b16 %v13118
    %v13487 = vunpack.c.l.b16 %v13119
    %v13488 = vunpack.c.h.b16 %v13119
    %v13489 = vunpack.c.l.b16 %v13120
    %v13490 = vunpack.c.h.b16 %v13120
    %v13491 = vunpack.c.l.b16 %v13121
    %v13492 = vunpack.c.h.b16 %v13121
    %v13493 = vunpack.c.l.b16 %v13122
    %v13494 = vunpack.c.h.b16 %v13122
    %v13495 = vunpack.c.l.b16 %v13123
    %v13496 = vunpack.c.h.b16 %v13123
    %v13497 = vunpack.c.l.b16 %v13124
    %v13498 = vunpack.c.h.b16 %v13124
    %v13499 = vunpack.c.l.b16 %v13125
    %v13500 = vunpack.c.h.b16 %v13125
    %v13501 = vunpack.c.l.b16 %v13126
    %v13502 = vunpack.c.h.b16 %v13126
    %v13503 = vunpack.c.l.b16 %v13127
    %v13504 = vunpack.c.h.b16 %v13127
    %v13505 = vunpack.c.l.b16 %v13128
    %v13506 = vunpack.c.h.b16 %v13128
    %v13507 = vunpack.c.l.b16 %v13129
    %v13508 = vunpack.c.h.b16 %v13129
    %v13509 = vunpack.c.l.b16 %v13130
    %v13510 = vunpack.c.h.b16 %v13130
    %v13511 = vunpack.c.l.b16 %v13131
    %v13512 = vunpack.c.h.b16 %v13131
    %v13513 = vunpack.c.l.b16 %v13132
    %v13514 = vunpack.c.h.b16 %v13132
    %v13515 = vunpack.c.l.b16 %v13133
    %v13516 = vunpack.c.h.b16 %v13133
    %v13517 = vunpack.c.l.b16 %v13134
    %v13518 = vunpack.c.h.b16 %v13134
    %v13519 = vunpack.c.l.b16 %v13135
    %v13520 = vunpack.c.h.b16 %v13135
    %v13521 = vunpack.c.l.b16 %v13136
    %v13522 = vunpack.c.h.b16 %v13136
    %v13523 = vunpack.c.l.b16 %v13137
    %v13524 = vunpack.c.h.b16 %v13137
    %v13525 = vunpack.c.l.b16 %v13138
    %v13526 = vunpack.c.h.b16 %v13138
    %v13527 = vunpack.c.l.b16 %v13139
    %v13528 = vunpack.c.h.b16 %v13139
    %v13529 = vunpack.c.l.b16 %v13140
    %v13530 = vunpack.c.h.b16 %v13140
    %v13531 = vpack.c.b16 %v13277, %v13275
    %v13532 = vpack.c.b16 %v13278, %v13276
    %v13533 = vpack.c.b16 %v13281, %v13279
    %v13534 = vpack.c.b16 %v13282, %v13280
    %v13535 = vpack.c.b16 %v13285, %v13283
    %v13536 = vpack.c.b16 %v13286, %v13284
    %v13537 = vpack.c.b16 %v13289, %v13287
    %v13538 = vpack.c.b16 %v13290, %v13288
    %v13539 = vpack.c.b16 %v13293, %v13291
    %v13540 = vpack.c.b16 %v13294, %v13292
    %v13541 = vpack.c.b16 %v13297, %v13295
    %v13542 = vpack.c.b16 %v13298, %v13296
    %v13543 = vpack.c.b16 %v13301, %v13299
    %v13544 = vpack.c.b16 %v13302, %v13300
    %v13545 = vpack.c.b16 %v13305, %v13303
    %v13546 = vpack.c.b16 %v13306, %v13304
    %v13547 = vpack.c.b16 %v13309, %v13307
    %v13548 = vpack.c.b16 %v13310, %v13308
    %v13549 = vpack.c.b16 %v13313, %v13311
    %v13550 = vpack.c.b16 %v13314, %v13312
    %v13551 = vpack.c.b16 %v13317, %v13315
    %v13552 = vpack.c.b16 %v13318, %v13316
    %v13553 = vpack.c.b16 %v13321, %v13319
    %v13554 = vpack.c.b16 %v13322, %v13320
    %v13555 = vpack.c.b16 %v13325, %v13323
    %v13556 = vpack.c.b16 %v13326, %v13324
    %v13557 = vpack.c.b16 %v13329, %v13327
    %v13558 = vpack.c.b16 %v13330, %v13328
    %v13559 = vpack.c.b16 %v13333, %v13331
    %v13560 = vpack.c.b16 %v13334, %v13332
    %v13561 = vpack.c.b16 %v13337, %v13335
    %v13562 = vpack.c.b16 %v13338, %v13336
    %v13563 = vpack.c.b16 %v13341, %v13339
    %v13564 = vpack.c.b16 %v13342, %v13340
    %v13565 = vpack.c.b16 %v13345, %v13343
    %v13566 = vpack.c.b16 %v13346, %v13344
    %v13567 = vpack.c.b16 %v13349, %v13347
    %v13568 = vpack.c.b16 %v13350, %v13348
    %v13569 = vpack.c.b16 %v13353, %v13351
    %v13570 = vpack.c.b16 %v13354, %v13352
    %v13571 = vpack.c.b16 %v13357, %v13355
    %v13572 = vpack.c.b16 %v13358, %v13356
    %v13573 = vpack.c.b16 %v13361, %v13359
    %v13574 = vpack.c.b16 %v13362, %v13360
    %v13575 = vpack.c.b16 %v13365, %v13363
    %v13576 = vpack.c.b16 %v13366, %v13364
    %v13577 = vpack.c.b16 %v13369, %v13367
    %v13578 = vpack.c.b16 %v13370, %v13368
    %v13579 = vpack.c.b16 %v13373, %v13371
    %v13580 = vpack.c.b16 %v13374, %v13372
    %v13581 = vpack.c.b16 %v13377, %v13375
    %v13582 = vpack.c.b16 %v13378, %v13376
    %v13583 = vpack.c.b16 %v13381, %v13379
    %v13584 = vpack.c.b16 %v13382, %v13380
    %v13585 = vpack.c.b16 %v13385, %v13383
    %v13586 = vpack.c.b16 %v13386, %v13384
    %v13587 = vpack.c.b16 %v13389, %v13387
    %v13588 = vpack.c.b16 %v13390, %v13388
    %v13589 = vpack.c.b16 %v13393, %v13391
    %v13590 = vpack.c.b16 %v13394, %v13392
    %v13591 = vpack.c.b16 %v13397, %v13395
    %v13592 = vpack.c.b16 %v13398, %v13396
    %v13593 = vpack.c.b16 %v13401, %v13399
    %v13594 = vpack.c.b16 %v13402, %v13400
    %v13595 = vpack.c.b16 %v13405, %v13403
    %v13596 = vpack.c.b16 %v13406, %v13404
    %v13597 = vpack.c.b16 %v13409, %v13407
    %v13598 = vpack.c.b16 %v13410, %v13408
    %v13599 = vpack.c.b16 %v13413, %v13411
    %v13600 = vpack.c.b16 %v13414, %v13412
    %v13601 = vpack.c.b16 %v13417, %v13415
    %v13602 = vpack.c.b16 %v13418, %v13416
    %v13603 = vpack.c.b16 %v13421, %v13419
    %v13604 = vpack.c.b16 %v13422, %v13420
    %v13605 = vpack.c.b16 %v13425, %v13423
    %v13606 = vpack.c.b16 %v13426, %v13424
    %v13607 = vpack.c.b16 %v13429, %v13427
    %v13608 = vpack.c.b16 %v13430, %v13428
    %v13609 = vpack.c.b16 %v13433, %v13431
    %v13610 = vpack.c.b16 %v13434, %v13432
    %v13611 = vpack.c.b16 %v13437, %v13435
    %v13612 = vpack.c.b16 %v13438, %v13436
    %v13613 = vpack.c.b16 %v13441, %v13439
    %v13614 = vpack.c.b16 %v13442, %v13440
    %v13615 = vpack.c.b16 %v13445, %v13443
    %v13616 = vpack.c.b16 %v13446, %v13444
    %v13617 = vpack.c.b16 %v13449, %v13447
    %v13618 = vpack.c.b16 %v13450, %v13448
    %v13619 = vpack.c.b16 %v13453, %v13451
    %v13620 = vpack.c.b16 %v13454, %v13452
    %v13621 = vpack.c.b16 %v13457, %v13455
    %v13622 = vpack.c.b16 %v13458, %v13456
    %v13623 = vpack.c.b16 %v13461, %v13459
    %v13624 = vpack.c.b16 %v13462, %v13460
    %v13625 = vpack.c.b16 %v13465, %v13463
    %v13626 = vpack.c.b16 %v13466, %v13464
    %v13627 = vpack.c.b16 %v13469, %v13467
    %v13628 = vpack.c.b16 %v13470, %v13468
    %v13629 = vpack.c.b16 %v13473, %v13471
    %v13630 = vpack.c.b16 %v13474, %v13472
    %v13631 = vpack.c.b16 %v13477, %v13475
    %v13632 = vpack.c.b16 %v13478, %v13476
    %v13633 = vpack.c.b16 %v13481, %v13479
    %v13634 = vpack.c.b16 %v13482, %v13480
    %v13635 = vpack.c.b16 %v13485, %v13483
    %v13636 = vpack.c.b16 %v13486, %v13484
    %v13637 = vpack.c.b16 %v13489, %v13487
    %v13638 = vpack.c.b16 %v13490, %v13488
    %v13639 = vpack.c.b16 %v13493, %v13491
    %v13640 = vpack.c.b16 %v13494, %v13492
    %v13641 = vpack.c.b16 %v13497, %v13495
    %v13642 = vpack.c.b16 %v13498, %v13496
    %v13643 = vpack.c.b16 %v13501, %v13499
    %v13644 = vpack.c.b16 %v13502, %v13500
    %v13645 = vpack.c.b16 %v13505, %v13503
    %v13646 = vpack.c.b16 %v13506, %v13504
    %v13647 = vpack.c.b16 %v13509, %v13507
    %v13648 = vpack.c.b16 %v13510, %v13508
    %v13649 = vpack.c.b16 %v13513, %v13511
    %v13650 = vpack.c.b16 %v13514, %v13512
    %v13651 = vpack.c.b16 %v13517, %v13515
    %v13652 = vpack.c.b16 %v13518, %v13516
    %v13653 = vpack.c.b16 %v13521, %v13519
    %v13654 = vpack.c.b16 %v13522, %v13520
    %v13655 = vpack.c.b16 %v13525, %v13523
    %v13656 = vpack.c.b16 %v13526, %v13524
    %v13657 = vpack.c.b16 %v13529, %v13527
    %v13658 = vpack.c.b16 %v13530, %v13528
    %13787 = vmatpush.bf16.msra.mxu0 %v13545
    %13788 = vmatpush.bf16.msra.mxu0 %v13543
    %13789 = vmatpush.bf16.msra.mxu0 %v13541
    %13790 = vmatpush.bf16.msra.mxu0 %v13539
    %13791 = vmatpush.bf16.msra.mxu0 %v13537
    %13792 = vmatpush.bf16.msra.mxu0 %v13535
    %13793 = vmatpush.bf16.msra.mxu0 %v13533
    %13794 = vmatpush.bf16.msra.mxu0 %v13531
    %13795 = vmatmul.bf16.gmra.mxu0 %v13005
    %v13796 = vpop.f32.mrf.mxu0
    %v13797 = vadd.f32 %v13143, %v13796
    %v13798 = vpop.f32.mrf.mxu0
    %13799 = vdwg.mxu0
    %13800 = vmatpush.bf16.msra.mxu0 %v13561
    %13801 = vmatpush.bf16.msra.mxu0 %v13559
    %13802 = vmatpush.bf16.msra.mxu0 %v13557
    %13803 = vmatpush.bf16.msra.mxu0 %v13555
    %13804 = vmatpush.bf16.msra.mxu0 %v13553
    %13805 = vmatpush.bf16.msra.mxu0 %v13551
    %13806 = vmatpush.bf16.msra.mxu0 %v13549
    %13807 = vmatpush.bf16.msra.mxu0 %v13547
    %13808 = vmatmul.bf16.gmra.mxu0 %v13006
    %v13809 = vpop.f32.mrf.mxu0
    %v13810 = vadd.f32 %v13797, %v13809
    %v13811 = vpop.f32.mrf.mxu0
    %13812 = vdwg.mxu0
    %13813 = vmatpush.bf16.msra.mxu0 %v13577
    %13814 = vmatpush.bf16.msra.mxu0 %v13575
    %13815 = vmatpush.bf16.msra.mxu0 %v13573
    %13816 = vmatpush.bf16.msra.mxu0 %v13571
    %13817 = vmatpush.bf16.msra.mxu0 %v13569
    %13818 = vmatpush.bf16.msra.mxu0 %v13567
    %13819 = vmatpush.bf16.msra.mxu0 %v13565
    %13820 = vmatpush.bf16.msra.mxu0 %v13563
    %13821 = vmatmul.bf16.gmra.mxu0 %v13007
    %v13822 = vpop.f32.mrf.mxu0
    %v13823 = vadd.f32 %v13810, %v13822
    %v13824 = vpop.f32.mrf.mxu0
    %13825 = vdwg.mxu0
    %13826 = vmatpush.bf16.msra.mxu0 %v13593
    %13827 = vmatpush.bf16.msra.mxu0 %v13591
    %13828 = vmatpush.bf16.msra.mxu0 %v13589
    %13829 = vmatpush.bf16.msra.mxu0 %v13587
    %13830 = vmatpush.bf16.msra.mxu0 %v13585
    %13831 = vmatpush.bf16.msra.mxu0 %v13583
    %13832 = vmatpush.bf16.msra.mxu0 %v13581
    %13833 = vmatpush.bf16.msra.mxu0 %v13579
    %13834 = vmatmul.bf16.gmra.mxu0 %v13008
    %v13835 = vpop.f32.mrf.mxu0
    %v13836 = vadd.f32 %v13823, %v13835
    %v13837 = vpop.f32.mrf.mxu0
    %13838 = vdwg.mxu0
    %13839 = vmatpush.bf16.msra.mxu0 %v13609
    %13840 = vmatpush.bf16.msra.mxu0 %v13607
    %13841 = vmatpush.bf16.msra.mxu0 %v13605
    %13842 = vmatpush.bf16.msra.mxu0 %v13603
    %13843 = vmatpush.bf16.msra.mxu0 %v13601
    %13844 = vmatpush.bf16.msra.mxu0 %v13599
    %13845 = vmatpush.bf16.msra.mxu0 %v13597
    %13846 = vmatpush.bf16.msra.mxu0 %v13595
    %13847 = vmatmul.bf16.gmra.mxu0 %v13009
    %v13848 = vpop.f32.mrf.mxu0
    %v13849 = vadd.f32 %v13836, %v13848
    %v13850 = vpop.f32.mrf.mxu0
    %13851 = vdwg.mxu0
    %13852 = vmatpush.bf16.msra.mxu0 %v13625
    %13853 = vmatpush.bf16.msra.mxu0 %v13623
    %13854 = vmatpush.bf16.msra.mxu0 %v13621
    %13855 = vmatpush.bf16.msra.mxu0 %v13619
    %13856 = vmatpush.bf16.msra.mxu0 %v13617
    %13857 = vmatpush.bf16.msra.mxu0 %v13615
    %13858 = vmatpush.bf16.msra.mxu0 %v13613
    %13859 = vmatpush.bf16.msra.mxu0 %v13611
    %13860 = vmatmul.bf16.gmra.mxu0 %v13010
    %v13861 = vpop.f32.mrf.mxu0
    %v13862 = vadd.f32 %v13849, %v13861
    %v13863 = vpop.f32.mrf.mxu0
    %13864 = vdwg.mxu0
    %13865 = vmatpush.bf16.msra.mxu0 %v13641
    %13866 = vmatpush.bf16.msra.mxu0 %v13639
    %13867 = vmatpush.bf16.msra.mxu0 %v13637
    %13868 = vmatpush.bf16.msra.mxu0 %v13635
    %13869 = vmatpush.bf16.msra.mxu0 %v13633
    %13870 = vmatpush.bf16.msra.mxu0 %v13631
    %13871 = vmatpush.bf16.msra.mxu0 %v13629
    %13872 = vmatpush.bf16.msra.mxu0 %v13627
    %13873 = vmatmul.bf16.gmra.mxu0 %v13011
    %v13874 = vpop.f32.mrf.mxu0
    %v13875 = vadd.f32 %v13862, %v13874
    %v13876 = vpop.f32.mrf.mxu0
    %13877 = vdwg.mxu0
    %13878 = vmatpush.bf16.msra.mxu0 %v13657
    %13879 = vmatpush.bf16.msra.mxu0 %v13655
    %13880 = vmatpush.bf16.msra.mxu0 %v13653
    %13881 = vmatpush.bf16.msra.mxu0 %v13651
    %13882 = vmatpush.bf16.msra.mxu0 %v13649
    %13883 = vmatpush.bf16.msra.mxu0 %v13647
    %13884 = vmatpush.bf16.msra.mxu0 %v13645
    %13885 = vmatpush.bf16.msra.mxu0 %v13643
    %13886 = vmatmul.bf16.gmra.mxu0 %v13012
    %v13887 = vpop.f32.mrf.mxu0
    %v13888 = vadd.f32 %v13875, %v13887
    %v13889 = vpop.f32.mrf.mxu0
    %13890 = vdwg.mxu0
    %13891 = vmatpush.bf16.msra.mxu0 %v13546
    %13892 = vmatpush.bf16.msra.mxu0 %v13544
    %13893 = vmatpush.bf16.msra.mxu0 %v13542
    %13894 = vmatpush.bf16.msra.mxu0 %v13540
    %13895 = vmatpush.bf16.msra.mxu0 %v13538
    %13896 = vmatpush.bf16.msra.mxu0 %v13536
    %13897 = vmatpush.bf16.msra.mxu0 %v13534
    %13898 = vmatpush.bf16.msra.mxu0 %v13532
    %13899 = vmatmul.bf16.gmra.mxu0 %v13005
    %v13900 = vpop.f32.mrf.mxu0
    %v13901 = vadd.f32 %v13144, %v13900
    %v13902 = vpop.f32.mrf.mxu0
    %13903 = vdwg.mxu0
    %13904 = vmatpush.bf16.msra.mxu0 %v13562
    %13905 = vmatpush.bf16.msra.mxu0 %v13560
    %13906 = vmatpush.bf16.msra.mxu0 %v13558
    %13907 = vmatpush.bf16.msra.mxu0 %v13556
    %13908 = vmatpush.bf16.msra.mxu0 %v13554
    %13909 = vmatpush.bf16.msra.mxu0 %v13552
    %13910 = vmatpush.bf16.msra.mxu0 %v13550
    %13911 = vmatpush.bf16.msra.mxu0 %v13548
    %13912 = vmatmul.bf16.gmra.mxu0 %v13006
    %v13913 = vpop.f32.mrf.mxu0
    %v13914 = vadd.f32 %v13901, %v13913
    %v13915 = vpop.f32.mrf.mxu0
    %13916 = vdwg.mxu0
    %13917 = vmatpush.bf16.msra.mxu0 %v13578
    %13918 = vmatpush.bf16.msra.mxu0 %v13576
    %13919 = vmatpush.bf16.msra.mxu0 %v13574
    %13920 = vmatpush.bf16.msra.mxu0 %v13572
    %13921 = vmatpush.bf16.msra.mxu0 %v13570
    %13922 = vmatpush.bf16.msra.mxu0 %v13568
    %13923 = vmatpush.bf16.msra.mxu0 %v13566
    %13924 = vmatpush.bf16.msra.mxu0 %v13564
    %13925 = vmatmul.bf16.gmra.mxu0 %v13007
    %v13926 = vpop.f32.mrf.mxu0
    %v13927 = vadd.f32 %v13914, %v13926
    %v13928 = vpop.f32.mrf.mxu0
    %13929 = vdwg.mxu0
    %13930 = vmatpush.bf16.msra.mxu0 %v13594
    %13931 = vmatpush.bf16.msra.mxu0 %v13592
    %13932 = vmatpush.bf16.msra.mxu0 %v13590
    %13933 = vmatpush.bf16.msra.mxu0 %v13588
    %13934 = vmatpush.bf16.msra.mxu0 %v13586
    %13935 = vmatpush.bf16.msra.mxu0 %v13584
    %13936 = vmatpush.bf16.msra.mxu0 %v13582
    %13937 = vmatpush.bf16.msra.mxu0 %v13580
    %13938 = vmatmul.bf16.gmra.mxu0 %v13008
    %v13939 = vpop.f32.mrf.mxu0
    %v13940 = vadd.f32 %v13927, %v13939
    %v13941 = vpop.f32.mrf.mxu0
    %13942 = vdwg.mxu0
    %13943 = vmatpush.bf16.msra.mxu0 %v13610
    %13944 = vmatpush.bf16.msra.mxu0 %v13608
    %13945 = vmatpush.bf16.msra.mxu0 %v13606
    %13946 = vmatpush.bf16.msra.mxu0 %v13604
    %13947 = vmatpush.bf16.msra.mxu0 %v13602
    %13948 = vmatpush.bf16.msra.mxu0 %v13600
    %13949 = vmatpush.bf16.msra.mxu0 %v13598
    %13950 = vmatpush.bf16.msra.mxu0 %v13596
    %13951 = vmatmul.bf16.gmra.mxu0 %v13009
    %v13952 = vpop.f32.mrf.mxu0
    %v13953 = vadd.f32 %v13940, %v13952
    %v13954 = vpop.f32.mrf.mxu0
    %13955 = vdwg.mxu0
    %13956 = vmatpush.bf16.msra.mxu0 %v13626
    %13957 = vmatpush.bf16.msra.mxu0 %v13624
    %13958 = vmatpush.bf16.msra.mxu0 %v13622
    %13959 = vmatpush.bf16.msra.mxu0 %v13620
    %13960 = vmatpush.bf16.msra.mxu0 %v13618
    %13961 = vmatpush.bf16.msra.mxu0 %v13616
    %13962 = vmatpush.bf16.msra.mxu0 %v13614
    %13963 = vmatpush.bf16.msra.mxu0 %v13612
    %13964 = vmatmul.bf16.gmra.mxu0 %v13010
    %v13965 = vpop.f32.mrf.mxu0
    %v13966 = vadd.f32 %v13953, %v13965
    %v13967 = vpop.f32.mrf.mxu0
    %13968 = vdwg.mxu0
    %13969 = vmatpush.bf16.msra.mxu0 %v13642
    %13970 = vmatpush.bf16.msra.mxu0 %v13640
    %13971 = vmatpush.bf16.msra.mxu0 %v13638
    %13972 = vmatpush.bf16.msra.mxu0 %v13636
    %13973 = vmatpush.bf16.msra.mxu0 %v13634
    %13974 = vmatpush.bf16.msra.mxu0 %v13632
    %13975 = vmatpush.bf16.msra.mxu0 %v13630
    %13976 = vmatpush.bf16.msra.mxu0 %v13628
    %13977 = vmatmul.bf16.gmra.mxu0 %v13011
    %v13978 = vpop.f32.mrf.mxu0
    %v13979 = vadd.f32 %v13966, %v13978
    %v13980 = vpop.f32.mrf.mxu0
    %13981 = vdwg.mxu0
    %13982 = vmatpush.bf16.msra.mxu0 %v13658
    %13983 = vmatpush.bf16.msra.mxu0 %v13656
    %13984 = vmatpush.bf16.msra.mxu0 %v13654
    %13985 = vmatpush.bf16.msra.mxu0 %v13652
    %13986 = vmatpush.bf16.msra.mxu0 %v13650
    %13987 = vmatpush.bf16.msra.mxu0 %v13648
    %13988 = vmatpush.bf16.msra.mxu0 %v13646
    %13989 = vmatpush.bf16.msra.mxu0 %v13644
    %13990 = vmatmul.bf16.gmra.mxu0 %v13012
    %v13991 = vpop.f32.mrf.mxu0
    %v13992 = vadd.f32 %v13979, %v13991
    %v13993 = vpop.f32.mrf.mxu0
    %13994 = vdwg.mxu0
    %v13995 = vld [vmem:[%s12] sm:$0x3]
    %v13997 = vperm.slane %v13995, 0
    %v13998 = vperm.slane %v13995, 1
    %v14001 = vmul.f32 %v13888, %v13997
    %v14002 = vmul.f32 %v13992, %v13998
    %v14003 = vld [vmem:[%s13] sm:$0x3]
    %v14005 = vperm.slane %v14003, 0
    %v14006 = vperm.slane %v14003, 1
    %v14009 = vadd.f32 %v14001, %v14005
    %v14010 = vadd.f32 %v14002, %v14006
    %v14011 = vmax.f32 %v14009, 0.0
    %v14012 = vmax.f32 %v14010, 0.0
    %v14013 = vld [vmem:[%s14] sm:$0x3]
    %s14014 = sld [smem:[#allocation3]]
    %v14015 = vstv %s14014
    %v14017 = vperm.slane %v14013, 0
    %v14018 = vperm.slane %v14013, 1
    %14021 = vmatpush.xpose.msra.mxu0 0.0
    %14022 = vmatpush.xpose.msra.mxu0 0.0
    %14023 = vmatpush.xpose.msra.mxu0 0.0
    %14024 = vmatpush.xpose.msra.mxu0 0.0
    %14025 = vmatpush.xpose.msra.mxu0 0.0
    %14026 = vmatpush.xpose.msra.mxu0 0.0
    %14027 = vmatpush.xpose.msra.mxu0 0.0
    %14028 = vmatpush.xpose.msra.mxu0 0.0
    %14029 = vmatpush.xpose.msra.mxu0 0.0
    %14030 = vmatpush.xpose.msra.mxu0 0.0
    %14031 = vmatpush.xpose.msra.mxu0 0.0
    %14032 = vmatpush.xpose.msra.mxu0 0.0
    %14033 = vmatpush.xpose.msra.mxu0 0.0
    %14034 = vmatpush.xpose.msra.mxu0 0.0
    %14035 = vmatpush.xpose.msra.mxu0 0.0
    %14036 = vmatpush.xpose.msra.mxu0 %v14011
    %14037 = vmatmul.f32.gmra.mxu0 %v14017
    %v14038 = vpop.f32.mrf.mxu0
    %v14039 = vadd.f32 %v14015, %v14038
    %14040 = vdwg.mxu0
    %14041 = vmatpush.xpose.msra.mxu0 0.0
    %14042 = vmatpush.xpose.msra.mxu0 0.0
    %14043 = vmatpush.xpose.msra.mxu0 0.0
    %14044 = vmatpush.xpose.msra.mxu0 0.0
    %14045 = vmatpush.xpose.msra.mxu0 0.0
    %14046 = vmatpush.xpose.msra.mxu0 0.0
    %14047 = vmatpush.xpose.msra.mxu0 0.0
    %14048 = vmatpush.xpose.msra.mxu0 0.0
    %14049 = vmatpush.xpose.msra.mxu0 0.0
    %14050 = vmatpush.xpose.msra.mxu0 0.0
    %14051 = vmatpush.xpose.msra.mxu0 0.0
    %14052 = vmatpush.xpose.msra.mxu0 0.0
    %14053 = vmatpush.xpose.msra.mxu0 0.0
    %14054 = vmatpush.xpose.msra.mxu0 0.0
    %14055 = vmatpush.xpose.msra.mxu0 0.0
    %14056 = vmatpush.xpose.msra.mxu0 %v14012
    %14057 = vmatmul.f32.gmra.mxu0 %v14018
    %v14058 = vpop.f32.mrf.mxu0
    %v14059 = vadd.f32 %v14039, %v14058
    %14060 = vdwg.mxu0
    %vm14061 = vcmask 57344
    %14062 = vst.msk [vmem:[%s16] sm:$0x1] %vm14061, %v14059
    // Predicated region
    $region70: #{face_classifier_forward.1} parent=1 // pred_check
      _
    $region71: #{face_classifier_forward.1} parent=1 // pred_check_branch
      %14064 = sbr.rel (0) target = $region73
    $region72: #{face_classifier_forward.1} parent=1 // pred_region
      _
    $region73: #{face_classifier_forward.1} parent=1 // pred_fallthru
      _
    // Predicated region
    $region74: #{face_classifier_forward.1} parent=1 // pred_check
      _
    $region75: #{face_classifier_forward.1} parent=1 // pred_check_branch
      %14066 = sbr.rel (0) target = $region77
    $region76: #{face_classifier_forward.1} parent=1 // pred_region
      _
    $region77: #{face_classifier_forward.1} parent=1 // pred_fallthru
      _
    %14067 = vsyncpa [#allocation5], 1

</llo_original>
